<compile_context>
chip_gen: v7x
topology: tpu7x:2x2x1
jax: 0.10.0
libtpu: 0.0.40
codegen_flags: <defaults>
</compile_context>

<pallas_src>
import jax
import jax.numpy as jnp
from jax.experimental import pallas as pl
from jax.experimental.pallas import tpu as pltpu

_LANE = 128
_ROW_TILE = 16      # bf16 sublane tile is (16, 128): keep row offsets aligned
_TC_MAX = 64        # timesteps per VMEM chunk of the gate slab


def _round_up(x, m):
    return ((x + m - 1) // m) * m


def _pad_gate_axis(w, H, Hp):
    """Pad the packed-gate (..., 4H) axis to (..., 4*Hp), per gate, with zeros."""
    lead = w.shape[:-1]
    w4 = w.reshape(lead + (4, H))
    w4 = jnp.pad(w4, [(0, 0)] * len(lead) + [(0, 0), (0, Hp - H)])
    return w4.reshape(lead + (4 * Hp,))


def _sigmoid(x):
    # tanh-form sigmoid: exactly one EUP op per gate, scale/shift on the VPU.
    return 0.5 * jnp.tanh(0.5 * x) + 0.5


# ----------------------------------------------------------------------------
# Fused Pallas kernel: all LSTM layers + final Linear, grid over time chunks
# ----------------------------------------------------------------------------
def make_fused_kernel(T, Tpad, Tc, Bp, Hp, num_layers):
    n_w = 3 * num_layers + 2          # [wih, whh, bias] per layer + fc_w, fc_b

    def kernel(*args):
        # inputs : x_chunk, (wih, whh, bias)*L, wfc, bfc      (weights in HBM)
        # outputs: out_ref
        # scratch: VMEM weight copies (same order), gate slab, h-chunk buffer,
        #          h carry, c carry, DMA semaphores
        x_ref = args[0]
        w_hbm = args[1:1 + n_w]
        out_ref = args[1 + n_w]
        scr = args[2 + n_w:]
        w_vmem = scr[:n_w]
        gates_scr, hbuf_scr, h_scr, c_scr, w_sems = scr[n_w:]

        chunk = pl.program_id(0)
        n_chunks = pl.num_programs(0)

        # ---- one-time setup (chunk 0): weights HBM -> VMEM, zero the state.
        @pl.when(chunk == 0)
        def _():
            copies = [
                pltpu.make_async_copy(src, dst, w_sems.at[i])
                for i, (src, dst) in enumerate(zip(w_hbm, w_vmem))
            ]
            for cp in copies:
                cp.start()
            # Overlap the state zeroing with the weight DMAs.
            h_scr[...] = jnp.zeros(h_scr.shape, h_scr.dtype)
            c_scr[...] = jnp.zeros(c_scr.shape, c_scr.dtype)
            hbuf_scr[...] = jnp.zeros(hbuf_scr.shape, hbuf_scr.dtype)
            for cp in copies:
                cp.wait()

        # ---- all layers on this time chunk (per-layer h/c persist in scratch)
        for l in range(num_layers):
            wih_v = w_vmem[3 * l]
            whh_v = w_vmem[3 * l + 1]
            b_v = w_vmem[3 * l + 2]
            is_last = l == num_layers - 1

            # Hoisted input projection for the whole chunk: one bf16 MXU
            # matmul (bias folded in), f32 accumulate, stored bf16.
            layer_in = x_ref[...] if l == 0 else hbuf_scr[...]
            gates_scr[...] = (
                jnp.dot(layer_in, wih_v[...],
                        preferred_element_type=jnp.float32)
                + b_v[...]
            ).astype(gates_scr.dtype)

            def step_body(t, whh_v=whh_v, l=l, is_last=is_last):
                row = pl.ds(pl.multiple_of(t * Bp, Bp), Bp)
                # Recurrent half only; gates_x already sits in the VMEM slab.
                gates = gates_scr[row, :].astype(jnp.float32) + jnp.dot(
                    h_scr[l].astype(jnp.bfloat16), whh_v[...],
                    preferred_element_type=jnp.float32)
                # Lane-aligned PyTorch gate order [i, f, g, o].
                i_g = _sigmoid(gates[:, 0 * Hp:1 * Hp])
                f_g = _sigmoid(gates[:, 1 * Hp:2 * Hp])
                g_g = jnp.tanh(gates[:, 2 * Hp:3 * Hp])
                o_g = _sigmoid(gates[:, 3 * Hp:4 * Hp])
                c_new = f_g * c_scr[l] + i_g * g_g
                h_new = o_g * jnp.tanh(c_new)
                c_scr[l] = c_new
                h_scr[l] = h_new
                if not is_last:          # last layer: hidden seq never needed
                    hbuf_scr[row, :] = h_new.astype(hbuf_scr.dtype)

            def step(t, carry, step_body=step_body):
                if Tpad == T:            # every timestep of every chunk valid
                    step_body(t)
                else:                    # guard padded timesteps (last chunk)
                    pl.when(chunk * Tc + t < T)(lambda: step_body(t))
                return carry

            # Full unroll for tiny chunks; bounded unroll otherwise to keep
            # vreg pressure / code size under control.
            jax.lax.fori_loop(0, Tc, step, 0,
                              unroll=True if Tc <= 8 else 4)

        # ---- fused final Linear on h_{T-1} of the last layer (last chunk).
        @pl.when(chunk == n_chunks - 1)
        def _():
            wfc_v = w_vmem[3 * num_layers]
            bfc_v = w_vmem[3 * num_layers + 1]
            out_ref[...] = (
                jnp.dot(h_scr[num_layers - 1].astype(jnp.bfloat16), wfc_v[...],
                        preferred_element_type=jnp.float32)
                + bfc_v[...]
            ).astype(out_ref.dtype)

    return kernel


# ----------------------------------------------------------------------------
# Wrapper: padding / layout plumbing + single pallas_call
# ----------------------------------------------------------------------------
def lstm_classifier_forward(x, params, hidden_dim):
    """x: (B, T, D_in) batch-first (PyTorch convention). Returns (B, output_dim)."""
    B, T, D = x.shape
    H = hidden_dim
    O = params["fc_w"].shape[0]
    num_layers = len(params["lstm_layers"])

    Bp = _round_up(max(B, _ROW_TILE), _ROW_TILE)   # aligned bf16 row tiles
    Hp = _round_up(max(H, _LANE), _LANE)           # lane-align gate slices
    Op = _round_up(max(O, _LANE), _LANE)           # lane-dense output store

    Tc = min(T, _TC_MAX)                           # timesteps per chunk
    n_chunks = (T + Tc - 1) // Tc
    Tpad = n_chunks * Tc

    # (B,T,D) -> time-major (T,B,D) -> pad time/batch -> (Tpad*Bp, D) bf16
    x_tbd = jnp.transpose(x, (1, 0, 2)).astype(jnp.float32)
    x_tbd = jnp.pad(x_tbd, ((0, Tpad - T), (0, Bp - B), (0, 0)))
    x2d = x_tbd.reshape(Tpad * Bp, D).astype(jnp.bfloat16)

    kernel_inputs = [x2d]
    in_specs = [pl.BlockSpec((Tc * Bp, D), lambda c: (c, 0))]
    weight_vmem = []

    for l, (w_ih, w_hh, b_ih, b_hh) in enumerate(params["lstm_layers"]):
        d_in = w_ih.shape[1]
        d_in_p = d_in if l == 0 else Hp
        wih_t = _pad_gate_axis(w_ih.T.astype(jnp.float32), H, Hp)    # (d_in, 4Hp)
        wih_t = jnp.pad(wih_t, ((0, d_in_p - d_in), (0, 0)))         # (d_in_p, 4Hp)
        whh_t = _pad_gate_axis(w_hh.T.astype(jnp.float32), H, Hp)    # (H, 4Hp)
        whh_t = jnp.pad(whh_t, ((0, Hp - H), (0, 0)))                # (Hp, 4Hp)
        bias = _pad_gate_axis((b_ih + b_hh).reshape(1, 4 * H).astype(jnp.float32),
                              H, Hp)                                 # (1, 4Hp) f32
        kernel_inputs += [wih_t.astype(jnp.bfloat16),
                          whh_t.astype(jnp.bfloat16), bias]
        in_specs += [pl.BlockSpec(memory_space=pl.ANY)] * 3          # stay in HBM
        weight_vmem += [pltpu.VMEM((d_in_p, 4 * Hp), jnp.bfloat16),
                        pltpu.VMEM((Hp, 4 * Hp), jnp.bfloat16),
                        pltpu.VMEM((1, 4 * Hp), jnp.float32)]

    wfc_t = jnp.pad(params["fc_w"].T.astype(jnp.float32),
                    ((0, Hp - H), (0, Op - O)))                      # (Hp, Op)
    bfc = jnp.pad(params["fc_b"].reshape(1, O).astype(jnp.float32),
                  ((0, 0), (0, Op - O)))                             # (1, Op) f32
    kernel_inputs += [wfc_t.astype(jnp.bfloat16), bfc]
    in_specs += [pl.BlockSpec(memory_space=pl.ANY)] * 2
    weight_vmem += [pltpu.VMEM((Hp, Op), jnp.bfloat16),
                    pltpu.VMEM((1, Op), jnp.float32)]

    n_w = 3 * num_layers + 2
    scratch_shapes = weight_vmem + [
        pltpu.VMEM((Tc * Bp, 4 * Hp), jnp.bfloat16),     # chunk gate slab
        pltpu.VMEM((Tc * Bp, Hp), jnp.bfloat16),         # inter-layer h chunk
        pltpu.VMEM((num_layers, Bp, Hp), jnp.float32),   # h carry per layer
        pltpu.VMEM((num_layers, Bp, Hp), jnp.float32),   # c carry per layer
        pltpu.SemaphoreType.DMA((n_w,)),                 # weight DMA sems
    ]

    # Explicit VMEM budget: single-buffered weights + slabs + state + the
    # double-buffered x/out pipeline blocks, with ~30% headroom.
    wbytes = 0
    for l, (w_ih, _, _, _) in enumerate(params["lstm_layers"]):
        d_in_p = w_ih.shape[1] if l == 0 else Hp
        wbytes += 2 * d_in_p * 4 * Hp + 2 * Hp * 4 * Hp + 4 * 4 * Hp
    wbytes += 2 * Hp * Op + 4 * Op
    slab_bytes = 2 * (Tc * Bp * 4 * Hp) + 2 * (Tc * Bp * Hp)
    state_bytes = 2 * 4 * num_layers * Bp * Hp
    io_bytes = 2 * (2 * Tc * Bp * D) + 2 * (4 * Bp * Op)
    vmem_bytes = int(1.3 * (wbytes + slab_bytes + state_bytes + io_bytes)) + (4 << 20)
    vmem_bytes = min(vmem_bytes, 128 * 1024 * 1024)

    kernel = make_fused_kernel(T=T, Tpad=Tpad, Tc=Tc, Bp=Bp, Hp=Hp,
                               num_layers=num_layers)

    out_p = pl.pallas_call(
        kernel,
        out_shape=jax.ShapeDtypeStruct((Bp, Op), jnp.float32),
        grid_spec=pltpu.PrefetchScalarGridSpec(
            num_scalar_prefetch=0,
            grid=(n_chunks,),
            in_specs=in_specs,
            out_specs=pl.BlockSpec((Bp, Op), lambda c: (0, 0)),
            scratch_shapes=scratch_shapes,
        ),
        compiler_params=pltpu.CompilerParams(
            dimension_semantics=("arbitrary",),
            vmem_limit_bytes=vmem_bytes,
        ),
    )(*kernel_inputs)

    return out_p[:B, :O]


# ----------------------------------------------------------------------------
# Deterministic parameter construction (PyTorch nn.LSTM / nn.Linear layout)
# ----------------------------------------------------------------------------
def init_params(key, input_dim, hidden_dim, layer_dim, output_dim):
    H = hidden_dim
    scale = H ** -0.5
    layers = []
    for layer in range(layer_dim):
        d_in = input_dim if layer == 0 else hidden_dim
        key, k1, k2, k3, k4 = jax.random.split(key, 5)
        w_ih = jax.random.uniform(k1, (4 * H, d_in), jnp.float32, -scale, scale)
        w_hh = jax.random.uniform(k2, (4 * H, H), jnp.float32, -scale, scale)
        b_ih = jax.random.uniform(k3, (4 * H,), jnp.float32, -scale, scale)
        b_hh = jax.random.uniform(k4, (4 * H,), jnp.float32, -scale, scale)
        layers.append((w_ih, w_hh, b_ih, b_hh))
    key, k5, k6 = jax.random.split(key, 3)
    w_fc = jax.random.uniform(k5, (output_dim, H), jnp.float32, -scale, scale)
    b_fc = jax.random.uniform(k6, (output_dim,), jnp.float32, -scale, scale)
    return {"lstm_layers": layers, "fc_w": w_fc, "fc_b": b_fc}


# ----------------------------------------------------------------------------
# Pure-JAX f32 reference (unpadded), for correctness check
# ----------------------------------------------------------------------------
def reference_forward(x, params, hidden_dim):
    B, T, D = x.shape
    H = hidden_dim
    layer_in = jnp.transpose(x, (1, 0, 2)).astype(jnp.float32)   # (T, B, D)
    for (w_ih, w_hh, b_ih, b_hh) in params["lstm_layers"]:
        wih_t, whh_t = w_ih.T, w_hh.T
        bias = (b_ih + b_hh)[None, :]

        def step(carry, x_t, wih_t=wih_t, whh_t=whh_t, bias=bias):
            h, c = carry
            gates = x_t @ wih_t + h @ whh_t + bias
            i = jax.nn.sigmoid(gates[:, 0 * H:1 * H])
            f = jax.nn.sigmoid(gates[:, 1 * H:2 * H])
            g = jnp.tanh(gates[:, 2 * H:3 * H])
            o = jax.nn.sigmoid(gates[:, 3 * H:4 * H])
            c = f * c + i * g
            h = o * jnp.tanh(c)
            return (h, c), h

        init = (jnp.zeros((B, H), jnp.float32), jnp.zeros((B, H), jnp.float32))
        _, hseq = jax.lax.scan(step, init, layer_in)
        layer_in = hseq
    return layer_in[-1] @ params["fc_w"].T + params["fc_b"][None, :]


# ----------------------------------------------------------------------------
if __name__ == "__main__":
    B, T = 2, 8
    input_dim, hidden_dim, layer_dim, output_dim = 16, 32, 2, 4

    key = jax.random.PRNGKey(0)
    key, kx = jax.random.split(key)
    x = jax.random.normal(kx, (B, T, input_dim), jnp.float32)

    params = init_params(key, input_dim, hidden_dim, layer_dim, output_dim)

    out = lstm_classifier_forward(x, params, hidden_dim)
    out = jax.block_until_ready(out)

    ref = reference_forward(x, params, hidden_dim)
    assert out.shape == (B, output_dim)
    # bf16 weights/activations on the MXU path -> compare against the f32
    # reference with a bf16-appropriate tolerance.
    assert jnp.allclose(out, ref, atol=5e-2, rtol=5e-2), "mismatch vs reference"

    print("KERNEL_OK")
</pallas_src>

<mosaic_0001>
module attributes {stable_mosaic.version = 11 : i64} {
  func.func @kernel(%arg0: i32, %arg1: memref<128x16xbf16, #tpu.memory_space<vmem>>, %arg2: memref<16x512xbf16, #tpu.memory_space<any>>, %arg3: memref<128x512xbf16, #tpu.memory_space<any>>, %arg4: memref<1x512xf32, #tpu.memory_space<any>>, %arg5: memref<128x512xbf16, #tpu.memory_space<any>>, %arg6: memref<128x512xbf16, #tpu.memory_space<any>>, %arg7: memref<1x512xf32, #tpu.memory_space<any>>, %arg8: memref<128x128xbf16, #tpu.memory_space<any>>, %arg9: memref<1x128xf32, #tpu.memory_space<any>>, %arg10: memref<16x128xf32, #tpu.memory_space<vmem>>, %arg11: memref<16x512xbf16, #tpu.memory_space<vmem>>, %arg12: memref<128x512xbf16, #tpu.memory_space<vmem>>, %arg13: memref<1x512xf32, #tpu.memory_space<vmem>>, %arg14: memref<128x512xbf16, #tpu.memory_space<vmem>>, %arg15: memref<128x512xbf16, #tpu.memory_space<vmem>>, %arg16: memref<1x512xf32, #tpu.memory_space<vmem>>, %arg17: memref<128x128xbf16, #tpu.memory_space<vmem>>, %arg18: memref<1x128xf32, #tpu.memory_space<vmem>>, %arg19: memref<128x512xbf16, #tpu.memory_space<vmem>>, %arg20: memref<128x128xbf16, #tpu.memory_space<vmem>>, %arg21: memref<2x16x128xf32, #tpu.memory_space<vmem>>, %arg22: memref<2x16x128xf32, #tpu.memory_space<vmem>>, %arg23: memref<8x!tpu.dma_semaphore, #tpu.memory_space<semaphore_mem>>) attributes {dimension_semantics = [#tpu.dimension_semantics<arbitrary>], iteration_bounds = array<i64: 1>, scalar_prefetch = 0 : i64, scratch_operands = 13 : i64, tpu.core_type = #tpu.core_type<tc>, window_params = [{transform_indices = @transform_0, window_bounds = array<i64: 128, 16>}, {}, {}, {}, {}, {}, {}, {}, {}, {pipeline_mode = #tpu.pipeline_mode<synchronous>, transform_indices = @transform_9, window_bounds = array<i64: 16, 128>}]} {
    %c0_i32 = arith.constant 0 : i32
    %0 = arith.cmpi eq, %arg0, %c0_i32 : i32
    %1 = arith.extui %0 : i1 to i32
    %c0_i32_0 = arith.constant 0 : i32
    %2 = arith.cmpi ne, %1, %c0_i32_0 : i32
    scf.if %2 {
      %c0_i32_451 = arith.constant 0 : i32
      %846 = tpu.memref_slice %arg23[%c0_i32_451] : memref<8x!tpu.dma_semaphore, #tpu.memory_space<semaphore_mem>> -> memref<1x!tpu.dma_semaphore, #tpu.memory_space<semaphore_mem>>
      %847 = tpu.memref_squeeze %846 : memref<1x!tpu.dma_semaphore, #tpu.memory_space<semaphore_mem>> -> memref<!tpu.dma_semaphore, #tpu.memory_space<semaphore_mem>>
      tpu.enqueue_dma source(%arg2 : memref<16x512xbf16, #tpu.memory_space<any>>) target(%arg11 : memref<16x512xbf16, #tpu.memory_space<vmem>>) target_semaphore(%847 : memref<!tpu.dma_semaphore, #tpu.memory_space<semaphore_mem>>)
      %c1_i32_452 = arith.constant 1 : i32
      %848 = tpu.memref_slice %arg23[%c1_i32_452] : memref<8x!tpu.dma_semaphore, #tpu.memory_space<semaphore_mem>> -> memref<1x!tpu.dma_semaphore, #tpu.memory_space<semaphore_mem>>
      %849 = tpu.memref_squeeze %848 : memref<1x!tpu.dma_semaphore, #tpu.memory_space<semaphore_mem>> -> memref<!tpu.dma_semaphore, #tpu.memory_space<semaphore_mem>>
      tpu.enqueue_dma source(%arg3 : memref<128x512xbf16, #tpu.memory_space<any>>) target(%arg12 : memref<128x512xbf16, #tpu.memory_space<vmem>>) target_semaphore(%849 : memref<!tpu.dma_semaphore, #tpu.memory_space<semaphore_mem>>)
      %c2_i32_453 = arith.constant 2 : i32
      %850 = tpu.memref_slice %arg23[%c2_i32_453] : memref<8x!tpu.dma_semaphore, #tpu.memory_space<semaphore_mem>> -> memref<1x!tpu.dma_semaphore, #tpu.memory_space<semaphore_mem>>
      %851 = tpu.memref_squeeze %850 : memref<1x!tpu.dma_semaphore, #tpu.memory_space<semaphore_mem>> -> memref<!tpu.dma_semaphore, #tpu.memory_space<semaphore_mem>>
      tpu.enqueue_dma source(%arg4 : memref<1x512xf32, #tpu.memory_space<any>>) target(%arg13 : memref<1x512xf32, #tpu.memory_space<vmem>>) target_semaphore(%851 : memref<!tpu.dma_semaphore, #tpu.memory_space<semaphore_mem>>)
      %c3_i32_454 = arith.constant 3 : i32
      %852 = tpu.memref_slice %arg23[%c3_i32_454] : memref<8x!tpu.dma_semaphore, #tpu.memory_space<semaphore_mem>> -> memref<1x!tpu.dma_semaphore, #tpu.memory_space<semaphore_mem>>
      %853 = tpu.memref_squeeze %852 : memref<1x!tpu.dma_semaphore, #tpu.memory_space<semaphore_mem>> -> memref<!tpu.dma_semaphore, #tpu.memory_space<semaphore_mem>>
      tpu.enqueue_dma source(%arg5 : memref<128x512xbf16, #tpu.memory_space<any>>) target(%arg14 : memref<128x512xbf16, #tpu.memory_space<vmem>>) target_semaphore(%853 : memref<!tpu.dma_semaphore, #tpu.memory_space<semaphore_mem>>)
      %c4_i32_455 = arith.constant 4 : i32
      %854 = tpu.memref_slice %arg23[%c4_i32_455] : memref<8x!tpu.dma_semaphore, #tpu.memory_space<semaphore_mem>> -> memref<1x!tpu.dma_semaphore, #tpu.memory_space<semaphore_mem>>
      %855 = tpu.memref_squeeze %854 : memref<1x!tpu.dma_semaphore, #tpu.memory_space<semaphore_mem>> -> memref<!tpu.dma_semaphore, #tpu.memory_space<semaphore_mem>>
      tpu.enqueue_dma source(%arg6 : memref<128x512xbf16, #tpu.memory_space<any>>) target(%arg15 : memref<128x512xbf16, #tpu.memory_space<vmem>>) target_semaphore(%855 : memref<!tpu.dma_semaphore, #tpu.memory_space<semaphore_mem>>)
      %c5_i32_456 = arith.constant 5 : i32
      %856 = tpu.memref_slice %arg23[%c5_i32_456] : memref<8x!tpu.dma_semaphore, #tpu.memory_space<semaphore_mem>> -> memref<1x!tpu.dma_semaphore, #tpu.memory_space<semaphore_mem>>
      %857 = tpu.memref_squeeze %856 : memref<1x!tpu.dma_semaphore, #tpu.memory_space<semaphore_mem>> -> memref<!tpu.dma_semaphore, #tpu.memory_space<semaphore_mem>>
      tpu.enqueue_dma source(%arg7 : memref<1x512xf32, #tpu.memory_space<any>>) target(%arg16 : memref<1x512xf32, #tpu.memory_space<vmem>>) target_semaphore(%857 : memref<!tpu.dma_semaphore, #tpu.memory_space<semaphore_mem>>)
      %c6_i32_457 = arith.constant 6 : i32
      %858 = tpu.memref_slice %arg23[%c6_i32_457] : memref<8x!tpu.dma_semaphore, #tpu.memory_space<semaphore_mem>> -> memref<1x!tpu.dma_semaphore, #tpu.memory_space<semaphore_mem>>
      %859 = tpu.memref_squeeze %858 : memref<1x!tpu.dma_semaphore, #tpu.memory_space<semaphore_mem>> -> memref<!tpu.dma_semaphore, #tpu.memory_space<semaphore_mem>>
      tpu.enqueue_dma source(%arg8 : memref<128x128xbf16, #tpu.memory_space<any>>) target(%arg17 : memref<128x128xbf16, #tpu.memory_space<vmem>>) target_semaphore(%859 : memref<!tpu.dma_semaphore, #tpu.memory_space<semaphore_mem>>)
      %c7_i32_458 = arith.constant 7 : i32
      %860 = tpu.memref_slice %arg23[%c7_i32_458] : memref<8x!tpu.dma_semaphore, #tpu.memory_space<semaphore_mem>> -> memref<1x!tpu.dma_semaphore, #tpu.memory_space<semaphore_mem>>
      %861 = tpu.memref_squeeze %860 : memref<1x!tpu.dma_semaphore, #tpu.memory_space<semaphore_mem>> -> memref<!tpu.dma_semaphore, #tpu.memory_space<semaphore_mem>>
      tpu.enqueue_dma source(%arg9 : memref<1x128xf32, #tpu.memory_space<any>>) target(%arg18 : memref<1x128xf32, #tpu.memory_space<vmem>>) target_semaphore(%861 : memref<!tpu.dma_semaphore, #tpu.memory_space<semaphore_mem>>)
      %cst_459 = arith.constant 0.000000e+00 : f32
      %862 = vector.broadcast %cst_459 : f32 to vector<2x16x128xf32>
      %c0_460 = arith.constant 0 : index
      %c0_461 = arith.constant 0 : index
      %c0_462 = arith.constant 0 : index
      %863 = vector.load %arg21[%c0_460, %c0_461, %c0_462] : memref<2x16x128xf32, #tpu.memory_space<vmem>>, vector<2x16x128xf32>
      tpu.vector_store %arg21[%c0_460, %c0_461, %c0_462], %862 {strides = array<i32>} : memref<2x16x128xf32, #tpu.memory_space<vmem>>, vector<2x16x128xf32>,
      %cst_463 = arith.constant 0.000000e+00 : f32
      %864 = vector.broadcast %cst_463 : f32 to vector<2x16x128xf32>
      %c0_464 = arith.constant 0 : index
      %c0_465 = arith.constant 0 : index
      %c0_466 = arith.constant 0 : index
      %865 = vector.load %arg22[%c0_464, %c0_465, %c0_466] : memref<2x16x128xf32, #tpu.memory_space<vmem>>, vector<2x16x128xf32>
      tpu.vector_store %arg22[%c0_464, %c0_465, %c0_466], %864 {strides = array<i32>} : memref<2x16x128xf32, #tpu.memory_space<vmem>>, vector<2x16x128xf32>,
      %cst_467 = arith.constant 0.000000e+00 : bf16
      %866 = vector.broadcast %cst_467 : bf16 to vector<128x128xbf16>
      %c0_468 = arith.constant 0 : index
      %c0_469 = arith.constant 0 : index
      %867 = vector.load %arg20[%c0_468, %c0_469] : memref<128x128xbf16, #tpu.memory_space<vmem>>, vector<128x128xbf16>
      tpu.vector_store %arg20[%c0_468, %c0_469], %866 {strides = array<i32>} : memref<128x128xbf16, #tpu.memory_space<vmem>>, vector<128x128xbf16>,
      %c0_i32_470 = arith.constant 0 : i32
      %868 = tpu.memref_slice %arg23[%c0_i32_470] : memref<8x!tpu.dma_semaphore, #tpu.memory_space<semaphore_mem>> -> memref<1x!tpu.dma_semaphore, #tpu.memory_space<semaphore_mem>>
      %869 = tpu.memref_squeeze %868 : memref<1x!tpu.dma_semaphore, #tpu.memory_space<semaphore_mem>> -> memref<!tpu.dma_semaphore, #tpu.memory_space<semaphore_mem>>
      tpu.wait_dma2 semaphore(%869 : memref<!tpu.dma_semaphore, #tpu.memory_space<semaphore_mem>>) src(%arg2 : memref<16x512xbf16, #tpu.memory_space<any>>) dst(%arg11 : memref<16x512xbf16, #tpu.memory_space<vmem>>)
      %c1_i32_471 = arith.constant 1 : i32
      %870 = tpu.memref_slice %arg23[%c1_i32_471] : memref<8x!tpu.dma_semaphore, #tpu.memory_space<semaphore_mem>> -> memref<1x!tpu.dma_semaphore, #tpu.memory_space<semaphore_mem>>
      %871 = tpu.memref_squeeze %870 : memref<1x!tpu.dma_semaphore, #tpu.memory_space<semaphore_mem>> -> memref<!tpu.dma_semaphore, #tpu.memory_space<semaphore_mem>>
      tpu.wait_dma2 semaphore(%871 : memref<!tpu.dma_semaphore, #tpu.memory_space<semaphore_mem>>) src(%arg3 : memref<128x512xbf16, #tpu.memory_space<any>>) dst(%arg12 : memref<128x512xbf16, #tpu.memory_space<vmem>>)
      %c2_i32_472 = arith.constant 2 : i32
      %872 = tpu.memref_slice %arg23[%c2_i32_472] : memref<8x!tpu.dma_semaphore, #tpu.memory_space<semaphore_mem>> -> memref<1x!tpu.dma_semaphore, #tpu.memory_space<semaphore_mem>>
      %873 = tpu.memref_squeeze %872 : memref<1x!tpu.dma_semaphore, #tpu.memory_space<semaphore_mem>> -> memref<!tpu.dma_semaphore, #tpu.memory_space<semaphore_mem>>
      tpu.wait_dma2 semaphore(%873 : memref<!tpu.dma_semaphore, #tpu.memory_space<semaphore_mem>>) src(%arg4 : memref<1x512xf32, #tpu.memory_space<any>>) dst(%arg13 : memref<1x512xf32, #tpu.memory_space<vmem>>)
      %c3_i32_473 = arith.constant 3 : i32
      %874 = tpu.memref_slice %arg23[%c3_i32_473] : memref<8x!tpu.dma_semaphore, #tpu.memory_space<semaphore_mem>> -> memref<1x!tpu.dma_semaphore, #tpu.memory_space<semaphore_mem>>
      %875 = tpu.memref_squeeze %874 : memref<1x!tpu.dma_semaphore, #tpu.memory_space<semaphore_mem>> -> memref<!tpu.dma_semaphore, #tpu.memory_space<semaphore_mem>>
      tpu.wait_dma2 semaphore(%875 : memref<!tpu.dma_semaphore, #tpu.memory_space<semaphore_mem>>) src(%arg5 : memref<128x512xbf16, #tpu.memory_space<any>>) dst(%arg14 : memref<128x512xbf16, #tpu.memory_space<vmem>>)
      %c4_i32_474 = arith.constant 4 : i32
      %876 = tpu.memref_slice %arg23[%c4_i32_474] : memref<8x!tpu.dma_semaphore, #tpu.memory_space<semaphore_mem>> -> memref<1x!tpu.dma_semaphore, #tpu.memory_space<semaphore_mem>>
      %877 = tpu.memref_squeeze %876 : memref<1x!tpu.dma_semaphore, #tpu.memory_space<semaphore_mem>> -> memref<!tpu.dma_semaphore, #tpu.memory_space<semaphore_mem>>
      tpu.wait_dma2 semaphore(%877 : memref<!tpu.dma_semaphore, #tpu.memory_space<semaphore_mem>>) src(%arg6 : memref<128x512xbf16, #tpu.memory_space<any>>) dst(%arg15 : memref<128x512xbf16, #tpu.memory_space<vmem>>)
      %c5_i32_475 = arith.constant 5 : i32
      %878 = tpu.memref_slice %arg23[%c5_i32_475] : memref<8x!tpu.dma_semaphore, #tpu.memory_space<semaphore_mem>> -> memref<1x!tpu.dma_semaphore, #tpu.memory_space<semaphore_mem>>
      %879 = tpu.memref_squeeze %878 : memref<1x!tpu.dma_semaphore, #tpu.memory_space<semaphore_mem>> -> memref<!tpu.dma_semaphore, #tpu.memory_space<semaphore_mem>>
      tpu.wait_dma2 semaphore(%879 : memref<!tpu.dma_semaphore, #tpu.memory_space<semaphore_mem>>) src(%arg7 : memref<1x512xf32, #tpu.memory_space<any>>) dst(%arg16 : memref<1x512xf32, #tpu.memory_space<vmem>>)
      %c6_i32_476 = arith.constant 6 : i32
      %880 = tpu.memref_slice %arg23[%c6_i32_476] : memref<8x!tpu.dma_semaphore, #tpu.memory_space<semaphore_mem>> -> memref<1x!tpu.dma_semaphore, #tpu.memory_space<semaphore_mem>>
      %881 = tpu.memref_squeeze %880 : memref<1x!tpu.dma_semaphore, #tpu.memory_space<semaphore_mem>> -> memref<!tpu.dma_semaphore, #tpu.memory_space<semaphore_mem>>
      tpu.wait_dma2 semaphore(%881 : memref<!tpu.dma_semaphore, #tpu.memory_space<semaphore_mem>>) src(%arg8 : memref<128x128xbf16, #tpu.memory_space<any>>) dst(%arg17 : memref<128x128xbf16, #tpu.memory_space<vmem>>)
      %c7_i32_477 = arith.constant 7 : i32
      %882 = tpu.memref_slice %arg23[%c7_i32_477] : memref<8x!tpu.dma_semaphore, #tpu.memory_space<semaphore_mem>> -> memref<1x!tpu.dma_semaphore, #tpu.memory_space<semaphore_mem>>
      %883 = tpu.memref_squeeze %882 : memref<1x!tpu.dma_semaphore, #tpu.memory_space<semaphore_mem>> -> memref<!tpu.dma_semaphore, #tpu.memory_space<semaphore_mem>>
      tpu.wait_dma2 semaphore(%883 : memref<!tpu.dma_semaphore, #tpu.memory_space<semaphore_mem>>) src(%arg9 : memref<1x128xf32, #tpu.memory_space<any>>) dst(%arg18 : memref<1x128xf32, #tpu.memory_space<vmem>>)
    } else {
    }
    %c0 = arith.constant 0 : index
    %c0_1 = arith.constant 0 : index
    %3 = vector.load %arg1[%c0, %c0_1] : memref<128x16xbf16, #tpu.memory_space<vmem>>, vector<128x16xbf16>
    %c0_2 = arith.constant 0 : index
    %c0_3 = arith.constant 0 : index
    %4 = vector.load %arg11[%c0_2, %c0_3] : memref<16x512xbf16, #tpu.memory_space<vmem>>, vector<16x512xbf16>
    %cst = arith.constant dense<0.000000e+00> : vector<128x512xf32>
    %5 = tpu.matmul %3, %4, %cst {dimension_numbers = #tpu.dot_dimension_numbers<[1], [0], [0], [1], [0, 0, 1, 1], [], []>} : vector<128x16xbf16>, vector<16x512xbf16>, vector<128x512xf32> -> vector<128x512xf32>
    %c0_4 = arith.constant 0 : index
    %c0_5 = arith.constant 0 : index
    %6 = vector.load %arg13[%c0_4, %c0_5] : memref<1x512xf32, #tpu.memory_space<vmem>>, vector<1x512xf32>
    %7 = vector.broadcast %6 : vector<1x512xf32> to vector<128x512xf32>
    %8 = arith.addf %5, %7 : vector<128x512xf32>
    %9 = arith.truncf %8 : vector<128x512xf32> to vector<128x512xbf16>
    %c0_6 = arith.constant 0 : index
    %c0_7 = arith.constant 0 : index
    %10 = vector.load %arg19[%c0_6, %c0_7] : memref<128x512xbf16, #tpu.memory_space<vmem>>, vector<128x512xbf16>
    tpu.vector_store %arg19[%c0_6, %c0_7], %9 {strides = array<i32>} : memref<128x512xbf16, #tpu.memory_space<vmem>>, vector<128x512xbf16>,
    %c0_i32_8 = arith.constant 0 : i32
    %c16_i32 = arith.constant 16 : i32
    %11 = arith.muli %c0_i32_8, %c16_i32 : i32
    %12 = tpu.assume_multiple %11, 16 : i32
    %13 = arith.index_cast %12 : i32 to index
    %c0_9 = arith.constant 0 : index
    %14 = vector.load %arg19[%13, %c0_9] : memref<128x512xbf16, #tpu.memory_space<vmem>>, vector<16x512xbf16>
    %15 = arith.extf %14 : vector<16x512xbf16> to vector<16x512xf32>
    %c0_10 = arith.constant 0 : index
    %c0_11 = arith.constant 0 : index
    %c0_12 = arith.constant 0 : index
    %16 = vector.load %arg21[%c0_10, %c0_11, %c0_12] : memref<2x16x128xf32, #tpu.memory_space<vmem>>, vector<1x16x128xf32>
    %17 = vector.shape_cast %16 : vector<1x16x128xf32> to vector<16x128xf32>
    %18 = arith.truncf %17 : vector<16x128xf32> to vector<16x128xbf16>
    %c0_13 = arith.constant 0 : index
    %c0_14 = arith.constant 0 : index
    %19 = vector.load %arg12[%c0_13, %c0_14] : memref<128x512xbf16, #tpu.memory_space<vmem>>, vector<128x512xbf16>
    %cst_15 = arith.constant dense<0.000000e+00> : vector<16x512xf32>
    %20 = tpu.matmul %18, %19, %cst_15 {dimension_numbers = #tpu.dot_dimension_numbers<[1], [0], [0], [1], [0, 0, 1, 1], [], []>} : vector<16x128xbf16>, vector<128x512xbf16>, vector<16x512xf32> -> vector<16x512xf32>
    %21 = arith.addf %15, %20 : vector<16x512xf32>
    %22 = vector.extract_strided_slice %21 {offsets = [0, 0], sizes = [16, 128], strides = [1, 1]} : vector<16x512xf32> to vector<16x128xf32>
    %cst_16 = arith.constant 5.000000e-01 : f32
    %23 = vector.broadcast %cst_16 : f32 to vector<16x128xf32>
    %24 = arith.mulf %23, %22 : vector<16x128xf32>
    %25 = math.tanh %24 : vector<16x128xf32>
    %cst_17 = arith.constant 5.000000e-01 : f32
    %26 = vector.broadcast %cst_17 : f32 to vector<16x128xf32>
    %27 = arith.mulf %26, %25 : vector<16x128xf32>
    %cst_18 = arith.constant 5.000000e-01 : f32
    %28 = vector.broadcast %cst_18 : f32 to vector<16x128xf32>
    %29 = arith.addf %27, %28 : vector<16x128xf32>
    %30 = vector.extract_strided_slice %21 {offsets = [0, 128], sizes = [16, 128], strides = [1, 1]} : vector<16x512xf32> to vector<16x128xf32>
    %cst_19 = arith.constant 5.000000e-01 : f32
    %31 = vector.broadcast %cst_19 : f32 to vector<16x128xf32>
    %32 = arith.mulf %31, %30 : vector<16x128xf32>
    %33 = math.tanh %32 : vector<16x128xf32>
    %cst_20 = arith.constant 5.000000e-01 : f32
    %34 = vector.broadcast %cst_20 : f32 to vector<16x128xf32>
    %35 = arith.mulf %34, %33 : vector<16x128xf32>
    %cst_21 = arith.constant 5.000000e-01 : f32
    %36 = vector.broadcast %cst_21 : f32 to vector<16x128xf32>
    %37 = arith.addf %35, %36 : vector<16x128xf32>
    %38 = vector.extract_strided_slice %21 {offsets = [0, 256], sizes = [16, 128], strides = [1, 1]} : vector<16x512xf32> to vector<16x128xf32>
    %39 = math.tanh %38 : vector<16x128xf32>
    %40 = vector.extract_strided_slice %21 {offsets = [0, 384], sizes = [16, 128], strides = [1, 1]} : vector<16x512xf32> to vector<16x128xf32>
    %cst_22 = arith.constant 5.000000e-01 : f32
    %41 = vector.broadcast %cst_22 : f32 to vector<16x128xf32>
    %42 = arith.mulf %41, %40 : vector<16x128xf32>
    %43 = math.tanh %42 : vector<16x128xf32>
    %cst_23 = arith.constant 5.000000e-01 : f32
    %44 = vector.broadcast %cst_23 : f32 to vector<16x128xf32>
    %45 = arith.mulf %44, %43 : vector<16x128xf32>
    %cst_24 = arith.constant 5.000000e-01 : f32
    %46 = vector.broadcast %cst_24 : f32 to vector<16x128xf32>
    %47 = arith.addf %45, %46 : vector<16x128xf32>
    %c0_25 = arith.constant 0 : index
    %c0_26 = arith.constant 0 : index
    %c0_27 = arith.constant 0 : index
    %48 = vector.load %arg22[%c0_25, %c0_26, %c0_27] : memref<2x16x128xf32, #tpu.memory_space<vmem>>, vector<1x16x128xf32>
    %49 = vector.shape_cast %48 : vector<1x16x128xf32> to vector<16x128xf32>
    %50 = arith.mulf %37, %49 : vector<16x128xf32>
    %51 = arith.mulf %29, %39 : vector<16x128xf32>
    %52 = arith.addf %50, %51 : vector<16x128xf32>
    %53 = math.tanh %52 : vector<16x128xf32>
    %54 = arith.mulf %47, %53 : vector<16x128xf32>
    %c0_28 = arith.constant 0 : index
    %c0_29 = arith.constant 0 : index
    %c0_30 = arith.constant 0 : index
    %55 = vector.load %arg22[%c0_28, %c0_29, %c0_30] : memref<2x16x128xf32, #tpu.memory_space<vmem>>, vector<1x16x128xf32>
    %56 = vector.shape_cast %55 : vector<1x16x128xf32> to vector<16x128xf32>
    %57 = vector.shape_cast %52 : vector<16x128xf32> to vector<1x16x128xf32>
    tpu.vector_store %arg22[%c0_28, %c0_29, %c0_30], %57 {strides = array<i32>} : memref<2x16x128xf32, #tpu.memory_space<vmem>>, vector<1x16x128xf32>,
    %c0_31 = arith.constant 0 : index
    %c0_32 = arith.constant 0 : index
    %c0_33 = arith.constant 0 : index
    %58 = vector.load %arg21[%c0_31, %c0_32, %c0_33] : memref<2x16x128xf32, #tpu.memory_space<vmem>>, vector<1x16x128xf32>
    %59 = vector.shape_cast %58 : vector<1x16x128xf32> to vector<16x128xf32>
    %60 = vector.shape_cast %54 : vector<16x128xf32> to vector<1x16x128xf32>
    tpu.vector_store %arg21[%c0_31, %c0_32, %c0_33], %60 {strides = array<i32>} : memref<2x16x128xf32, #tpu.memory_space<vmem>>, vector<1x16x128xf32>,
    %61 = arith.truncf %54 : vector<16x128xf32> to vector<16x128xbf16>
    %62 = arith.index_cast %12 : i32 to index
    %c0_34 = arith.constant 0 : index
    %63 = vector.load %arg20[%62, %c0_34] : memref<128x128xbf16, #tpu.memory_space<vmem>>, vector<16x128xbf16>
    tpu.vector_store %arg20[%62, %c0_34], %61 {strides = array<i32>} : memref<128x128xbf16, #tpu.memory_space<vmem>>, vector<16x128xbf16>,
    %c1_i32 = arith.constant 1 : i32
    %c16_i32_35 = arith.constant 16 : i32
    %64 = arith.muli %c1_i32, %c16_i32_35 : i32
    %65 = tpu.assume_multiple %64, 16 : i32
    %66 = arith.index_cast %65 : i32 to index
    %c0_36 = arith.constant 0 : index
    %67 = vector.load %arg19[%66, %c0_36] : memref<128x512xbf16, #tpu.memory_space<vmem>>, vector<16x512xbf16>
    %68 = arith.extf %67 : vector<16x512xbf16> to vector<16x512xf32>
    %c0_37 = arith.constant 0 : index
    %c0_38 = arith.constant 0 : index
    %c0_39 = arith.constant 0 : index
    %69 = vector.load %arg21[%c0_37, %c0_38, %c0_39] : memref<2x16x128xf32, #tpu.memory_space<vmem>>, vector<1x16x128xf32>
    %70 = vector.shape_cast %69 : vector<1x16x128xf32> to vector<16x128xf32>
    %71 = arith.truncf %70 : vector<16x128xf32> to vector<16x128xbf16>
    %c0_40 = arith.constant 0 : index
    %c0_41 = arith.constant 0 : index
    %72 = vector.load %arg12[%c0_40, %c0_41] : memref<128x512xbf16, #tpu.memory_space<vmem>>, vector<128x512xbf16>
    %cst_42 = arith.constant dense<0.000000e+00> : vector<16x512xf32>
    %73 = tpu.matmul %71, %72, %cst_42 {dimension_numbers = #tpu.dot_dimension_numbers<[1], [0], [0], [1], [0, 0, 1, 1], [], []>} : vector<16x128xbf16>, vector<128x512xbf16>, vector<16x512xf32> -> vector<16x512xf32>
    %74 = arith.addf %68, %73 : vector<16x512xf32>
    %75 = vector.extract_strided_slice %74 {offsets = [0, 0], sizes = [16, 128], strides = [1, 1]} : vector<16x512xf32> to vector<16x128xf32>
    %cst_43 = arith.constant 5.000000e-01 : f32
    %76 = vector.broadcast %cst_43 : f32 to vector<16x128xf32>
    %77 = arith.mulf %76, %75 : vector<16x128xf32>
    %78 = math.tanh %77 : vector<16x128xf32>
    %cst_44 = arith.constant 5.000000e-01 : f32
    %79 = vector.broadcast %cst_44 : f32 to vector<16x128xf32>
    %80 = arith.mulf %79, %78 : vector<16x128xf32>
    %cst_45 = arith.constant 5.000000e-01 : f32
    %81 = vector.broadcast %cst_45 : f32 to vector<16x128xf32>
    %82 = arith.addf %80, %81 : vector<16x128xf32>
    %83 = vector.extract_strided_slice %74 {offsets = [0, 128], sizes = [16, 128], strides = [1, 1]} : vector<16x512xf32> to vector<16x128xf32>
    %cst_46 = arith.constant 5.000000e-01 : f32
    %84 = vector.broadcast %cst_46 : f32 to vector<16x128xf32>
    %85 = arith.mulf %84, %83 : vector<16x128xf32>
    %86 = math.tanh %85 : vector<16x128xf32>
    %cst_47 = arith.constant 5.000000e-01 : f32
    %87 = vector.broadcast %cst_47 : f32 to vector<16x128xf32>
    %88 = arith.mulf %87, %86 : vector<16x128xf32>
    %cst_48 = arith.constant 5.000000e-01 : f32
    %89 = vector.broadcast %cst_48 : f32 to vector<16x128xf32>
    %90 = arith.addf %88, %89 : vector<16x128xf32>
    %91 = vector.extract_strided_slice %74 {offsets = [0, 256], sizes = [16, 128], strides = [1, 1]} : vector<16x512xf32> to vector<16x128xf32>
    %92 = math.tanh %91 : vector<16x128xf32>
    %93 = vector.extract_strided_slice %74 {offsets = [0, 384], sizes = [16, 128], strides = [1, 1]} : vector<16x512xf32> to vector<16x128xf32>
    %cst_49 = arith.constant 5.000000e-01 : f32
    %94 = vector.broadcast %cst_49 : f32 to vector<16x128xf32>
    %95 = arith.mulf %94, %93 : vector<16x128xf32>
    %96 = math.tanh %95 : vector<16x128xf32>
    %cst_50 = arith.constant 5.000000e-01 : f32
    %97 = vector.broadcast %cst_50 : f32 to vector<16x128xf32>
    %98 = arith.mulf %97, %96 : vector<16x128xf32>
    %cst_51 = arith.constant 5.000000e-01 : f32
    %99 = vector.broadcast %cst_51 : f32 to vector<16x128xf32>
    %100 = arith.addf %98, %99 : vector<16x128xf32>
    %c0_52 = arith.constant 0 : index
    %c0_53 = arith.constant 0 : index
    %c0_54 = arith.constant 0 : index
    %101 = vector.load %arg22[%c0_52, %c0_53, %c0_54] : memref<2x16x128xf32, #tpu.memory_space<vmem>>, vector<1x16x128xf32>
    %102 = vector.shape_cast %101 : vector<1x16x128xf32> to vector<16x128xf32>
    %103 = arith.mulf %90, %102 : vector<16x128xf32>
    %104 = arith.mulf %82, %92 : vector<16x128xf32>
    %105 = arith.addf %103, %104 : vector<16x128xf32>
    %106 = math.tanh %105 : vector<16x128xf32>
    %107 = arith.mulf %100, %106 : vector<16x128xf32>
    %c0_55 = arith.constant 0 : index
    %c0_56 = arith.constant 0 : index
    %c0_57 = arith.constant 0 : index
    %108 = vector.load %arg22[%c0_55, %c0_56, %c0_57] : memref<2x16x128xf32, #tpu.memory_space<vmem>>, vector<1x16x128xf32>
    %109 = vector.shape_cast %108 : vector<1x16x128xf32> to vector<16x128xf32>
    %110 = vector.shape_cast %105 : vector<16x128xf32> to vector<1x16x128xf32>
    tpu.vector_store %arg22[%c0_55, %c0_56, %c0_57], %110 {strides = array<i32>} : memref<2x16x128xf32, #tpu.memory_space<vmem>>, vector<1x16x128xf32>,
    %c0_58 = arith.constant 0 : index
    %c0_59 = arith.constant 0 : index
    %c0_60 = arith.constant 0 : index
    %111 = vector.load %arg21[%c0_58, %c0_59, %c0_60] : memref<2x16x128xf32, #tpu.memory_space<vmem>>, vector<1x16x128xf32>
    %112 = vector.shape_cast %111 : vector<1x16x128xf32> to vector<16x128xf32>
    %113 = vector.shape_cast %107 : vector<16x128xf32> to vector<1x16x128xf32>
    tpu.vector_store %arg21[%c0_58, %c0_59, %c0_60], %113 {strides = array<i32>} : memref<2x16x128xf32, #tpu.memory_space<vmem>>, vector<1x16x128xf32>,
    %114 = arith.truncf %107 : vector<16x128xf32> to vector<16x128xbf16>
    %115 = arith.index_cast %65 : i32 to index
    %c0_61 = arith.constant 0 : index
    %116 = vector.load %arg20[%115, %c0_61] : memref<128x128xbf16, #tpu.memory_space<vmem>>, vector<16x128xbf16>
    tpu.vector_store %arg20[%115, %c0_61], %114 {strides = array<i32>} : memref<128x128xbf16, #tpu.memory_space<vmem>>, vector<16x128xbf16>,
    %c2_i32 = arith.constant 2 : i32
    %c16_i32_62 = arith.constant 16 : i32
    %117 = arith.muli %c2_i32, %c16_i32_62 : i32
    %118 = tpu.assume_multiple %117, 16 : i32
    %119 = arith.index_cast %118 : i32 to index
    %c0_63 = arith.constant 0 : index
    %120 = vector.load %arg19[%119, %c0_63] : memref<128x512xbf16, #tpu.memory_space<vmem>>, vector<16x512xbf16>
    %121 = arith.extf %120 : vector<16x512xbf16> to vector<16x512xf32>
    %c0_64 = arith.constant 0 : index
    %c0_65 = arith.constant 0 : index
    %c0_66 = arith.constant 0 : index
    %122 = vector.load %arg21[%c0_64, %c0_65, %c0_66] : memref<2x16x128xf32, #tpu.memory_space<vmem>>, vector<1x16x128xf32>
    %123 = vector.shape_cast %122 : vector<1x16x128xf32> to vector<16x128xf32>
    %124 = arith.truncf %123 : vector<16x128xf32> to vector<16x128xbf16>
    %c0_67 = arith.constant 0 : index
    %c0_68 = arith.constant 0 : index
    %125 = vector.load %arg12[%c0_67, %c0_68] : memref<128x512xbf16, #tpu.memory_space<vmem>>, vector<128x512xbf16>
    %cst_69 = arith.constant dense<0.000000e+00> : vector<16x512xf32>
    %126 = tpu.matmul %124, %125, %cst_69 {dimension_numbers = #tpu.dot_dimension_numbers<[1], [0], [0], [1], [0, 0, 1, 1], [], []>} : vector<16x128xbf16>, vector<128x512xbf16>, vector<16x512xf32> -> vector<16x512xf32>
    %127 = arith.addf %121, %126 : vector<16x512xf32>
    %128 = vector.extract_strided_slice %127 {offsets = [0, 0], sizes = [16, 128], strides = [1, 1]} : vector<16x512xf32> to vector<16x128xf32>
    %cst_70 = arith.constant 5.000000e-01 : f32
    %129 = vector.broadcast %cst_70 : f32 to vector<16x128xf32>
    %130 = arith.mulf %129, %128 : vector<16x128xf32>
    %131 = math.tanh %130 : vector<16x128xf32>
    %cst_71 = arith.constant 5.000000e-01 : f32
    %132 = vector.broadcast %cst_71 : f32 to vector<16x128xf32>
    %133 = arith.mulf %132, %131 : vector<16x128xf32>
    %cst_72 = arith.constant 5.000000e-01 : f32
    %134 = vector.broadcast %cst_72 : f32 to vector<16x128xf32>
    %135 = arith.addf %133, %134 : vector<16x128xf32>
    %136 = vector.extract_strided_slice %127 {offsets = [0, 128], sizes = [16, 128], strides = [1, 1]} : vector<16x512xf32> to vector<16x128xf32>
    %cst_73 = arith.constant 5.000000e-01 : f32
    %137 = vector.broadcast %cst_73 : f32 to vector<16x128xf32>
    %138 = arith.mulf %137, %136 : vector<16x128xf32>
    %139 = math.tanh %138 : vector<16x128xf32>
    %cst_74 = arith.constant 5.000000e-01 : f32
    %140 = vector.broadcast %cst_74 : f32 to vector<16x128xf32>
    %141 = arith.mulf %140, %139 : vector<16x128xf32>
    %cst_75 = arith.constant 5.000000e-01 : f32
    %142 = vector.broadcast %cst_75 : f32 to vector<16x128xf32>
    %143 = arith.addf %141, %142 : vector<16x128xf32>
    %144 = vector.extract_strided_slice %127 {offsets = [0, 256], sizes = [16, 128], strides = [1, 1]} : vector<16x512xf32> to vector<16x128xf32>
    %145 = math.tanh %144 : vector<16x128xf32>
    %146 = vector.extract_strided_slice %127 {offsets = [0, 384], sizes = [16, 128], strides = [1, 1]} : vector<16x512xf32> to vector<16x128xf32>
    %cst_76 = arith.constant 5.000000e-01 : f32
    %147 = vector.broadcast %cst_76 : f32 to vector<16x128xf32>
    %148 = arith.mulf %147, %146 : vector<16x128xf32>
    %149 = math.tanh %148 : vector<16x128xf32>
    %cst_77 = arith.constant 5.000000e-01 : f32
    %150 = vector.broadcast %cst_77 : f32 to vector<16x128xf32>
    %151 = arith.mulf %150, %149 : vector<16x128xf32>
    %cst_78 = arith.constant 5.000000e-01 : f32
    %152 = vector.broadcast %cst_78 : f32 to vector<16x128xf32>
    %153 = arith.addf %151, %152 : vector<16x128xf32>
    %c0_79 = arith.constant 0 : index
    %c0_80 = arith.constant 0 : index
    %c0_81 = arith.constant 0 : index
    %154 = vector.load %arg22[%c0_79, %c0_80, %c0_81] : memref<2x16x128xf32, #tpu.memory_space<vmem>>, vector<1x16x128xf32>
    %155 = vector.shape_cast %154 : vector<1x16x128xf32> to vector<16x128xf32>
    %156 = arith.mulf %143, %155 : vector<16x128xf32>
    %157 = arith.mulf %135, %145 : vector<16x128xf32>
    %158 = arith.addf %156, %157 : vector<16x128xf32>
    %159 = math.tanh %158 : vector<16x128xf32>
    %160 = arith.mulf %153, %159 : vector<16x128xf32>
    %c0_82 = arith.constant 0 : index
    %c0_83 = arith.constant 0 : index
    %c0_84 = arith.constant 0 : index
    %161 = vector.load %arg22[%c0_82, %c0_83, %c0_84] : memref<2x16x128xf32, #tpu.memory_space<vmem>>, vector<1x16x128xf32>
    %162 = vector.shape_cast %161 : vector<1x16x128xf32> to vector<16x128xf32>
    %163 = vector.shape_cast %158 : vector<16x128xf32> to vector<1x16x128xf32>
    tpu.vector_store %arg22[%c0_82, %c0_83, %c0_84], %163 {strides = array<i32>} : memref<2x16x128xf32, #tpu.memory_space<vmem>>, vector<1x16x128xf32>,
    %c0_85 = arith.constant 0 : index
    %c0_86 = arith.constant 0 : index
    %c0_87 = arith.constant 0 : index
    %164 = vector.load %arg21[%c0_85, %c0_86, %c0_87] : memref<2x16x128xf32, #tpu.memory_space<vmem>>, vector<1x16x128xf32>
    %165 = vector.shape_cast %164 : vector<1x16x128xf32> to vector<16x128xf32>
    %166 = vector.shape_cast %160 : vector<16x128xf32> to vector<1x16x128xf32>
    tpu.vector_store %arg21[%c0_85, %c0_86, %c0_87], %166 {strides = array<i32>} : memref<2x16x128xf32, #tpu.memory_space<vmem>>, vector<1x16x128xf32>,
    %167 = arith.truncf %160 : vector<16x128xf32> to vector<16x128xbf16>
    %168 = arith.index_cast %118 : i32 to index
    %c0_88 = arith.constant 0 : index
    %169 = vector.load %arg20[%168, %c0_88] : memref<128x128xbf16, #tpu.memory_space<vmem>>, vector<16x128xbf16>
    tpu.vector_store %arg20[%168, %c0_88], %167 {strides = array<i32>} : memref<128x128xbf16, #tpu.memory_space<vmem>>, vector<16x128xbf16>,
    %c3_i32 = arith.constant 3 : i32
    %c16_i32_89 = arith.constant 16 : i32
    %170 = arith.muli %c3_i32, %c16_i32_89 : i32
    %171 = tpu.assume_multiple %170, 16 : i32
    %172 = arith.index_cast %171 : i32 to index
    %c0_90 = arith.constant 0 : index
    %173 = vector.load %arg19[%172, %c0_90] : memref<128x512xbf16, #tpu.memory_space<vmem>>, vector<16x512xbf16>
    %174 = arith.extf %173 : vector<16x512xbf16> to vector<16x512xf32>
    %c0_91 = arith.constant 0 : index
    %c0_92 = arith.constant 0 : index
    %c0_93 = arith.constant 0 : index
    %175 = vector.load %arg21[%c0_91, %c0_92, %c0_93] : memref<2x16x128xf32, #tpu.memory_space<vmem>>, vector<1x16x128xf32>
    %176 = vector.shape_cast %175 : vector<1x16x128xf32> to vector<16x128xf32>
    %177 = arith.truncf %176 : vector<16x128xf32> to vector<16x128xbf16>
    %c0_94 = arith.constant 0 : index
    %c0_95 = arith.constant 0 : index
    %178 = vector.load %arg12[%c0_94, %c0_95] : memref<128x512xbf16, #tpu.memory_space<vmem>>, vector<128x512xbf16>
    %cst_96 = arith.constant dense<0.000000e+00> : vector<16x512xf32>
    %179 = tpu.matmul %177, %178, %cst_96 {dimension_numbers = #tpu.dot_dimension_numbers<[1], [0], [0], [1], [0, 0, 1, 1], [], []>} : vector<16x128xbf16>, vector<128x512xbf16>, vector<16x512xf32> -> vector<16x512xf32>
    %180 = arith.addf %174, %179 : vector<16x512xf32>
    %181 = vector.extract_strided_slice %180 {offsets = [0, 0], sizes = [16, 128], strides = [1, 1]} : vector<16x512xf32> to vector<16x128xf32>
    %cst_97 = arith.constant 5.000000e-01 : f32
    %182 = vector.broadcast %cst_97 : f32 to vector<16x128xf32>
    %183 = arith.mulf %182, %181 : vector<16x128xf32>
    %184 = math.tanh %183 : vector<16x128xf32>
    %cst_98 = arith.constant 5.000000e-01 : f32
    %185 = vector.broadcast %cst_98 : f32 to vector<16x128xf32>
    %186 = arith.mulf %185, %184 : vector<16x128xf32>
    %cst_99 = arith.constant 5.000000e-01 : f32
    %187 = vector.broadcast %cst_99 : f32 to vector<16x128xf32>
    %188 = arith.addf %186, %187 : vector<16x128xf32>
    %189 = vector.extract_strided_slice %180 {offsets = [0, 128], sizes = [16, 128], strides = [1, 1]} : vector<16x512xf32> to vector<16x128xf32>
    %cst_100 = arith.constant 5.000000e-01 : f32
    %190 = vector.broadcast %cst_100 : f32 to vector<16x128xf32>
    %191 = arith.mulf %190, %189 : vector<16x128xf32>
    %192 = math.tanh %191 : vector<16x128xf32>
    %cst_101 = arith.constant 5.000000e-01 : f32
    %193 = vector.broadcast %cst_101 : f32 to vector<16x128xf32>
    %194 = arith.mulf %193, %192 : vector<16x128xf32>
    %cst_102 = arith.constant 5.000000e-01 : f32
    %195 = vector.broadcast %cst_102 : f32 to vector<16x128xf32>
    %196 = arith.addf %194, %195 : vector<16x128xf32>
    %197 = vector.extract_strided_slice %180 {offsets = [0, 256], sizes = [16, 128], strides = [1, 1]} : vector<16x512xf32> to vector<16x128xf32>
    %198 = math.tanh %197 : vector<16x128xf32>
    %199 = vector.extract_strided_slice %180 {offsets = [0, 384], sizes = [16, 128], strides = [1, 1]} : vector<16x512xf32> to vector<16x128xf32>
    %cst_103 = arith.constant 5.000000e-01 : f32
    %200 = vector.broadcast %cst_103 : f32 to vector<16x128xf32>
    %201 = arith.mulf %200, %199 : vector<16x128xf32>
    %202 = math.tanh %201 : vector<16x128xf32>
    %cst_104 = arith.constant 5.000000e-01 : f32
    %203 = vector.broadcast %cst_104 : f32 to vector<16x128xf32>
    %204 = arith.mulf %203, %202 : vector<16x128xf32>
    %cst_105 = arith.constant 5.000000e-01 : f32
    %205 = vector.broadcast %cst_105 : f32 to vector<16x128xf32>
    %206 = arith.addf %204, %205 : vector<16x128xf32>
    %c0_106 = arith.constant 0 : index
    %c0_107 = arith.constant 0 : index
    %c0_108 = arith.constant 0 : index
    %207 = vector.load %arg22[%c0_106, %c0_107, %c0_108] : memref<2x16x128xf32, #tpu.memory_space<vmem>>, vector<1x16x128xf32>
    %208 = vector.shape_cast %207 : vector<1x16x128xf32> to vector<16x128xf32>
    %209 = arith.mulf %196, %208 : vector<16x128xf32>
    %210 = arith.mulf %188, %198 : vector<16x128xf32>
    %211 = arith.addf %209, %210 : vector<16x128xf32>
    %212 = math.tanh %211 : vector<16x128xf32>
    %213 = arith.mulf %206, %212 : vector<16x128xf32>
    %c0_109 = arith.constant 0 : index
    %c0_110 = arith.constant 0 : index
    %c0_111 = arith.constant 0 : index
    %214 = vector.load %arg22[%c0_109, %c0_110, %c0_111] : memref<2x16x128xf32, #tpu.memory_space<vmem>>, vector<1x16x128xf32>
    %215 = vector.shape_cast %214 : vector<1x16x128xf32> to vector<16x128xf32>
    %216 = vector.shape_cast %211 : vector<16x128xf32> to vector<1x16x128xf32>
    tpu.vector_store %arg22[%c0_109, %c0_110, %c0_111], %216 {strides = array<i32>} : memref<2x16x128xf32, #tpu.memory_space<vmem>>, vector<1x16x128xf32>,
    %c0_112 = arith.constant 0 : index
    %c0_113 = arith.constant 0 : index
    %c0_114 = arith.constant 0 : index
    %217 = vector.load %arg21[%c0_112, %c0_113, %c0_114] : memref<2x16x128xf32, #tpu.memory_space<vmem>>, vector<1x16x128xf32>
    %218 = vector.shape_cast %217 : vector<1x16x128xf32> to vector<16x128xf32>
    %219 = vector.shape_cast %213 : vector<16x128xf32> to vector<1x16x128xf32>
    tpu.vector_store %arg21[%c0_112, %c0_113, %c0_114], %219 {strides = array<i32>} : memref<2x16x128xf32, #tpu.memory_space<vmem>>, vector<1x16x128xf32>,
    %220 = arith.truncf %213 : vector<16x128xf32> to vector<16x128xbf16>
    %221 = arith.index_cast %171 : i32 to index
    %c0_115 = arith.constant 0 : index
    %222 = vector.load %arg20[%221, %c0_115] : memref<128x128xbf16, #tpu.memory_space<vmem>>, vector<16x128xbf16>
    tpu.vector_store %arg20[%221, %c0_115], %220 {strides = array<i32>} : memref<128x128xbf16, #tpu.memory_space<vmem>>, vector<16x128xbf16>,
    %c4_i32 = arith.constant 4 : i32
    %c16_i32_116 = arith.constant 16 : i32
    %223 = arith.muli %c4_i32, %c16_i32_116 : i32
    %224 = tpu.assume_multiple %223, 16 : i32
    %225 = arith.index_cast %224 : i32 to index
    %c0_117 = arith.constant 0 : index
    %226 = vector.load %arg19[%225, %c0_117] : memref<128x512xbf16, #tpu.memory_space<vmem>>, vector<16x512xbf16>
    %227 = arith.extf %226 : vector<16x512xbf16> to vector<16x512xf32>
    %c0_118 = arith.constant 0 : index
    %c0_119 = arith.constant 0 : index
    %c0_120 = arith.constant 0 : index
    %228 = vector.load %arg21[%c0_118, %c0_119, %c0_120] : memref<2x16x128xf32, #tpu.memory_space<vmem>>, vector<1x16x128xf32>
    %229 = vector.shape_cast %228 : vector<1x16x128xf32> to vector<16x128xf32>
    %230 = arith.truncf %229 : vector<16x128xf32> to vector<16x128xbf16>
    %c0_121 = arith.constant 0 : index
    %c0_122 = arith.constant 0 : index
    %231 = vector.load %arg12[%c0_121, %c0_122] : memref<128x512xbf16, #tpu.memory_space<vmem>>, vector<128x512xbf16>
    %cst_123 = arith.constant dense<0.000000e+00> : vector<16x512xf32>
    %232 = tpu.matmul %230, %231, %cst_123 {dimension_numbers = #tpu.dot_dimension_numbers<[1], [0], [0], [1], [0, 0, 1, 1], [], []>} : vector<16x128xbf16>, vector<128x512xbf16>, vector<16x512xf32> -> vector<16x512xf32>
    %233 = arith.addf %227, %232 : vector<16x512xf32>
    %234 = vector.extract_strided_slice %233 {offsets = [0, 0], sizes = [16, 128], strides = [1, 1]} : vector<16x512xf32> to vector<16x128xf32>
    %cst_124 = arith.constant 5.000000e-01 : f32
    %235 = vector.broadcast %cst_124 : f32 to vector<16x128xf32>
    %236 = arith.mulf %235, %234 : vector<16x128xf32>
    %237 = math.tanh %236 : vector<16x128xf32>
    %cst_125 = arith.constant 5.000000e-01 : f32
    %238 = vector.broadcast %cst_125 : f32 to vector<16x128xf32>
    %239 = arith.mulf %238, %237 : vector<16x128xf32>
    %cst_126 = arith.constant 5.000000e-01 : f32
    %240 = vector.broadcast %cst_126 : f32 to vector<16x128xf32>
    %241 = arith.addf %239, %240 : vector<16x128xf32>
    %242 = vector.extract_strided_slice %233 {offsets = [0, 128], sizes = [16, 128], strides = [1, 1]} : vector<16x512xf32> to vector<16x128xf32>
    %cst_127 = arith.constant 5.000000e-01 : f32
    %243 = vector.broadcast %cst_127 : f32 to vector<16x128xf32>
    %244 = arith.mulf %243, %242 : vector<16x128xf32>
    %245 = math.tanh %244 : vector<16x128xf32>
    %cst_128 = arith.constant 5.000000e-01 : f32
    %246 = vector.broadcast %cst_128 : f32 to vector<16x128xf32>
    %247 = arith.mulf %246, %245 : vector<16x128xf32>
    %cst_129 = arith.constant 5.000000e-01 : f32
    %248 = vector.broadcast %cst_129 : f32 to vector<16x128xf32>
    %249 = arith.addf %247, %248 : vector<16x128xf32>
    %250 = vector.extract_strided_slice %233 {offsets = [0, 256], sizes = [16, 128], strides = [1, 1]} : vector<16x512xf32> to vector<16x128xf32>
    %251 = math.tanh %250 : vector<16x128xf32>
    %252 = vector.extract_strided_slice %233 {offsets = [0, 384], sizes = [16, 128], strides = [1, 1]} : vector<16x512xf32> to vector<16x128xf32>
    %cst_130 = arith.constant 5.000000e-01 : f32
    %253 = vector.broadcast %cst_130 : f32 to vector<16x128xf32>
    %254 = arith.mulf %253, %252 : vector<16x128xf32>
    %255 = math.tanh %254 : vector<16x128xf32>
    %cst_131 = arith.constant 5.000000e-01 : f32
    %256 = vector.broadcast %cst_131 : f32 to vector<16x128xf32>
    %257 = arith.mulf %256, %255 : vector<16x128xf32>
    %cst_132 = arith.constant 5.000000e-01 : f32
    %258 = vector.broadcast %cst_132 : f32 to vector<16x128xf32>
    %259 = arith.addf %257, %258 : vector<16x128xf32>
    %c0_133 = arith.constant 0 : index
    %c0_134 = arith.constant 0 : index
    %c0_135 = arith.constant 0 : index
    %260 = vector.load %arg22[%c0_133, %c0_134, %c0_135] : memref<2x16x128xf32, #tpu.memory_space<vmem>>, vector<1x16x128xf32>
    %261 = vector.shape_cast %260 : vector<1x16x128xf32> to vector<16x128xf32>
    %262 = arith.mulf %249, %261 : vector<16x128xf32>
    %263 = arith.mulf %241, %251 : vector<16x128xf32>
    %264 = arith.addf %262, %263 : vector<16x128xf32>
    %265 = math.tanh %264 : vector<16x128xf32>
    %266 = arith.mulf %259, %265 : vector<16x128xf32>
    %c0_136 = arith.constant 0 : index
    %c0_137 = arith.constant 0 : index
    %c0_138 = arith.constant 0 : index
    %267 = vector.load %arg22[%c0_136, %c0_137, %c0_138] : memref<2x16x128xf32, #tpu.memory_space<vmem>>, vector<1x16x128xf32>
    %268 = vector.shape_cast %267 : vector<1x16x128xf32> to vector<16x128xf32>
    %269 = vector.shape_cast %264 : vector<16x128xf32> to vector<1x16x128xf32>
    tpu.vector_store %arg22[%c0_136, %c0_137, %c0_138], %269 {strides = array<i32>} : memref<2x16x128xf32, #tpu.memory_space<vmem>>, vector<1x16x128xf32>,
    %c0_139 = arith.constant 0 : index
    %c0_140 = arith.constant 0 : index
    %c0_141 = arith.constant 0 : index
    %270 = vector.load %arg21[%c0_139, %c0_140, %c0_141] : memref<2x16x128xf32, #tpu.memory_space<vmem>>, vector<1x16x128xf32>
    %271 = vector.shape_cast %270 : vector<1x16x128xf32> to vector<16x128xf32>
    %272 = vector.shape_cast %266 : vector<16x128xf32> to vector<1x16x128xf32>
    tpu.vector_store %arg21[%c0_139, %c0_140, %c0_141], %272 {strides = array<i32>} : memref<2x16x128xf32, #tpu.memory_space<vmem>>, vector<1x16x128xf32>,
    %273 = arith.truncf %266 : vector<16x128xf32> to vector<16x128xbf16>
    %274 = arith.index_cast %224 : i32 to index
    %c0_142 = arith.constant 0 : index
    %275 = vector.load %arg20[%274, %c0_142] : memref<128x128xbf16, #tpu.memory_space<vmem>>, vector<16x128xbf16>
    tpu.vector_store %arg20[%274, %c0_142], %273 {strides = array<i32>} : memref<128x128xbf16, #tpu.memory_space<vmem>>, vector<16x128xbf16>,
    %c5_i32 = arith.constant 5 : i32
    %c16_i32_143 = arith.constant 16 : i32
    %276 = arith.muli %c5_i32, %c16_i32_143 : i32
    %277 = tpu.assume_multiple %276, 16 : i32
    %278 = arith.index_cast %277 : i32 to index
    %c0_144 = arith.constant 0 : index
    %279 = vector.load %arg19[%278, %c0_144] : memref<128x512xbf16, #tpu.memory_space<vmem>>, vector<16x512xbf16>
    %280 = arith.extf %279 : vector<16x512xbf16> to vector<16x512xf32>
    %c0_145 = arith.constant 0 : index
    %c0_146 = arith.constant 0 : index
    %c0_147 = arith.constant 0 : index
    %281 = vector.load %arg21[%c0_145, %c0_146, %c0_147] : memref<2x16x128xf32, #tpu.memory_space<vmem>>, vector<1x16x128xf32>
    %282 = vector.shape_cast %281 : vector<1x16x128xf32> to vector<16x128xf32>
    %283 = arith.truncf %282 : vector<16x128xf32> to vector<16x128xbf16>
    %c0_148 = arith.constant 0 : index
    %c0_149 = arith.constant 0 : index
    %284 = vector.load %arg12[%c0_148, %c0_149] : memref<128x512xbf16, #tpu.memory_space<vmem>>, vector<128x512xbf16>
    %cst_150 = arith.constant dense<0.000000e+00> : vector<16x512xf32>
    %285 = tpu.matmul %283, %284, %cst_150 {dimension_numbers = #tpu.dot_dimension_numbers<[1], [0], [0], [1], [0, 0, 1, 1], [], []>} : vector<16x128xbf16>, vector<128x512xbf16>, vector<16x512xf32> -> vector<16x512xf32>
    %286 = arith.addf %280, %285 : vector<16x512xf32>
    %287 = vector.extract_strided_slice %286 {offsets = [0, 0], sizes = [16, 128], strides = [1, 1]} : vector<16x512xf32> to vector<16x128xf32>
    %cst_151 = arith.constant 5.000000e-01 : f32
    %288 = vector.broadcast %cst_151 : f32 to vector<16x128xf32>
    %289 = arith.mulf %288, %287 : vector<16x128xf32>
    %290 = math.tanh %289 : vector<16x128xf32>
    %cst_152 = arith.constant 5.000000e-01 : f32
    %291 = vector.broadcast %cst_152 : f32 to vector<16x128xf32>
    %292 = arith.mulf %291, %290 : vector<16x128xf32>
    %cst_153 = arith.constant 5.000000e-01 : f32
    %293 = vector.broadcast %cst_153 : f32 to vector<16x128xf32>
    %294 = arith.addf %292, %293 : vector<16x128xf32>
    %295 = vector.extract_strided_slice %286 {offsets = [0, 128], sizes = [16, 128], strides = [1, 1]} : vector<16x512xf32> to vector<16x128xf32>
    %cst_154 = arith.constant 5.000000e-01 : f32
    %296 = vector.broadcast %cst_154 : f32 to vector<16x128xf32>
    %297 = arith.mulf %296, %295 : vector<16x128xf32>
    %298 = math.tanh %297 : vector<16x128xf32>
    %cst_155 = arith.constant 5.000000e-01 : f32
    %299 = vector.broadcast %cst_155 : f32 to vector<16x128xf32>
    %300 = arith.mulf %299, %298 : vector<16x128xf32>
    %cst_156 = arith.constant 5.000000e-01 : f32
    %301 = vector.broadcast %cst_156 : f32 to vector<16x128xf32>
    %302 = arith.addf %300, %301 : vector<16x128xf32>
    %303 = vector.extract_strided_slice %286 {offsets = [0, 256], sizes = [16, 128], strides = [1, 1]} : vector<16x512xf32> to vector<16x128xf32>
    %304 = math.tanh %303 : vector<16x128xf32>
    %305 = vector.extract_strided_slice %286 {offsets = [0, 384], sizes = [16, 128], strides = [1, 1]} : vector<16x512xf32> to vector<16x128xf32>
    %cst_157 = arith.constant 5.000000e-01 : f32
    %306 = vector.broadcast %cst_157 : f32 to vector<16x128xf32>
    %307 = arith.mulf %306, %305 : vector<16x128xf32>
    %308 = math.tanh %307 : vector<16x128xf32>
    %cst_158 = arith.constant 5.000000e-01 : f32
    %309 = vector.broadcast %cst_158 : f32 to vector<16x128xf32>
    %310 = arith.mulf %309, %308 : vector<16x128xf32>
    %cst_159 = arith.constant 5.000000e-01 : f32
    %311 = vector.broadcast %cst_159 : f32 to vector<16x128xf32>
    %312 = arith.addf %310, %311 : vector<16x128xf32>
    %c0_160 = arith.constant 0 : index
    %c0_161 = arith.constant 0 : index
    %c0_162 = arith.constant 0 : index
    %313 = vector.load %arg22[%c0_160, %c0_161, %c0_162] : memref<2x16x128xf32, #tpu.memory_space<vmem>>, vector<1x16x128xf32>
    %314 = vector.shape_cast %313 : vector<1x16x128xf32> to vector<16x128xf32>
    %315 = arith.mulf %302, %314 : vector<16x128xf32>
    %316 = arith.mulf %294, %304 : vector<16x128xf32>
    %317 = arith.addf %315, %316 : vector<16x128xf32>
    %318 = math.tanh %317 : vector<16x128xf32>
    %319 = arith.mulf %312, %318 : vector<16x128xf32>
    %c0_163 = arith.constant 0 : index
    %c0_164 = arith.constant 0 : index
    %c0_165 = arith.constant 0 : index
    %320 = vector.load %arg22[%c0_163, %c0_164, %c0_165] : memref<2x16x128xf32, #tpu.memory_space<vmem>>, vector<1x16x128xf32>
    %321 = vector.shape_cast %320 : vector<1x16x128xf32> to vector<16x128xf32>
    %322 = vector.shape_cast %317 : vector<16x128xf32> to vector<1x16x128xf32>
    tpu.vector_store %arg22[%c0_163, %c0_164, %c0_165], %322 {strides = array<i32>} : memref<2x16x128xf32, #tpu.memory_space<vmem>>, vector<1x16x128xf32>,
    %c0_166 = arith.constant 0 : index
    %c0_167 = arith.constant 0 : index
    %c0_168 = arith.constant 0 : index
    %323 = vector.load %arg21[%c0_166, %c0_167, %c0_168] : memref<2x16x128xf32, #tpu.memory_space<vmem>>, vector<1x16x128xf32>
    %324 = vector.shape_cast %323 : vector<1x16x128xf32> to vector<16x128xf32>
    %325 = vector.shape_cast %319 : vector<16x128xf32> to vector<1x16x128xf32>
    tpu.vector_store %arg21[%c0_166, %c0_167, %c0_168], %325 {strides = array<i32>} : memref<2x16x128xf32, #tpu.memory_space<vmem>>, vector<1x16x128xf32>,
    %326 = arith.truncf %319 : vector<16x128xf32> to vector<16x128xbf16>
    %327 = arith.index_cast %277 : i32 to index
    %c0_169 = arith.constant 0 : index
    %328 = vector.load %arg20[%327, %c0_169] : memref<128x128xbf16, #tpu.memory_space<vmem>>, vector<16x128xbf16>
    tpu.vector_store %arg20[%327, %c0_169], %326 {strides = array<i32>} : memref<128x128xbf16, #tpu.memory_space<vmem>>, vector<16x128xbf16>,
    %c6_i32 = arith.constant 6 : i32
    %c16_i32_170 = arith.constant 16 : i32
    %329 = arith.muli %c6_i32, %c16_i32_170 : i32
    %330 = tpu.assume_multiple %329, 16 : i32
    %331 = arith.index_cast %330 : i32 to index
    %c0_171 = arith.constant 0 : index
    %332 = vector.load %arg19[%331, %c0_171] : memref<128x512xbf16, #tpu.memory_space<vmem>>, vector<16x512xbf16>
    %333 = arith.extf %332 : vector<16x512xbf16> to vector<16x512xf32>
    %c0_172 = arith.constant 0 : index
    %c0_173 = arith.constant 0 : index
    %c0_174 = arith.constant 0 : index
    %334 = vector.load %arg21[%c0_172, %c0_173, %c0_174] : memref<2x16x128xf32, #tpu.memory_space<vmem>>, vector<1x16x128xf32>
    %335 = vector.shape_cast %334 : vector<1x16x128xf32> to vector<16x128xf32>
    %336 = arith.truncf %335 : vector<16x128xf32> to vector<16x128xbf16>
    %c0_175 = arith.constant 0 : index
    %c0_176 = arith.constant 0 : index
    %337 = vector.load %arg12[%c0_175, %c0_176] : memref<128x512xbf16, #tpu.memory_space<vmem>>, vector<128x512xbf16>
    %cst_177 = arith.constant dense<0.000000e+00> : vector<16x512xf32>
    %338 = tpu.matmul %336, %337, %cst_177 {dimension_numbers = #tpu.dot_dimension_numbers<[1], [0], [0], [1], [0, 0, 1, 1], [], []>} : vector<16x128xbf16>, vector<128x512xbf16>, vector<16x512xf32> -> vector<16x512xf32>
    %339 = arith.addf %333, %338 : vector<16x512xf32>
    %340 = vector.extract_strided_slice %339 {offsets = [0, 0], sizes = [16, 128], strides = [1, 1]} : vector<16x512xf32> to vector<16x128xf32>
    %cst_178 = arith.constant 5.000000e-01 : f32
    %341 = vector.broadcast %cst_178 : f32 to vector<16x128xf32>
    %342 = arith.mulf %341, %340 : vector<16x128xf32>
    %343 = math.tanh %342 : vector<16x128xf32>
    %cst_179 = arith.constant 5.000000e-01 : f32
    %344 = vector.broadcast %cst_179 : f32 to vector<16x128xf32>
    %345 = arith.mulf %344, %343 : vector<16x128xf32>
    %cst_180 = arith.constant 5.000000e-01 : f32
    %346 = vector.broadcast %cst_180 : f32 to vector<16x128xf32>
    %347 = arith.addf %345, %346 : vector<16x128xf32>
    %348 = vector.extract_strided_slice %339 {offsets = [0, 128], sizes = [16, 128], strides = [1, 1]} : vector<16x512xf32> to vector<16x128xf32>
    %cst_181 = arith.constant 5.000000e-01 : f32
    %349 = vector.broadcast %cst_181 : f32 to vector<16x128xf32>
    %350 = arith.mulf %349, %348 : vector<16x128xf32>
    %351 = math.tanh %350 : vector<16x128xf32>
    %cst_182 = arith.constant 5.000000e-01 : f32
    %352 = vector.broadcast %cst_182 : f32 to vector<16x128xf32>
    %353 = arith.mulf %352, %351 : vector<16x128xf32>
    %cst_183 = arith.constant 5.000000e-01 : f32
    %354 = vector.broadcast %cst_183 : f32 to vector<16x128xf32>
    %355 = arith.addf %353, %354 : vector<16x128xf32>
    %356 = vector.extract_strided_slice %339 {offsets = [0, 256], sizes = [16, 128], strides = [1, 1]} : vector<16x512xf32> to vector<16x128xf32>
    %357 = math.tanh %356 : vector<16x128xf32>
    %358 = vector.extract_strided_slice %339 {offsets = [0, 384], sizes = [16, 128], strides = [1, 1]} : vector<16x512xf32> to vector<16x128xf32>
    %cst_184 = arith.constant 5.000000e-01 : f32
    %359 = vector.broadcast %cst_184 : f32 to vector<16x128xf32>
    %360 = arith.mulf %359, %358 : vector<16x128xf32>
    %361 = math.tanh %360 : vector<16x128xf32>
    %cst_185 = arith.constant 5.000000e-01 : f32
    %362 = vector.broadcast %cst_185 : f32 to vector<16x128xf32>
    %363 = arith.mulf %362, %361 : vector<16x128xf32>
    %cst_186 = arith.constant 5.000000e-01 : f32
    %364 = vector.broadcast %cst_186 : f32 to vector<16x128xf32>
    %365 = arith.addf %363, %364 : vector<16x128xf32>
    %c0_187 = arith.constant 0 : index
    %c0_188 = arith.constant 0 : index
    %c0_189 = arith.constant 0 : index
    %366 = vector.load %arg22[%c0_187, %c0_188, %c0_189] : memref<2x16x128xf32, #tpu.memory_space<vmem>>, vector<1x16x128xf32>
    %367 = vector.shape_cast %366 : vector<1x16x128xf32> to vector<16x128xf32>
    %368 = arith.mulf %355, %367 : vector<16x128xf32>
    %369 = arith.mulf %347, %357 : vector<16x128xf32>
    %370 = arith.addf %368, %369 : vector<16x128xf32>
    %371 = math.tanh %370 : vector<16x128xf32>
    %372 = arith.mulf %365, %371 : vector<16x128xf32>
    %c0_190 = arith.constant 0 : index
    %c0_191 = arith.constant 0 : index
    %c0_192 = arith.constant 0 : index
    %373 = vector.load %arg22[%c0_190, %c0_191, %c0_192] : memref<2x16x128xf32, #tpu.memory_space<vmem>>, vector<1x16x128xf32>
    %374 = vector.shape_cast %373 : vector<1x16x128xf32> to vector<16x128xf32>
    %375 = vector.shape_cast %370 : vector<16x128xf32> to vector<1x16x128xf32>
    tpu.vector_store %arg22[%c0_190, %c0_191, %c0_192], %375 {strides = array<i32>} : memref<2x16x128xf32, #tpu.memory_space<vmem>>, vector<1x16x128xf32>,
    %c0_193 = arith.constant 0 : index
    %c0_194 = arith.constant 0 : index
    %c0_195 = arith.constant 0 : index
    %376 = vector.load %arg21[%c0_193, %c0_194, %c0_195] : memref<2x16x128xf32, #tpu.memory_space<vmem>>, vector<1x16x128xf32>
    %377 = vector.shape_cast %376 : vector<1x16x128xf32> to vector<16x128xf32>
    %378 = vector.shape_cast %372 : vector<16x128xf32> to vector<1x16x128xf32>
    tpu.vector_store %arg21[%c0_193, %c0_194, %c0_195], %378 {strides = array<i32>} : memref<2x16x128xf32, #tpu.memory_space<vmem>>, vector<1x16x128xf32>,
    %379 = arith.truncf %372 : vector<16x128xf32> to vector<16x128xbf16>
    %380 = arith.index_cast %330 : i32 to index
    %c0_196 = arith.constant 0 : index
    %381 = vector.load %arg20[%380, %c0_196] : memref<128x128xbf16, #tpu.memory_space<vmem>>, vector<16x128xbf16>
    tpu.vector_store %arg20[%380, %c0_196], %379 {strides = array<i32>} : memref<128x128xbf16, #tpu.memory_space<vmem>>, vector<16x128xbf16>,
    %c7_i32 = arith.constant 7 : i32
    %c16_i32_197 = arith.constant 16 : i32
    %382 = arith.muli %c7_i32, %c16_i32_197 : i32
    %383 = tpu.assume_multiple %382, 16 : i32
    %384 = arith.index_cast %383 : i32 to index
    %c0_198 = arith.constant 0 : index
    %385 = vector.load %arg19[%384, %c0_198] : memref<128x512xbf16, #tpu.memory_space<vmem>>, vector<16x512xbf16>
    %386 = arith.extf %385 : vector<16x512xbf16> to vector<16x512xf32>
    %c0_199 = arith.constant 0 : index
    %c0_200 = arith.constant 0 : index
    %c0_201 = arith.constant 0 : index
    %387 = vector.load %arg21[%c0_199, %c0_200, %c0_201] : memref<2x16x128xf32, #tpu.memory_space<vmem>>, vector<1x16x128xf32>
    %388 = vector.shape_cast %387 : vector<1x16x128xf32> to vector<16x128xf32>
    %389 = arith.truncf %388 : vector<16x128xf32> to vector<16x128xbf16>
    %c0_202 = arith.constant 0 : index
    %c0_203 = arith.constant 0 : index
    %390 = vector.load %arg12[%c0_202, %c0_203] : memref<128x512xbf16, #tpu.memory_space<vmem>>, vector<128x512xbf16>
    %cst_204 = arith.constant dense<0.000000e+00> : vector<16x512xf32>
    %391 = tpu.matmul %389, %390, %cst_204 {dimension_numbers = #tpu.dot_dimension_numbers<[1], [0], [0], [1], [0, 0, 1, 1], [], []>} : vector<16x128xbf16>, vector<128x512xbf16>, vector<16x512xf32> -> vector<16x512xf32>
    %392 = arith.addf %386, %391 : vector<16x512xf32>
    %393 = vector.extract_strided_slice %392 {offsets = [0, 0], sizes = [16, 128], strides = [1, 1]} : vector<16x512xf32> to vector<16x128xf32>
    %cst_205 = arith.constant 5.000000e-01 : f32
    %394 = vector.broadcast %cst_205 : f32 to vector<16x128xf32>
    %395 = arith.mulf %394, %393 : vector<16x128xf32>
    %396 = math.tanh %395 : vector<16x128xf32>
    %cst_206 = arith.constant 5.000000e-01 : f32
    %397 = vector.broadcast %cst_206 : f32 to vector<16x128xf32>
    %398 = arith.mulf %397, %396 : vector<16x128xf32>
    %cst_207 = arith.constant 5.000000e-01 : f32
    %399 = vector.broadcast %cst_207 : f32 to vector<16x128xf32>
    %400 = arith.addf %398, %399 : vector<16x128xf32>
    %401 = vector.extract_strided_slice %392 {offsets = [0, 128], sizes = [16, 128], strides = [1, 1]} : vector<16x512xf32> to vector<16x128xf32>
    %cst_208 = arith.constant 5.000000e-01 : f32
    %402 = vector.broadcast %cst_208 : f32 to vector<16x128xf32>
    %403 = arith.mulf %402, %401 : vector<16x128xf32>
    %404 = math.tanh %403 : vector<16x128xf32>
    %cst_209 = arith.constant 5.000000e-01 : f32
    %405 = vector.broadcast %cst_209 : f32 to vector<16x128xf32>
    %406 = arith.mulf %405, %404 : vector<16x128xf32>
    %cst_210 = arith.constant 5.000000e-01 : f32
    %407 = vector.broadcast %cst_210 : f32 to vector<16x128xf32>
    %408 = arith.addf %406, %407 : vector<16x128xf32>
    %409 = vector.extract_strided_slice %392 {offsets = [0, 256], sizes = [16, 128], strides = [1, 1]} : vector<16x512xf32> to vector<16x128xf32>
    %410 = math.tanh %409 : vector<16x128xf32>
    %411 = vector.extract_strided_slice %392 {offsets = [0, 384], sizes = [16, 128], strides = [1, 1]} : vector<16x512xf32> to vector<16x128xf32>
    %cst_211 = arith.constant 5.000000e-01 : f32
    %412 = vector.broadcast %cst_211 : f32 to vector<16x128xf32>
    %413 = arith.mulf %412, %411 : vector<16x128xf32>
    %414 = math.tanh %413 : vector<16x128xf32>
    %cst_212 = arith.constant 5.000000e-01 : f32
    %415 = vector.broadcast %cst_212 : f32 to vector<16x128xf32>
    %416 = arith.mulf %415, %414 : vector<16x128xf32>
    %cst_213 = arith.constant 5.000000e-01 : f32
    %417 = vector.broadcast %cst_213 : f32 to vector<16x128xf32>
    %418 = arith.addf %416, %417 : vector<16x128xf32>
    %c0_214 = arith.constant 0 : index
    %c0_215 = arith.constant 0 : index
    %c0_216 = arith.constant 0 : index
    %419 = vector.load %arg22[%c0_214, %c0_215, %c0_216] : memref<2x16x128xf32, #tpu.memory_space<vmem>>, vector<1x16x128xf32>
    %420 = vector.shape_cast %419 : vector<1x16x128xf32> to vector<16x128xf32>
    %421 = arith.mulf %408, %420 : vector<16x128xf32>
    %422 = arith.mulf %400, %410 : vector<16x128xf32>
    %423 = arith.addf %421, %422 : vector<16x128xf32>
    %424 = math.tanh %423 : vector<16x128xf32>
    %425 = arith.mulf %418, %424 : vector<16x128xf32>
    %c0_217 = arith.constant 0 : index
    %c0_218 = arith.constant 0 : index
    %c0_219 = arith.constant 0 : index
    %426 = vector.load %arg22[%c0_217, %c0_218, %c0_219] : memref<2x16x128xf32, #tpu.memory_space<vmem>>, vector<1x16x128xf32>
    %427 = vector.shape_cast %426 : vector<1x16x128xf32> to vector<16x128xf32>
    %428 = vector.shape_cast %423 : vector<16x128xf32> to vector<1x16x128xf32>
    tpu.vector_store %arg22[%c0_217, %c0_218, %c0_219], %428 {strides = array<i32>} : memref<2x16x128xf32, #tpu.memory_space<vmem>>, vector<1x16x128xf32>,
    %c0_220 = arith.constant 0 : index
    %c0_221 = arith.constant 0 : index
    %c0_222 = arith.constant 0 : index
    %429 = vector.load %arg21[%c0_220, %c0_221, %c0_222] : memref<2x16x128xf32, #tpu.memory_space<vmem>>, vector<1x16x128xf32>
    %430 = vector.shape_cast %429 : vector<1x16x128xf32> to vector<16x128xf32>
    %431 = vector.shape_cast %425 : vector<16x128xf32> to vector<1x16x128xf32>
    tpu.vector_store %arg21[%c0_220, %c0_221, %c0_222], %431 {strides = array<i32>} : memref<2x16x128xf32, #tpu.memory_space<vmem>>, vector<1x16x128xf32>,
    %432 = arith.truncf %425 : vector<16x128xf32> to vector<16x128xbf16>
    %433 = arith.index_cast %383 : i32 to index
    %c0_223 = arith.constant 0 : index
    %434 = vector.load %arg20[%433, %c0_223] : memref<128x128xbf16, #tpu.memory_space<vmem>>, vector<16x128xbf16>
    tpu.vector_store %arg20[%433, %c0_223], %432 {strides = array<i32>} : memref<128x128xbf16, #tpu.memory_space<vmem>>, vector<16x128xbf16>,
    %c8_i32 = arith.constant 8 : i32
    %c0_224 = arith.constant 0 : index
    %c0_225 = arith.constant 0 : index
    %435 = vector.load %arg20[%c0_224, %c0_225] : memref<128x128xbf16, #tpu.memory_space<vmem>>, vector<128x128xbf16>
    %c0_226 = arith.constant 0 : index
    %c0_227 = arith.constant 0 : index
    %436 = vector.load %arg14[%c0_226, %c0_227] : memref<128x512xbf16, #tpu.memory_space<vmem>>, vector<128x512xbf16>
    %cst_228 = arith.constant dense<0.000000e+00> : vector<128x512xf32>
    %437 = tpu.matmul %435, %436, %cst_228 {dimension_numbers = #tpu.dot_dimension_numbers<[1], [0], [0], [1], [0, 0, 1, 1], [], []>} : vector<128x128xbf16>, vector<128x512xbf16>, vector<128x512xf32> -> vector<128x512xf32>
    %c0_229 = arith.constant 0 : index
    %c0_230 = arith.constant 0 : index
    %438 = vector.load %arg16[%c0_229, %c0_230] : memref<1x512xf32, #tpu.memory_space<vmem>>, vector<1x512xf32>
    %439 = vector.broadcast %438 : vector<1x512xf32> to vector<128x512xf32>
    %440 = arith.addf %437, %439 : vector<128x512xf32>
    %441 = arith.truncf %440 : vector<128x512xf32> to vector<128x512xbf16>
    %c0_231 = arith.constant 0 : index
    %c0_232 = arith.constant 0 : index
    %442 = vector.load %arg19[%c0_231, %c0_232] : memref<128x512xbf16, #tpu.memory_space<vmem>>, vector<128x512xbf16>
    tpu.vector_store %arg19[%c0_231, %c0_232], %441 {strides = array<i32>} : memref<128x512xbf16, #tpu.memory_space<vmem>>, vector<128x512xbf16>,
    %c0_i32_233 = arith.constant 0 : i32
    %c16_i32_234 = arith.constant 16 : i32
    %443 = arith.muli %c0_i32_233, %c16_i32_234 : i32
    %444 = tpu.assume_multiple %443, 16 : i32
    %445 = arith.index_cast %444 : i32 to index
    %c0_235 = arith.constant 0 : index
    %446 = vector.load %arg19[%445, %c0_235] : memref<128x512xbf16, #tpu.memory_space<vmem>>, vector<16x512xbf16>
    %447 = arith.extf %446 : vector<16x512xbf16> to vector<16x512xf32>
    %c1 = arith.constant 1 : index
    %c0_236 = arith.constant 0 : index
    %c0_237 = arith.constant 0 : index
    %448 = vector.load %arg21[%c1, %c0_236, %c0_237] : memref<2x16x128xf32, #tpu.memory_space<vmem>>, vector<1x16x128xf32>
    %449 = vector.shape_cast %448 : vector<1x16x128xf32> to vector<16x128xf32>
    %450 = arith.truncf %449 : vector<16x128xf32> to vector<16x128xbf16>
    %c0_238 = arith.constant 0 : index
    %c0_239 = arith.constant 0 : index
    %451 = vector.load %arg15[%c0_238, %c0_239] : memref<128x512xbf16, #tpu.memory_space<vmem>>, vector<128x512xbf16>
    %cst_240 = arith.constant dense<0.000000e+00> : vector<16x512xf32>
    %452 = tpu.matmul %450, %451, %cst_240 {dimension_numbers = #tpu.dot_dimension_numbers<[1], [0], [0], [1], [0, 0, 1, 1], [], []>} : vector<16x128xbf16>, vector<128x512xbf16>, vector<16x512xf32> -> vector<16x512xf32>
    %453 = arith.addf %447, %452 : vector<16x512xf32>
    %454 = vector.extract_strided_slice %453 {offsets = [0, 0], sizes = [16, 128], strides = [1, 1]} : vector<16x512xf32> to vector<16x128xf32>
    %cst_241 = arith.constant 5.000000e-01 : f32
    %455 = vector.broadcast %cst_241 : f32 to vector<16x128xf32>
    %456 = arith.mulf %455, %454 : vector<16x128xf32>
    %457 = math.tanh %456 : vector<16x128xf32>
    %cst_242 = arith.constant 5.000000e-01 : f32
    %458 = vector.broadcast %cst_242 : f32 to vector<16x128xf32>
    %459 = arith.mulf %458, %457 : vector<16x128xf32>
    %cst_243 = arith.constant 5.000000e-01 : f32
    %460 = vector.broadcast %cst_243 : f32 to vector<16x128xf32>
    %461 = arith.addf %459, %460 : vector<16x128xf32>
    %462 = vector.extract_strided_slice %453 {offsets = [0, 128], sizes = [16, 128], strides = [1, 1]} : vector<16x512xf32> to vector<16x128xf32>
    %cst_244 = arith.constant 5.000000e-01 : f32
    %463 = vector.broadcast %cst_244 : f32 to vector<16x128xf32>
    %464 = arith.mulf %463, %462 : vector<16x128xf32>
    %465 = math.tanh %464 : vector<16x128xf32>
    %cst_245 = arith.constant 5.000000e-01 : f32
    %466 = vector.broadcast %cst_245 : f32 to vector<16x128xf32>
    %467 = arith.mulf %466, %465 : vector<16x128xf32>
    %cst_246 = arith.constant 5.000000e-01 : f32
    %468 = vector.broadcast %cst_246 : f32 to vector<16x128xf32>
    %469 = arith.addf %467, %468 : vector<16x128xf32>
    %470 = vector.extract_strided_slice %453 {offsets = [0, 256], sizes = [16, 128], strides = [1, 1]} : vector<16x512xf32> to vector<16x128xf32>
    %471 = math.tanh %470 : vector<16x128xf32>
    %472 = vector.extract_strided_slice %453 {offsets = [0, 384], sizes = [16, 128], strides = [1, 1]} : vector<16x512xf32> to vector<16x128xf32>
    %cst_247 = arith.constant 5.000000e-01 : f32
    %473 = vector.broadcast %cst_247 : f32 to vector<16x128xf32>
    %474 = arith.mulf %473, %472 : vector<16x128xf32>
    %475 = math.tanh %474 : vector<16x128xf32>
    %cst_248 = arith.constant 5.000000e-01 : f32
    %476 = vector.broadcast %cst_248 : f32 to vector<16x128xf32>
    %477 = arith.mulf %476, %475 : vector<16x128xf32>
    %cst_249 = arith.constant 5.000000e-01 : f32
    %478 = vector.broadcast %cst_249 : f32 to vector<16x128xf32>
    %479 = arith.addf %477, %478 : vector<16x128xf32>
    %c1_250 = arith.constant 1 : index
    %c0_251 = arith.constant 0 : index
    %c0_252 = arith.constant 0 : index
    %480 = vector.load %arg22[%c1_250, %c0_251, %c0_252] : memref<2x16x128xf32, #tpu.memory_space<vmem>>, vector<1x16x128xf32>
    %481 = vector.shape_cast %480 : vector<1x16x128xf32> to vector<16x128xf32>
    %482 = arith.mulf %469, %481 : vector<16x128xf32>
    %483 = arith.mulf %461, %471 : vector<16x128xf32>
    %484 = arith.addf %482, %483 : vector<16x128xf32>
    %485 = math.tanh %484 : vector<16x128xf32>
    %486 = arith.mulf %479, %485 : vector<16x128xf32>
    %c1_253 = arith.constant 1 : index
    %c0_254 = arith.constant 0 : index
    %c0_255 = arith.constant 0 : index
    %487 = vector.load %arg22[%c1_253, %c0_254, %c0_255] : memref<2x16x128xf32, #tpu.memory_space<vmem>>, vector<1x16x128xf32>
    %488 = vector.shape_cast %487 : vector<1x16x128xf32> to vector<16x128xf32>
    %489 = vector.shape_cast %484 : vector<16x128xf32> to vector<1x16x128xf32>
    tpu.vector_store %arg22[%c1_253, %c0_254, %c0_255], %489 {strides = array<i32>} : memref<2x16x128xf32, #tpu.memory_space<vmem>>, vector<1x16x128xf32>,
    %c1_256 = arith.constant 1 : index
    %c0_257 = arith.constant 0 : index
    %c0_258 = arith.constant 0 : index
    %490 = vector.load %arg21[%c1_256, %c0_257, %c0_258] : memref<2x16x128xf32, #tpu.memory_space<vmem>>, vector<1x16x128xf32>
    %491 = vector.shape_cast %490 : vector<1x16x128xf32> to vector<16x128xf32>
    %492 = vector.shape_cast %486 : vector<16x128xf32> to vector<1x16x128xf32>
    tpu.vector_store %arg21[%c1_256, %c0_257, %c0_258], %492 {strides = array<i32>} : memref<2x16x128xf32, #tpu.memory_space<vmem>>, vector<1x16x128xf32>,
    %c1_i32_259 = arith.constant 1 : i32
    %c16_i32_260 = arith.constant 16 : i32
    %493 = arith.muli %c1_i32_259, %c16_i32_260 : i32
    %494 = tpu.assume_multiple %493, 16 : i32
    %495 = arith.index_cast %494 : i32 to index
    %c0_261 = arith.constant 0 : index
    %496 = vector.load %arg19[%495, %c0_261] : memref<128x512xbf16, #tpu.memory_space<vmem>>, vector<16x512xbf16>
    %497 = arith.extf %496 : vector<16x512xbf16> to vector<16x512xf32>
    %c1_262 = arith.constant 1 : index
    %c0_263 = arith.constant 0 : index
    %c0_264 = arith.constant 0 : index
    %498 = vector.load %arg21[%c1_262, %c0_263, %c0_264] : memref<2x16x128xf32, #tpu.memory_space<vmem>>, vector<1x16x128xf32>
    %499 = vector.shape_cast %498 : vector<1x16x128xf32> to vector<16x128xf32>
    %500 = arith.truncf %499 : vector<16x128xf32> to vector<16x128xbf16>
    %c0_265 = arith.constant 0 : index
    %c0_266 = arith.constant 0 : index
    %501 = vector.load %arg15[%c0_265, %c0_266] : memref<128x512xbf16, #tpu.memory_space<vmem>>, vector<128x512xbf16>
    %cst_267 = arith.constant dense<0.000000e+00> : vector<16x512xf32>
    %502 = tpu.matmul %500, %501, %cst_267 {dimension_numbers = #tpu.dot_dimension_numbers<[1], [0], [0], [1], [0, 0, 1, 1], [], []>} : vector<16x128xbf16>, vector<128x512xbf16>, vector<16x512xf32> -> vector<16x512xf32>
    %503 = arith.addf %497, %502 : vector<16x512xf32>
    %504 = vector.extract_strided_slice %503 {offsets = [0, 0], sizes = [16, 128], strides = [1, 1]} : vector<16x512xf32> to vector<16x128xf32>
    %cst_268 = arith.constant 5.000000e-01 : f32
    %505 = vector.broadcast %cst_268 : f32 to vector<16x128xf32>
    %506 = arith.mulf %505, %504 : vector<16x128xf32>
    %507 = math.tanh %506 : vector<16x128xf32>
    %cst_269 = arith.constant 5.000000e-01 : f32
    %508 = vector.broadcast %cst_269 : f32 to vector<16x128xf32>
    %509 = arith.mulf %508, %507 : vector<16x128xf32>
    %cst_270 = arith.constant 5.000000e-01 : f32
    %510 = vector.broadcast %cst_270 : f32 to vector<16x128xf32>
    %511 = arith.addf %509, %510 : vector<16x128xf32>
    %512 = vector.extract_strided_slice %503 {offsets = [0, 128], sizes = [16, 128], strides = [1, 1]} : vector<16x512xf32> to vector<16x128xf32>
    %cst_271 = arith.constant 5.000000e-01 : f32
    %513 = vector.broadcast %cst_271 : f32 to vector<16x128xf32>
    %514 = arith.mulf %513, %512 : vector<16x128xf32>
    %515 = math.tanh %514 : vector<16x128xf32>
    %cst_272 = arith.constant 5.000000e-01 : f32
    %516 = vector.broadcast %cst_272 : f32 to vector<16x128xf32>
    %517 = arith.mulf %516, %515 : vector<16x128xf32>
    %cst_273 = arith.constant 5.000000e-01 : f32
    %518 = vector.broadcast %cst_273 : f32 to vector<16x128xf32>
    %519 = arith.addf %517, %518 : vector<16x128xf32>
    %520 = vector.extract_strided_slice %503 {offsets = [0, 256], sizes = [16, 128], strides = [1, 1]} : vector<16x512xf32> to vector<16x128xf32>
    %521 = math.tanh %520 : vector<16x128xf32>
    %522 = vector.extract_strided_slice %503 {offsets = [0, 384], sizes = [16, 128], strides = [1, 1]} : vector<16x512xf32> to vector<16x128xf32>
    %cst_274 = arith.constant 5.000000e-01 : f32
    %523 = vector.broadcast %cst_274 : f32 to vector<16x128xf32>
    %524 = arith.mulf %523, %522 : vector<16x128xf32>
    %525 = math.tanh %524 : vector<16x128xf32>
    %cst_275 = arith.constant 5.000000e-01 : f32
    %526 = vector.broadcast %cst_275 : f32 to vector<16x128xf32>
    %527 = arith.mulf %526, %525 : vector<16x128xf32>
    %cst_276 = arith.constant 5.000000e-01 : f32
    %528 = vector.broadcast %cst_276 : f32 to vector<16x128xf32>
    %529 = arith.addf %527, %528 : vector<16x128xf32>
    %c1_277 = arith.constant 1 : index
    %c0_278 = arith.constant 0 : index
    %c0_279 = arith.constant 0 : index
    %530 = vector.load %arg22[%c1_277, %c0_278, %c0_279] : memref<2x16x128xf32, #tpu.memory_space<vmem>>, vector<1x16x128xf32>
    %531 = vector.shape_cast %530 : vector<1x16x128xf32> to vector<16x128xf32>
    %532 = arith.mulf %519, %531 : vector<16x128xf32>
    %533 = arith.mulf %511, %521 : vector<16x128xf32>
    %534 = arith.addf %532, %533 : vector<16x128xf32>
    %535 = math.tanh %534 : vector<16x128xf32>
    %536 = arith.mulf %529, %535 : vector<16x128xf32>
    %c1_280 = arith.constant 1 : index
    %c0_281 = arith.constant 0 : index
    %c0_282 = arith.constant 0 : index
    %537 = vector.load %arg22[%c1_280, %c0_281, %c0_282] : memref<2x16x128xf32, #tpu.memory_space<vmem>>, vector<1x16x128xf32>
    %538 = vector.shape_cast %537 : vector<1x16x128xf32> to vector<16x128xf32>
    %539 = vector.shape_cast %534 : vector<16x128xf32> to vector<1x16x128xf32>
    tpu.vector_store %arg22[%c1_280, %c0_281, %c0_282], %539 {strides = array<i32>} : memref<2x16x128xf32, #tpu.memory_space<vmem>>, vector<1x16x128xf32>,
    %c1_283 = arith.constant 1 : index
    %c0_284 = arith.constant 0 : index
    %c0_285 = arith.constant 0 : index
    %540 = vector.load %arg21[%c1_283, %c0_284, %c0_285] : memref<2x16x128xf32, #tpu.memory_space<vmem>>, vector<1x16x128xf32>
    %541 = vector.shape_cast %540 : vector<1x16x128xf32> to vector<16x128xf32>
    %542 = vector.shape_cast %536 : vector<16x128xf32> to vector<1x16x128xf32>
    tpu.vector_store %arg21[%c1_283, %c0_284, %c0_285], %542 {strides = array<i32>} : memref<2x16x128xf32, #tpu.memory_space<vmem>>, vector<1x16x128xf32>,
    %c2_i32_286 = arith.constant 2 : i32
    %c16_i32_287 = arith.constant 16 : i32
    %543 = arith.muli %c2_i32_286, %c16_i32_287 : i32
    %544 = tpu.assume_multiple %543, 16 : i32
    %545 = arith.index_cast %544 : i32 to index
    %c0_288 = arith.constant 0 : index
    %546 = vector.load %arg19[%545, %c0_288] : memref<128x512xbf16, #tpu.memory_space<vmem>>, vector<16x512xbf16>
    %547 = arith.extf %546 : vector<16x512xbf16> to vector<16x512xf32>
    %c1_289 = arith.constant 1 : index
    %c0_290 = arith.constant 0 : index
    %c0_291 = arith.constant 0 : index
    %548 = vector.load %arg21[%c1_289, %c0_290, %c0_291] : memref<2x16x128xf32, #tpu.memory_space<vmem>>, vector<1x16x128xf32>
    %549 = vector.shape_cast %548 : vector<1x16x128xf32> to vector<16x128xf32>
    %550 = arith.truncf %549 : vector<16x128xf32> to vector<16x128xbf16>
    %c0_292 = arith.constant 0 : index
    %c0_293 = arith.constant 0 : index
    %551 = vector.load %arg15[%c0_292, %c0_293] : memref<128x512xbf16, #tpu.memory_space<vmem>>, vector<128x512xbf16>
    %cst_294 = arith.constant dense<0.000000e+00> : vector<16x512xf32>
    %552 = tpu.matmul %550, %551, %cst_294 {dimension_numbers = #tpu.dot_dimension_numbers<[1], [0], [0], [1], [0, 0, 1, 1], [], []>} : vector<16x128xbf16>, vector<128x512xbf16>, vector<16x512xf32> -> vector<16x512xf32>
    %553 = arith.addf %547, %552 : vector<16x512xf32>
    %554 = vector.extract_strided_slice %553 {offsets = [0, 0], sizes = [16, 128], strides = [1, 1]} : vector<16x512xf32> to vector<16x128xf32>
    %cst_295 = arith.constant 5.000000e-01 : f32
    %555 = vector.broadcast %cst_295 : f32 to vector<16x128xf32>
    %556 = arith.mulf %555, %554 : vector<16x128xf32>
    %557 = math.tanh %556 : vector<16x128xf32>
    %cst_296 = arith.constant 5.000000e-01 : f32
    %558 = vector.broadcast %cst_296 : f32 to vector<16x128xf32>
    %559 = arith.mulf %558, %557 : vector<16x128xf32>
    %cst_297 = arith.constant 5.000000e-01 : f32
    %560 = vector.broadcast %cst_297 : f32 to vector<16x128xf32>
    %561 = arith.addf %559, %560 : vector<16x128xf32>
    %562 = vector.extract_strided_slice %553 {offsets = [0, 128], sizes = [16, 128], strides = [1, 1]} : vector<16x512xf32> to vector<16x128xf32>
    %cst_298 = arith.constant 5.000000e-01 : f32
    %563 = vector.broadcast %cst_298 : f32 to vector<16x128xf32>
    %564 = arith.mulf %563, %562 : vector<16x128xf32>
    %565 = math.tanh %564 : vector<16x128xf32>
    %cst_299 = arith.constant 5.000000e-01 : f32
    %566 = vector.broadcast %cst_299 : f32 to vector<16x128xf32>
    %567 = arith.mulf %566, %565 : vector<16x128xf32>
    %cst_300 = arith.constant 5.000000e-01 : f32
    %568 = vector.broadcast %cst_300 : f32 to vector<16x128xf32>
    %569 = arith.addf %567, %568 : vector<16x128xf32>
    %570 = vector.extract_strided_slice %553 {offsets = [0, 256], sizes = [16, 128], strides = [1, 1]} : vector<16x512xf32> to vector<16x128xf32>
    %571 = math.tanh %570 : vector<16x128xf32>
    %572 = vector.extract_strided_slice %553 {offsets = [0, 384], sizes = [16, 128], strides = [1, 1]} : vector<16x512xf32> to vector<16x128xf32>
    %cst_301 = arith.constant 5.000000e-01 : f32
    %573 = vector.broadcast %cst_301 : f32 to vector<16x128xf32>
    %574 = arith.mulf %573, %572 : vector<16x128xf32>
    %575 = math.tanh %574 : vector<16x128xf32>
    %cst_302 = arith.constant 5.000000e-01 : f32
    %576 = vector.broadcast %cst_302 : f32 to vector<16x128xf32>
    %577 = arith.mulf %576, %575 : vector<16x128xf32>
    %cst_303 = arith.constant 5.000000e-01 : f32
    %578 = vector.broadcast %cst_303 : f32 to vector<16x128xf32>
    %579 = arith.addf %577, %578 : vector<16x128xf32>
    %c1_304 = arith.constant 1 : index
    %c0_305 = arith.constant 0 : index
    %c0_306 = arith.constant 0 : index
    %580 = vector.load %arg22[%c1_304, %c0_305, %c0_306] : memref<2x16x128xf32, #tpu.memory_space<vmem>>, vector<1x16x128xf32>
    %581 = vector.shape_cast %580 : vector<1x16x128xf32> to vector<16x128xf32>
    %582 = arith.mulf %569, %581 : vector<16x128xf32>
    %583 = arith.mulf %561, %571 : vector<16x128xf32>
    %584 = arith.addf %582, %583 : vector<16x128xf32>
    %585 = math.tanh %584 : vector<16x128xf32>
    %586 = arith.mulf %579, %585 : vector<16x128xf32>
    %c1_307 = arith.constant 1 : index
    %c0_308 = arith.constant 0 : index
    %c0_309 = arith.constant 0 : index
    %587 = vector.load %arg22[%c1_307, %c0_308, %c0_309] : memref<2x16x128xf32, #tpu.memory_space<vmem>>, vector<1x16x128xf32>
    %588 = vector.shape_cast %587 : vector<1x16x128xf32> to vector<16x128xf32>
    %589 = vector.shape_cast %584 : vector<16x128xf32> to vector<1x16x128xf32>
    tpu.vector_store %arg22[%c1_307, %c0_308, %c0_309], %589 {strides = array<i32>} : memref<2x16x128xf32, #tpu.memory_space<vmem>>, vector<1x16x128xf32>,
    %c1_310 = arith.constant 1 : index
    %c0_311 = arith.constant 0 : index
    %c0_312 = arith.constant 0 : index
    %590 = vector.load %arg21[%c1_310, %c0_311, %c0_312] : memref<2x16x128xf32, #tpu.memory_space<vmem>>, vector<1x16x128xf32>
    %591 = vector.shape_cast %590 : vector<1x16x128xf32> to vector<16x128xf32>
    %592 = vector.shape_cast %586 : vector<16x128xf32> to vector<1x16x128xf32>
    tpu.vector_store %arg21[%c1_310, %c0_311, %c0_312], %592 {strides = array<i32>} : memref<2x16x128xf32, #tpu.memory_space<vmem>>, vector<1x16x128xf32>,
    %c3_i32_313 = arith.constant 3 : i32
    %c16_i32_314 = arith.constant 16 : i32
    %593 = arith.muli %c3_i32_313, %c16_i32_314 : i32
    %594 = tpu.assume_multiple %593, 16 : i32
    %595 = arith.index_cast %594 : i32 to index
    %c0_315 = arith.constant 0 : index
    %596 = vector.load %arg19[%595, %c0_315] : memref<128x512xbf16, #tpu.memory_space<vmem>>, vector<16x512xbf16>
    %597 = arith.extf %596 : vector<16x512xbf16> to vector<16x512xf32>
    %c1_316 = arith.constant 1 : index
    %c0_317 = arith.constant 0 : index
    %c0_318 = arith.constant 0 : index
    %598 = vector.load %arg21[%c1_316, %c0_317, %c0_318] : memref<2x16x128xf32, #tpu.memory_space<vmem>>, vector<1x16x128xf32>
    %599 = vector.shape_cast %598 : vector<1x16x128xf32> to vector<16x128xf32>
    %600 = arith.truncf %599 : vector<16x128xf32> to vector<16x128xbf16>
    %c0_319 = arith.constant 0 : index
    %c0_320 = arith.constant 0 : index
    %601 = vector.load %arg15[%c0_319, %c0_320] : memref<128x512xbf16, #tpu.memory_space<vmem>>, vector<128x512xbf16>
    %cst_321 = arith.constant dense<0.000000e+00> : vector<16x512xf32>
    %602 = tpu.matmul %600, %601, %cst_321 {dimension_numbers = #tpu.dot_dimension_numbers<[1], [0], [0], [1], [0, 0, 1, 1], [], []>} : vector<16x128xbf16>, vector<128x512xbf16>, vector<16x512xf32> -> vector<16x512xf32>
    %603 = arith.addf %597, %602 : vector<16x512xf32>
    %604 = vector.extract_strided_slice %603 {offsets = [0, 0], sizes = [16, 128], strides = [1, 1]} : vector<16x512xf32> to vector<16x128xf32>
    %cst_322 = arith.constant 5.000000e-01 : f32
    %605 = vector.broadcast %cst_322 : f32 to vector<16x128xf32>
    %606 = arith.mulf %605, %604 : vector<16x128xf32>
    %607 = math.tanh %606 : vector<16x128xf32>
    %cst_323 = arith.constant 5.000000e-01 : f32
    %608 = vector.broadcast %cst_323 : f32 to vector<16x128xf32>
    %609 = arith.mulf %608, %607 : vector<16x128xf32>
    %cst_324 = arith.constant 5.000000e-01 : f32
    %610 = vector.broadcast %cst_324 : f32 to vector<16x128xf32>
    %611 = arith.addf %609, %610 : vector<16x128xf32>
    %612 = vector.extract_strided_slice %603 {offsets = [0, 128], sizes = [16, 128], strides = [1, 1]} : vector<16x512xf32> to vector<16x128xf32>
    %cst_325 = arith.constant 5.000000e-01 : f32
    %613 = vector.broadcast %cst_325 : f32 to vector<16x128xf32>
    %614 = arith.mulf %613, %612 : vector<16x128xf32>
    %615 = math.tanh %614 : vector<16x128xf32>
    %cst_326 = arith.constant 5.000000e-01 : f32
    %616 = vector.broadcast %cst_326 : f32 to vector<16x128xf32>
    %617 = arith.mulf %616, %615 : vector<16x128xf32>
    %cst_327 = arith.constant 5.000000e-01 : f32
    %618 = vector.broadcast %cst_327 : f32 to vector<16x128xf32>
    %619 = arith.addf %617, %618 : vector<16x128xf32>
    %620 = vector.extract_strided_slice %603 {offsets = [0, 256], sizes = [16, 128], strides = [1, 1]} : vector<16x512xf32> to vector<16x128xf32>
    %621 = math.tanh %620 : vector<16x128xf32>
    %622 = vector.extract_strided_slice %603 {offsets = [0, 384], sizes = [16, 128], strides = [1, 1]} : vector<16x512xf32> to vector<16x128xf32>
    %cst_328 = arith.constant 5.000000e-01 : f32
    %623 = vector.broadcast %cst_328 : f32 to vector<16x128xf32>
    %624 = arith.mulf %623, %622 : vector<16x128xf32>
    %625 = math.tanh %624 : vector<16x128xf32>
    %cst_329 = arith.constant 5.000000e-01 : f32
    %626 = vector.broadcast %cst_329 : f32 to vector<16x128xf32>
    %627 = arith.mulf %626, %625 : vector<16x128xf32>
    %cst_330 = arith.constant 5.000000e-01 : f32
    %628 = vector.broadcast %cst_330 : f32 to vector<16x128xf32>
    %629 = arith.addf %627, %628 : vector<16x128xf32>
    %c1_331 = arith.constant 1 : index
    %c0_332 = arith.constant 0 : index
    %c0_333 = arith.constant 0 : index
    %630 = vector.load %arg22[%c1_331, %c0_332, %c0_333] : memref<2x16x128xf32, #tpu.memory_space<vmem>>, vector<1x16x128xf32>
    %631 = vector.shape_cast %630 : vector<1x16x128xf32> to vector<16x128xf32>
    %632 = arith.mulf %619, %631 : vector<16x128xf32>
    %633 = arith.mulf %611, %621 : vector<16x128xf32>
    %634 = arith.addf %632, %633 : vector<16x128xf32>
    %635 = math.tanh %634 : vector<16x128xf32>
    %636 = arith.mulf %629, %635 : vector<16x128xf32>
    %c1_334 = arith.constant 1 : index
    %c0_335 = arith.constant 0 : index
    %c0_336 = arith.constant 0 : index
    %637 = vector.load %arg22[%c1_334, %c0_335, %c0_336] : memref<2x16x128xf32, #tpu.memory_space<vmem>>, vector<1x16x128xf32>
    %638 = vector.shape_cast %637 : vector<1x16x128xf32> to vector<16x128xf32>
    %639 = vector.shape_cast %634 : vector<16x128xf32> to vector<1x16x128xf32>
    tpu.vector_store %arg22[%c1_334, %c0_335, %c0_336], %639 {strides = array<i32>} : memref<2x16x128xf32, #tpu.memory_space<vmem>>, vector<1x16x128xf32>,
    %c1_337 = arith.constant 1 : index
    %c0_338 = arith.constant 0 : index
    %c0_339 = arith.constant 0 : index
    %640 = vector.load %arg21[%c1_337, %c0_338, %c0_339] : memref<2x16x128xf32, #tpu.memory_space<vmem>>, vector<1x16x128xf32>
    %641 = vector.shape_cast %640 : vector<1x16x128xf32> to vector<16x128xf32>
    %642 = vector.shape_cast %636 : vector<16x128xf32> to vector<1x16x128xf32>
    tpu.vector_store %arg21[%c1_337, %c0_338, %c0_339], %642 {strides = array<i32>} : memref<2x16x128xf32, #tpu.memory_space<vmem>>, vector<1x16x128xf32>,
    %c4_i32_340 = arith.constant 4 : i32
    %c16_i32_341 = arith.constant 16 : i32
    %643 = arith.muli %c4_i32_340, %c16_i32_341 : i32
    %644 = tpu.assume_multiple %643, 16 : i32
    %645 = arith.index_cast %644 : i32 to index
    %c0_342 = arith.constant 0 : index
    %646 = vector.load %arg19[%645, %c0_342] : memref<128x512xbf16, #tpu.memory_space<vmem>>, vector<16x512xbf16>
    %647 = arith.extf %646 : vector<16x512xbf16> to vector<16x512xf32>
    %c1_343 = arith.constant 1 : index
    %c0_344 = arith.constant 0 : index
    %c0_345 = arith.constant 0 : index
    %648 = vector.load %arg21[%c1_343, %c0_344, %c0_345] : memref<2x16x128xf32, #tpu.memory_space<vmem>>, vector<1x16x128xf32>
    %649 = vector.shape_cast %648 : vector<1x16x128xf32> to vector<16x128xf32>
    %650 = arith.truncf %649 : vector<16x128xf32> to vector<16x128xbf16>
    %c0_346 = arith.constant 0 : index
    %c0_347 = arith.constant 0 : index
    %651 = vector.load %arg15[%c0_346, %c0_347] : memref<128x512xbf16, #tpu.memory_space<vmem>>, vector<128x512xbf16>
    %cst_348 = arith.constant dense<0.000000e+00> : vector<16x512xf32>
    %652 = tpu.matmul %650, %651, %cst_348 {dimension_numbers = #tpu.dot_dimension_numbers<[1], [0], [0], [1], [0, 0, 1, 1], [], []>} : vector<16x128xbf16>, vector<128x512xbf16>, vector<16x512xf32> -> vector<16x512xf32>
    %653 = arith.addf %647, %652 : vector<16x512xf32>
    %654 = vector.extract_strided_slice %653 {offsets = [0, 0], sizes = [16, 128], strides = [1, 1]} : vector<16x512xf32> to vector<16x128xf32>
    %cst_349 = arith.constant 5.000000e-01 : f32
    %655 = vector.broadcast %cst_349 : f32 to vector<16x128xf32>
    %656 = arith.mulf %655, %654 : vector<16x128xf32>
    %657 = math.tanh %656 : vector<16x128xf32>
    %cst_350 = arith.constant 5.000000e-01 : f32
    %658 = vector.broadcast %cst_350 : f32 to vector<16x128xf32>
    %659 = arith.mulf %658, %657 : vector<16x128xf32>
    %cst_351 = arith.constant 5.000000e-01 : f32
    %660 = vector.broadcast %cst_351 : f32 to vector<16x128xf32>
    %661 = arith.addf %659, %660 : vector<16x128xf32>
    %662 = vector.extract_strided_slice %653 {offsets = [0, 128], sizes = [16, 128], strides = [1, 1]} : vector<16x512xf32> to vector<16x128xf32>
    %cst_352 = arith.constant 5.000000e-01 : f32
    %663 = vector.broadcast %cst_352 : f32 to vector<16x128xf32>
    %664 = arith.mulf %663, %662 : vector<16x128xf32>
    %665 = math.tanh %664 : vector<16x128xf32>
    %cst_353 = arith.constant 5.000000e-01 : f32
    %666 = vector.broadcast %cst_353 : f32 to vector<16x128xf32>
    %667 = arith.mulf %666, %665 : vector<16x128xf32>
    %cst_354 = arith.constant 5.000000e-01 : f32
    %668 = vector.broadcast %cst_354 : f32 to vector<16x128xf32>
    %669 = arith.addf %667, %668 : vector<16x128xf32>
    %670 = vector.extract_strided_slice %653 {offsets = [0, 256], sizes = [16, 128], strides = [1, 1]} : vector<16x512xf32> to vector<16x128xf32>
    %671 = math.tanh %670 : vector<16x128xf32>
    %672 = vector.extract_strided_slice %653 {offsets = [0, 384], sizes = [16, 128], strides = [1, 1]} : vector<16x512xf32> to vector<16x128xf32>
    %cst_355 = arith.constant 5.000000e-01 : f32
    %673 = vector.broadcast %cst_355 : f32 to vector<16x128xf32>
    %674 = arith.mulf %673, %672 : vector<16x128xf32>
    %675 = math.tanh %674 : vector<16x128xf32>
    %cst_356 = arith.constant 5.000000e-01 : f32
    %676 = vector.broadcast %cst_356 : f32 to vector<16x128xf32>
    %677 = arith.mulf %676, %675 : vector<16x128xf32>
    %cst_357 = arith.constant 5.000000e-01 : f32
    %678 = vector.broadcast %cst_357 : f32 to vector<16x128xf32>
    %679 = arith.addf %677, %678 : vector<16x128xf32>
    %c1_358 = arith.constant 1 : index
    %c0_359 = arith.constant 0 : index
    %c0_360 = arith.constant 0 : index
    %680 = vector.load %arg22[%c1_358, %c0_359, %c0_360] : memref<2x16x128xf32, #tpu.memory_space<vmem>>, vector<1x16x128xf32>
    %681 = vector.shape_cast %680 : vector<1x16x128xf32> to vector<16x128xf32>
    %682 = arith.mulf %669, %681 : vector<16x128xf32>
    %683 = arith.mulf %661, %671 : vector<16x128xf32>
    %684 = arith.addf %682, %683 : vector<16x128xf32>
    %685 = math.tanh %684 : vector<16x128xf32>
    %686 = arith.mulf %679, %685 : vector<16x128xf32>
    %c1_361 = arith.constant 1 : index
    %c0_362 = arith.constant 0 : index
    %c0_363 = arith.constant 0 : index
    %687 = vector.load %arg22[%c1_361, %c0_362, %c0_363] : memref<2x16x128xf32, #tpu.memory_space<vmem>>, vector<1x16x128xf32>
    %688 = vector.shape_cast %687 : vector<1x16x128xf32> to vector<16x128xf32>
    %689 = vector.shape_cast %684 : vector<16x128xf32> to vector<1x16x128xf32>
    tpu.vector_store %arg22[%c1_361, %c0_362, %c0_363], %689 {strides = array<i32>} : memref<2x16x128xf32, #tpu.memory_space<vmem>>, vector<1x16x128xf32>,
    %c1_364 = arith.constant 1 : index
    %c0_365 = arith.constant 0 : index
    %c0_366 = arith.constant 0 : index
    %690 = vector.load %arg21[%c1_364, %c0_365, %c0_366] : memref<2x16x128xf32, #tpu.memory_space<vmem>>, vector<1x16x128xf32>
    %691 = vector.shape_cast %690 : vector<1x16x128xf32> to vector<16x128xf32>
    %692 = vector.shape_cast %686 : vector<16x128xf32> to vector<1x16x128xf32>
    tpu.vector_store %arg21[%c1_364, %c0_365, %c0_366], %692 {strides = array<i32>} : memref<2x16x128xf32, #tpu.memory_space<vmem>>, vector<1x16x128xf32>,
    %c5_i32_367 = arith.constant 5 : i32
    %c16_i32_368 = arith.constant 16 : i32
    %693 = arith.muli %c5_i32_367, %c16_i32_368 : i32
    %694 = tpu.assume_multiple %693, 16 : i32
    %695 = arith.index_cast %694 : i32 to index
    %c0_369 = arith.constant 0 : index
    %696 = vector.load %arg19[%695, %c0_369] : memref<128x512xbf16, #tpu.memory_space<vmem>>, vector<16x512xbf16>
    %697 = arith.extf %696 : vector<16x512xbf16> to vector<16x512xf32>
    %c1_370 = arith.constant 1 : index
    %c0_371 = arith.constant 0 : index
    %c0_372 = arith.constant 0 : index
    %698 = vector.load %arg21[%c1_370, %c0_371, %c0_372] : memref<2x16x128xf32, #tpu.memory_space<vmem>>, vector<1x16x128xf32>
    %699 = vector.shape_cast %698 : vector<1x16x128xf32> to vector<16x128xf32>
    %700 = arith.truncf %699 : vector<16x128xf32> to vector<16x128xbf16>
    %c0_373 = arith.constant 0 : index
    %c0_374 = arith.constant 0 : index
    %701 = vector.load %arg15[%c0_373, %c0_374] : memref<128x512xbf16, #tpu.memory_space<vmem>>, vector<128x512xbf16>
    %cst_375 = arith.constant dense<0.000000e+00> : vector<16x512xf32>
    %702 = tpu.matmul %700, %701, %cst_375 {dimension_numbers = #tpu.dot_dimension_numbers<[1], [0], [0], [1], [0, 0, 1, 1], [], []>} : vector<16x128xbf16>, vector<128x512xbf16>, vector<16x512xf32> -> vector<16x512xf32>
    %703 = arith.addf %697, %702 : vector<16x512xf32>
    %704 = vector.extract_strided_slice %703 {offsets = [0, 0], sizes = [16, 128], strides = [1, 1]} : vector<16x512xf32> to vector<16x128xf32>
    %cst_376 = arith.constant 5.000000e-01 : f32
    %705 = vector.broadcast %cst_376 : f32 to vector<16x128xf32>
    %706 = arith.mulf %705, %704 : vector<16x128xf32>
    %707 = math.tanh %706 : vector<16x128xf32>
    %cst_377 = arith.constant 5.000000e-01 : f32
    %708 = vector.broadcast %cst_377 : f32 to vector<16x128xf32>
    %709 = arith.mulf %708, %707 : vector<16x128xf32>
    %cst_378 = arith.constant 5.000000e-01 : f32
    %710 = vector.broadcast %cst_378 : f32 to vector<16x128xf32>
    %711 = arith.addf %709, %710 : vector<16x128xf32>
    %712 = vector.extract_strided_slice %703 {offsets = [0, 128], sizes = [16, 128], strides = [1, 1]} : vector<16x512xf32> to vector<16x128xf32>
    %cst_379 = arith.constant 5.000000e-01 : f32
    %713 = vector.broadcast %cst_379 : f32 to vector<16x128xf32>
    %714 = arith.mulf %713, %712 : vector<16x128xf32>
    %715 = math.tanh %714 : vector<16x128xf32>
    %cst_380 = arith.constant 5.000000e-01 : f32
    %716 = vector.broadcast %cst_380 : f32 to vector<16x128xf32>
    %717 = arith.mulf %716, %715 : vector<16x128xf32>
    %cst_381 = arith.constant 5.000000e-01 : f32
    %718 = vector.broadcast %cst_381 : f32 to vector<16x128xf32>
    %719 = arith.addf %717, %718 : vector<16x128xf32>
    %720 = vector.extract_strided_slice %703 {offsets = [0, 256], sizes = [16, 128], strides = [1, 1]} : vector<16x512xf32> to vector<16x128xf32>
    %721 = math.tanh %720 : vector<16x128xf32>
    %722 = vector.extract_strided_slice %703 {offsets = [0, 384], sizes = [16, 128], strides = [1, 1]} : vector<16x512xf32> to vector<16x128xf32>
    %cst_382 = arith.constant 5.000000e-01 : f32
    %723 = vector.broadcast %cst_382 : f32 to vector<16x128xf32>
    %724 = arith.mulf %723, %722 : vector<16x128xf32>
    %725 = math.tanh %724 : vector<16x128xf32>
    %cst_383 = arith.constant 5.000000e-01 : f32
    %726 = vector.broadcast %cst_383 : f32 to vector<16x128xf32>
    %727 = arith.mulf %726, %725 : vector<16x128xf32>
    %cst_384 = arith.constant 5.000000e-01 : f32
    %728 = vector.broadcast %cst_384 : f32 to vector<16x128xf32>
    %729 = arith.addf %727, %728 : vector<16x128xf32>
    %c1_385 = arith.constant 1 : index
    %c0_386 = arith.constant 0 : index
    %c0_387 = arith.constant 0 : index
    %730 = vector.load %arg22[%c1_385, %c0_386, %c0_387] : memref<2x16x128xf32, #tpu.memory_space<vmem>>, vector<1x16x128xf32>
    %731 = vector.shape_cast %730 : vector<1x16x128xf32> to vector<16x128xf32>
    %732 = arith.mulf %719, %731 : vector<16x128xf32>
    %733 = arith.mulf %711, %721 : vector<16x128xf32>
    %734 = arith.addf %732, %733 : vector<16x128xf32>
    %735 = math.tanh %734 : vector<16x128xf32>
    %736 = arith.mulf %729, %735 : vector<16x128xf32>
    %c1_388 = arith.constant 1 : index
    %c0_389 = arith.constant 0 : index
    %c0_390 = arith.constant 0 : index
    %737 = vector.load %arg22[%c1_388, %c0_389, %c0_390] : memref<2x16x128xf32, #tpu.memory_space<vmem>>, vector<1x16x128xf32>
    %738 = vector.shape_cast %737 : vector<1x16x128xf32> to vector<16x128xf32>
    %739 = vector.shape_cast %734 : vector<16x128xf32> to vector<1x16x128xf32>
    tpu.vector_store %arg22[%c1_388, %c0_389, %c0_390], %739 {strides = array<i32>} : memref<2x16x128xf32, #tpu.memory_space<vmem>>, vector<1x16x128xf32>,
    %c1_391 = arith.constant 1 : index
    %c0_392 = arith.constant 0 : index
    %c0_393 = arith.constant 0 : index
    %740 = vector.load %arg21[%c1_391, %c0_392, %c0_393] : memref<2x16x128xf32, #tpu.memory_space<vmem>>, vector<1x16x128xf32>
    %741 = vector.shape_cast %740 : vector<1x16x128xf32> to vector<16x128xf32>
    %742 = vector.shape_cast %736 : vector<16x128xf32> to vector<1x16x128xf32>
    tpu.vector_store %arg21[%c1_391, %c0_392, %c0_393], %742 {strides = array<i32>} : memref<2x16x128xf32, #tpu.memory_space<vmem>>, vector<1x16x128xf32>,
    %c6_i32_394 = arith.constant 6 : i32
    %c16_i32_395 = arith.constant 16 : i32
    %743 = arith.muli %c6_i32_394, %c16_i32_395 : i32
    %744 = tpu.assume_multiple %743, 16 : i32
    %745 = arith.index_cast %744 : i32 to index
    %c0_396 = arith.constant 0 : index
    %746 = vector.load %arg19[%745, %c0_396] : memref<128x512xbf16, #tpu.memory_space<vmem>>, vector<16x512xbf16>
    %747 = arith.extf %746 : vector<16x512xbf16> to vector<16x512xf32>
    %c1_397 = arith.constant 1 : index
    %c0_398 = arith.constant 0 : index
    %c0_399 = arith.constant 0 : index
    %748 = vector.load %arg21[%c1_397, %c0_398, %c0_399] : memref<2x16x128xf32, #tpu.memory_space<vmem>>, vector<1x16x128xf32>
    %749 = vector.shape_cast %748 : vector<1x16x128xf32> to vector<16x128xf32>
    %750 = arith.truncf %749 : vector<16x128xf32> to vector<16x128xbf16>
    %c0_400 = arith.constant 0 : index
    %c0_401 = arith.constant 0 : index
    %751 = vector.load %arg15[%c0_400, %c0_401] : memref<128x512xbf16, #tpu.memory_space<vmem>>, vector<128x512xbf16>
    %cst_402 = arith.constant dense<0.000000e+00> : vector<16x512xf32>
    %752 = tpu.matmul %750, %751, %cst_402 {dimension_numbers = #tpu.dot_dimension_numbers<[1], [0], [0], [1], [0, 0, 1, 1], [], []>} : vector<16x128xbf16>, vector<128x512xbf16>, vector<16x512xf32> -> vector<16x512xf32>
    %753 = arith.addf %747, %752 : vector<16x512xf32>
    %754 = vector.extract_strided_slice %753 {offsets = [0, 0], sizes = [16, 128], strides = [1, 1]} : vector<16x512xf32> to vector<16x128xf32>
    %cst_403 = arith.constant 5.000000e-01 : f32
    %755 = vector.broadcast %cst_403 : f32 to vector<16x128xf32>
    %756 = arith.mulf %755, %754 : vector<16x128xf32>
    %757 = math.tanh %756 : vector<16x128xf32>
    %cst_404 = arith.constant 5.000000e-01 : f32
    %758 = vector.broadcast %cst_404 : f32 to vector<16x128xf32>
    %759 = arith.mulf %758, %757 : vector<16x128xf32>
    %cst_405 = arith.constant 5.000000e-01 : f32
    %760 = vector.broadcast %cst_405 : f32 to vector<16x128xf32>
    %761 = arith.addf %759, %760 : vector<16x128xf32>
    %762 = vector.extract_strided_slice %753 {offsets = [0, 128], sizes = [16, 128], strides = [1, 1]} : vector<16x512xf32> to vector<16x128xf32>
    %cst_406 = arith.constant 5.000000e-01 : f32
    %763 = vector.broadcast %cst_406 : f32 to vector<16x128xf32>
    %764 = arith.mulf %763, %762 : vector<16x128xf32>
    %765 = math.tanh %764 : vector<16x128xf32>
    %cst_407 = arith.constant 5.000000e-01 : f32
    %766 = vector.broadcast %cst_407 : f32 to vector<16x128xf32>
    %767 = arith.mulf %766, %765 : vector<16x128xf32>
    %cst_408 = arith.constant 5.000000e-01 : f32
    %768 = vector.broadcast %cst_408 : f32 to vector<16x128xf32>
    %769 = arith.addf %767, %768 : vector<16x128xf32>
    %770 = vector.extract_strided_slice %753 {offsets = [0, 256], sizes = [16, 128], strides = [1, 1]} : vector<16x512xf32> to vector<16x128xf32>
    %771 = math.tanh %770 : vector<16x128xf32>
    %772 = vector.extract_strided_slice %753 {offsets = [0, 384], sizes = [16, 128], strides = [1, 1]} : vector<16x512xf32> to vector<16x128xf32>
    %cst_409 = arith.constant 5.000000e-01 : f32
    %773 = vector.broadcast %cst_409 : f32 to vector<16x128xf32>
    %774 = arith.mulf %773, %772 : vector<16x128xf32>
    %775 = math.tanh %774 : vector<16x128xf32>
    %cst_410 = arith.constant 5.000000e-01 : f32
    %776 = vector.broadcast %cst_410 : f32 to vector<16x128xf32>
    %777 = arith.mulf %776, %775 : vector<16x128xf32>
    %cst_411 = arith.constant 5.000000e-01 : f32
    %778 = vector.broadcast %cst_411 : f32 to vector<16x128xf32>
    %779 = arith.addf %777, %778 : vector<16x128xf32>
    %c1_412 = arith.constant 1 : index
    %c0_413 = arith.constant 0 : index
    %c0_414 = arith.constant 0 : index
    %780 = vector.load %arg22[%c1_412, %c0_413, %c0_414] : memref<2x16x128xf32, #tpu.memory_space<vmem>>, vector<1x16x128xf32>
    %781 = vector.shape_cast %780 : vector<1x16x128xf32> to vector<16x128xf32>
    %782 = arith.mulf %769, %781 : vector<16x128xf32>
    %783 = arith.mulf %761, %771 : vector<16x128xf32>
    %784 = arith.addf %782, %783 : vector<16x128xf32>
    %785 = math.tanh %784 : vector<16x128xf32>
    %786 = arith.mulf %779, %785 : vector<16x128xf32>
    %c1_415 = arith.constant 1 : index
    %c0_416 = arith.constant 0 : index
    %c0_417 = arith.constant 0 : index
    %787 = vector.load %arg22[%c1_415, %c0_416, %c0_417] : memref<2x16x128xf32, #tpu.memory_space<vmem>>, vector<1x16x128xf32>
    %788 = vector.shape_cast %787 : vector<1x16x128xf32> to vector<16x128xf32>
    %789 = vector.shape_cast %784 : vector<16x128xf32> to vector<1x16x128xf32>
    tpu.vector_store %arg22[%c1_415, %c0_416, %c0_417], %789 {strides = array<i32>} : memref<2x16x128xf32, #tpu.memory_space<vmem>>, vector<1x16x128xf32>,
    %c1_418 = arith.constant 1 : index
    %c0_419 = arith.constant 0 : index
    %c0_420 = arith.constant 0 : index
    %790 = vector.load %arg21[%c1_418, %c0_419, %c0_420] : memref<2x16x128xf32, #tpu.memory_space<vmem>>, vector<1x16x128xf32>
    %791 = vector.shape_cast %790 : vector<1x16x128xf32> to vector<16x128xf32>
    %792 = vector.shape_cast %786 : vector<16x128xf32> to vector<1x16x128xf32>
    tpu.vector_store %arg21[%c1_418, %c0_419, %c0_420], %792 {strides = array<i32>} : memref<2x16x128xf32, #tpu.memory_space<vmem>>, vector<1x16x128xf32>,
    %c7_i32_421 = arith.constant 7 : i32
    %c16_i32_422 = arith.constant 16 : i32
    %793 = arith.muli %c7_i32_421, %c16_i32_422 : i32
    %794 = tpu.assume_multiple %793, 16 : i32
    %795 = arith.index_cast %794 : i32 to index
    %c0_423 = arith.constant 0 : index
    %796 = vector.load %arg19[%795, %c0_423] : memref<128x512xbf16, #tpu.memory_space<vmem>>, vector<16x512xbf16>
    %797 = arith.extf %796 : vector<16x512xbf16> to vector<16x512xf32>
    %c1_424 = arith.constant 1 : index
    %c0_425 = arith.constant 0 : index
    %c0_426 = arith.constant 0 : index
    %798 = vector.load %arg21[%c1_424, %c0_425, %c0_426] : memref<2x16x128xf32, #tpu.memory_space<vmem>>, vector<1x16x128xf32>
    %799 = vector.shape_cast %798 : vector<1x16x128xf32> to vector<16x128xf32>
    %800 = arith.truncf %799 : vector<16x128xf32> to vector<16x128xbf16>
    %c0_427 = arith.constant 0 : index
    %c0_428 = arith.constant 0 : index
    %801 = vector.load %arg15[%c0_427, %c0_428] : memref<128x512xbf16, #tpu.memory_space<vmem>>, vector<128x512xbf16>
    %cst_429 = arith.constant dense<0.000000e+00> : vector<16x512xf32>
    %802 = tpu.matmul %800, %801, %cst_429 {dimension_numbers = #tpu.dot_dimension_numbers<[1], [0], [0], [1], [0, 0, 1, 1], [], []>} : vector<16x128xbf16>, vector<128x512xbf16>, vector<16x512xf32> -> vector<16x512xf32>
    %803 = arith.addf %797, %802 : vector<16x512xf32>
    %804 = vector.extract_strided_slice %803 {offsets = [0, 0], sizes = [16, 128], strides = [1, 1]} : vector<16x512xf32> to vector<16x128xf32>
    %cst_430 = arith.constant 5.000000e-01 : f32
    %805 = vector.broadcast %cst_430 : f32 to vector<16x128xf32>
    %806 = arith.mulf %805, %804 : vector<16x128xf32>
    %807 = math.tanh %806 : vector<16x128xf32>
    %cst_431 = arith.constant 5.000000e-01 : f32
    %808 = vector.broadcast %cst_431 : f32 to vector<16x128xf32>
    %809 = arith.mulf %808, %807 : vector<16x128xf32>
    %cst_432 = arith.constant 5.000000e-01 : f32
    %810 = vector.broadcast %cst_432 : f32 to vector<16x128xf32>
    %811 = arith.addf %809, %810 : vector<16x128xf32>
    %812 = vector.extract_strided_slice %803 {offsets = [0, 128], sizes = [16, 128], strides = [1, 1]} : vector<16x512xf32> to vector<16x128xf32>
    %cst_433 = arith.constant 5.000000e-01 : f32
    %813 = vector.broadcast %cst_433 : f32 to vector<16x128xf32>
    %814 = arith.mulf %813, %812 : vector<16x128xf32>
    %815 = math.tanh %814 : vector<16x128xf32>
    %cst_434 = arith.constant 5.000000e-01 : f32
    %816 = vector.broadcast %cst_434 : f32 to vector<16x128xf32>
    %817 = arith.mulf %816, %815 : vector<16x128xf32>
    %cst_435 = arith.constant 5.000000e-01 : f32
    %818 = vector.broadcast %cst_435 : f32 to vector<16x128xf32>
    %819 = arith.addf %817, %818 : vector<16x128xf32>
    %820 = vector.extract_strided_slice %803 {offsets = [0, 256], sizes = [16, 128], strides = [1, 1]} : vector<16x512xf32> to vector<16x128xf32>
    %821 = math.tanh %820 : vector<16x128xf32>
    %822 = vector.extract_strided_slice %803 {offsets = [0, 384], sizes = [16, 128], strides = [1, 1]} : vector<16x512xf32> to vector<16x128xf32>
    %cst_436 = arith.constant 5.000000e-01 : f32
    %823 = vector.broadcast %cst_436 : f32 to vector<16x128xf32>
    %824 = arith.mulf %823, %822 : vector<16x128xf32>
    %825 = math.tanh %824 : vector<16x128xf32>
    %cst_437 = arith.constant 5.000000e-01 : f32
    %826 = vector.broadcast %cst_437 : f32 to vector<16x128xf32>
    %827 = arith.mulf %826, %825 : vector<16x128xf32>
    %cst_438 = arith.constant 5.000000e-01 : f32
    %828 = vector.broadcast %cst_438 : f32 to vector<16x128xf32>
    %829 = arith.addf %827, %828 : vector<16x128xf32>
    %c1_439 = arith.constant 1 : index
    %c0_440 = arith.constant 0 : index
    %c0_441 = arith.constant 0 : index
    %830 = vector.load %arg22[%c1_439, %c0_440, %c0_441] : memref<2x16x128xf32, #tpu.memory_space<vmem>>, vector<1x16x128xf32>
    %831 = vector.shape_cast %830 : vector<1x16x128xf32> to vector<16x128xf32>
    %832 = arith.mulf %819, %831 : vector<16x128xf32>
    %833 = arith.mulf %811, %821 : vector<16x128xf32>
    %834 = arith.addf %832, %833 : vector<16x128xf32>
    %835 = math.tanh %834 : vector<16x128xf32>
    %836 = arith.mulf %829, %835 : vector<16x128xf32>
    %c1_442 = arith.constant 1 : index
    %c0_443 = arith.constant 0 : index
    %c0_444 = arith.constant 0 : index
    %837 = vector.load %arg22[%c1_442, %c0_443, %c0_444] : memref<2x16x128xf32, #tpu.memory_space<vmem>>, vector<1x16x128xf32>
    %838 = vector.shape_cast %837 : vector<1x16x128xf32> to vector<16x128xf32>
    %839 = vector.shape_cast %834 : vector<16x128xf32> to vector<1x16x128xf32>
    tpu.vector_store %arg22[%c1_442, %c0_443, %c0_444], %839 {strides = array<i32>} : memref<2x16x128xf32, #tpu.memory_space<vmem>>, vector<1x16x128xf32>,
    %c1_445 = arith.constant 1 : index
    %c0_446 = arith.constant 0 : index
    %c0_447 = arith.constant 0 : index
    %840 = vector.load %arg21[%c1_445, %c0_446, %c0_447] : memref<2x16x128xf32, #tpu.memory_space<vmem>>, vector<1x16x128xf32>
    %841 = vector.shape_cast %840 : vector<1x16x128xf32> to vector<16x128xf32>
    %842 = vector.shape_cast %836 : vector<16x128xf32> to vector<1x16x128xf32>
    tpu.vector_store %arg21[%c1_445, %c0_446, %c0_447], %842 {strides = array<i32>} : memref<2x16x128xf32, #tpu.memory_space<vmem>>, vector<1x16x128xf32>,
    %c8_i32_448 = arith.constant 8 : i32
    %c0_i32_449 = arith.constant 0 : i32
    %843 = arith.cmpi eq, %arg0, %c0_i32_449 : i32
    %844 = arith.extui %843 : i1 to i32
    %c0_i32_450 = arith.constant 0 : i32
    %845 = arith.cmpi ne, %844, %c0_i32_450 : i32
    scf.if %845 {
      %c1_451 = arith.constant 1 : index
      %c0_452 = arith.constant 0 : index
      %c0_453 = arith.constant 0 : index
      %846 = vector.load %arg21[%c1_451, %c0_452, %c0_453] : memref<2x16x128xf32, #tpu.memory_space<vmem>>, vector<1x16x128xf32>
      %847 = vector.shape_cast %846 : vector<1x16x128xf32> to vector<16x128xf32>
      %848 = arith.truncf %847 : vector<16x128xf32> to vector<16x128xbf16>
      %c0_454 = arith.constant 0 : index
      %c0_455 = arith.constant 0 : index
      %849 = vector.load %arg17[%c0_454, %c0_455] : memref<128x128xbf16, #tpu.memory_space<vmem>>, vector<128x128xbf16>
      %cst_456 = arith.constant dense<0.000000e+00> : vector<16x128xf32>
      %850 = tpu.matmul %848, %849, %cst_456 {dimension_numbers = #tpu.dot_dimension_numbers<[1], [0], [0], [1], [0, 0, 1, 1], [], []>} : vector<16x128xbf16>, vector<128x128xbf16>, vector<16x128xf32> -> vector<16x128xf32>
      %c0_457 = arith.constant 0 : index
      %c0_458 = arith.constant 0 : index
      %851 = vector.load %arg18[%c0_457, %c0_458] : memref<1x128xf32, #tpu.memory_space<vmem>>, vector<1x128xf32>
      %852 = vector.broadcast %851 : vector<1x128xf32> to vector<16x128xf32>
      %853 = arith.addf %850, %852 : vector<16x128xf32>
      %c0_459 = arith.constant 0 : index
      %c0_460 = arith.constant 0 : index
      %854 = vector.load %arg10[%c0_459, %c0_460] : memref<16x128xf32, #tpu.memory_space<vmem>>, vector<16x128xf32>
      tpu.vector_store %arg10[%c0_459, %c0_460], %853 {strides = array<i32>} : memref<16x128xf32, #tpu.memory_space<vmem>>, vector<16x128xf32>,
    } else {
    }
    return
  }
  func.func @transform_0(%arg0: i32) -> (i32, i32) {
    %c0_i32 = arith.constant 0 : i32
    %c0_i32_0 = arith.constant 0 : i32
    return %arg0, %c0_i32 : i32, i32
  }
  func.func @transform_9(%arg0: i32) -> (i32, i32) {
    %c0_i32 = arith.constant 0 : i32
    %c0_i32_0 = arith.constant 0 : i32
    %c0_i32_1 = arith.constant 0 : i32
    return %c0_i32, %c0_i32_0 : i32, i32
  }
}

</mosaic_0001>

<llo_original>
// kernel: tpu_custom_call.1
$region0: #{tpu_custom_call.1}
  #allocation0 [shape = 'u32[]', space=smem, size = 0x4, offset = 0x4, fixed_abs, tag = 'smem constant byte address 0x4 - core index']
  #allocation1 [shape = 'u32[144,128]{1,0:T(1,128)}', space=vmem, size = 0x12000, scoped, tag = 'internal scratch']
  #allocation2 [shape = 'bf16[16,512]{1,0:T(16,128)(2,1)}', space=vmem, size = 0x4000, scoped, tag = 'scratch operand']
  #allocation3 [shape = 'bf16[128,512]{1,0:T(16,128)(2,1)}', space=vmem, size = 0x20000, scoped, tag = 'scratch operand']
  #allocation4 [shape = 'f32[1,512]{1,0:T(1,128)}', space=vmem, size = 0x800, scoped, tag = 'scratch operand']
  #allocation5 [shape = 'bf16[128,512]{1,0:T(16,128)(2,1)}', space=vmem, size = 0x20000, scoped, tag = 'scratch operand']
  #allocation6 [shape = 'bf16[128,512]{1,0:T(16,128)(2,1)}', space=vmem, size = 0x20000, scoped, tag = 'scratch operand']
  #allocation7 [shape = 'f32[1,512]{1,0:T(1,128)}', space=vmem, size = 0x800, scoped, tag = 'scratch operand']
  #allocation8 [shape = 'bf16[128,128]{1,0:T(16,128)(2,1)}', space=vmem, size = 0x8000, scoped, tag = 'scratch operand']
  #allocation9 [shape = 'f32[1,128]{1,0:T(1,128)}', space=vmem, size = 0x200, scoped, tag = 'scratch operand']
  #allocation10 [shape = 'bf16[128,512]{1,0:T(16,128)(2,1)}', space=vmem, size = 0x20000, scoped, tag = 'scratch operand']
  #allocation11 [shape = 'bf16[128,128]{1,0:T(16,128)(2,1)}', space=vmem, size = 0x8000, scoped, tag = 'scratch operand']
  #allocation12 [shape = 'f32[2,16,128]{2,1,0:T(8,128)}', space=vmem, size = 0x4000, scoped, tag = 'scratch operand']
  #allocation13 [shape = 'f32[2,16,128]{2,1,0:T(8,128)}', space=vmem, size = 0x4000, scoped, tag = 'scratch operand']
  #allocation14 [shape = 's32[8]{0}', space=sflag, size = 0x20, scoped, tag = 'scratch operand']
  #allocation17 [shape = 's32[]', space=sflag, size = 0x4, offset = 0, fixed_abs, tag = 'sflag constant byte address 0x0 - dummy sync flag']
  #allocation18 [shape = 's32[]', space=sflag, size = 0x4, offset = 0, fixed_abs, tag = 'sflag constant byte address 0x0 - dummy sync flag']
  #allocation20 [shape = 's32[]', space=sflag, size = 0x4, offset = 0, fixed_abs, tag = 'sflag constant byte address 0x0 - dummy sync flag']
  #allocation21 [shape = 's32[]', space=sflag, size = 0x4, offset = 0, fixed_abs, tag = 'sflag constant byte address 0x0 - dummy sync flag']
  #allocation22 [shape = 'u32[]', space=smem, size = 0x4, offset = 0x44, fixed_abs, tag = 'smem constant byte address 0x44 - assertion arg 0']
  #allocation23 [shape = 'u32[]', space=smem, size = 0x4, offset = 0x48, fixed_abs, tag = 'smem constant byte address 0x48 - assertion arg 1']
  #allocation24 [shape = 's32[]', space=sflag, size = 0x4, offset = 0, fixed_abs, tag = 'sflag constant byte address 0x0 - dummy sync flag']
  #allocation26 [shape = 's32[]', space=sflag, size = 0x4, offset = 0, fixed_abs, tag = 'sflag constant byte address 0x0 - dummy sync flag']
  #allocation28 [shape = 's32[]', space=sflag, size = 0x4, offset = 0, fixed_abs, tag = 'sflag constant byte address 0x0 - dummy sync flag']
  #allocation29 [shape = 's32[]', space=sflag, size = 0x4, offset = 0, fixed_abs, tag = 'sflag constant byte address 0x0 - dummy sync flag']
  #allocation30 [shape = 's32[]', space=sflag, size = 0x4, offset = 0, fixed_abs, tag = 'sflag constant byte address 0x0 - dummy sync flag']
  #allocation31 [shape = 's32[]', space=sflag, size = 0x4, offset = 0, fixed_abs, tag = 'sflag constant byte address 0x0 - dummy sync flag']
  %s0 = inlined_call_operand.vmem [shape: bf16[128,16], index: 0, kind: input, shape index: {}]
  %s1 = inlined_call_operand.vmem [shape: bf16[16,512], index: 1, kind: input, shape index: {}]
  %s2 = inlined_call_operand.hbm [shape: bf16[128,512], index: 2, kind: input, shape index: {}]
  %s3 = inlined_call_operand.hbm [shape: f32[1,512], index: 3, kind: input, shape index: {}]
  %s4 = inlined_call_operand.hbm [shape: bf16[128,512], index: 4, kind: input, shape index: {}]
  %s5 = inlined_call_operand.hbm [shape: bf16[128,512], index: 5, kind: input, shape index: {}]
  %s6 = inlined_call_operand.hbm [shape: f32[1,512], index: 6, kind: input, shape index: {}]
  %s7 = inlined_call_operand.vmem [shape: bf16[128,128], index: 7, kind: input, shape index: {}]
  %s8 = inlined_call_operand.vmem [shape: f32[1,128], index: 8, kind: input, shape index: {}]
  %s9 = inlined_call_operand.hbm [shape: f32[16,128], index: 9, kind: output, shape index: {}]
  %s10 = sld [smem:[#allocation0]]
  $region131: #{tpu_custom_call.1} parent=0
    _
  %s12 = ssub.s32 1, %s10
  %s13 = scalar_select 0, %s12, %s10
  $region1: #{tpu_custom_call.1} parent=0
    #allocation15 [shape = 'u8[8192]{0}', space=vmem, size = 0x2000, scoped, tag = 'output window, operand 0, single buffered']
    #allocation16 [shape = 's32[1]{0}', space=sflag, size = 0x4, scoped, tag = 'scoped memory for tpu_custom_call.1']
    %14 = vsyncpa [#allocation16], 0
    // Predicated region
    $region2: #{tpu_custom_call.1} parent=1 // pred_check
      _
    $region3: #{tpu_custom_call.1} parent=1 // pred_check_branch
      %16 = sbr.rel (0) target = $region5
    $region4: #{tpu_custom_call.1} parent=1 // pred_region
      _
    $region5: #{tpu_custom_call.1} parent=1 // pred_fallthru
      _
    %p18 = scmp.eq.s32.totalorder 0, 0
    // Predicated region
    $region6: #{tpu_custom_call.1} parent=1 // pred_check
      %p19 = pneg %p18
    $region7: #{tpu_custom_call.1} parent=1 // pred_check_branch
      %21 = sbr.rel (%p19) target = $region9
    $region8: #{tpu_custom_call.1} parent=1 // pred_region
      #allocation19 [shape = 'u32[9]{0}', space=smem, size = 0x24, scoped, tag = 'DMA stride descriptor']
      #allocation25 [shape = 'u32[9]{0}', space=smem, size = 0x24, scoped, tag = 'DMA stride descriptor']
      #allocation27 [shape = 'u32[9]{0}', space=smem, size = 0x24, scoped, tag = 'DMA stride descriptor']
      %p23 = scmp.lt.u32.totalorder 4, 8
      %p24 = pneg %p23
      // Predicated region
      $region10: #{tpu_custom_call.1} parent=8 // pred_check
        _
      $region11: #{tpu_custom_call.1} parent=8 // pred_check_branch
        %26 = sbr.rel (%p23) target = $region13
      $region12: #{tpu_custom_call.1} parent=8 // pred_region
        %s55 = sand.u32 4, 7
        %p56 = scmp.eq.s32.totalorder %s55, 0
        %p57 = pneg %p56
        // Predicated region
        $region25: #{tpu_custom_call.1} parent=12 // pred_check
          _
        $region26: #{tpu_custom_call.1} parent=12 // pred_check_branch
          %59 = sbr.rel (%p56) target = $region28
        $region27: #{tpu_custom_call.1} parent=12 // pred_region
          %s60 = sand.u32 4, 7
          %s61 = ssub.s32 4, %s60
          %s62 = scalar_lea.vmem %s1, %s61
          %s63 = ssub.s32 4, %s60
          %s64 = scalar_lea.vmem [#allocation2], %s63
          loop: start=0, step=1, limit=1
          $region29: #{tpu_custom_call.1} parent=27 // loop_pre_header
            _
          $region30: #{tpu_custom_call.1} parent=27 // loop_header
            %s66 = sphi 0, %s70
            %p67 = scmp.ge.s32.totalorder %s66, 1
            %s71 = sphi %s1, %s1
            %s72 = sphi [#allocation2], [#allocation2]
          $region31: #{tpu_custom_call.1} parent=27 // loop_header_branch
            %69 = sbr.rel (%p67) target = $region35
          $region32: #{tpu_custom_call.1} parent=27 // loop_body
            _
          $region33: #{tpu_custom_call.1} parent=27 // loop_footer
            %s70 = sadd.s32 1, %s66
          $region34: #{tpu_custom_call.1} parent=27 // loop_footer_branch
            %65 = sbr.rel target = $region30
          $region35: #{tpu_custom_call.1} parent=27 // loop_exit
            _
          %s73 = sshllo.u32 0, %s60
          loop: start=0, step=1, limit=1
          $region36: #{tpu_custom_call.1} parent=27 // loop_pre_header
            _
          $region37: #{tpu_custom_call.1} parent=27 // loop_header
            %s75 = sphi 0, %s79
            %p76 = scmp.ge.s32.totalorder %s75, 1
            %s80 = sphi %s62, %s62
            %s81 = sphi %s64, %s64
          $region38: #{tpu_custom_call.1} parent=27 // loop_header_branch
            %78 = sbr.rel (%p76) target = $region42
          $region39: #{tpu_custom_call.1} parent=27 // loop_body
            %v82 = vld [vmem:[%s80] sm:%s73]
            %83 = vst [vmem:[%s81] sm:%s73] %v82
            %v84 = vld [vmem:[%s80 + $0x10] sm:%s73]
            %85 = vst [vmem:[%s81 + $0x4] sm:%s73] %v84
            %v86 = vld [vmem:[%s80 + $0x4] sm:%s73]
            %87 = vst [vmem:[%s81 + $0x8] sm:%s73] %v86
            %v88 = vld [vmem:[%s80 + $0x14] sm:%s73]
            %89 = vst [vmem:[%s81 + $0xc] sm:%s73] %v88
            %v90 = vld [vmem:[%s80 + $0x8] sm:%s73]
            %91 = vst [vmem:[%s81 + $0x10] sm:%s73] %v90
            %v92 = vld [vmem:[%s80 + $0x18] sm:%s73]
            %93 = vst [vmem:[%s81 + $0x14] sm:%s73] %v92
            %v94 = vld [vmem:[%s80 + $0xc] sm:%s73]
            %95 = vst [vmem:[%s81 + $0x18] sm:%s73] %v94
            %v96 = vld [vmem:[%s80 + $0x1c] sm:%s73]
            %97 = vst [vmem:[%s81 + $0x1c] sm:%s73] %v96
          $region40: #{tpu_custom_call.1} parent=27 // loop_footer
            %s79 = sadd.s32 1, %s75
          $region41: #{tpu_custom_call.1} parent=27 // loop_footer_branch
            %74 = sbr.rel target = $region37
          $region42: #{tpu_custom_call.1} parent=27 // loop_exit
            _
        $region28: #{tpu_custom_call.1} parent=12 // pred_fallthru
          _
      $region13: #{tpu_custom_call.1} parent=8 // pred_fallthru
        _
      // Predicated region
      $region14: #{tpu_custom_call.1} parent=8 // pred_check
        %p27 = pneg %p23
      $region15: #{tpu_custom_call.1} parent=8 // pred_check_branch
        %29 = sbr.rel (%p27) target = $region17
      $region16: #{tpu_custom_call.1} parent=8 // pred_region
        %s30 = sshllo.u32 0, 4
        loop: start=0, step=1, limit=1
        $region18: #{tpu_custom_call.1} parent=16 // loop_pre_header
          _
        $region19: #{tpu_custom_call.1} parent=16 // loop_header
          %s32 = sphi 0, %s36
          %p33 = scmp.ge.s32.totalorder %s32, 1
          %s37 = sphi %s1, %s1
          %s38 = sphi [#allocation2], [#allocation2]
        $region20: #{tpu_custom_call.1} parent=16 // loop_header_branch
          %35 = sbr.rel (%p33) target = $region24
        $region21: #{tpu_custom_call.1} parent=16 // loop_body
          %v39 = vld [vmem:[%s37] sm:%s30]
          %40 = vst [vmem:[%s38] sm:%s30] %v39
          %v41 = vld [vmem:[%s37 + $0x10] sm:%s30]
          %42 = vst [vmem:[%s38 + $0x4] sm:%s30] %v41
          %v43 = vld [vmem:[%s37 + $0x4] sm:%s30]
          %44 = vst [vmem:[%s38 + $0x8] sm:%s30] %v43
          %v45 = vld [vmem:[%s37 + $0x14] sm:%s30]
          %46 = vst [vmem:[%s38 + $0xc] sm:%s30] %v45
          %v47 = vld [vmem:[%s37 + $0x8] sm:%s30]
          %48 = vst [vmem:[%s38 + $0x10] sm:%s30] %v47
          %v49 = vld [vmem:[%s37 + $0x18] sm:%s30]
          %50 = vst [vmem:[%s38 + $0x14] sm:%s30] %v49
          %v51 = vld [vmem:[%s37 + $0xc] sm:%s30]
          %52 = vst [vmem:[%s38 + $0x18] sm:%s30] %v51
          %v53 = vld [vmem:[%s37 + $0x1c] sm:%s30]
          %54 = vst [vmem:[%s38 + $0x1c] sm:%s30] %v53
        $region22: #{tpu_custom_call.1} parent=16 // loop_footer
          %s36 = sadd.s32 1, %s32
        $region23: #{tpu_custom_call.1} parent=16 // loop_footer_branch
          %31 = sbr.rel target = $region19
        $region24: #{tpu_custom_call.1} parent=16 // loop_exit
          _
      $region17: #{tpu_custom_call.1} parent=8 // pred_fallthru
        _
      // Predicated region
      $region43: #{tpu_custom_call.1} parent=8 // pred_check
        _
      $region44: #{tpu_custom_call.1} parent=8 // pred_check_branch
        %100 = sbr.rel (0) target = $region46
      $region45: #{tpu_custom_call.1} parent=8 // pred_region
        %101 = vsyncadd [#allocation14], 512
      $region46: #{tpu_custom_call.1} parent=8 // pred_fallthru
        _
      %s102 = scalar_lea.sflag [#allocation14], 1
      %s104 = sshll.u32 1, 14
      %s105 = sxor.u32 4294967295, %s104
      %s107 = sld [smem:[#allocation0]]
      %s108 = sadd.s32 2, %s107
      %s110 = sshll.u32 7, 26
      %s111 = sxor.u32 4294967295, %s110
      %s112 = sand.u32 0, %s111
      %s113 = sshll.u32 %s108, 26
      %s114 = sor.u32 %s112, %s113
      %s115 = sshll.u32 [#allocation3], 4
      %s116 = int_to_ptr.vmem [resolvable:$true] %s115
      %119 = sst [smem:[#allocation19]] 512
      %s120 = scalar_lea.smem [#allocation19], 1
      %121 = sst [smem:[%s120]] 512
      %s122 = scalar_lea.smem [#allocation19], 2
      %123 = sst [smem:[%s122]] 4
      %s124 = scalar_lea.smem [#allocation19], 3
      %125 = sst [smem:[%s124]] 64
      %s126 = scalar_lea.smem [#allocation19], 4
      %127 = sst [smem:[%s126]] 128
      %s128 = scalar_lea.smem [#allocation19], 5
      %129 = sst [smem:[%s128]] 2
      %s130 = scalar_lea.smem [#allocation19], 6
      %131 = sst [smem:[%s130]] 256
      %s132 = scalar_lea.smem [#allocation19], 7
      %133 = sst [smem:[%s132]] 64
      %s134 = scalar_lea.smem [#allocation19], 8
      %135 = sst [smem:[%s134]] 4
      %137 = dma.general %s2, 4096, %s116, %s102, [#allocation18], [#allocation19], %s114, 0
      %s138 = scalar_lea.sflag [#allocation14], 2
      // Predicated region
      $region47: #{tpu_custom_call.1} parent=8 // pred_check
        _
      $region48: #{tpu_custom_call.1} parent=8 // pred_check_branch
        %140 = sbr.rel target = $region50
      $region49: #{tpu_custom_call.1} parent=8 // pred_region
        %141 = sst [smem:[#allocation22]] [#allocation21]
        %142 = sst [smem:[#allocation23]] [#allocation20]
      $region50: #{tpu_custom_call.1} parent=8 // pred_fallthru
        _
      %144 = shalt.err (0)
      %s146 = sshll.u32 [#allocation4], 4
      %s147 = int_to_ptr.vmem [resolvable:$true] %s146
      %149 = dma.hbm_to_vmem [thread:$0]  %s3, 64, %s147, %s138
      %s150 = scalar_lea.sflag [#allocation14], 3
      %s152 = sshll.u32 1, 14
      %s153 = sxor.u32 4294967295, %s152
      %s155 = sadd.s32 2, %s107
      %s157 = sshll.u32 7, 26
      %s158 = sxor.u32 4294967295, %s157
      %s159 = sand.u32 0, %s158
      %s160 = sshll.u32 %s155, 26
      %s161 = sor.u32 %s159, %s160
      %s162 = sshll.u32 [#allocation5], 4
      %s163 = int_to_ptr.vmem [resolvable:$true] %s162
      %166 = sst [smem:[#allocation25]] 512
      %s167 = scalar_lea.smem [#allocation25], 1
      %168 = sst [smem:[%s167]] 512
      %s169 = scalar_lea.smem [#allocation25], 2
      %170 = sst [smem:[%s169]] 4
      %s171 = scalar_lea.smem [#allocation25], 3
      %172 = sst [smem:[%s171]] 64
      %s173 = scalar_lea.smem [#allocation25], 4
      %174 = sst [smem:[%s173]] 128
      %s175 = scalar_lea.smem [#allocation25], 5
      %176 = sst [smem:[%s175]] 2
      %s177 = scalar_lea.smem [#allocation25], 6
      %178 = sst [smem:[%s177]] 256
      %s179 = scalar_lea.smem [#allocation25], 7
      %180 = sst [smem:[%s179]] 64
      %s181 = scalar_lea.smem [#allocation25], 8
      %182 = sst [smem:[%s181]] 4
      %184 = dma.general %s4, 4096, %s163, %s150, [#allocation24], [#allocation25], %s161, 0
      %s185 = scalar_lea.sflag [#allocation14], 4
      %s187 = sshll.u32 1, 14
      %s188 = sxor.u32 4294967295, %s187
      %s190 = sadd.s32 2, %s107
      %s192 = sshll.u32 7, 26
      %s193 = sxor.u32 4294967295, %s192
      %s194 = sand.u32 0, %s193
      %s195 = sshll.u32 %s190, 26
      %s196 = sor.u32 %s194, %s195
      %s197 = sshll.u32 [#allocation6], 4
      %s198 = int_to_ptr.vmem [resolvable:$true] %s197
      %201 = sst [smem:[#allocation27]] 512
      %s202 = scalar_lea.smem [#allocation27], 1
      %203 = sst [smem:[%s202]] 512
      %s204 = scalar_lea.smem [#allocation27], 2
      %205 = sst [smem:[%s204]] 4
      %s206 = scalar_lea.smem [#allocation27], 3
      %207 = sst [smem:[%s206]] 64
      %s208 = scalar_lea.smem [#allocation27], 4
      %209 = sst [smem:[%s208]] 128
      %s210 = scalar_lea.smem [#allocation27], 5
      %211 = sst [smem:[%s210]] 2
      %s212 = scalar_lea.smem [#allocation27], 6
      %213 = sst [smem:[%s212]] 256
      %s214 = scalar_lea.smem [#allocation27], 7
      %215 = sst [smem:[%s214]] 64
      %s216 = scalar_lea.smem [#allocation27], 8
      %217 = sst [smem:[%s216]] 4
      %219 = dma.general %s5, 4096, %s198, %s185, [#allocation26], [#allocation27], %s196, 0
      %s220 = scalar_lea.sflag [#allocation14], 5
      // Predicated region
      $region51: #{tpu_custom_call.1} parent=8 // pred_check
        _
      $region52: #{tpu_custom_call.1} parent=8 // pred_check_branch
        %222 = sbr.rel target = $region54
      $region53: #{tpu_custom_call.1} parent=8 // pred_region
        %223 = sst [smem:[#allocation22]] [#allocation29]
        %224 = sst [smem:[#allocation23]] [#allocation28]
      $region54: #{tpu_custom_call.1} parent=8 // pred_fallthru
        _
      %226 = shalt.err (0)
      %s228 = sshll.u32 [#allocation7], 4
      %s229 = int_to_ptr.vmem [resolvable:$true] %s228
      %231 = dma.hbm_to_vmem [thread:$0]  %s6, 64, %s229, %s220
      %s232 = scalar_lea.sflag [#allocation14], 6
      %p234 = scmp.lt.u32.totalorder 64, 8
      %p235 = pneg %p234
      // Predicated region
      $region55: #{tpu_custom_call.1} parent=8 // pred_check
        _
      $region56: #{tpu_custom_call.1} parent=8 // pred_check_branch
        %237 = sbr.rel (%p234) target = $region58
      $region57: #{tpu_custom_call.1} parent=8 // pred_region
        %s252 = sand.u32 64, 7
        %p253 = scmp.eq.s32.totalorder %s252, 0
        // Predicated region
        $region70: #{tpu_custom_call.1} parent=57 // pred_check
          %p254 = pneg %p253
        $region71: #{tpu_custom_call.1} parent=57 // pred_check_branch
          %256 = sbr.rel (%p254) target = $region73
        $region72: #{tpu_custom_call.1} parent=57 // pred_region
          loop: start=0, step=1, limit=1
          $region74: #{tpu_custom_call.1} parent=72 // loop_pre_header
            _
          $region75: #{tpu_custom_call.1} parent=72 // loop_header
            %s258 = sphi 0, %s262
            %p259 = scmp.ge.s32.totalorder %s258, 1
            %s263 = sphi %s7, %s7
            %s264 = sphi [#allocation8], [#allocation8]
          $region76: #{tpu_custom_call.1} parent=72 // loop_header_branch
            %261 = sbr.rel (%p259) target = $region80
          $region77: #{tpu_custom_call.1} parent=72 // loop_body
            %v265 = vld [vmem:[%s263] sm:$0xff]
            %266 = vst [vmem:[%s264] sm:$0xff] %v265
            %v267 = vld [vmem:[%s263 + $0x8] sm:$0xff]
            %268 = vst [vmem:[%s264 + $0x8] sm:$0xff] %v267
            %v269 = vld [vmem:[%s263 + $0x10] sm:$0xff]
            %270 = vst [vmem:[%s264 + $0x10] sm:$0xff] %v269
            %v271 = vld [vmem:[%s263 + $0x18] sm:$0xff]
            %272 = vst [vmem:[%s264 + $0x18] sm:$0xff] %v271
            %v273 = vld [vmem:[%s263 + $0x20] sm:$0xff]
            %274 = vst [vmem:[%s264 + $0x20] sm:$0xff] %v273
            %v275 = vld [vmem:[%s263 + $0x28] sm:$0xff]
            %276 = vst [vmem:[%s264 + $0x28] sm:$0xff] %v275
            %v277 = vld [vmem:[%s263 + $0x30] sm:$0xff]
            %278 = vst [vmem:[%s264 + $0x30] sm:$0xff] %v277
            %v279 = vld [vmem:[%s263 + $0x38] sm:$0xff]
            %280 = vst [vmem:[%s264 + $0x38] sm:$0xff] %v279
          $region78: #{tpu_custom_call.1} parent=72 // loop_footer
            %s262 = sadd.s32 1, %s258
          $region79: #{tpu_custom_call.1} parent=72 // loop_footer_branch
            %257 = sbr.rel target = $region75
          $region80: #{tpu_custom_call.1} parent=72 // loop_exit
            _
        $region73: #{tpu_custom_call.1} parent=57 // pred_fallthru
          _
        %p281 = pneg %p253
        // Predicated region
        $region81: #{tpu_custom_call.1} parent=57 // pred_check
          _
        $region82: #{tpu_custom_call.1} parent=57 // pred_check_branch
          %283 = sbr.rel (%p253) target = $region84
        $region83: #{tpu_custom_call.1} parent=57 // pred_region
          %s284 = sand.u32 64, 7
        $region84: #{tpu_custom_call.1} parent=57 // pred_fallthru
          _
      $region58: #{tpu_custom_call.1} parent=8 // pred_fallthru
        _
      // Predicated region
      $region59: #{tpu_custom_call.1} parent=8 // pred_check
        %p238 = pneg %p234
      $region60: #{tpu_custom_call.1} parent=8 // pred_check_branch
        %240 = sbr.rel (%p238) target = $region62
      $region61: #{tpu_custom_call.1} parent=8 // pred_region
        %s241 = sshllo.u32 0, 64
        loop: start=0, step=1, limit=1
        $region63: #{tpu_custom_call.1} parent=61 // loop_pre_header
          _
        $region64: #{tpu_custom_call.1} parent=61 // loop_header
          %s243 = sphi 0, %s247
          %p244 = scmp.ge.s32.totalorder %s243, 1
          %s248 = sphi %s7, %s7
          %s249 = sphi [#allocation8], [#allocation8]
        $region65: #{tpu_custom_call.1} parent=61 // loop_header_branch
          %246 = sbr.rel (%p244) target = $region69
        $region66: #{tpu_custom_call.1} parent=61 // loop_body
          %v250 = vld [vmem:[%s248] sm:%s241]
          %251 = vst [vmem:[%s249] sm:%s241] %v250
        $region67: #{tpu_custom_call.1} parent=61 // loop_footer
          %s247 = sadd.s32 1, %s243
        $region68: #{tpu_custom_call.1} parent=61 // loop_footer_branch
          %242 = sbr.rel target = $region64
        $region69: #{tpu_custom_call.1} parent=61 // loop_exit
          _
      $region62: #{tpu_custom_call.1} parent=8 // pred_fallthru
        _
      // Predicated region
      $region85: #{tpu_custom_call.1} parent=8 // pred_check
        _
      $region86: #{tpu_custom_call.1} parent=8 // pred_check_branch
        %287 = sbr.rel (0) target = $region88
      $region87: #{tpu_custom_call.1} parent=8 // pred_region
        %288 = vsyncadd %s232, 1024
      $region88: #{tpu_custom_call.1} parent=8 // pred_fallthru
        _
      %s289 = scalar_lea.sflag [#allocation14], 7
      %p291 = scmp.lt.u32.totalorder 1, 8
      %p292 = pneg %p291
      // Predicated region
      $region89: #{tpu_custom_call.1} parent=8 // pred_check
        _
      $region90: #{tpu_custom_call.1} parent=8 // pred_check_branch
        %294 = sbr.rel (%p291) target = $region92
      $region91: #{tpu_custom_call.1} parent=8 // pred_region
        %s309 = sand.u32 1, 7
        %p310 = scmp.eq.s32.totalorder %s309, 0
        %p311 = pneg %p310
        // Predicated region
        $region104: #{tpu_custom_call.1} parent=91 // pred_check
          _
        $region105: #{tpu_custom_call.1} parent=91 // pred_check_branch
          %313 = sbr.rel (%p310) target = $region107
        $region106: #{tpu_custom_call.1} parent=91 // pred_region
          %s314 = sand.u32 1, 7
          %s315 = ssub.s32 1, %s314
          %s316 = scalar_lea.vmem %s8, %s315
          %s317 = ssub.s32 1, %s314
          %s318 = scalar_lea.vmem [#allocation9], %s317
          %s319 = sshllo.u32 0, %s314
          loop: start=0, step=1, limit=1
          $region108: #{tpu_custom_call.1} parent=106 // loop_pre_header
            _
          $region109: #{tpu_custom_call.1} parent=106 // loop_header
            %s321 = sphi 0, %s325
            %p322 = scmp.ge.s32.totalorder %s321, 1
            %s326 = sphi %s316, %s316
            %s327 = sphi %s318, %s318
          $region110: #{tpu_custom_call.1} parent=106 // loop_header_branch
            %324 = sbr.rel (%p322) target = $region114
          $region111: #{tpu_custom_call.1} parent=106 // loop_body
            %v328 = vld [vmem:[%s326] sm:%s319]
            %329 = vst [vmem:[%s327] sm:%s319] %v328
          $region112: #{tpu_custom_call.1} parent=106 // loop_footer
            %s325 = sadd.s32 1, %s321
          $region113: #{tpu_custom_call.1} parent=106 // loop_footer_branch
            %320 = sbr.rel target = $region109
          $region114: #{tpu_custom_call.1} parent=106 // loop_exit
            _
        $region107: #{tpu_custom_call.1} parent=91 // pred_fallthru
          _
      $region92: #{tpu_custom_call.1} parent=8 // pred_fallthru
        _
      // Predicated region
      $region93: #{tpu_custom_call.1} parent=8 // pred_check
        %p295 = pneg %p291
      $region94: #{tpu_custom_call.1} parent=8 // pred_check_branch
        %297 = sbr.rel (%p295) target = $region96
      $region95: #{tpu_custom_call.1} parent=8 // pred_region
        %s298 = sshllo.u32 0, 1
        loop: start=0, step=1, limit=1
        $region97: #{tpu_custom_call.1} parent=95 // loop_pre_header
          _
        $region98: #{tpu_custom_call.1} parent=95 // loop_header
          %s300 = sphi 0, %s304
          %p301 = scmp.ge.s32.totalorder %s300, 1
          %s305 = sphi %s8, %s8
          %s306 = sphi [#allocation9], [#allocation9]
        $region99: #{tpu_custom_call.1} parent=95 // loop_header_branch
          %303 = sbr.rel (%p301) target = $region103
        $region100: #{tpu_custom_call.1} parent=95 // loop_body
          %v307 = vld [vmem:[%s305] sm:%s298]
          %308 = vst [vmem:[%s306] sm:%s298] %v307
        $region101: #{tpu_custom_call.1} parent=95 // loop_footer
          %s304 = sadd.s32 1, %s300
        $region102: #{tpu_custom_call.1} parent=95 // loop_footer_branch
          %299 = sbr.rel target = $region98
        $region103: #{tpu_custom_call.1} parent=95 // loop_exit
          _
      $region96: #{tpu_custom_call.1} parent=8 // pred_fallthru
        _
      // Predicated region
      $region115: #{tpu_custom_call.1} parent=8 // pred_check
        _
      $region116: #{tpu_custom_call.1} parent=8 // pred_check_branch
        %332 = sbr.rel (0) target = $region118
      $region117: #{tpu_custom_call.1} parent=8 // pred_region
        %333 = vsyncadd %s289, 16
      $region118: #{tpu_custom_call.1} parent=8 // pred_fallthru
        _
      %334 = vst [vmem:[#allocation12] sm:$0xff] 0.0
      %335 = vst [vmem:[#allocation12 + $0x8] sm:$0xff] 0.0
      %336 = vst [vmem:[#allocation12 + $0x10] sm:$0xff] 0.0
      %337 = vst [vmem:[#allocation12 + $0x18] sm:$0xff] 0.0
      %338 = vst [vmem:[#allocation13] sm:$0xff] 0.0
      %339 = vst [vmem:[#allocation13 + $0x8] sm:$0xff] 0.0
      %340 = vst [vmem:[#allocation13 + $0x10] sm:$0xff] 0.0
      %341 = vst [vmem:[#allocation13 + $0x18] sm:$0xff] 0.0
      %342 = vst [vmem:[#allocation11] sm:$0xff] 0
      %343 = vst [vmem:[#allocation11 + $0x8] sm:$0xff] 0
      %344 = vst [vmem:[#allocation11 + $0x10] sm:$0xff] 0
      %345 = vst [vmem:[#allocation11 + $0x18] sm:$0xff] 0
      %346 = vst [vmem:[#allocation11 + $0x20] sm:$0xff] 0
      %347 = vst [vmem:[#allocation11 + $0x28] sm:$0xff] 0
      %348 = vst [vmem:[#allocation11 + $0x30] sm:$0xff] 0
      %349 = vst [vmem:[#allocation11 + $0x38] sm:$0xff] 0
      %s350 = smul.u32 4, 2
      %s351 = smul.u32 %s350, 4
      %s352 = sshll.u32 %s351, 4
      %353 = dma.done [#allocation14], %s352
      %s354 = smul.u32 4, 16
      %s355 = smul.u32 %s354, 4
      %s356 = sshll.u32 %s355, 4
      %357 = dma.done %s102, %s356
      %s358 = smul.u32 1, 4
      %s359 = sshll.u32 %s358, 4
      %360 = dma.done %s138, %s359
      %s361 = sshll.u32 %s355, 4
      %362 = dma.done %s150, %s361
      %s363 = sshll.u32 %s355, 4
      %364 = dma.done %s185, %s363
      %s365 = sshll.u32 %s358, 4
      %366 = dma.done %s220, %s365
      %s367 = smul.u32 %s354, 1
      %s368 = sshll.u32 %s367, 4
      %369 = dma.done %s232, %s368
      %s370 = smul.u32 1, 1
      %s371 = sshll.u32 %s370, 4
      %372 = dma.done %s289, %s371
    $region9: #{tpu_custom_call.1} parent=1 // pred_fallthru
      _
    %v373 = vld [vmem:[%s0] sm:$0xf]
    %v374 = vld [vmem:[%s0 + $0x4] sm:$0xf]
    %v375 = vld [vmem:[%s0 + $0x8] sm:$0xf]
    %v376 = vld [vmem:[%s0 + $0xc] sm:$0xf]
    %v377 = vld [vmem:[%s0 + $0x10] sm:$0xf]
    %v378 = vld [vmem:[%s0 + $0x14] sm:$0xf]
    %v379 = vld [vmem:[%s0 + $0x18] sm:$0xf]
    %v380 = vld [vmem:[%s0 + $0x1c] sm:$0xf]
    %v381 = vld [vmem:[%s0 + $0x20] sm:$0xf]
    %v382 = vld [vmem:[%s0 + $0x24] sm:$0xf]
    %v383 = vld [vmem:[%s0 + $0x28] sm:$0xf]
    %v384 = vld [vmem:[%s0 + $0x2c] sm:$0xf]
    %v385 = vld [vmem:[%s0 + $0x30] sm:$0xf]
    %v386 = vld [vmem:[%s0 + $0x34] sm:$0xf]
    %v387 = vld [vmem:[%s0 + $0x38] sm:$0xf]
    %v388 = vld [vmem:[%s0 + $0x3c] sm:$0xf]
    %v389 = vld [vmem:[#allocation2] sm:$0xff]
    %v390 = vld [vmem:[#allocation2 + $0x8] sm:$0xff]
    %v391 = vld [vmem:[#allocation2 + $0x10] sm:$0xff]
    %v392 = vld [vmem:[#allocation2 + $0x18] sm:$0xff]
    %v393 = vld [vmem:[#allocation4] sm:$0xf]
    %v395 = vlaneseq
    %v396 = vshrl.u32 %v395, 7
    %v397 = vsub.s32 0, %v396
    %v398 = vrot.slane %v393, %v397
    %v399 = vlaneseq
    %v400 = vshrl.u32 %v399, 7
    %v401 = vsub.s32 1, %v400
    %v402 = vrot.slane %v393, %v401
    %v403 = vlaneseq
    %v404 = vshrl.u32 %v403, 7
    %v405 = vsub.s32 2, %v404
    %v406 = vrot.slane %v393, %v405
    %v407 = vlaneseq
    %v408 = vshrl.u32 %v407, 7
    %v409 = vsub.s32 3, %v408
    %v410 = vrot.slane %v393, %v409
    %v431 = vunpack.c.l.b16 %v373
    %v432 = vunpack.c.l.b16 %v374
    %v433 = vunpack.c.l.b16 %v375
    %v434 = vunpack.c.l.b16 %v376
    %v435 = vunpack.c.l.b16 %v377
    %v436 = vunpack.c.l.b16 %v378
    %v437 = vunpack.c.l.b16 %v379
    %v438 = vunpack.c.l.b16 %v380
    %v439 = vunpack.c.l.b16 %v381
    %v440 = vunpack.c.l.b16 %v382
    %v441 = vunpack.c.l.b16 %v383
    %v442 = vunpack.c.l.b16 %v384
    %v443 = vunpack.c.l.b16 %v385
    %v444 = vunpack.c.l.b16 %v386
    %v445 = vunpack.c.l.b16 %v387
    %v446 = vunpack.c.l.b16 %v388
    %v447 = vpack.c.b16 %v432, %v431
    %v448 = vpack.c.b16 %v434, %v433
    %v449 = vpack.c.b16 %v436, %v435
    %v450 = vpack.c.b16 %v438, %v437
    %v451 = vpack.c.b16 %v440, %v439
    %v452 = vpack.c.b16 %v442, %v441
    %v453 = vpack.c.b16 %v444, %v443
    %v454 = vpack.c.b16 %v446, %v445
    %vm455 = vcmask 130048
    %v457 = vsel %vm455, %v447, 0
    %v460 = vsel %vm455, %v448, 0
    %v463 = vsel %vm455, %v449, 0
    %v466 = vsel %vm455, %v450, 0
    %v469 = vsel %vm455, %v451, 0
    %v472 = vsel %vm455, %v452, 0
    %v475 = vsel %vm455, %v453, 0
    %v478 = vsel %vm455, %v454, 0
    %480 = vmatprep.subr.bf16.mxu0 %v390
    %481 = vmatpush1.bf16.msra.mxu0 %v389
    %482 = vmatprep.subr.bf16.mxu0 0
    %483 = vmatpush1.bf16.msra.mxu0 0
    %484 = vmatprep.subr.bf16.mxu0 0
    %485 = vmatpush1.bf16.msra.mxu0 0
    %486 = vmatprep.subr.bf16.mxu0 0
    %487 = vmatpush1.bf16.msra.mxu0 0
    %488 = vmatprep.subr.bf16.mxu0 0
    %489 = vmatpush1.bf16.msra.mxu0 0
    %490 = vmatprep.subr.bf16.mxu0 0
    %491 = vmatpush1.bf16.msra.mxu0 0
    %492 = vmatprep.subr.bf16.mxu0 0
    %493 = vmatpush1.bf16.msra.mxu0 0
    %494 = vmatprep.subr.bf16.mxu0 0
    %495 = vmatpush1.bf16.msra.mxu0 0
    %496 = vmatprep.subr.bf16.mxu0 0
    %497 = vmatpush1.bf16.msra.mxu0 0
    %498 = vmatprep.subr.bf16.mxu0 0
    %499 = vmatpush1.bf16.msra.mxu0 0
    %500 = vmatprep.subr.bf16.mxu0 0
    %501 = vmatpush1.bf16.msra.mxu0 0
    %502 = vmatprep.subr.bf16.mxu0 0
    %503 = vmatpush1.bf16.msra.mxu0 0
    %504 = vmatprep.subr.bf16.mxu0 0
    %505 = vmatpush1.bf16.msra.mxu0 0
    %506 = vmatprep.subr.bf16.mxu0 0
    %507 = vmatpush1.bf16.msra.mxu0 0
    %508 = vmatprep.subr.bf16.mxu0 0
    %509 = vmatpush1.bf16.msra.mxu0 0
    %510 = vmatprep.subr.bf16.mxu0 0
    %511 = vmatpush1.bf16.msra.mxu0 0
    %512 = vmatprep.mubr.bf16.mxu0 0
    %513 = vmatmul.mubr.bf16.gmra.mrb[0].mxu0 %v457
    %v514 = vpop.f32.mrb[0].mxu0
    %v515 = vadd.f32 %v398, %v514
    %v516 = vpop.f32.mrb[0].mxu0
    %v517 = vadd.f32 %v402, %v516
    %v518 = vpop.f32.mrb[0].mxu0
    %v519 = vadd.f32 %v398, %v518
    %v520 = vpop.f32.mrb[0].mxu0
    %v521 = vadd.f32 %v402, %v520
    %522 = vmatprep.mubr.bf16.mxu0 0
    %523 = vmatmul.mubr.bf16.gmra.mrb[0].mxu0 %v460
    %v524 = vpop.f32.mrb[0].mxu0
    %v525 = vadd.f32 %v398, %v524
    %v526 = vpop.f32.mrb[0].mxu0
    %v527 = vadd.f32 %v402, %v526
    %v528 = vpop.f32.mrb[0].mxu0
    %v529 = vadd.f32 %v398, %v528
    %v530 = vpop.f32.mrb[0].mxu0
    %v531 = vadd.f32 %v402, %v530
    %532 = vmatprep.mubr.bf16.mxu0 0
    %533 = vmatmul.mubr.bf16.gmra.mrb[0].mxu0 %v463
    %v534 = vpop.f32.mrb[0].mxu0
    %v535 = vadd.f32 %v398, %v534
    %v536 = vpop.f32.mrb[0].mxu0
    %v537 = vadd.f32 %v402, %v536
    %v538 = vpop.f32.mrb[0].mxu0
    %v539 = vadd.f32 %v398, %v538
    %v540 = vpop.f32.mrb[0].mxu0
    %v541 = vadd.f32 %v402, %v540
    %542 = vmatprep.mubr.bf16.mxu0 0
    %543 = vmatmul.mubr.bf16.gmra.mrb[0].mxu0 %v466
    %v544 = vpop.f32.mrb[0].mxu0
    %v545 = vadd.f32 %v398, %v544
    %v546 = vpop.f32.mrb[0].mxu0
    %v547 = vadd.f32 %v402, %v546
    %v548 = vpop.f32.mrb[0].mxu0
    %v549 = vadd.f32 %v398, %v548
    %v550 = vpop.f32.mrb[0].mxu0
    %v551 = vadd.f32 %v402, %v550
    %552 = vmatprep.mubr.bf16.mxu0 0
    %553 = vmatmul.mubr.bf16.gmra.mrb[0].mxu0 %v469
    %v554 = vpop.f32.mrb[0].mxu0
    %v555 = vadd.f32 %v398, %v554
    %v556 = vpop.f32.mrb[0].mxu0
    %v557 = vadd.f32 %v402, %v556
    %v558 = vpop.f32.mrb[0].mxu0
    %v559 = vadd.f32 %v398, %v558
    %v560 = vpop.f32.mrb[0].mxu0
    %v561 = vadd.f32 %v402, %v560
    %562 = vmatprep.mubr.bf16.mxu0 0
    %563 = vmatmul.mubr.bf16.gmra.mrb[0].mxu0 %v472
    %v564 = vpop.f32.mrb[0].mxu0
    %v565 = vadd.f32 %v398, %v564
    %v566 = vpop.f32.mrb[0].mxu0
    %v567 = vadd.f32 %v402, %v566
    %v568 = vpop.f32.mrb[0].mxu0
    %v569 = vadd.f32 %v398, %v568
    %v570 = vpop.f32.mrb[0].mxu0
    %v571 = vadd.f32 %v402, %v570
    %572 = vmatprep.mubr.bf16.mxu0 0
    %573 = vmatmul.mubr.bf16.gmra.mrb[0].mxu0 %v475
    %v574 = vpop.f32.mrb[0].mxu0
    %v575 = vadd.f32 %v398, %v574
    %v576 = vpop.f32.mrb[0].mxu0
    %v577 = vadd.f32 %v402, %v576
    %v578 = vpop.f32.mrb[0].mxu0
    %v579 = vadd.f32 %v398, %v578
    %v580 = vpop.f32.mrb[0].mxu0
    %v581 = vadd.f32 %v402, %v580
    %582 = vmatprep.mubr.bf16.mxu0 0
    %583 = vmatmul.mubr.bf16.gmra.mrb[0].mxu0 %v478
    %v584 = vpop.f32.mrb[0].mxu0
    %v585 = vadd.f32 %v398, %v584
    %v586 = vpop.f32.mrb[0].mxu0
    %v587 = vadd.f32 %v402, %v586
    %v588 = vpop.f32.mrb[0].mxu0
    %v589 = vadd.f32 %v398, %v588
    %v590 = vpop.f32.mrb[0].mxu0
    %v591 = vadd.f32 %v402, %v590
    %592 = vdwg.mxu0
    %593 = vmatprep.subr.bf16.mxu0 %v392
    %594 = vmatpush1.bf16.msra.mxu0 %v391
    %595 = vmatprep.subr.bf16.mxu0 0
    %596 = vmatpush1.bf16.msra.mxu0 0
    %597 = vmatprep.subr.bf16.mxu0 0
    %598 = vmatpush1.bf16.msra.mxu0 0
    %599 = vmatprep.subr.bf16.mxu0 0
    %600 = vmatpush1.bf16.msra.mxu0 0
    %601 = vmatprep.subr.bf16.mxu0 0
    %602 = vmatpush1.bf16.msra.mxu0 0
    %603 = vmatprep.subr.bf16.mxu0 0
    %604 = vmatpush1.bf16.msra.mxu0 0
    %605 = vmatprep.subr.bf16.mxu0 0
    %606 = vmatpush1.bf16.msra.mxu0 0
    %607 = vmatprep.subr.bf16.mxu0 0
    %608 = vmatpush1.bf16.msra.mxu0 0
    %609 = vmatprep.subr.bf16.mxu0 0
    %610 = vmatpush1.bf16.msra.mxu0 0
    %611 = vmatprep.subr.bf16.mxu0 0
    %612 = vmatpush1.bf16.msra.mxu0 0
    %613 = vmatprep.subr.bf16.mxu0 0
    %614 = vmatpush1.bf16.msra.mxu0 0
    %615 = vmatprep.subr.bf16.mxu0 0
    %616 = vmatpush1.bf16.msra.mxu0 0
    %617 = vmatprep.subr.bf16.mxu0 0
    %618 = vmatpush1.bf16.msra.mxu0 0
    %619 = vmatprep.subr.bf16.mxu0 0
    %620 = vmatpush1.bf16.msra.mxu0 0
    %621 = vmatprep.subr.bf16.mxu0 0
    %622 = vmatpush1.bf16.msra.mxu0 0
    %623 = vmatprep.subr.bf16.mxu0 0
    %624 = vmatpush1.bf16.msra.mxu0 0
    %625 = vmatprep.mubr.bf16.mxu0 0
    %626 = vmatmul.mubr.bf16.gmra.mrb[0].mxu0 %v457
    %v627 = vpop.f32.mrb[0].mxu0
    %v628 = vadd.f32 %v406, %v627
    %v629 = vpop.f32.mrb[0].mxu0
    %v630 = vadd.f32 %v410, %v629
    %v631 = vpop.f32.mrb[0].mxu0
    %v632 = vadd.f32 %v406, %v631
    %v633 = vpop.f32.mrb[0].mxu0
    %v634 = vadd.f32 %v410, %v633
    %635 = vmatprep.mubr.bf16.mxu0 0
    %636 = vmatmul.mubr.bf16.gmra.mrb[0].mxu0 %v460
    %v637 = vpop.f32.mrb[0].mxu0
    %v638 = vadd.f32 %v406, %v637
    %v639 = vpop.f32.mrb[0].mxu0
    %v640 = vadd.f32 %v410, %v639
    %v641 = vpop.f32.mrb[0].mxu0
    %v642 = vadd.f32 %v406, %v641
    %v643 = vpop.f32.mrb[0].mxu0
    %v644 = vadd.f32 %v410, %v643
    %645 = vmatprep.mubr.bf16.mxu0 0
    %646 = vmatmul.mubr.bf16.gmra.mrb[0].mxu0 %v463
    %v647 = vpop.f32.mrb[0].mxu0
    %v648 = vadd.f32 %v406, %v647
    %v649 = vpop.f32.mrb[0].mxu0
    %v650 = vadd.f32 %v410, %v649
    %v651 = vpop.f32.mrb[0].mxu0
    %v652 = vadd.f32 %v406, %v651
    %v653 = vpop.f32.mrb[0].mxu0
    %v654 = vadd.f32 %v410, %v653
    %655 = vmatprep.mubr.bf16.mxu0 0
    %656 = vmatmul.mubr.bf16.gmra.mrb[0].mxu0 %v466
    %v657 = vpop.f32.mrb[0].mxu0
    %v658 = vadd.f32 %v406, %v657
    %v659 = vpop.f32.mrb[0].mxu0
    %v660 = vadd.f32 %v410, %v659
    %v661 = vpop.f32.mrb[0].mxu0
    %v662 = vadd.f32 %v406, %v661
    %v663 = vpop.f32.mrb[0].mxu0
    %v664 = vadd.f32 %v410, %v663
    %665 = vmatprep.mubr.bf16.mxu0 0
    %666 = vmatmul.mubr.bf16.gmra.mrb[0].mxu0 %v469
    %v667 = vpop.f32.mrb[0].mxu0
    %v668 = vadd.f32 %v406, %v667
    %v669 = vpop.f32.mrb[0].mxu0
    %v670 = vadd.f32 %v410, %v669
    %v671 = vpop.f32.mrb[0].mxu0
    %v672 = vadd.f32 %v406, %v671
    %v673 = vpop.f32.mrb[0].mxu0
    %v674 = vadd.f32 %v410, %v673
    %675 = vmatprep.mubr.bf16.mxu0 0
    %676 = vmatmul.mubr.bf16.gmra.mrb[0].mxu0 %v472
    %v677 = vpop.f32.mrb[0].mxu0
    %v678 = vadd.f32 %v406, %v677
    %v679 = vpop.f32.mrb[0].mxu0
    %v680 = vadd.f32 %v410, %v679
    %v681 = vpop.f32.mrb[0].mxu0
    %v682 = vadd.f32 %v406, %v681
    %v683 = vpop.f32.mrb[0].mxu0
    %v684 = vadd.f32 %v410, %v683
    %685 = vmatprep.mubr.bf16.mxu0 0
    %686 = vmatmul.mubr.bf16.gmra.mrb[0].mxu0 %v475
    %v687 = vpop.f32.mrb[0].mxu0
    %v688 = vadd.f32 %v406, %v687
    %v689 = vpop.f32.mrb[0].mxu0
    %v690 = vadd.f32 %v410, %v689
    %v691 = vpop.f32.mrb[0].mxu0
    %v692 = vadd.f32 %v406, %v691
    %v693 = vpop.f32.mrb[0].mxu0
    %v694 = vadd.f32 %v410, %v693
    %695 = vmatprep.mubr.bf16.mxu0 0
    %696 = vmatmul.mubr.bf16.gmra.mrb[0].mxu0 %v478
    %v697 = vpop.f32.mrb[0].mxu0
    %v698 = vadd.f32 %v406, %v697
    %v699 = vpop.f32.mrb[0].mxu0
    %v700 = vadd.f32 %v410, %v699
    %v701 = vpop.f32.mrb[0].mxu0
    %v702 = vadd.f32 %v406, %v701
    %v703 = vpop.f32.mrb[0].mxu0
    %v704 = vadd.f32 %v410, %v703
    %705 = vdwg.mxu0
    %v706 = vpack.c.bf16 %v519, %v515
    %v707 = vpack.c.bf16 %v521, %v517
    %v708 = vpack.c.bf16 %v632, %v628
    %v709 = vpack.c.bf16 %v634, %v630
    %v710 = vpack.c.bf16 %v529, %v525
    %v711 = vpack.c.bf16 %v531, %v527
    %v712 = vpack.c.bf16 %v642, %v638
    %v713 = vpack.c.bf16 %v644, %v640
    %v714 = vpack.c.bf16 %v539, %v535
    %v715 = vpack.c.bf16 %v541, %v537
    %v716 = vpack.c.bf16 %v652, %v648
    %v717 = vpack.c.bf16 %v654, %v650
    %v718 = vpack.c.bf16 %v549, %v545
    %v719 = vpack.c.bf16 %v551, %v547
    %v720 = vpack.c.bf16 %v662, %v658
    %v721 = vpack.c.bf16 %v664, %v660
    %v722 = vpack.c.bf16 %v559, %v555
    %v723 = vpack.c.bf16 %v561, %v557
    %v724 = vpack.c.bf16 %v672, %v668
    %v725 = vpack.c.bf16 %v674, %v670
    %v726 = vpack.c.bf16 %v569, %v565
    %v727 = vpack.c.bf16 %v571, %v567
    %v728 = vpack.c.bf16 %v682, %v678
    %v729 = vpack.c.bf16 %v684, %v680
    %v730 = vpack.c.bf16 %v579, %v575
    %v731 = vpack.c.bf16 %v581, %v577
    %v732 = vpack.c.bf16 %v692, %v688
    %v733 = vpack.c.bf16 %v694, %v690
    %v734 = vpack.c.bf16 %v589, %v585
    %v735 = vpack.c.bf16 %v591, %v587
    %v736 = vpack.c.bf16 %v702, %v698
    %v737 = vpack.c.bf16 %v704, %v700
    %738 = vst [vmem:[#allocation10] sm:$0xff] %v706
    %739 = vst [vmem:[#allocation10 + $0x8] sm:$0xff] %v707
    %740 = vst [vmem:[#allocation10 + $0x10] sm:$0xff] %v708
    %741 = vst [vmem:[#allocation10 + $0x18] sm:$0xff] %v709
    %742 = vst [vmem:[#allocation10 + $0x20] sm:$0xff] %v710
    %743 = vst [vmem:[#allocation10 + $0x28] sm:$0xff] %v711
    %744 = vst [vmem:[#allocation10 + $0x30] sm:$0xff] %v712
    %745 = vst [vmem:[#allocation10 + $0x38] sm:$0xff] %v713
    %746 = vst [vmem:[#allocation10 + $0x40] sm:$0xff] %v714
    %747 = vst [vmem:[#allocation10 + $0x48] sm:$0xff] %v715
    %748 = vst [vmem:[#allocation10 + $0x50] sm:$0xff] %v716
    %749 = vst [vmem:[#allocation10 + $0x58] sm:$0xff] %v717
    %750 = vst [vmem:[#allocation10 + $0x60] sm:$0xff] %v718
    %751 = vst [vmem:[#allocation10 + $0x68] sm:$0xff] %v719
    %752 = vst [vmem:[#allocation10 + $0x70] sm:$0xff] %v720
    %753 = vst [vmem:[#allocation10 + $0x78] sm:$0xff] %v721
    %754 = vst [vmem:[#allocation10 + $0x80] sm:$0xff] %v722
    %755 = vst [vmem:[#allocation10 + $0x88] sm:$0xff] %v723
    %756 = vst [vmem:[#allocation10 + $0x90] sm:$0xff] %v724
    %757 = vst [vmem:[#allocation10 + $0x98] sm:$0xff] %v725
    %758 = vst [vmem:[#allocation10 + $0xa0] sm:$0xff] %v726
    %759 = vst [vmem:[#allocation10 + $0xa8] sm:$0xff] %v727
    %760 = vst [vmem:[#allocation10 + $0xb0] sm:$0xff] %v728
    %761 = vst [vmem:[#allocation10 + $0xb8] sm:$0xff] %v729
    %762 = vst [vmem:[#allocation10 + $0xc0] sm:$0xff] %v730
    %763 = vst [vmem:[#allocation10 + $0xc8] sm:$0xff] %v731
    %764 = vst [vmem:[#allocation10 + $0xd0] sm:$0xff] %v732
    %765 = vst [vmem:[#allocation10 + $0xd8] sm:$0xff] %v733
    %766 = vst [vmem:[#allocation10 + $0xe0] sm:$0xff] %v734
    %767 = vst [vmem:[#allocation10 + $0xe8] sm:$0xff] %v735
    %768 = vst [vmem:[#allocation10 + $0xf0] sm:$0xff] %v736
    %769 = vst [vmem:[#allocation10 + $0xf8] sm:$0xff] %v737
    %s770 = smul.u32 0, 4
    %s771 = smul.addr %s770, 8
    %s772 = scalar_lea.vmem [#allocation10], %s771
    %v773 = vld [vmem:[%s772] sm:$0xff]
    %v774 = vld [vmem:[%s772 + $0x8] sm:$0xff]
    %v775 = vld [vmem:[%s772 + $0x10] sm:$0xff]
    %v776 = vld [vmem:[%s772 + $0x18] sm:$0xff]
    %v777 = vunpack.c.l.bf16 %v773
    %v778 = vunpack.c.l.bf16 %v774
    %v779 = vunpack.c.l.bf16 %v775
    %v780 = vunpack.c.l.bf16 %v776
    %v781 = vunpack.c.h.bf16 %v773
    %v782 = vunpack.c.h.bf16 %v774
    %v783 = vunpack.c.h.bf16 %v775
    %v784 = vunpack.c.h.bf16 %v776
    %v785 = vld [vmem:[#allocation12] sm:$0xff]
    %v786 = vld [vmem:[#allocation12 + $0x8] sm:$0xff]
    %v787 = vpack.c.bf16 %v786, %v785
    %v788 = vld [vmem:[#allocation3] sm:$0xff]
    %v789 = vld [vmem:[#allocation3 + $0x8] sm:$0xff]
    %v790 = vld [vmem:[#allocation3 + $0x10] sm:$0xff]
    %v791 = vld [vmem:[#allocation3 + $0x18] sm:$0xff]
    %v792 = vld [vmem:[#allocation3 + $0x20] sm:$0xff]
    %v793 = vld [vmem:[#allocation3 + $0x28] sm:$0xff]
    %v794 = vld [vmem:[#allocation3 + $0x30] sm:$0xff]
    %v795 = vld [vmem:[#allocation3 + $0x38] sm:$0xff]
    %v796 = vld [vmem:[#allocation3 + $0x40] sm:$0xff]
    %v797 = vld [vmem:[#allocation3 + $0x48] sm:$0xff]
    %v798 = vld [vmem:[#allocation3 + $0x50] sm:$0xff]
    %v799 = vld [vmem:[#allocation3 + $0x58] sm:$0xff]
    %v800 = vld [vmem:[#allocation3 + $0x60] sm:$0xff]
    %v801 = vld [vmem:[#allocation3 + $0x68] sm:$0xff]
    %v802 = vld [vmem:[#allocation3 + $0x70] sm:$0xff]
    %v803 = vld [vmem:[#allocation3 + $0x78] sm:$0xff]
    %v804 = vld [vmem:[#allocation3 + $0x80] sm:$0xff]
    %v805 = vld [vmem:[#allocation3 + $0x88] sm:$0xff]
    %v806 = vld [vmem:[#allocation3 + $0x90] sm:$0xff]
    %v807 = vld [vmem:[#allocation3 + $0x98] sm:$0xff]
    %v808 = vld [vmem:[#allocation3 + $0xa0] sm:$0xff]
    %v809 = vld [vmem:[#allocation3 + $0xa8] sm:$0xff]
    %v810 = vld [vmem:[#allocation3 + $0xb0] sm:$0xff]
    %v811 = vld [vmem:[#allocation3 + $0xb8] sm:$0xff]
    %v812 = vld [vmem:[#allocation3 + $0xc0] sm:$0xff]
    %v813 = vld [vmem:[#allocation3 + $0xc8] sm:$0xff]
    %v814 = vld [vmem:[#allocation3 + $0xd0] sm:$0xff]
    %v815 = vld [vmem:[#allocation3 + $0xd8] sm:$0xff]
    %v816 = vld [vmem:[#allocation3 + $0xe0] sm:$0xff]
    %v817 = vld [vmem:[#allocation3 + $0xe8] sm:$0xff]
    %v818 = vld [vmem:[#allocation3 + $0xf0] sm:$0xff]
    %v819 = vld [vmem:[#allocation3 + $0xf8] sm:$0xff]
    %820 = vmatprep.subr.bf16.mxu0 %v789
    %821 = vmatpush1.bf16.msra.mxu0 %v788
    %822 = vmatprep.subr.bf16.mxu0 %v793
    %823 = vmatpush1.bf16.msra.mxu0 %v792
    %824 = vmatprep.subr.bf16.mxu0 %v797
    %825 = vmatpush1.bf16.msra.mxu0 %v796
    %826 = vmatprep.subr.bf16.mxu0 %v801
    %827 = vmatpush1.bf16.msra.mxu0 %v800
    %828 = vmatprep.subr.bf16.mxu0 %v805
    %829 = vmatpush1.bf16.msra.mxu0 %v804
    %830 = vmatprep.subr.bf16.mxu0 %v809
    %831 = vmatpush1.bf16.msra.mxu0 %v808
    %832 = vmatprep.subr.bf16.mxu0 %v813
    %833 = vmatpush1.bf16.msra.mxu0 %v812
    %834 = vmatprep.subr.bf16.mxu0 %v817
    %835 = vmatpush1.bf16.msra.mxu0 %v816
    %836 = vmatprep.subr.bf16.mxu0 0
    %837 = vmatpush1.bf16.msra.mxu0 0
    %838 = vmatprep.subr.bf16.mxu0 0
    %839 = vmatpush1.bf16.msra.mxu0 0
    %840 = vmatprep.subr.bf16.mxu0 0
    %841 = vmatpush1.bf16.msra.mxu0 0
    %842 = vmatprep.subr.bf16.mxu0 0
    %843 = vmatpush1.bf16.msra.mxu0 0
    %844 = vmatprep.subr.bf16.mxu0 0
    %845 = vmatpush1.bf16.msra.mxu0 0
    %846 = vmatprep.subr.bf16.mxu0 0
    %847 = vmatpush1.bf16.msra.mxu0 0
    %848 = vmatprep.subr.bf16.mxu0 0
    %849 = vmatpush1.bf16.msra.mxu0 0
    %850 = vmatprep.subr.bf16.mxu0 0
    %851 = vmatpush1.bf16.msra.mxu0 0
    %852 = vmatprep.mubr.bf16.mxu0 0
    %853 = vmatmul.mubr.bf16.gmra.mrb[0].mxu0 %v787
    %v854 = vpop.f32.mrb[0].mxu0
    %v855 = vadd.f32 0.0, %v854
    %v856 = vpop.f32.mrb[0].mxu0
    %v857 = vadd.f32 0.0, %v856
    %v858 = vpop.f32.mrb[0].mxu0
    %v859 = vadd.f32 0.0, %v858
    %v860 = vpop.f32.mrb[0].mxu0
    %v861 = vadd.f32 0.0, %v860
    %862 = vdwg.mxu0
    %863 = vmatprep.subr.bf16.mxu0 %v791
    %864 = vmatpush1.bf16.msra.mxu0 %v790
    %865 = vmatprep.subr.bf16.mxu0 %v795
    %866 = vmatpush1.bf16.msra.mxu0 %v794
    %867 = vmatprep.subr.bf16.mxu0 %v799
    %868 = vmatpush1.bf16.msra.mxu0 %v798
    %869 = vmatprep.subr.bf16.mxu0 %v803
    %870 = vmatpush1.bf16.msra.mxu0 %v802
    %871 = vmatprep.subr.bf16.mxu0 %v807
    %872 = vmatpush1.bf16.msra.mxu0 %v806
    %873 = vmatprep.subr.bf16.mxu0 %v811
    %874 = vmatpush1.bf16.msra.mxu0 %v810
    %875 = vmatprep.subr.bf16.mxu0 %v815
    %876 = vmatpush1.bf16.msra.mxu0 %v814
    %877 = vmatprep.subr.bf16.mxu0 %v819
    %878 = vmatpush1.bf16.msra.mxu0 %v818
    %879 = vmatprep.subr.bf16.mxu0 0
    %880 = vmatpush1.bf16.msra.mxu0 0
    %881 = vmatprep.subr.bf16.mxu0 0
    %882 = vmatpush1.bf16.msra.mxu0 0
    %883 = vmatprep.subr.bf16.mxu0 0
    %884 = vmatpush1.bf16.msra.mxu0 0
    %885 = vmatprep.subr.bf16.mxu0 0
    %886 = vmatpush1.bf16.msra.mxu0 0
    %887 = vmatprep.subr.bf16.mxu0 0
    %888 = vmatpush1.bf16.msra.mxu0 0
    %889 = vmatprep.subr.bf16.mxu0 0
    %890 = vmatpush1.bf16.msra.mxu0 0
    %891 = vmatprep.subr.bf16.mxu0 0
    %892 = vmatpush1.bf16.msra.mxu0 0
    %893 = vmatprep.subr.bf16.mxu0 0
    %894 = vmatpush1.bf16.msra.mxu0 0
    %895 = vmatprep.mubr.bf16.mxu0 0
    %896 = vmatmul.mubr.bf16.gmra.mrb[0].mxu0 %v787
    %v897 = vpop.f32.mrb[0].mxu0
    %v898 = vadd.f32 0.0, %v897
    %v899 = vpop.f32.mrb[0].mxu0
    %v900 = vadd.f32 0.0, %v899
    %v901 = vpop.f32.mrb[0].mxu0
    %v902 = vadd.f32 0.0, %v901
    %v903 = vpop.f32.mrb[0].mxu0
    %v904 = vadd.f32 0.0, %v903
    %905 = vdwg.mxu0
    %v906 = vadd.f32 %v777, %v855
    %v907 = vadd.f32 %v778, %v857
    %v908 = vadd.f32 %v779, %v898
    %v909 = vadd.f32 %v780, %v900
    %v910 = vadd.f32 %v781, %v859
    %v911 = vadd.f32 %v782, %v861
    %v912 = vadd.f32 %v783, %v902
    %v913 = vadd.f32 %v784, %v904
    %v914 = vmul.f32 %v906, 0.5
    %v915 = vmul.f32 %v910, 0.5
    %v916 = vtanh.pop %v914
    %v917 = vtanh.pop %v915
    %v918 = vmul.f32 %v916, 0.5
    %v919 = vmul.f32 %v917, 0.5
    %v920 = vadd.f32 %v918, 0.5
    %v921 = vadd.f32 %v919, 0.5
    %v922 = vmul.f32 %v907, 0.5
    %v923 = vmul.f32 %v911, 0.5
    %v924 = vtanh.pop %v922
    %v925 = vtanh.pop %v923
    %v926 = vmul.f32 %v924, 0.5
    %v927 = vmul.f32 %v925, 0.5
    %v928 = vadd.f32 %v926, 0.5
    %v929 = vadd.f32 %v927, 0.5
    %v930 = vtanh.pop %v908
    %v931 = vtanh.pop %v912
    %v932 = vmul.f32 %v909, 0.5
    %v933 = vmul.f32 %v913, 0.5
    %v934 = vtanh.pop %v932
    %v935 = vtanh.pop %v933
    %v936 = vmul.f32 %v934, 0.5
    %v937 = vmul.f32 %v935, 0.5
    %v938 = vadd.f32 %v936, 0.5
    %v939 = vadd.f32 %v937, 0.5
    %v940 = vld [vmem:[#allocation13] sm:$0xff]
    %v941 = vld [vmem:[#allocation13 + $0x8] sm:$0xff]
    %v942 = vmul.f32 %v928, %v940
    %v943 = vmul.f32 %v929, %v941
    %v944 = vmul.f32 %v920, %v930
    %v945 = vmul.f32 %v921, %v931
    %v946 = vadd.f32 %v942, %v944
    %v947 = vadd.f32 %v943, %v945
    %v948 = vtanh.pop %v946
    %v949 = vtanh.pop %v947
    %v950 = vmul.f32 %v938, %v948
    %v951 = vmul.f32 %v939, %v949
    %952 = vst [vmem:[#allocation13] sm:$0xff] %v946
    %953 = vst [vmem:[#allocation13 + $0x8] sm:$0xff] %v947
    %954 = vst [vmem:[#allocation12] sm:$0xff] %v950
    %955 = vst [vmem:[#allocation12 + $0x8] sm:$0xff] %v951
    %v956 = vpack.c.bf16 %v951, %v950
    %957 = vst [vmem:[#allocation11] sm:$0xff] %v956
    %s958 = smul.u32 1, 4
    %s959 = smul.addr %s958, 8
    %s960 = scalar_lea.vmem [#allocation10], %s959
    %v961 = vld [vmem:[%s960] sm:$0xff]
    %v962 = vld [vmem:[%s960 + $0x8] sm:$0xff]
    %v963 = vld [vmem:[%s960 + $0x10] sm:$0xff]
    %v964 = vld [vmem:[%s960 + $0x18] sm:$0xff]
    %v965 = vunpack.c.l.bf16 %v961
    %v966 = vunpack.c.l.bf16 %v962
    %v967 = vunpack.c.l.bf16 %v963
    %v968 = vunpack.c.l.bf16 %v964
    %v969 = vunpack.c.h.bf16 %v961
    %v970 = vunpack.c.h.bf16 %v962
    %v971 = vunpack.c.h.bf16 %v963
    %v972 = vunpack.c.h.bf16 %v964
    %v973 = vld [vmem:[#allocation12] sm:$0xff]
    %v974 = vld [vmem:[#allocation12 + $0x8] sm:$0xff]
    %v975 = vpack.c.bf16 %v974, %v973
    %v976 = vld [vmem:[#allocation3] sm:$0xff]
    %v977 = vld [vmem:[#allocation3 + $0x8] sm:$0xff]
    %v978 = vld [vmem:[#allocation3 + $0x10] sm:$0xff]
    %v979 = vld [vmem:[#allocation3 + $0x18] sm:$0xff]
    %v980 = vld [vmem:[#allocation3 + $0x20] sm:$0xff]
    %v981 = vld [vmem:[#allocation3 + $0x28] sm:$0xff]
    %v982 = vld [vmem:[#allocation3 + $0x30] sm:$0xff]
    %v983 = vld [vmem:[#allocation3 + $0x38] sm:$0xff]
    %v984 = vld [vmem:[#allocation3 + $0x40] sm:$0xff]
    %v985 = vld [vmem:[#allocation3 + $0x48] sm:$0xff]
    %v986 = vld [vmem:[#allocation3 + $0x50] sm:$0xff]
    %v987 = vld [vmem:[#allocation3 + $0x58] sm:$0xff]
    %v988 = vld [vmem:[#allocation3 + $0x60] sm:$0xff]
    %v989 = vld [vmem:[#allocation3 + $0x68] sm:$0xff]
    %v990 = vld [vmem:[#allocation3 + $0x70] sm:$0xff]
    %v991 = vld [vmem:[#allocation3 + $0x78] sm:$0xff]
    %v992 = vld [vmem:[#allocation3 + $0x80] sm:$0xff]
    %v993 = vld [vmem:[#allocation3 + $0x88] sm:$0xff]
    %v994 = vld [vmem:[#allocation3 + $0x90] sm:$0xff]
    %v995 = vld [vmem:[#allocation3 + $0x98] sm:$0xff]
    %v996 = vld [vmem:[#allocation3 + $0xa0] sm:$0xff]
    %v997 = vld [vmem:[#allocation3 + $0xa8] sm:$0xff]
    %v998 = vld [vmem:[#allocation3 + $0xb0] sm:$0xff]
    %v999 = vld [vmem:[#allocation3 + $0xb8] sm:$0xff]
    %v1000 = vld [vmem:[#allocation3 + $0xc0] sm:$0xff]
    %v1001 = vld [vmem:[#allocation3 + $0xc8] sm:$0xff]
    %v1002 = vld [vmem:[#allocation3 + $0xd0] sm:$0xff]
    %v1003 = vld [vmem:[#allocation3 + $0xd8] sm:$0xff]
    %v1004 = vld [vmem:[#allocation3 + $0xe0] sm:$0xff]
    %v1005 = vld [vmem:[#allocation3 + $0xe8] sm:$0xff]
    %v1006 = vld [vmem:[#allocation3 + $0xf0] sm:$0xff]
    %v1007 = vld [vmem:[#allocation3 + $0xf8] sm:$0xff]
    %1008 = vmatprep.subr.bf16.mxu0 %v977
    %1009 = vmatpush1.bf16.msra.mxu0 %v976
    %1010 = vmatprep.subr.bf16.mxu0 %v981
    %1011 = vmatpush1.bf16.msra.mxu0 %v980
    %1012 = vmatprep.subr.bf16.mxu0 %v985
    %1013 = vmatpush1.bf16.msra.mxu0 %v984
    %1014 = vmatprep.subr.bf16.mxu0 %v989
    %1015 = vmatpush1.bf16.msra.mxu0 %v988
    %1016 = vmatprep.subr.bf16.mxu0 %v993
    %1017 = vmatpush1.bf16.msra.mxu0 %v992
    %1018 = vmatprep.subr.bf16.mxu0 %v997
    %1019 = vmatpush1.bf16.msra.mxu0 %v996
    %1020 = vmatprep.subr.bf16.mxu0 %v1001
    %1021 = vmatpush1.bf16.msra.mxu0 %v1000
    %1022 = vmatprep.subr.bf16.mxu0 %v1005
    %1023 = vmatpush1.bf16.msra.mxu0 %v1004
    %1024 = vmatprep.subr.bf16.mxu0 0
    %1025 = vmatpush1.bf16.msra.mxu0 0
    %1026 = vmatprep.subr.bf16.mxu0 0
    %1027 = vmatpush1.bf16.msra.mxu0 0
    %1028 = vmatprep.subr.bf16.mxu0 0
    %1029 = vmatpush1.bf16.msra.mxu0 0
    %1030 = vmatprep.subr.bf16.mxu0 0
    %1031 = vmatpush1.bf16.msra.mxu0 0
    %1032 = vmatprep.subr.bf16.mxu0 0
    %1033 = vmatpush1.bf16.msra.mxu0 0
    %1034 = vmatprep.subr.bf16.mxu0 0
    %1035 = vmatpush1.bf16.msra.mxu0 0
    %1036 = vmatprep.subr.bf16.mxu0 0
    %1037 = vmatpush1.bf16.msra.mxu0 0
    %1038 = vmatprep.subr.bf16.mxu0 0
    %1039 = vmatpush1.bf16.msra.mxu0 0
    %1040 = vmatprep.mubr.bf16.mxu0 0
    %1041 = vmatmul.mubr.bf16.gmra.mrb[0].mxu0 %v975
    %v1042 = vpop.f32.mrb[0].mxu0
    %v1043 = vadd.f32 0.0, %v1042
    %v1044 = vpop.f32.mrb[0].mxu0
    %v1045 = vadd.f32 0.0, %v1044
    %v1046 = vpop.f32.mrb[0].mxu0
    %v1047 = vadd.f32 0.0, %v1046
    %v1048 = vpop.f32.mrb[0].mxu0
    %v1049 = vadd.f32 0.0, %v1048
    %1050 = vdwg.mxu0
    %1051 = vmatprep.subr.bf16.mxu0 %v979
    %1052 = vmatpush1.bf16.msra.mxu0 %v978
    %1053 = vmatprep.subr.bf16.mxu0 %v983
    %1054 = vmatpush1.bf16.msra.mxu0 %v982
    %1055 = vmatprep.subr.bf16.mxu0 %v987
    %1056 = vmatpush1.bf16.msra.mxu0 %v986
    %1057 = vmatprep.subr.bf16.mxu0 %v991
    %1058 = vmatpush1.bf16.msra.mxu0 %v990
    %1059 = vmatprep.subr.bf16.mxu0 %v995
    %1060 = vmatpush1.bf16.msra.mxu0 %v994
    %1061 = vmatprep.subr.bf16.mxu0 %v999
    %1062 = vmatpush1.bf16.msra.mxu0 %v998
    %1063 = vmatprep.subr.bf16.mxu0 %v1003
    %1064 = vmatpush1.bf16.msra.mxu0 %v1002
    %1065 = vmatprep.subr.bf16.mxu0 %v1007
    %1066 = vmatpush1.bf16.msra.mxu0 %v1006
    %1067 = vmatprep.subr.bf16.mxu0 0
    %1068 = vmatpush1.bf16.msra.mxu0 0
    %1069 = vmatprep.subr.bf16.mxu0 0
    %1070 = vmatpush1.bf16.msra.mxu0 0
    %1071 = vmatprep.subr.bf16.mxu0 0
    %1072 = vmatpush1.bf16.msra.mxu0 0
    %1073 = vmatprep.subr.bf16.mxu0 0
    %1074 = vmatpush1.bf16.msra.mxu0 0
    %1075 = vmatprep.subr.bf16.mxu0 0
    %1076 = vmatpush1.bf16.msra.mxu0 0
    %1077 = vmatprep.subr.bf16.mxu0 0
    %1078 = vmatpush1.bf16.msra.mxu0 0
    %1079 = vmatprep.subr.bf16.mxu0 0
    %1080 = vmatpush1.bf16.msra.mxu0 0
    %1081 = vmatprep.subr.bf16.mxu0 0
    %1082 = vmatpush1.bf16.msra.mxu0 0
    %1083 = vmatprep.mubr.bf16.mxu0 0
    %1084 = vmatmul.mubr.bf16.gmra.mrb[0].mxu0 %v975
    %v1085 = vpop.f32.mrb[0].mxu0
    %v1086 = vadd.f32 0.0, %v1085
    %v1087 = vpop.f32.mrb[0].mxu0
    %v1088 = vadd.f32 0.0, %v1087
    %v1089 = vpop.f32.mrb[0].mxu0
    %v1090 = vadd.f32 0.0, %v1089
    %v1091 = vpop.f32.mrb[0].mxu0
    %v1092 = vadd.f32 0.0, %v1091
    %1093 = vdwg.mxu0
    %v1094 = vadd.f32 %v965, %v1043
    %v1095 = vadd.f32 %v966, %v1045
    %v1096 = vadd.f32 %v967, %v1086
    %v1097 = vadd.f32 %v968, %v1088
    %v1098 = vadd.f32 %v969, %v1047
    %v1099 = vadd.f32 %v970, %v1049
    %v1100 = vadd.f32 %v971, %v1090
    %v1101 = vadd.f32 %v972, %v1092
    %v1102 = vmul.f32 %v1094, 0.5
    %v1103 = vmul.f32 %v1098, 0.5
    %v1104 = vtanh.pop %v1102
    %v1105 = vtanh.pop %v1103
    %v1106 = vmul.f32 %v1104, 0.5
    %v1107 = vmul.f32 %v1105, 0.5
    %v1108 = vadd.f32 %v1106, 0.5
    %v1109 = vadd.f32 %v1107, 0.5
    %v1110 = vmul.f32 %v1095, 0.5
    %v1111 = vmul.f32 %v1099, 0.5
    %v1112 = vtanh.pop %v1110
    %v1113 = vtanh.pop %v1111
    %v1114 = vmul.f32 %v1112, 0.5
    %v1115 = vmul.f32 %v1113, 0.5
    %v1116 = vadd.f32 %v1114, 0.5
    %v1117 = vadd.f32 %v1115, 0.5
    %v1118 = vtanh.pop %v1096
    %v1119 = vtanh.pop %v1100
    %v1120 = vmul.f32 %v1097, 0.5
    %v1121 = vmul.f32 %v1101, 0.5
    %v1122 = vtanh.pop %v1120
    %v1123 = vtanh.pop %v1121
    %v1124 = vmul.f32 %v1122, 0.5
    %v1125 = vmul.f32 %v1123, 0.5
    %v1126 = vadd.f32 %v1124, 0.5
    %v1127 = vadd.f32 %v1125, 0.5
    %v1128 = vld [vmem:[#allocation13] sm:$0xff]
    %v1129 = vld [vmem:[#allocation13 + $0x8] sm:$0xff]
    %v1130 = vmul.f32 %v1116, %v1128
    %v1131 = vmul.f32 %v1117, %v1129
    %v1132 = vmul.f32 %v1108, %v1118
    %v1133 = vmul.f32 %v1109, %v1119
    %v1134 = vadd.f32 %v1130, %v1132
    %v1135 = vadd.f32 %v1131, %v1133
    %v1136 = vtanh.pop %v1134
    %v1137 = vtanh.pop %v1135
    %v1138 = vmul.f32 %v1126, %v1136
    %v1139 = vmul.f32 %v1127, %v1137
    %1140 = vst [vmem:[#allocation13] sm:$0xff] %v1134
    %1141 = vst [vmem:[#allocation13 + $0x8] sm:$0xff] %v1135
    %1142 = vst [vmem:[#allocation12] sm:$0xff] %v1138
    %1143 = vst [vmem:[#allocation12 + $0x8] sm:$0xff] %v1139
    %v1144 = vpack.c.bf16 %v1139, %v1138
    %s1145 = scalar_lea.vmem [#allocation11], 8
    %1146 = vst [vmem:[%s1145] sm:$0xff] %v1144
    %s1147 = smul.u32 2, 4
    %s1148 = smul.addr %s1147, 8
    %s1149 = scalar_lea.vmem [#allocation10], %s1148
    %v1150 = vld [vmem:[%s1149] sm:$0xff]
    %v1151 = vld [vmem:[%s1149 + $0x8] sm:$0xff]
    %v1152 = vld [vmem:[%s1149 + $0x10] sm:$0xff]
    %v1153 = vld [vmem:[%s1149 + $0x18] sm:$0xff]
    %v1154 = vunpack.c.l.bf16 %v1150
    %v1155 = vunpack.c.l.bf16 %v1151
    %v1156 = vunpack.c.l.bf16 %v1152
    %v1157 = vunpack.c.l.bf16 %v1153
    %v1158 = vunpack.c.h.bf16 %v1150
    %v1159 = vunpack.c.h.bf16 %v1151
    %v1160 = vunpack.c.h.bf16 %v1152
    %v1161 = vunpack.c.h.bf16 %v1153
    %v1162 = vld [vmem:[#allocation12] sm:$0xff]
    %v1163 = vld [vmem:[#allocation12 + $0x8] sm:$0xff]
    %v1164 = vpack.c.bf16 %v1163, %v1162
    %v1165 = vld [vmem:[#allocation3] sm:$0xff]
    %v1166 = vld [vmem:[#allocation3 + $0x8] sm:$0xff]
    %v1167 = vld [vmem:[#allocation3 + $0x10] sm:$0xff]
    %v1168 = vld [vmem:[#allocation3 + $0x18] sm:$0xff]
    %v1169 = vld [vmem:[#allocation3 + $0x20] sm:$0xff]
    %v1170 = vld [vmem:[#allocation3 + $0x28] sm:$0xff]
    %v1171 = vld [vmem:[#allocation3 + $0x30] sm:$0xff]
    %v1172 = vld [vmem:[#allocation3 + $0x38] sm:$0xff]
    %v1173 = vld [vmem:[#allocation3 + $0x40] sm:$0xff]
    %v1174 = vld [vmem:[#allocation3 + $0x48] sm:$0xff]
    %v1175 = vld [vmem:[#allocation3 + $0x50] sm:$0xff]
    %v1176 = vld [vmem:[#allocation3 + $0x58] sm:$0xff]
    %v1177 = vld [vmem:[#allocation3 + $0x60] sm:$0xff]
    %v1178 = vld [vmem:[#allocation3 + $0x68] sm:$0xff]
    %v1179 = vld [vmem:[#allocation3 + $0x70] sm:$0xff]
    %v1180 = vld [vmem:[#allocation3 + $0x78] sm:$0xff]
    %v1181 = vld [vmem:[#allocation3 + $0x80] sm:$0xff]
    %v1182 = vld [vmem:[#allocation3 + $0x88] sm:$0xff]
    %v1183 = vld [vmem:[#allocation3 + $0x90] sm:$0xff]
    %v1184 = vld [vmem:[#allocation3 + $0x98] sm:$0xff]
    %v1185 = vld [vmem:[#allocation3 + $0xa0] sm:$0xff]
    %v1186 = vld [vmem:[#allocation3 + $0xa8] sm:$0xff]
    %v1187 = vld [vmem:[#allocation3 + $0xb0] sm:$0xff]
    %v1188 = vld [vmem:[#allocation3 + $0xb8] sm:$0xff]
    %v1189 = vld [vmem:[#allocation3 + $0xc0] sm:$0xff]
    %v1190 = vld [vmem:[#allocation3 + $0xc8] sm:$0xff]
    %v1191 = vld [vmem:[#allocation3 + $0xd0] sm:$0xff]
    %v1192 = vld [vmem:[#allocation3 + $0xd8] sm:$0xff]
    %v1193 = vld [vmem:[#allocation3 + $0xe0] sm:$0xff]
    %v1194 = vld [vmem:[#allocation3 + $0xe8] sm:$0xff]
    %v1195 = vld [vmem:[#allocation3 + $0xf0] sm:$0xff]
    %v1196 = vld [vmem:[#allocation3 + $0xf8] sm:$0xff]
    %1197 = vmatprep.subr.bf16.mxu0 %v1166
    %1198 = vmatpush1.bf16.msra.mxu0 %v1165
    %1199 = vmatprep.subr.bf16.mxu0 %v1170
    %1200 = vmatpush1.bf16.msra.mxu0 %v1169
    %1201 = vmatprep.subr.bf16.mxu0 %v1174
    %1202 = vmatpush1.bf16.msra.mxu0 %v1173
    %1203 = vmatprep.subr.bf16.mxu0 %v1178
    %1204 = vmatpush1.bf16.msra.mxu0 %v1177
    %1205 = vmatprep.subr.bf16.mxu0 %v1182
    %1206 = vmatpush1.bf16.msra.mxu0 %v1181
    %1207 = vmatprep.subr.bf16.mxu0 %v1186
    %1208 = vmatpush1.bf16.msra.mxu0 %v1185
    %1209 = vmatprep.subr.bf16.mxu0 %v1190
    %1210 = vmatpush1.bf16.msra.mxu0 %v1189
    %1211 = vmatprep.subr.bf16.mxu0 %v1194
    %1212 = vmatpush1.bf16.msra.mxu0 %v1193
    %1213 = vmatprep.subr.bf16.mxu0 0
    %1214 = vmatpush1.bf16.msra.mxu0 0
    %1215 = vmatprep.subr.bf16.mxu0 0
    %1216 = vmatpush1.bf16.msra.mxu0 0
    %1217 = vmatprep.subr.bf16.mxu0 0
    %1218 = vmatpush1.bf16.msra.mxu0 0
    %1219 = vmatprep.subr.bf16.mxu0 0
    %1220 = vmatpush1.bf16.msra.mxu0 0
    %1221 = vmatprep.subr.bf16.mxu0 0
    %1222 = vmatpush1.bf16.msra.mxu0 0
    %1223 = vmatprep.subr.bf16.mxu0 0
    %1224 = vmatpush1.bf16.msra.mxu0 0
    %1225 = vmatprep.subr.bf16.mxu0 0
    %1226 = vmatpush1.bf16.msra.mxu0 0
    %1227 = vmatprep.subr.bf16.mxu0 0
    %1228 = vmatpush1.bf16.msra.mxu0 0
    %1229 = vmatprep.mubr.bf16.mxu0 0
    %1230 = vmatmul.mubr.bf16.gmra.mrb[0].mxu0 %v1164
    %v1231 = vpop.f32.mrb[0].mxu0
    %v1232 = vadd.f32 0.0, %v1231
    %v1233 = vpop.f32.mrb[0].mxu0
    %v1234 = vadd.f32 0.0, %v1233
    %v1235 = vpop.f32.mrb[0].mxu0
    %v1236 = vadd.f32 0.0, %v1235
    %v1237 = vpop.f32.mrb[0].mxu0
    %v1238 = vadd.f32 0.0, %v1237
    %1239 = vdwg.mxu0
    %1240 = vmatprep.subr.bf16.mxu0 %v1168
    %1241 = vmatpush1.bf16.msra.mxu0 %v1167
    %1242 = vmatprep.subr.bf16.mxu0 %v1172
    %1243 = vmatpush1.bf16.msra.mxu0 %v1171
    %1244 = vmatprep.subr.bf16.mxu0 %v1176
    %1245 = vmatpush1.bf16.msra.mxu0 %v1175
    %1246 = vmatprep.subr.bf16.mxu0 %v1180
    %1247 = vmatpush1.bf16.msra.mxu0 %v1179
    %1248 = vmatprep.subr.bf16.mxu0 %v1184
    %1249 = vmatpush1.bf16.msra.mxu0 %v1183
    %1250 = vmatprep.subr.bf16.mxu0 %v1188
    %1251 = vmatpush1.bf16.msra.mxu0 %v1187
    %1252 = vmatprep.subr.bf16.mxu0 %v1192
    %1253 = vmatpush1.bf16.msra.mxu0 %v1191
    %1254 = vmatprep.subr.bf16.mxu0 %v1196
    %1255 = vmatpush1.bf16.msra.mxu0 %v1195
    %1256 = vmatprep.subr.bf16.mxu0 0
    %1257 = vmatpush1.bf16.msra.mxu0 0
    %1258 = vmatprep.subr.bf16.mxu0 0
    %1259 = vmatpush1.bf16.msra.mxu0 0
    %1260 = vmatprep.subr.bf16.mxu0 0
    %1261 = vmatpush1.bf16.msra.mxu0 0
    %1262 = vmatprep.subr.bf16.mxu0 0
    %1263 = vmatpush1.bf16.msra.mxu0 0
    %1264 = vmatprep.subr.bf16.mxu0 0
    %1265 = vmatpush1.bf16.msra.mxu0 0
    %1266 = vmatprep.subr.bf16.mxu0 0
    %1267 = vmatpush1.bf16.msra.mxu0 0
    %1268 = vmatprep.subr.bf16.mxu0 0
    %1269 = vmatpush1.bf16.msra.mxu0 0
    %1270 = vmatprep.subr.bf16.mxu0 0
    %1271 = vmatpush1.bf16.msra.mxu0 0
    %1272 = vmatprep.mubr.bf16.mxu0 0
    %1273 = vmatmul.mubr.bf16.gmra.mrb[0].mxu0 %v1164
    %v1274 = vpop.f32.mrb[0].mxu0
    %v1275 = vadd.f32 0.0, %v1274
    %v1276 = vpop.f32.mrb[0].mxu0
    %v1277 = vadd.f32 0.0, %v1276
    %v1278 = vpop.f32.mrb[0].mxu0
    %v1279 = vadd.f32 0.0, %v1278
    %v1280 = vpop.f32.mrb[0].mxu0
    %v1281 = vadd.f32 0.0, %v1280
    %1282 = vdwg.mxu0
    %v1283 = vadd.f32 %v1154, %v1232
    %v1284 = vadd.f32 %v1155, %v1234
    %v1285 = vadd.f32 %v1156, %v1275
    %v1286 = vadd.f32 %v1157, %v1277
    %v1287 = vadd.f32 %v1158, %v1236
    %v1288 = vadd.f32 %v1159, %v1238
    %v1289 = vadd.f32 %v1160, %v1279
    %v1290 = vadd.f32 %v1161, %v1281
    %v1291 = vmul.f32 %v1283, 0.5
    %v1292 = vmul.f32 %v1287, 0.5
    %v1293 = vtanh.pop %v1291
    %v1294 = vtanh.pop %v1292
    %v1295 = vmul.f32 %v1293, 0.5
    %v1296 = vmul.f32 %v1294, 0.5
    %v1297 = vadd.f32 %v1295, 0.5
    %v1298 = vadd.f32 %v1296, 0.5
    %v1299 = vmul.f32 %v1284, 0.5
    %v1300 = vmul.f32 %v1288, 0.5
    %v1301 = vtanh.pop %v1299
    %v1302 = vtanh.pop %v1300
    %v1303 = vmul.f32 %v1301, 0.5
    %v1304 = vmul.f32 %v1302, 0.5
    %v1305 = vadd.f32 %v1303, 0.5
    %v1306 = vadd.f32 %v1304, 0.5
    %v1307 = vtanh.pop %v1285
    %v1308 = vtanh.pop %v1289
    %v1309 = vmul.f32 %v1286, 0.5
    %v1310 = vmul.f32 %v1290, 0.5
    %v1311 = vtanh.pop %v1309
    %v1312 = vtanh.pop %v1310
    %v1313 = vmul.f32 %v1311, 0.5
    %v1314 = vmul.f32 %v1312, 0.5
    %v1315 = vadd.f32 %v1313, 0.5
    %v1316 = vadd.f32 %v1314, 0.5
    %v1317 = vld [vmem:[#allocation13] sm:$0xff]
    %v1318 = vld [vmem:[#allocation13 + $0x8] sm:$0xff]
    %v1319 = vmul.f32 %v1305, %v1317
    %v1320 = vmul.f32 %v1306, %v1318
    %v1321 = vmul.f32 %v1297, %v1307
    %v1322 = vmul.f32 %v1298, %v1308
    %v1323 = vadd.f32 %v1319, %v1321
    %v1324 = vadd.f32 %v1320, %v1322
    %v1325 = vtanh.pop %v1323
    %v1326 = vtanh.pop %v1324
    %v1327 = vmul.f32 %v1315, %v1325
    %v1328 = vmul.f32 %v1316, %v1326
    %1329 = vst [vmem:[#allocation13] sm:$0xff] %v1323
    %1330 = vst [vmem:[#allocation13 + $0x8] sm:$0xff] %v1324
    %1331 = vst [vmem:[#allocation12] sm:$0xff] %v1327
    %1332 = vst [vmem:[#allocation12 + $0x8] sm:$0xff] %v1328
    %v1333 = vpack.c.bf16 %v1328, %v1327
    %s1334 = scalar_lea.vmem [#allocation11], 16
    %1335 = vst [vmem:[%s1334] sm:$0xff] %v1333
    %s1336 = smul.u32 3, 4
    %s1337 = smul.addr %s1336, 8
    %s1338 = scalar_lea.vmem [#allocation10], %s1337
    %v1339 = vld [vmem:[%s1338] sm:$0xff]
    %v1340 = vld [vmem:[%s1338 + $0x8] sm:$0xff]
    %v1341 = vld [vmem:[%s1338 + $0x10] sm:$0xff]
    %v1342 = vld [vmem:[%s1338 + $0x18] sm:$0xff]
    %v1343 = vunpack.c.l.bf16 %v1339
    %v1344 = vunpack.c.l.bf16 %v1340
    %v1345 = vunpack.c.l.bf16 %v1341
    %v1346 = vunpack.c.l.bf16 %v1342
    %v1347 = vunpack.c.h.bf16 %v1339
    %v1348 = vunpack.c.h.bf16 %v1340
    %v1349 = vunpack.c.h.bf16 %v1341
    %v1350 = vunpack.c.h.bf16 %v1342
    %v1351 = vld [vmem:[#allocation12] sm:$0xff]
    %v1352 = vld [vmem:[#allocation12 + $0x8] sm:$0xff]
    %v1353 = vpack.c.bf16 %v1352, %v1351
    %v1354 = vld [vmem:[#allocation3] sm:$0xff]
    %v1355 = vld [vmem:[#allocation3 + $0x8] sm:$0xff]
    %v1356 = vld [vmem:[#allocation3 + $0x10] sm:$0xff]
    %v1357 = vld [vmem:[#allocation3 + $0x18] sm:$0xff]
    %v1358 = vld [vmem:[#allocation3 + $0x20] sm:$0xff]
    %v1359 = vld [vmem:[#allocation3 + $0x28] sm:$0xff]
    %v1360 = vld [vmem:[#allocation3 + $0x30] sm:$0xff]
    %v1361 = vld [vmem:[#allocation3 + $0x38] sm:$0xff]
    %v1362 = vld [vmem:[#allocation3 + $0x40] sm:$0xff]
    %v1363 = vld [vmem:[#allocation3 + $0x48] sm:$0xff]
    %v1364 = vld [vmem:[#allocation3 + $0x50] sm:$0xff]
    %v1365 = vld [vmem:[#allocation3 + $0x58] sm:$0xff]
    %v1366 = vld [vmem:[#allocation3 + $0x60] sm:$0xff]
    %v1367 = vld [vmem:[#allocation3 + $0x68] sm:$0xff]
    %v1368 = vld [vmem:[#allocation3 + $0x70] sm:$0xff]
    %v1369 = vld [vmem:[#allocation3 + $0x78] sm:$0xff]
    %v1370 = vld [vmem:[#allocation3 + $0x80] sm:$0xff]
    %v1371 = vld [vmem:[#allocation3 + $0x88] sm:$0xff]
    %v1372 = vld [vmem:[#allocation3 + $0x90] sm:$0xff]
    %v1373 = vld [vmem:[#allocation3 + $0x98] sm:$0xff]
    %v1374 = vld [vmem:[#allocation3 + $0xa0] sm:$0xff]
    %v1375 = vld [vmem:[#allocation3 + $0xa8] sm:$0xff]
    %v1376 = vld [vmem:[#allocation3 + $0xb0] sm:$0xff]
    %v1377 = vld [vmem:[#allocation3 + $0xb8] sm:$0xff]
    %v1378 = vld [vmem:[#allocation3 + $0xc0] sm:$0xff]
    %v1379 = vld [vmem:[#allocation3 + $0xc8] sm:$0xff]
    %v1380 = vld [vmem:[#allocation3 + $0xd0] sm:$0xff]
    %v1381 = vld [vmem:[#allocation3 + $0xd8] sm:$0xff]
    %v1382 = vld [vmem:[#allocation3 + $0xe0] sm:$0xff]
    %v1383 = vld [vmem:[#allocation3 + $0xe8] sm:$0xff]
    %v1384 = vld [vmem:[#allocation3 + $0xf0] sm:$0xff]
    %v1385 = vld [vmem:[#allocation3 + $0xf8] sm:$0xff]
    %1386 = vmatprep.subr.bf16.mxu0 %v1355
    %1387 = vmatpush1.bf16.msra.mxu0 %v1354
    %1388 = vmatprep.subr.bf16.mxu0 %v1359
    %1389 = vmatpush1.bf16.msra.mxu0 %v1358
    %1390 = vmatprep.subr.bf16.mxu0 %v1363
    %1391 = vmatpush1.bf16.msra.mxu0 %v1362
    %1392 = vmatprep.subr.bf16.mxu0 %v1367
    %1393 = vmatpush1.bf16.msra.mxu0 %v1366
    %1394 = vmatprep.subr.bf16.mxu0 %v1371
    %1395 = vmatpush1.bf16.msra.mxu0 %v1370
    %1396 = vmatprep.subr.bf16.mxu0 %v1375
    %1397 = vmatpush1.bf16.msra.mxu0 %v1374
    %1398 = vmatprep.subr.bf16.mxu0 %v1379
    %1399 = vmatpush1.bf16.msra.mxu0 %v1378
    %1400 = vmatprep.subr.bf16.mxu0 %v1383
    %1401 = vmatpush1.bf16.msra.mxu0 %v1382
    %1402 = vmatprep.subr.bf16.mxu0 0
    %1403 = vmatpush1.bf16.msra.mxu0 0
    %1404 = vmatprep.subr.bf16.mxu0 0
    %1405 = vmatpush1.bf16.msra.mxu0 0
    %1406 = vmatprep.subr.bf16.mxu0 0
    %1407 = vmatpush1.bf16.msra.mxu0 0
    %1408 = vmatprep.subr.bf16.mxu0 0
    %1409 = vmatpush1.bf16.msra.mxu0 0
    %1410 = vmatprep.subr.bf16.mxu0 0
    %1411 = vmatpush1.bf16.msra.mxu0 0
    %1412 = vmatprep.subr.bf16.mxu0 0
    %1413 = vmatpush1.bf16.msra.mxu0 0
    %1414 = vmatprep.subr.bf16.mxu0 0
    %1415 = vmatpush1.bf16.msra.mxu0 0
    %1416 = vmatprep.subr.bf16.mxu0 0
    %1417 = vmatpush1.bf16.msra.mxu0 0
    %1418 = vmatprep.mubr.bf16.mxu0 0
    %1419 = vmatmul.mubr.bf16.gmra.mrb[0].mxu0 %v1353
    %v1420 = vpop.f32.mrb[0].mxu0
    %v1421 = vadd.f32 0.0, %v1420
    %v1422 = vpop.f32.mrb[0].mxu0
    %v1423 = vadd.f32 0.0, %v1422
    %v1424 = vpop.f32.mrb[0].mxu0
    %v1425 = vadd.f32 0.0, %v1424
    %v1426 = vpop.f32.mrb[0].mxu0
    %v1427 = vadd.f32 0.0, %v1426
    %1428 = vdwg.mxu0
    %1429 = vmatprep.subr.bf16.mxu0 %v1357
    %1430 = vmatpush1.bf16.msra.mxu0 %v1356
    %1431 = vmatprep.subr.bf16.mxu0 %v1361
    %1432 = vmatpush1.bf16.msra.mxu0 %v1360
    %1433 = vmatprep.subr.bf16.mxu0 %v1365
    %1434 = vmatpush1.bf16.msra.mxu0 %v1364
    %1435 = vmatprep.subr.bf16.mxu0 %v1369
    %1436 = vmatpush1.bf16.msra.mxu0 %v1368
    %1437 = vmatprep.subr.bf16.mxu0 %v1373
    %1438 = vmatpush1.bf16.msra.mxu0 %v1372
    %1439 = vmatprep.subr.bf16.mxu0 %v1377
    %1440 = vmatpush1.bf16.msra.mxu0 %v1376
    %1441 = vmatprep.subr.bf16.mxu0 %v1381
    %1442 = vmatpush1.bf16.msra.mxu0 %v1380
    %1443 = vmatprep.subr.bf16.mxu0 %v1385
    %1444 = vmatpush1.bf16.msra.mxu0 %v1384
    %1445 = vmatprep.subr.bf16.mxu0 0
    %1446 = vmatpush1.bf16.msra.mxu0 0
    %1447 = vmatprep.subr.bf16.mxu0 0
    %1448 = vmatpush1.bf16.msra.mxu0 0
    %1449 = vmatprep.subr.bf16.mxu0 0
    %1450 = vmatpush1.bf16.msra.mxu0 0
    %1451 = vmatprep.subr.bf16.mxu0 0
    %1452 = vmatpush1.bf16.msra.mxu0 0
    %1453 = vmatprep.subr.bf16.mxu0 0
    %1454 = vmatpush1.bf16.msra.mxu0 0
    %1455 = vmatprep.subr.bf16.mxu0 0
    %1456 = vmatpush1.bf16.msra.mxu0 0
    %1457 = vmatprep.subr.bf16.mxu0 0
    %1458 = vmatpush1.bf16.msra.mxu0 0
    %1459 = vmatprep.subr.bf16.mxu0 0
    %1460 = vmatpush1.bf16.msra.mxu0 0
    %1461 = vmatprep.mubr.bf16.mxu0 0
    %1462 = vmatmul.mubr.bf16.gmra.mrb[0].mxu0 %v1353
    %v1463 = vpop.f32.mrb[0].mxu0
    %v1464 = vadd.f32 0.0, %v1463
    %v1465 = vpop.f32.mrb[0].mxu0
    %v1466 = vadd.f32 0.0, %v1465
    %v1467 = vpop.f32.mrb[0].mxu0
    %v1468 = vadd.f32 0.0, %v1467
    %v1469 = vpop.f32.mrb[0].mxu0
    %v1470 = vadd.f32 0.0, %v1469
    %1471 = vdwg.mxu0
    %v1472 = vadd.f32 %v1343, %v1421
    %v1473 = vadd.f32 %v1344, %v1423
    %v1474 = vadd.f32 %v1345, %v1464
    %v1475 = vadd.f32 %v1346, %v1466
    %v1476 = vadd.f32 %v1347, %v1425
    %v1477 = vadd.f32 %v1348, %v1427
    %v1478 = vadd.f32 %v1349, %v1468
    %v1479 = vadd.f32 %v1350, %v1470
    %v1480 = vmul.f32 %v1472, 0.5
    %v1481 = vmul.f32 %v1476, 0.5
    %v1482 = vtanh.pop %v1480
    %v1483 = vtanh.pop %v1481
    %v1484 = vmul.f32 %v1482, 0.5
    %v1485 = vmul.f32 %v1483, 0.5
    %v1486 = vadd.f32 %v1484, 0.5
    %v1487 = vadd.f32 %v1485, 0.5
    %v1488 = vmul.f32 %v1473, 0.5
    %v1489 = vmul.f32 %v1477, 0.5
    %v1490 = vtanh.pop %v1488
    %v1491 = vtanh.pop %v1489
    %v1492 = vmul.f32 %v1490, 0.5
    %v1493 = vmul.f32 %v1491, 0.5
    %v1494 = vadd.f32 %v1492, 0.5
    %v1495 = vadd.f32 %v1493, 0.5
    %v1496 = vtanh.pop %v1474
    %v1497 = vtanh.pop %v1478
    %v1498 = vmul.f32 %v1475, 0.5
    %v1499 = vmul.f32 %v1479, 0.5
    %v1500 = vtanh.pop %v1498
    %v1501 = vtanh.pop %v1499
    %v1502 = vmul.f32 %v1500, 0.5
    %v1503 = vmul.f32 %v1501, 0.5
    %v1504 = vadd.f32 %v1502, 0.5
    %v1505 = vadd.f32 %v1503, 0.5
    %v1506 = vld [vmem:[#allocation13] sm:$0xff]
    %v1507 = vld [vmem:[#allocation13 + $0x8] sm:$0xff]
    %v1508 = vmul.f32 %v1494, %v1506
    %v1509 = vmul.f32 %v1495, %v1507
    %v1510 = vmul.f32 %v1486, %v1496
    %v1511 = vmul.f32 %v1487, %v1497
    %v1512 = vadd.f32 %v1508, %v1510
    %v1513 = vadd.f32 %v1509, %v1511
    %v1514 = vtanh.pop %v1512
    %v1515 = vtanh.pop %v1513
    %v1516 = vmul.f32 %v1504, %v1514
    %v1517 = vmul.f32 %v1505, %v1515
    %1518 = vst [vmem:[#allocation13] sm:$0xff] %v1512
    %1519 = vst [vmem:[#allocation13 + $0x8] sm:$0xff] %v1513
    %1520 = vst [vmem:[#allocation12] sm:$0xff] %v1516
    %1521 = vst [vmem:[#allocation12 + $0x8] sm:$0xff] %v1517
    %v1522 = vpack.c.bf16 %v1517, %v1516
    %s1523 = scalar_lea.vmem [#allocation11], 24
    %1524 = vst [vmem:[%s1523] sm:$0xff] %v1522
    %s1525 = smul.u32 4, 4
    %s1526 = smul.addr %s1525, 8
    %s1527 = scalar_lea.vmem [#allocation10], %s1526
    %v1528 = vld [vmem:[%s1527] sm:$0xff]
    %v1529 = vld [vmem:[%s1527 + $0x8] sm:$0xff]
    %v1530 = vld [vmem:[%s1527 + $0x10] sm:$0xff]
    %v1531 = vld [vmem:[%s1527 + $0x18] sm:$0xff]
    %v1532 = vunpack.c.l.bf16 %v1528
    %v1533 = vunpack.c.l.bf16 %v1529
    %v1534 = vunpack.c.l.bf16 %v1530
    %v1535 = vunpack.c.l.bf16 %v1531
    %v1536 = vunpack.c.h.bf16 %v1528
    %v1537 = vunpack.c.h.bf16 %v1529
    %v1538 = vunpack.c.h.bf16 %v1530
    %v1539 = vunpack.c.h.bf16 %v1531
    %v1540 = vld [vmem:[#allocation12] sm:$0xff]
    %v1541 = vld [vmem:[#allocation12 + $0x8] sm:$0xff]
    %v1542 = vpack.c.bf16 %v1541, %v1540
    %v1543 = vld [vmem:[#allocation3] sm:$0xff]
    %v1544 = vld [vmem:[#allocation3 + $0x8] sm:$0xff]
    %v1545 = vld [vmem:[#allocation3 + $0x10] sm:$0xff]
    %v1546 = vld [vmem:[#allocation3 + $0x18] sm:$0xff]
    %v1547 = vld [vmem:[#allocation3 + $0x20] sm:$0xff]
    %v1548 = vld [vmem:[#allocation3 + $0x28] sm:$0xff]
    %v1549 = vld [vmem:[#allocation3 + $0x30] sm:$0xff]
    %v1550 = vld [vmem:[#allocation3 + $0x38] sm:$0xff]
    %v1551 = vld [vmem:[#allocation3 + $0x40] sm:$0xff]
    %v1552 = vld [vmem:[#allocation3 + $0x48] sm:$0xff]
    %v1553 = vld [vmem:[#allocation3 + $0x50] sm:$0xff]
    %v1554 = vld [vmem:[#allocation3 + $0x58] sm:$0xff]
    %v1555 = vld [vmem:[#allocation3 + $0x60] sm:$0xff]
    %v1556 = vld [vmem:[#allocation3 + $0x68] sm:$0xff]
    %v1557 = vld [vmem:[#allocation3 + $0x70] sm:$0xff]
    %v1558 = vld [vmem:[#allocation3 + $0x78] sm:$0xff]
    %v1559 = vld [vmem:[#allocation3 + $0x80] sm:$0xff]
    %v1560 = vld [vmem:[#allocation3 + $0x88] sm:$0xff]
    %v1561 = vld [vmem:[#allocation3 + $0x90] sm:$0xff]
    %v1562 = vld [vmem:[#allocation3 + $0x98] sm:$0xff]
    %v1563 = vld [vmem:[#allocation3 + $0xa0] sm:$0xff]
    %v1564 = vld [vmem:[#allocation3 + $0xa8] sm:$0xff]
    %v1565 = vld [vmem:[#allocation3 + $0xb0] sm:$0xff]
    %v1566 = vld [vmem:[#allocation3 + $0xb8] sm:$0xff]
    %v1567 = vld [vmem:[#allocation3 + $0xc0] sm:$0xff]
    %v1568 = vld [vmem:[#allocation3 + $0xc8] sm:$0xff]
    %v1569 = vld [vmem:[#allocation3 + $0xd0] sm:$0xff]
    %v1570 = vld [vmem:[#allocation3 + $0xd8] sm:$0xff]
    %v1571 = vld [vmem:[#allocation3 + $0xe0] sm:$0xff]
    %v1572 = vld [vmem:[#allocation3 + $0xe8] sm:$0xff]
    %v1573 = vld [vmem:[#allocation3 + $0xf0] sm:$0xff]
    %v1574 = vld [vmem:[#allocation3 + $0xf8] sm:$0xff]
    %1575 = vmatprep.subr.bf16.mxu0 %v1544
    %1576 = vmatpush1.bf16.msra.mxu0 %v1543
    %1577 = vmatprep.subr.bf16.mxu0 %v1548
    %1578 = vmatpush1.bf16.msra.mxu0 %v1547
    %1579 = vmatprep.subr.bf16.mxu0 %v1552
    %1580 = vmatpush1.bf16.msra.mxu0 %v1551
    %1581 = vmatprep.subr.bf16.mxu0 %v1556
    %1582 = vmatpush1.bf16.msra.mxu0 %v1555
    %1583 = vmatprep.subr.bf16.mxu0 %v1560
    %1584 = vmatpush1.bf16.msra.mxu0 %v1559
    %1585 = vmatprep.subr.bf16.mxu0 %v1564
    %1586 = vmatpush1.bf16.msra.mxu0 %v1563
    %1587 = vmatprep.subr.bf16.mxu0 %v1568
    %1588 = vmatpush1.bf16.msra.mxu0 %v1567
    %1589 = vmatprep.subr.bf16.mxu0 %v1572
    %1590 = vmatpush1.bf16.msra.mxu0 %v1571
    %1591 = vmatprep.subr.bf16.mxu0 0
    %1592 = vmatpush1.bf16.msra.mxu0 0
    %1593 = vmatprep.subr.bf16.mxu0 0
    %1594 = vmatpush1.bf16.msra.mxu0 0
    %1595 = vmatprep.subr.bf16.mxu0 0
    %1596 = vmatpush1.bf16.msra.mxu0 0
    %1597 = vmatprep.subr.bf16.mxu0 0
    %1598 = vmatpush1.bf16.msra.mxu0 0
    %1599 = vmatprep.subr.bf16.mxu0 0
    %1600 = vmatpush1.bf16.msra.mxu0 0
    %1601 = vmatprep.subr.bf16.mxu0 0
    %1602 = vmatpush1.bf16.msra.mxu0 0
    %1603 = vmatprep.subr.bf16.mxu0 0
    %1604 = vmatpush1.bf16.msra.mxu0 0
    %1605 = vmatprep.subr.bf16.mxu0 0
    %1606 = vmatpush1.bf16.msra.mxu0 0
    %1607 = vmatprep.mubr.bf16.mxu0 0
    %1608 = vmatmul.mubr.bf16.gmra.mrb[0].mxu0 %v1542
    %v1609 = vpop.f32.mrb[0].mxu0
    %v1610 = vadd.f32 0.0, %v1609
    %v1611 = vpop.f32.mrb[0].mxu0
    %v1612 = vadd.f32 0.0, %v1611
    %v1613 = vpop.f32.mrb[0].mxu0
    %v1614 = vadd.f32 0.0, %v1613
    %v1615 = vpop.f32.mrb[0].mxu0
    %v1616 = vadd.f32 0.0, %v1615
    %1617 = vdwg.mxu0
    %1618 = vmatprep.subr.bf16.mxu0 %v1546
    %1619 = vmatpush1.bf16.msra.mxu0 %v1545
    %1620 = vmatprep.subr.bf16.mxu0 %v1550
    %1621 = vmatpush1.bf16.msra.mxu0 %v1549
    %1622 = vmatprep.subr.bf16.mxu0 %v1554
    %1623 = vmatpush1.bf16.msra.mxu0 %v1553
    %1624 = vmatprep.subr.bf16.mxu0 %v1558
    %1625 = vmatpush1.bf16.msra.mxu0 %v1557
    %1626 = vmatprep.subr.bf16.mxu0 %v1562
    %1627 = vmatpush1.bf16.msra.mxu0 %v1561
    %1628 = vmatprep.subr.bf16.mxu0 %v1566
    %1629 = vmatpush1.bf16.msra.mxu0 %v1565
    %1630 = vmatprep.subr.bf16.mxu0 %v1570
    %1631 = vmatpush1.bf16.msra.mxu0 %v1569
    %1632 = vmatprep.subr.bf16.mxu0 %v1574
    %1633 = vmatpush1.bf16.msra.mxu0 %v1573
    %1634 = vmatprep.subr.bf16.mxu0 0
    %1635 = vmatpush1.bf16.msra.mxu0 0
    %1636 = vmatprep.subr.bf16.mxu0 0
    %1637 = vmatpush1.bf16.msra.mxu0 0
    %1638 = vmatprep.subr.bf16.mxu0 0
    %1639 = vmatpush1.bf16.msra.mxu0 0
    %1640 = vmatprep.subr.bf16.mxu0 0
    %1641 = vmatpush1.bf16.msra.mxu0 0
    %1642 = vmatprep.subr.bf16.mxu0 0
    %1643 = vmatpush1.bf16.msra.mxu0 0
    %1644 = vmatprep.subr.bf16.mxu0 0
    %1645 = vmatpush1.bf16.msra.mxu0 0
    %1646 = vmatprep.subr.bf16.mxu0 0
    %1647 = vmatpush1.bf16.msra.mxu0 0
    %1648 = vmatprep.subr.bf16.mxu0 0
    %1649 = vmatpush1.bf16.msra.mxu0 0
    %1650 = vmatprep.mubr.bf16.mxu0 0
    %1651 = vmatmul.mubr.bf16.gmra.mrb[0].mxu0 %v1542
    %v1652 = vpop.f32.mrb[0].mxu0
    %v1653 = vadd.f32 0.0, %v1652
    %v1654 = vpop.f32.mrb[0].mxu0
    %v1655 = vadd.f32 0.0, %v1654
    %v1656 = vpop.f32.mrb[0].mxu0
    %v1657 = vadd.f32 0.0, %v1656
    %v1658 = vpop.f32.mrb[0].mxu0
    %v1659 = vadd.f32 0.0, %v1658
    %1660 = vdwg.mxu0
    %v1661 = vadd.f32 %v1532, %v1610
    %v1662 = vadd.f32 %v1533, %v1612
    %v1663 = vadd.f32 %v1534, %v1653
    %v1664 = vadd.f32 %v1535, %v1655
    %v1665 = vadd.f32 %v1536, %v1614
    %v1666 = vadd.f32 %v1537, %v1616
    %v1667 = vadd.f32 %v1538, %v1657
    %v1668 = vadd.f32 %v1539, %v1659
    %v1669 = vmul.f32 %v1661, 0.5
    %v1670 = vmul.f32 %v1665, 0.5
    %v1671 = vtanh.pop %v1669
    %v1672 = vtanh.pop %v1670
    %v1673 = vmul.f32 %v1671, 0.5
    %v1674 = vmul.f32 %v1672, 0.5
    %v1675 = vadd.f32 %v1673, 0.5
    %v1676 = vadd.f32 %v1674, 0.5
    %v1677 = vmul.f32 %v1662, 0.5
    %v1678 = vmul.f32 %v1666, 0.5
    %v1679 = vtanh.pop %v1677
    %v1680 = vtanh.pop %v1678
    %v1681 = vmul.f32 %v1679, 0.5
    %v1682 = vmul.f32 %v1680, 0.5
    %v1683 = vadd.f32 %v1681, 0.5
    %v1684 = vadd.f32 %v1682, 0.5
    %v1685 = vtanh.pop %v1663
    %v1686 = vtanh.pop %v1667
    %v1687 = vmul.f32 %v1664, 0.5
    %v1688 = vmul.f32 %v1668, 0.5
    %v1689 = vtanh.pop %v1687
    %v1690 = vtanh.pop %v1688
    %v1691 = vmul.f32 %v1689, 0.5
    %v1692 = vmul.f32 %v1690, 0.5
    %v1693 = vadd.f32 %v1691, 0.5
    %v1694 = vadd.f32 %v1692, 0.5
    %v1695 = vld [vmem:[#allocation13] sm:$0xff]
    %v1696 = vld [vmem:[#allocation13 + $0x8] sm:$0xff]
    %v1697 = vmul.f32 %v1683, %v1695
    %v1698 = vmul.f32 %v1684, %v1696
    %v1699 = vmul.f32 %v1675, %v1685
    %v1700 = vmul.f32 %v1676, %v1686
    %v1701 = vadd.f32 %v1697, %v1699
    %v1702 = vadd.f32 %v1698, %v1700
    %v1703 = vtanh.pop %v1701
    %v1704 = vtanh.pop %v1702
    %v1705 = vmul.f32 %v1693, %v1703
    %v1706 = vmul.f32 %v1694, %v1704
    %1707 = vst [vmem:[#allocation13] sm:$0xff] %v1701
    %1708 = vst [vmem:[#allocation13 + $0x8] sm:$0xff] %v1702
    %1709 = vst [vmem:[#allocation12] sm:$0xff] %v1705
    %1710 = vst [vmem:[#allocation12 + $0x8] sm:$0xff] %v1706
    %v1711 = vpack.c.bf16 %v1706, %v1705
    %s1712 = scalar_lea.vmem [#allocation11], 32
    %1713 = vst [vmem:[%s1712] sm:$0xff] %v1711
    %s1714 = smul.u32 5, 4
    %s1715 = smul.addr %s1714, 8
    %s1716 = scalar_lea.vmem [#allocation10], %s1715
    %v1717 = vld [vmem:[%s1716] sm:$0xff]
    %v1718 = vld [vmem:[%s1716 + $0x8] sm:$0xff]
    %v1719 = vld [vmem:[%s1716 + $0x10] sm:$0xff]
    %v1720 = vld [vmem:[%s1716 + $0x18] sm:$0xff]
    %v1721 = vunpack.c.l.bf16 %v1717
    %v1722 = vunpack.c.l.bf16 %v1718
    %v1723 = vunpack.c.l.bf16 %v1719
    %v1724 = vunpack.c.l.bf16 %v1720
    %v1725 = vunpack.c.h.bf16 %v1717
    %v1726 = vunpack.c.h.bf16 %v1718
    %v1727 = vunpack.c.h.bf16 %v1719
    %v1728 = vunpack.c.h.bf16 %v1720
    %v1729 = vld [vmem:[#allocation12] sm:$0xff]
    %v1730 = vld [vmem:[#allocation12 + $0x8] sm:$0xff]
    %v1731 = vpack.c.bf16 %v1730, %v1729
    %v1732 = vld [vmem:[#allocation3] sm:$0xff]
    %v1733 = vld [vmem:[#allocation3 + $0x8] sm:$0xff]
    %v1734 = vld [vmem:[#allocation3 + $0x10] sm:$0xff]
    %v1735 = vld [vmem:[#allocation3 + $0x18] sm:$0xff]
    %v1736 = vld [vmem:[#allocation3 + $0x20] sm:$0xff]
    %v1737 = vld [vmem:[#allocation3 + $0x28] sm:$0xff]
    %v1738 = vld [vmem:[#allocation3 + $0x30] sm:$0xff]
    %v1739 = vld [vmem:[#allocation3 + $0x38] sm:$0xff]
    %v1740 = vld [vmem:[#allocation3 + $0x40] sm:$0xff]
    %v1741 = vld [vmem:[#allocation3 + $0x48] sm:$0xff]
    %v1742 = vld [vmem:[#allocation3 + $0x50] sm:$0xff]
    %v1743 = vld [vmem:[#allocation3 + $0x58] sm:$0xff]
    %v1744 = vld [vmem:[#allocation3 + $0x60] sm:$0xff]
    %v1745 = vld [vmem:[#allocation3 + $0x68] sm:$0xff]
    %v1746 = vld [vmem:[#allocation3 + $0x70] sm:$0xff]
    %v1747 = vld [vmem:[#allocation3 + $0x78] sm:$0xff]
    %v1748 = vld [vmem:[#allocation3 + $0x80] sm:$0xff]
    %v1749 = vld [vmem:[#allocation3 + $0x88] sm:$0xff]
    %v1750 = vld [vmem:[#allocation3 + $0x90] sm:$0xff]
    %v1751 = vld [vmem:[#allocation3 + $0x98] sm:$0xff]
    %v1752 = vld [vmem:[#allocation3 + $0xa0] sm:$0xff]
    %v1753 = vld [vmem:[#allocation3 + $0xa8] sm:$0xff]
    %v1754 = vld [vmem:[#allocation3 + $0xb0] sm:$0xff]
    %v1755 = vld [vmem:[#allocation3 + $0xb8] sm:$0xff]
    %v1756 = vld [vmem:[#allocation3 + $0xc0] sm:$0xff]
    %v1757 = vld [vmem:[#allocation3 + $0xc8] sm:$0xff]
    %v1758 = vld [vmem:[#allocation3 + $0xd0] sm:$0xff]
    %v1759 = vld [vmem:[#allocation3 + $0xd8] sm:$0xff]
    %v1760 = vld [vmem:[#allocation3 + $0xe0] sm:$0xff]
    %v1761 = vld [vmem:[#allocation3 + $0xe8] sm:$0xff]
    %v1762 = vld [vmem:[#allocation3 + $0xf0] sm:$0xff]
    %v1763 = vld [vmem:[#allocation3 + $0xf8] sm:$0xff]
    %1764 = vmatprep.subr.bf16.mxu0 %v1733
    %1765 = vmatpush1.bf16.msra.mxu0 %v1732
    %1766 = vmatprep.subr.bf16.mxu0 %v1737
    %1767 = vmatpush1.bf16.msra.mxu0 %v1736
    %1768 = vmatprep.subr.bf16.mxu0 %v1741
    %1769 = vmatpush1.bf16.msra.mxu0 %v1740
    %1770 = vmatprep.subr.bf16.mxu0 %v1745
    %1771 = vmatpush1.bf16.msra.mxu0 %v1744
    %1772 = vmatprep.subr.bf16.mxu0 %v1749
    %1773 = vmatpush1.bf16.msra.mxu0 %v1748
    %1774 = vmatprep.subr.bf16.mxu0 %v1753
    %1775 = vmatpush1.bf16.msra.mxu0 %v1752
    %1776 = vmatprep.subr.bf16.mxu0 %v1757
    %1777 = vmatpush1.bf16.msra.mxu0 %v1756
    %1778 = vmatprep.subr.bf16.mxu0 %v1761
    %1779 = vmatpush1.bf16.msra.mxu0 %v1760
    %1780 = vmatprep.subr.bf16.mxu0 0
    %1781 = vmatpush1.bf16.msra.mxu0 0
    %1782 = vmatprep.subr.bf16.mxu0 0
    %1783 = vmatpush1.bf16.msra.mxu0 0
    %1784 = vmatprep.subr.bf16.mxu0 0
    %1785 = vmatpush1.bf16.msra.mxu0 0
    %1786 = vmatprep.subr.bf16.mxu0 0
    %1787 = vmatpush1.bf16.msra.mxu0 0
    %1788 = vmatprep.subr.bf16.mxu0 0
    %1789 = vmatpush1.bf16.msra.mxu0 0
    %1790 = vmatprep.subr.bf16.mxu0 0
    %1791 = vmatpush1.bf16.msra.mxu0 0
    %1792 = vmatprep.subr.bf16.mxu0 0
    %1793 = vmatpush1.bf16.msra.mxu0 0
    %1794 = vmatprep.subr.bf16.mxu0 0
    %1795 = vmatpush1.bf16.msra.mxu0 0
    %1796 = vmatprep.mubr.bf16.mxu0 0
    %1797 = vmatmul.mubr.bf16.gmra.mrb[0].mxu0 %v1731
    %v1798 = vpop.f32.mrb[0].mxu0
    %v1799 = vadd.f32 0.0, %v1798
    %v1800 = vpop.f32.mrb[0].mxu0
    %v1801 = vadd.f32 0.0, %v1800
    %v1802 = vpop.f32.mrb[0].mxu0
    %v1803 = vadd.f32 0.0, %v1802
    %v1804 = vpop.f32.mrb[0].mxu0
    %v1805 = vadd.f32 0.0, %v1804
    %1806 = vdwg.mxu0
    %1807 = vmatprep.subr.bf16.mxu0 %v1735
    %1808 = vmatpush1.bf16.msra.mxu0 %v1734
    %1809 = vmatprep.subr.bf16.mxu0 %v1739
    %1810 = vmatpush1.bf16.msra.mxu0 %v1738
    %1811 = vmatprep.subr.bf16.mxu0 %v1743
    %1812 = vmatpush1.bf16.msra.mxu0 %v1742
    %1813 = vmatprep.subr.bf16.mxu0 %v1747
    %1814 = vmatpush1.bf16.msra.mxu0 %v1746
    %1815 = vmatprep.subr.bf16.mxu0 %v1751
    %1816 = vmatpush1.bf16.msra.mxu0 %v1750
    %1817 = vmatprep.subr.bf16.mxu0 %v1755
    %1818 = vmatpush1.bf16.msra.mxu0 %v1754
    %1819 = vmatprep.subr.bf16.mxu0 %v1759
    %1820 = vmatpush1.bf16.msra.mxu0 %v1758
    %1821 = vmatprep.subr.bf16.mxu0 %v1763
    %1822 = vmatpush1.bf16.msra.mxu0 %v1762
    %1823 = vmatprep.subr.bf16.mxu0 0
    %1824 = vmatpush1.bf16.msra.mxu0 0
    %1825 = vmatprep.subr.bf16.mxu0 0
    %1826 = vmatpush1.bf16.msra.mxu0 0
    %1827 = vmatprep.subr.bf16.mxu0 0
    %1828 = vmatpush1.bf16.msra.mxu0 0
    %1829 = vmatprep.subr.bf16.mxu0 0
    %1830 = vmatpush1.bf16.msra.mxu0 0
    %1831 = vmatprep.subr.bf16.mxu0 0
    %1832 = vmatpush1.bf16.msra.mxu0 0
    %1833 = vmatprep.subr.bf16.mxu0 0
    %1834 = vmatpush1.bf16.msra.mxu0 0
    %1835 = vmatprep.subr.bf16.mxu0 0
    %1836 = vmatpush1.bf16.msra.mxu0 0
    %1837 = vmatprep.subr.bf16.mxu0 0
    %1838 = vmatpush1.bf16.msra.mxu0 0
    %1839 = vmatprep.mubr.bf16.mxu0 0
    %1840 = vmatmul.mubr.bf16.gmra.mrb[0].mxu0 %v1731
    %v1841 = vpop.f32.mrb[0].mxu0
    %v1842 = vadd.f32 0.0, %v1841
    %v1843 = vpop.f32.mrb[0].mxu0
    %v1844 = vadd.f32 0.0, %v1843
    %v1845 = vpop.f32.mrb[0].mxu0
    %v1846 = vadd.f32 0.0, %v1845
    %v1847 = vpop.f32.mrb[0].mxu0
    %v1848 = vadd.f32 0.0, %v1847
    %1849 = vdwg.mxu0
    %v1850 = vadd.f32 %v1721, %v1799
    %v1851 = vadd.f32 %v1722, %v1801
    %v1852 = vadd.f32 %v1723, %v1842
    %v1853 = vadd.f32 %v1724, %v1844
    %v1854 = vadd.f32 %v1725, %v1803
    %v1855 = vadd.f32 %v1726, %v1805
    %v1856 = vadd.f32 %v1727, %v1846
    %v1857 = vadd.f32 %v1728, %v1848
    %v1858 = vmul.f32 %v1850, 0.5
    %v1859 = vmul.f32 %v1854, 0.5
    %v1860 = vtanh.pop %v1858
    %v1861 = vtanh.pop %v1859
    %v1862 = vmul.f32 %v1860, 0.5
    %v1863 = vmul.f32 %v1861, 0.5
    %v1864 = vadd.f32 %v1862, 0.5
    %v1865 = vadd.f32 %v1863, 0.5
    %v1866 = vmul.f32 %v1851, 0.5
    %v1867 = vmul.f32 %v1855, 0.5
    %v1868 = vtanh.pop %v1866
    %v1869 = vtanh.pop %v1867
    %v1870 = vmul.f32 %v1868, 0.5
    %v1871 = vmul.f32 %v1869, 0.5
    %v1872 = vadd.f32 %v1870, 0.5
    %v1873 = vadd.f32 %v1871, 0.5
    %v1874 = vtanh.pop %v1852
    %v1875 = vtanh.pop %v1856
    %v1876 = vmul.f32 %v1853, 0.5
    %v1877 = vmul.f32 %v1857, 0.5
    %v1878 = vtanh.pop %v1876
    %v1879 = vtanh.pop %v1877
    %v1880 = vmul.f32 %v1878, 0.5
    %v1881 = vmul.f32 %v1879, 0.5
    %v1882 = vadd.f32 %v1880, 0.5
    %v1883 = vadd.f32 %v1881, 0.5
    %v1884 = vld [vmem:[#allocation13] sm:$0xff]
    %v1885 = vld [vmem:[#allocation13 + $0x8] sm:$0xff]
    %v1886 = vmul.f32 %v1872, %v1884
    %v1887 = vmul.f32 %v1873, %v1885
    %v1888 = vmul.f32 %v1864, %v1874
    %v1889 = vmul.f32 %v1865, %v1875
    %v1890 = vadd.f32 %v1886, %v1888
    %v1891 = vadd.f32 %v1887, %v1889
    %v1892 = vtanh.pop %v1890
    %v1893 = vtanh.pop %v1891
    %v1894 = vmul.f32 %v1882, %v1892
    %v1895 = vmul.f32 %v1883, %v1893
    %1896 = vst [vmem:[#allocation13] sm:$0xff] %v1890
    %1897 = vst [vmem:[#allocation13 + $0x8] sm:$0xff] %v1891
    %1898 = vst [vmem:[#allocation12] sm:$0xff] %v1894
    %1899 = vst [vmem:[#allocation12 + $0x8] sm:$0xff] %v1895
    %v1900 = vpack.c.bf16 %v1895, %v1894
    %s1901 = scalar_lea.vmem [#allocation11], 40
    %1902 = vst [vmem:[%s1901] sm:$0xff] %v1900
    %s1903 = smul.u32 6, 4
    %s1904 = smul.addr %s1903, 8
    %s1905 = scalar_lea.vmem [#allocation10], %s1904
    %v1906 = vld [vmem:[%s1905] sm:$0xff]
    %v1907 = vld [vmem:[%s1905 + $0x8] sm:$0xff]
    %v1908 = vld [vmem:[%s1905 + $0x10] sm:$0xff]
    %v1909 = vld [vmem:[%s1905 + $0x18] sm:$0xff]
    %v1910 = vunpack.c.l.bf16 %v1906
    %v1911 = vunpack.c.l.bf16 %v1907
    %v1912 = vunpack.c.l.bf16 %v1908
    %v1913 = vunpack.c.l.bf16 %v1909
    %v1914 = vunpack.c.h.bf16 %v1906
    %v1915 = vunpack.c.h.bf16 %v1907
    %v1916 = vunpack.c.h.bf16 %v1908
    %v1917 = vunpack.c.h.bf16 %v1909
    %v1918 = vld [vmem:[#allocation12] sm:$0xff]
    %v1919 = vld [vmem:[#allocation12 + $0x8] sm:$0xff]
    %v1920 = vpack.c.bf16 %v1919, %v1918
    %v1921 = vld [vmem:[#allocation3] sm:$0xff]
    %v1922 = vld [vmem:[#allocation3 + $0x8] sm:$0xff]
    %v1923 = vld [vmem:[#allocation3 + $0x10] sm:$0xff]
    %v1924 = vld [vmem:[#allocation3 + $0x18] sm:$0xff]
    %v1925 = vld [vmem:[#allocation3 + $0x20] sm:$0xff]
    %v1926 = vld [vmem:[#allocation3 + $0x28] sm:$0xff]
    %v1927 = vld [vmem:[#allocation3 + $0x30] sm:$0xff]
    %v1928 = vld [vmem:[#allocation3 + $0x38] sm:$0xff]
    %v1929 = vld [vmem:[#allocation3 + $0x40] sm:$0xff]
    %v1930 = vld [vmem:[#allocation3 + $0x48] sm:$0xff]
    %v1931 = vld [vmem:[#allocation3 + $0x50] sm:$0xff]
    %v1932 = vld [vmem:[#allocation3 + $0x58] sm:$0xff]
    %v1933 = vld [vmem:[#allocation3 + $0x60] sm:$0xff]
    %v1934 = vld [vmem:[#allocation3 + $0x68] sm:$0xff]
    %v1935 = vld [vmem:[#allocation3 + $0x70] sm:$0xff]
    %v1936 = vld [vmem:[#allocation3 + $0x78] sm:$0xff]
    %v1937 = vld [vmem:[#allocation3 + $0x80] sm:$0xff]
    %v1938 = vld [vmem:[#allocation3 + $0x88] sm:$0xff]
    %v1939 = vld [vmem:[#allocation3 + $0x90] sm:$0xff]
    %v1940 = vld [vmem:[#allocation3 + $0x98] sm:$0xff]
    %v1941 = vld [vmem:[#allocation3 + $0xa0] sm:$0xff]
    %v1942 = vld [vmem:[#allocation3 + $0xa8] sm:$0xff]
    %v1943 = vld [vmem:[#allocation3 + $0xb0] sm:$0xff]
    %v1944 = vld [vmem:[#allocation3 + $0xb8] sm:$0xff]
    %v1945 = vld [vmem:[#allocation3 + $0xc0] sm:$0xff]
    %v1946 = vld [vmem:[#allocation3 + $0xc8] sm:$0xff]
    %v1947 = vld [vmem:[#allocation3 + $0xd0] sm:$0xff]
    %v1948 = vld [vmem:[#allocation3 + $0xd8] sm:$0xff]
    %v1949 = vld [vmem:[#allocation3 + $0xe0] sm:$0xff]
    %v1950 = vld [vmem:[#allocation3 + $0xe8] sm:$0xff]
    %v1951 = vld [vmem:[#allocation3 + $0xf0] sm:$0xff]
    %v1952 = vld [vmem:[#allocation3 + $0xf8] sm:$0xff]
    %1953 = vmatprep.subr.bf16.mxu0 %v1922
    %1954 = vmatpush1.bf16.msra.mxu0 %v1921
    %1955 = vmatprep.subr.bf16.mxu0 %v1926
    %1956 = vmatpush1.bf16.msra.mxu0 %v1925
    %1957 = vmatprep.subr.bf16.mxu0 %v1930
    %1958 = vmatpush1.bf16.msra.mxu0 %v1929
    %1959 = vmatprep.subr.bf16.mxu0 %v1934
    %1960 = vmatpush1.bf16.msra.mxu0 %v1933
    %1961 = vmatprep.subr.bf16.mxu0 %v1938
    %1962 = vmatpush1.bf16.msra.mxu0 %v1937
    %1963 = vmatprep.subr.bf16.mxu0 %v1942
    %1964 = vmatpush1.bf16.msra.mxu0 %v1941
    %1965 = vmatprep.subr.bf16.mxu0 %v1946
    %1966 = vmatpush1.bf16.msra.mxu0 %v1945
    %1967 = vmatprep.subr.bf16.mxu0 %v1950
    %1968 = vmatpush1.bf16.msra.mxu0 %v1949
    %1969 = vmatprep.subr.bf16.mxu0 0
    %1970 = vmatpush1.bf16.msra.mxu0 0
    %1971 = vmatprep.subr.bf16.mxu0 0
    %1972 = vmatpush1.bf16.msra.mxu0 0
    %1973 = vmatprep.subr.bf16.mxu0 0
    %1974 = vmatpush1.bf16.msra.mxu0 0
    %1975 = vmatprep.subr.bf16.mxu0 0
    %1976 = vmatpush1.bf16.msra.mxu0 0
    %1977 = vmatprep.subr.bf16.mxu0 0
    %1978 = vmatpush1.bf16.msra.mxu0 0
    %1979 = vmatprep.subr.bf16.mxu0 0
    %1980 = vmatpush1.bf16.msra.mxu0 0
    %1981 = vmatprep.subr.bf16.mxu0 0
    %1982 = vmatpush1.bf16.msra.mxu0 0
    %1983 = vmatprep.subr.bf16.mxu0 0
    %1984 = vmatpush1.bf16.msra.mxu0 0
    %1985 = vmatprep.mubr.bf16.mxu0 0
    %1986 = vmatmul.mubr.bf16.gmra.mrb[0].mxu0 %v1920
    %v1987 = vpop.f32.mrb[0].mxu0
    %v1988 = vadd.f32 0.0, %v1987
    %v1989 = vpop.f32.mrb[0].mxu0
    %v1990 = vadd.f32 0.0, %v1989
    %v1991 = vpop.f32.mrb[0].mxu0
    %v1992 = vadd.f32 0.0, %v1991
    %v1993 = vpop.f32.mrb[0].mxu0
    %v1994 = vadd.f32 0.0, %v1993
    %1995 = vdwg.mxu0
    %1996 = vmatprep.subr.bf16.mxu0 %v1924
    %1997 = vmatpush1.bf16.msra.mxu0 %v1923
    %1998 = vmatprep.subr.bf16.mxu0 %v1928
    %1999 = vmatpush1.bf16.msra.mxu0 %v1927
    %2000 = vmatprep.subr.bf16.mxu0 %v1932
    %2001 = vmatpush1.bf16.msra.mxu0 %v1931
    %2002 = vmatprep.subr.bf16.mxu0 %v1936
    %2003 = vmatpush1.bf16.msra.mxu0 %v1935
    %2004 = vmatprep.subr.bf16.mxu0 %v1940
    %2005 = vmatpush1.bf16.msra.mxu0 %v1939
    %2006 = vmatprep.subr.bf16.mxu0 %v1944
    %2007 = vmatpush1.bf16.msra.mxu0 %v1943
    %2008 = vmatprep.subr.bf16.mxu0 %v1948
    %2009 = vmatpush1.bf16.msra.mxu0 %v1947
    %2010 = vmatprep.subr.bf16.mxu0 %v1952
    %2011 = vmatpush1.bf16.msra.mxu0 %v1951
    %2012 = vmatprep.subr.bf16.mxu0 0
    %2013 = vmatpush1.bf16.msra.mxu0 0
    %2014 = vmatprep.subr.bf16.mxu0 0
    %2015 = vmatpush1.bf16.msra.mxu0 0
    %2016 = vmatprep.subr.bf16.mxu0 0
    %2017 = vmatpush1.bf16.msra.mxu0 0
    %2018 = vmatprep.subr.bf16.mxu0 0
    %2019 = vmatpush1.bf16.msra.mxu0 0
    %2020 = vmatprep.subr.bf16.mxu0 0
    %2021 = vmatpush1.bf16.msra.mxu0 0
    %2022 = vmatprep.subr.bf16.mxu0 0
    %2023 = vmatpush1.bf16.msra.mxu0 0
    %2024 = vmatprep.subr.bf16.mxu0 0
    %2025 = vmatpush1.bf16.msra.mxu0 0
    %2026 = vmatprep.subr.bf16.mxu0 0
    %2027 = vmatpush1.bf16.msra.mxu0 0
    %2028 = vmatprep.mubr.bf16.mxu0 0
    %2029 = vmatmul.mubr.bf16.gmra.mrb[0].mxu0 %v1920
    %v2030 = vpop.f32.mrb[0].mxu0
    %v2031 = vadd.f32 0.0, %v2030
    %v2032 = vpop.f32.mrb[0].mxu0
    %v2033 = vadd.f32 0.0, %v2032
    %v2034 = vpop.f32.mrb[0].mxu0
    %v2035 = vadd.f32 0.0, %v2034
    %v2036 = vpop.f32.mrb[0].mxu0
    %v2037 = vadd.f32 0.0, %v2036
    %2038 = vdwg.mxu0
    %v2039 = vadd.f32 %v1910, %v1988
    %v2040 = vadd.f32 %v1911, %v1990
    %v2041 = vadd.f32 %v1912, %v2031
    %v2042 = vadd.f32 %v1913, %v2033
    %v2043 = vadd.f32 %v1914, %v1992
    %v2044 = vadd.f32 %v1915, %v1994
    %v2045 = vadd.f32 %v1916, %v2035
    %v2046 = vadd.f32 %v1917, %v2037
    %v2047 = vmul.f32 %v2039, 0.5
    %v2048 = vmul.f32 %v2043, 0.5
    %v2049 = vtanh.pop %v2047
    %v2050 = vtanh.pop %v2048
    %v2051 = vmul.f32 %v2049, 0.5
    %v2052 = vmul.f32 %v2050, 0.5
    %v2053 = vadd.f32 %v2051, 0.5
    %v2054 = vadd.f32 %v2052, 0.5
    %v2055 = vmul.f32 %v2040, 0.5
    %v2056 = vmul.f32 %v2044, 0.5
    %v2057 = vtanh.pop %v2055
    %v2058 = vtanh.pop %v2056
    %v2059 = vmul.f32 %v2057, 0.5
    %v2060 = vmul.f32 %v2058, 0.5
    %v2061 = vadd.f32 %v2059, 0.5
    %v2062 = vadd.f32 %v2060, 0.5
    %v2063 = vtanh.pop %v2041
    %v2064 = vtanh.pop %v2045
    %v2065 = vmul.f32 %v2042, 0.5
    %v2066 = vmul.f32 %v2046, 0.5
    %v2067 = vtanh.pop %v2065
    %v2068 = vtanh.pop %v2066
    %v2069 = vmul.f32 %v2067, 0.5
    %v2070 = vmul.f32 %v2068, 0.5
    %v2071 = vadd.f32 %v2069, 0.5
    %v2072 = vadd.f32 %v2070, 0.5
    %v2073 = vld [vmem:[#allocation13] sm:$0xff]
    %v2074 = vld [vmem:[#allocation13 + $0x8] sm:$0xff]
    %v2075 = vmul.f32 %v2061, %v2073
    %v2076 = vmul.f32 %v2062, %v2074
    %v2077 = vmul.f32 %v2053, %v2063
    %v2078 = vmul.f32 %v2054, %v2064
    %v2079 = vadd.f32 %v2075, %v2077
    %v2080 = vadd.f32 %v2076, %v2078
    %v2081 = vtanh.pop %v2079
    %v2082 = vtanh.pop %v2080
    %v2083 = vmul.f32 %v2071, %v2081
    %v2084 = vmul.f32 %v2072, %v2082
    %2085 = vst [vmem:[#allocation13] sm:$0xff] %v2079
    %2086 = vst [vmem:[#allocation13 + $0x8] sm:$0xff] %v2080
    %2087 = vst [vmem:[#allocation12] sm:$0xff] %v2083
    %2088 = vst [vmem:[#allocation12 + $0x8] sm:$0xff] %v2084
    %v2089 = vpack.c.bf16 %v2084, %v2083
    %s2090 = scalar_lea.vmem [#allocation11], 48
    %2091 = vst [vmem:[%s2090] sm:$0xff] %v2089
    %s2092 = smul.u32 7, 4
    %s2093 = smul.addr %s2092, 8
    %s2094 = scalar_lea.vmem [#allocation10], %s2093
    %v2095 = vld [vmem:[%s2094] sm:$0xff]
    %v2096 = vld [vmem:[%s2094 + $0x8] sm:$0xff]
    %v2097 = vld [vmem:[%s2094 + $0x10] sm:$0xff]
    %v2098 = vld [vmem:[%s2094 + $0x18] sm:$0xff]
    %v2099 = vunpack.c.l.bf16 %v2095
    %v2100 = vunpack.c.l.bf16 %v2096
    %v2101 = vunpack.c.l.bf16 %v2097
    %v2102 = vunpack.c.l.bf16 %v2098
    %v2103 = vunpack.c.h.bf16 %v2095
    %v2104 = vunpack.c.h.bf16 %v2096
    %v2105 = vunpack.c.h.bf16 %v2097
    %v2106 = vunpack.c.h.bf16 %v2098
    %v2107 = vld [vmem:[#allocation12] sm:$0xff]
    %v2108 = vld [vmem:[#allocation12 + $0x8] sm:$0xff]
    %v2109 = vpack.c.bf16 %v2108, %v2107
    %v2110 = vld [vmem:[#allocation3] sm:$0xff]
    %v2111 = vld [vmem:[#allocation3 + $0x8] sm:$0xff]
    %v2112 = vld [vmem:[#allocation3 + $0x10] sm:$0xff]
    %v2113 = vld [vmem:[#allocation3 + $0x18] sm:$0xff]
    %v2114 = vld [vmem:[#allocation3 + $0x20] sm:$0xff]
    %v2115 = vld [vmem:[#allocation3 + $0x28] sm:$0xff]
    %v2116 = vld [vmem:[#allocation3 + $0x30] sm:$0xff]
    %v2117 = vld [vmem:[#allocation3 + $0x38] sm:$0xff]
    %v2118 = vld [vmem:[#allocation3 + $0x40] sm:$0xff]
    %v2119 = vld [vmem:[#allocation3 + $0x48] sm:$0xff]
    %v2120 = vld [vmem:[#allocation3 + $0x50] sm:$0xff]
    %v2121 = vld [vmem:[#allocation3 + $0x58] sm:$0xff]
    %v2122 = vld [vmem:[#allocation3 + $0x60] sm:$0xff]
    %v2123 = vld [vmem:[#allocation3 + $0x68] sm:$0xff]
    %v2124 = vld [vmem:[#allocation3 + $0x70] sm:$0xff]
    %v2125 = vld [vmem:[#allocation3 + $0x78] sm:$0xff]
    %v2126 = vld [vmem:[#allocation3 + $0x80] sm:$0xff]
    %v2127 = vld [vmem:[#allocation3 + $0x88] sm:$0xff]
    %v2128 = vld [vmem:[#allocation3 + $0x90] sm:$0xff]
    %v2129 = vld [vmem:[#allocation3 + $0x98] sm:$0xff]
    %v2130 = vld [vmem:[#allocation3 + $0xa0] sm:$0xff]
    %v2131 = vld [vmem:[#allocation3 + $0xa8] sm:$0xff]
    %v2132 = vld [vmem:[#allocation3 + $0xb0] sm:$0xff]
    %v2133 = vld [vmem:[#allocation3 + $0xb8] sm:$0xff]
    %v2134 = vld [vmem:[#allocation3 + $0xc0] sm:$0xff]
    %v2135 = vld [vmem:[#allocation3 + $0xc8] sm:$0xff]
    %v2136 = vld [vmem:[#allocation3 + $0xd0] sm:$0xff]
    %v2137 = vld [vmem:[#allocation3 + $0xd8] sm:$0xff]
    %v2138 = vld [vmem:[#allocation3 + $0xe0] sm:$0xff]
    %v2139 = vld [vmem:[#allocation3 + $0xe8] sm:$0xff]
    %v2140 = vld [vmem:[#allocation3 + $0xf0] sm:$0xff]
    %v2141 = vld [vmem:[#allocation3 + $0xf8] sm:$0xff]
    %2142 = vmatprep.subr.bf16.mxu0 %v2111
    %2143 = vmatpush1.bf16.msra.mxu0 %v2110
    %2144 = vmatprep.subr.bf16.mxu0 %v2115
    %2145 = vmatpush1.bf16.msra.mxu0 %v2114
    %2146 = vmatprep.subr.bf16.mxu0 %v2119
    %2147 = vmatpush1.bf16.msra.mxu0 %v2118
    %2148 = vmatprep.subr.bf16.mxu0 %v2123
    %2149 = vmatpush1.bf16.msra.mxu0 %v2122
    %2150 = vmatprep.subr.bf16.mxu0 %v2127
    %2151 = vmatpush1.bf16.msra.mxu0 %v2126
    %2152 = vmatprep.subr.bf16.mxu0 %v2131
    %2153 = vmatpush1.bf16.msra.mxu0 %v2130
    %2154 = vmatprep.subr.bf16.mxu0 %v2135
    %2155 = vmatpush1.bf16.msra.mxu0 %v2134
    %2156 = vmatprep.subr.bf16.mxu0 %v2139
    %2157 = vmatpush1.bf16.msra.mxu0 %v2138
    %2158 = vmatprep.subr.bf16.mxu0 0
    %2159 = vmatpush1.bf16.msra.mxu0 0
    %2160 = vmatprep.subr.bf16.mxu0 0
    %2161 = vmatpush1.bf16.msra.mxu0 0
    %2162 = vmatprep.subr.bf16.mxu0 0
    %2163 = vmatpush1.bf16.msra.mxu0 0
    %2164 = vmatprep.subr.bf16.mxu0 0
    %2165 = vmatpush1.bf16.msra.mxu0 0
    %2166 = vmatprep.subr.bf16.mxu0 0
    %2167 = vmatpush1.bf16.msra.mxu0 0
    %2168 = vmatprep.subr.bf16.mxu0 0
    %2169 = vmatpush1.bf16.msra.mxu0 0
    %2170 = vmatprep.subr.bf16.mxu0 0
    %2171 = vmatpush1.bf16.msra.mxu0 0
    %2172 = vmatprep.subr.bf16.mxu0 0
    %2173 = vmatpush1.bf16.msra.mxu0 0
    %2174 = vmatprep.mubr.bf16.mxu0 0
    %2175 = vmatmul.mubr.bf16.gmra.mrb[0].mxu0 %v2109
    %v2176 = vpop.f32.mrb[0].mxu0
    %v2177 = vadd.f32 0.0, %v2176
    %v2178 = vpop.f32.mrb[0].mxu0
    %v2179 = vadd.f32 0.0, %v2178
    %v2180 = vpop.f32.mrb[0].mxu0
    %v2181 = vadd.f32 0.0, %v2180
    %v2182 = vpop.f32.mrb[0].mxu0
    %v2183 = vadd.f32 0.0, %v2182
    %2184 = vdwg.mxu0
    %2185 = vmatprep.subr.bf16.mxu0 %v2113
    %2186 = vmatpush1.bf16.msra.mxu0 %v2112
    %2187 = vmatprep.subr.bf16.mxu0 %v2117
    %2188 = vmatpush1.bf16.msra.mxu0 %v2116
    %2189 = vmatprep.subr.bf16.mxu0 %v2121
    %2190 = vmatpush1.bf16.msra.mxu0 %v2120
    %2191 = vmatprep.subr.bf16.mxu0 %v2125
    %2192 = vmatpush1.bf16.msra.mxu0 %v2124
    %2193 = vmatprep.subr.bf16.mxu0 %v2129
    %2194 = vmatpush1.bf16.msra.mxu0 %v2128
    %2195 = vmatprep.subr.bf16.mxu0 %v2133
    %2196 = vmatpush1.bf16.msra.mxu0 %v2132
    %2197 = vmatprep.subr.bf16.mxu0 %v2137
    %2198 = vmatpush1.bf16.msra.mxu0 %v2136
    %2199 = vmatprep.subr.bf16.mxu0 %v2141
    %2200 = vmatpush1.bf16.msra.mxu0 %v2140
    %2201 = vmatprep.subr.bf16.mxu0 0
    %2202 = vmatpush1.bf16.msra.mxu0 0
    %2203 = vmatprep.subr.bf16.mxu0 0
    %2204 = vmatpush1.bf16.msra.mxu0 0
    %2205 = vmatprep.subr.bf16.mxu0 0
    %2206 = vmatpush1.bf16.msra.mxu0 0
    %2207 = vmatprep.subr.bf16.mxu0 0
    %2208 = vmatpush1.bf16.msra.mxu0 0
    %2209 = vmatprep.subr.bf16.mxu0 0
    %2210 = vmatpush1.bf16.msra.mxu0 0
    %2211 = vmatprep.subr.bf16.mxu0 0
    %2212 = vmatpush1.bf16.msra.mxu0 0
    %2213 = vmatprep.subr.bf16.mxu0 0
    %2214 = vmatpush1.bf16.msra.mxu0 0
    %2215 = vmatprep.subr.bf16.mxu0 0
    %2216 = vmatpush1.bf16.msra.mxu0 0
    %2217 = vmatprep.mubr.bf16.mxu0 0
    %2218 = vmatmul.mubr.bf16.gmra.mrb[0].mxu0 %v2109
    %v2219 = vpop.f32.mrb[0].mxu0
    %v2220 = vadd.f32 0.0, %v2219
    %v2221 = vpop.f32.mrb[0].mxu0
    %v2222 = vadd.f32 0.0, %v2221
    %v2223 = vpop.f32.mrb[0].mxu0
    %v2224 = vadd.f32 0.0, %v2223
    %v2225 = vpop.f32.mrb[0].mxu0
    %v2226 = vadd.f32 0.0, %v2225
    %2227 = vdwg.mxu0
    %v2228 = vadd.f32 %v2099, %v2177
    %v2229 = vadd.f32 %v2100, %v2179
    %v2230 = vadd.f32 %v2101, %v2220
    %v2231 = vadd.f32 %v2102, %v2222
    %v2232 = vadd.f32 %v2103, %v2181
    %v2233 = vadd.f32 %v2104, %v2183
    %v2234 = vadd.f32 %v2105, %v2224
    %v2235 = vadd.f32 %v2106, %v2226
    %v2236 = vmul.f32 %v2228, 0.5
    %v2237 = vmul.f32 %v2232, 0.5
    %v2238 = vtanh.pop %v2236
    %v2239 = vtanh.pop %v2237
    %v2240 = vmul.f32 %v2238, 0.5
    %v2241 = vmul.f32 %v2239, 0.5
    %v2242 = vadd.f32 %v2240, 0.5
    %v2243 = vadd.f32 %v2241, 0.5
    %v2244 = vmul.f32 %v2229, 0.5
    %v2245 = vmul.f32 %v2233, 0.5
    %v2246 = vtanh.pop %v2244
    %v2247 = vtanh.pop %v2245
    %v2248 = vmul.f32 %v2246, 0.5
    %v2249 = vmul.f32 %v2247, 0.5
    %v2250 = vadd.f32 %v2248, 0.5
    %v2251 = vadd.f32 %v2249, 0.5
    %v2252 = vtanh.pop %v2230
    %v2253 = vtanh.pop %v2234
    %v2254 = vmul.f32 %v2231, 0.5
    %v2255 = vmul.f32 %v2235, 0.5
    %v2256 = vtanh.pop %v2254
    %v2257 = vtanh.pop %v2255
    %v2258 = vmul.f32 %v2256, 0.5
    %v2259 = vmul.f32 %v2257, 0.5
    %v2260 = vadd.f32 %v2258, 0.5
    %v2261 = vadd.f32 %v2259, 0.5
    %v2262 = vld [vmem:[#allocation13] sm:$0xff]
    %v2263 = vld [vmem:[#allocation13 + $0x8] sm:$0xff]
    %v2264 = vmul.f32 %v2250, %v2262
    %v2265 = vmul.f32 %v2251, %v2263
    %v2266 = vmul.f32 %v2242, %v2252
    %v2267 = vmul.f32 %v2243, %v2253
    %v2268 = vadd.f32 %v2264, %v2266
    %v2269 = vadd.f32 %v2265, %v2267
    %v2270 = vtanh.pop %v2268
    %v2271 = vtanh.pop %v2269
    %v2272 = vmul.f32 %v2260, %v2270
    %v2273 = vmul.f32 %v2261, %v2271
    %2274 = vst [vmem:[#allocation13] sm:$0xff] %v2268
    %2275 = vst [vmem:[#allocation13 + $0x8] sm:$0xff] %v2269
    %2276 = vst [vmem:[#allocation12] sm:$0xff] %v2272
    %2277 = vst [vmem:[#allocation12 + $0x8] sm:$0xff] %v2273
    %v2278 = vpack.c.bf16 %v2273, %v2272
    %s2279 = scalar_lea.vmem [#allocation11], 56
    %2280 = vst [vmem:[%s2279] sm:$0xff] %v2278
    %v2281 = vld [vmem:[#allocation11] sm:$0xff]
    %v2282 = vld [vmem:[#allocation11 + $0x8] sm:$0xff]
    %v2283 = vld [vmem:[#allocation11 + $0x10] sm:$0xff]
    %v2284 = vld [vmem:[#allocation11 + $0x18] sm:$0xff]
    %v2285 = vld [vmem:[#allocation11 + $0x20] sm:$0xff]
    %v2286 = vld [vmem:[#allocation11 + $0x28] sm:$0xff]
    %v2287 = vld [vmem:[#allocation11 + $0x30] sm:$0xff]
    %v2288 = vld [vmem:[#allocation11 + $0x38] sm:$0xff]
    %v2289 = vld [vmem:[#allocation5] sm:$0xff]
    %v2290 = vld [vmem:[#allocation5 + $0x8] sm:$0xff]
    %v2291 = vld [vmem:[#allocation5 + $0x10] sm:$0xff]
    %v2292 = vld [vmem:[#allocation5 + $0x18] sm:$0xff]
    %v2293 = vld [vmem:[#allocation5 + $0x20] sm:$0xff]
    %v2294 = vld [vmem:[#allocation5 + $0x28] sm:$0xff]
    %v2295 = vld [vmem:[#allocation5 + $0x30] sm:$0xff]
    %v2296 = vld [vmem:[#allocation5 + $0x38] sm:$0xff]
    %v2297 = vld [vmem:[#allocation5 + $0x40] sm:$0xff]
    %v2298 = vld [vmem:[#allocation5 + $0x48] sm:$0xff]
    %v2299 = vld [vmem:[#allocation5 + $0x50] sm:$0xff]
    %v2300 = vld [vmem:[#allocation5 + $0x58] sm:$0xff]
    %v2301 = vld [vmem:[#allocation5 + $0x60] sm:$0xff]
    %v2302 = vld [vmem:[#allocation5 + $0x68] sm:$0xff]
    %v2303 = vld [vmem:[#allocation5 + $0x70] sm:$0xff]
    %v2304 = vld [vmem:[#allocation5 + $0x78] sm:$0xff]
    %v2305 = vld [vmem:[#allocation5 + $0x80] sm:$0xff]
    %v2306 = vld [vmem:[#allocation5 + $0x88] sm:$0xff]
    %v2307 = vld [vmem:[#allocation5 + $0x90] sm:$0xff]
    %v2308 = vld [vmem:[#allocation5 + $0x98] sm:$0xff]
    %v2309 = vld [vmem:[#allocation5 + $0xa0] sm:$0xff]
    %v2310 = vld [vmem:[#allocation5 + $0xa8] sm:$0xff]
    %v2311 = vld [vmem:[#allocation5 + $0xb0] sm:$0xff]
    %v2312 = vld [vmem:[#allocation5 + $0xb8] sm:$0xff]
    %v2313 = vld [vmem:[#allocation5 + $0xc0] sm:$0xff]
    %v2314 = vld [vmem:[#allocation5 + $0xc8] sm:$0xff]
    %v2315 = vld [vmem:[#allocation5 + $0xd0] sm:$0xff]
    %v2316 = vld [vmem:[#allocation5 + $0xd8] sm:$0xff]
    %v2317 = vld [vmem:[#allocation5 + $0xe0] sm:$0xff]
    %v2318 = vld [vmem:[#allocation5 + $0xe8] sm:$0xff]
    %v2319 = vld [vmem:[#allocation5 + $0xf0] sm:$0xff]
    %v2320 = vld [vmem:[#allocation5 + $0xf8] sm:$0xff]
    %v2321 = vld [vmem:[#allocation7] sm:$0xf]
    %v2323 = vlaneseq
    %v2324 = vshrl.u32 %v2323, 7
    %v2325 = vsub.s32 0, %v2324
    %v2326 = vrot.slane %v2321, %v2325
    %v2327 = vlaneseq
    %v2328 = vshrl.u32 %v2327, 7
    %v2329 = vsub.s32 1, %v2328
    %v2330 = vrot.slane %v2321, %v2329
    %v2331 = vlaneseq
    %v2332 = vshrl.u32 %v2331, 7
    %v2333 = vsub.s32 2, %v2332
    %v2334 = vrot.slane %v2321, %v2333
    %v2335 = vlaneseq
    %v2336 = vshrl.u32 %v2335, 7
    %v2337 = vsub.s32 3, %v2336
    %v2338 = vrot.slane %v2321, %v2337
    %2343 = vmatprep.subr.bf16.mxu0 %v2290
    %2344 = vmatpush1.bf16.msra.mxu0 %v2289
    %2345 = vmatprep.subr.bf16.mxu0 %v2294
    %2346 = vmatpush1.bf16.msra.mxu0 %v2293
    %2347 = vmatprep.subr.bf16.mxu0 %v2298
    %2348 = vmatpush1.bf16.msra.mxu0 %v2297
    %2349 = vmatprep.subr.bf16.mxu0 %v2302
    %2350 = vmatpush1.bf16.msra.mxu0 %v2301
    %2351 = vmatprep.subr.bf16.mxu0 %v2306
    %2352 = vmatpush1.bf16.msra.mxu0 %v2305
    %2353 = vmatprep.subr.bf16.mxu0 %v2310
    %2354 = vmatpush1.bf16.msra.mxu0 %v2309
    %2355 = vmatprep.subr.bf16.mxu0 %v2314
    %2356 = vmatpush1.bf16.msra.mxu0 %v2313
    %2357 = vmatprep.subr.bf16.mxu0 %v2318
    %2358 = vmatpush1.bf16.msra.mxu0 %v2317
    %2359 = vmatprep.subr.bf16.mxu0 0
    %2360 = vmatpush1.bf16.msra.mxu0 0
    %2361 = vmatprep.subr.bf16.mxu0 0
    %2362 = vmatpush1.bf16.msra.mxu0 0
    %2363 = vmatprep.subr.bf16.mxu0 0
    %2364 = vmatpush1.bf16.msra.mxu0 0
    %2365 = vmatprep.subr.bf16.mxu0 0
    %2366 = vmatpush1.bf16.msra.mxu0 0
    %2367 = vmatprep.subr.bf16.mxu0 0
    %2368 = vmatpush1.bf16.msra.mxu0 0
    %2369 = vmatprep.subr.bf16.mxu0 0
    %2370 = vmatpush1.bf16.msra.mxu0 0
    %2371 = vmatprep.subr.bf16.mxu0 0
    %2372 = vmatpush1.bf16.msra.mxu0 0
    %2373 = vmatprep.subr.bf16.mxu0 0
    %2374 = vmatpush1.bf16.msra.mxu0 0
    %2375 = vmatprep.mubr.bf16.mxu0 0
    %2376 = vmatmul.mubr.bf16.gmra.mrb[0].mxu0 %v2281
    %v2377 = vpop.f32.mrb[0].mxu0
    %v2378 = vadd.f32 %v2326, %v2377
    %v2379 = vpop.f32.mrb[0].mxu0
    %v2380 = vadd.f32 %v2330, %v2379
    %v2381 = vpop.f32.mrb[0].mxu0
    %v2382 = vadd.f32 %v2326, %v2381
    %v2383 = vpop.f32.mrb[0].mxu0
    %v2384 = vadd.f32 %v2330, %v2383
    %2385 = vmatprep.mubr.bf16.mxu0 0
    %2386 = vmatmul.mubr.bf16.gmra.mrb[0].mxu0 %v2282
    %v2387 = vpop.f32.mrb[0].mxu0
    %v2388 = vadd.f32 %v2326, %v2387
    %v2389 = vpop.f32.mrb[0].mxu0
    %v2390 = vadd.f32 %v2330, %v2389
    %v2391 = vpop.f32.mrb[0].mxu0
    %v2392 = vadd.f32 %v2326, %v2391
    %v2393 = vpop.f32.mrb[0].mxu0
    %v2394 = vadd.f32 %v2330, %v2393
    %2395 = vmatprep.mubr.bf16.mxu0 0
    %2396 = vmatmul.mubr.bf16.gmra.mrb[0].mxu0 %v2283
    %v2397 = vpop.f32.mrb[0].mxu0
    %v2398 = vadd.f32 %v2326, %v2397
    %v2399 = vpop.f32.mrb[0].mxu0
    %v2400 = vadd.f32 %v2330, %v2399
    %v2401 = vpop.f32.mrb[0].mxu0
    %v2402 = vadd.f32 %v2326, %v2401
    %v2403 = vpop.f32.mrb[0].mxu0
    %v2404 = vadd.f32 %v2330, %v2403
    %2405 = vmatprep.mubr.bf16.mxu0 0
    %2406 = vmatmul.mubr.bf16.gmra.mrb[0].mxu0 %v2284
    %v2407 = vpop.f32.mrb[0].mxu0
    %v2408 = vadd.f32 %v2326, %v2407
    %v2409 = vpop.f32.mrb[0].mxu0
    %v2410 = vadd.f32 %v2330, %v2409
    %v2411 = vpop.f32.mrb[0].mxu0
    %v2412 = vadd.f32 %v2326, %v2411
    %v2413 = vpop.f32.mrb[0].mxu0
    %v2414 = vadd.f32 %v2330, %v2413
    %2415 = vmatprep.mubr.bf16.mxu0 0
    %2416 = vmatmul.mubr.bf16.gmra.mrb[0].mxu0 %v2285
    %v2417 = vpop.f32.mrb[0].mxu0
    %v2418 = vadd.f32 %v2326, %v2417
    %v2419 = vpop.f32.mrb[0].mxu0
    %v2420 = vadd.f32 %v2330, %v2419
    %v2421 = vpop.f32.mrb[0].mxu0
    %v2422 = vadd.f32 %v2326, %v2421
    %v2423 = vpop.f32.mrb[0].mxu0
    %v2424 = vadd.f32 %v2330, %v2423
    %2425 = vmatprep.mubr.bf16.mxu0 0
    %2426 = vmatmul.mubr.bf16.gmra.mrb[0].mxu0 %v2286
    %v2427 = vpop.f32.mrb[0].mxu0
    %v2428 = vadd.f32 %v2326, %v2427
    %v2429 = vpop.f32.mrb[0].mxu0
    %v2430 = vadd.f32 %v2330, %v2429
    %v2431 = vpop.f32.mrb[0].mxu0
    %v2432 = vadd.f32 %v2326, %v2431
    %v2433 = vpop.f32.mrb[0].mxu0
    %v2434 = vadd.f32 %v2330, %v2433
    %2435 = vmatprep.mubr.bf16.mxu0 0
    %2436 = vmatmul.mubr.bf16.gmra.mrb[0].mxu0 %v2287
    %v2437 = vpop.f32.mrb[0].mxu0
    %v2438 = vadd.f32 %v2326, %v2437
    %v2439 = vpop.f32.mrb[0].mxu0
    %v2440 = vadd.f32 %v2330, %v2439
    %v2441 = vpop.f32.mrb[0].mxu0
    %v2442 = vadd.f32 %v2326, %v2441
    %v2443 = vpop.f32.mrb[0].mxu0
    %v2444 = vadd.f32 %v2330, %v2443
    %2445 = vmatprep.mubr.bf16.mxu0 0
    %2446 = vmatmul.mubr.bf16.gmra.mrb[0].mxu0 %v2288
    %v2447 = vpop.f32.mrb[0].mxu0
    %v2448 = vadd.f32 %v2326, %v2447
    %v2449 = vpop.f32.mrb[0].mxu0
    %v2450 = vadd.f32 %v2330, %v2449
    %v2451 = vpop.f32.mrb[0].mxu0
    %v2452 = vadd.f32 %v2326, %v2451
    %v2453 = vpop.f32.mrb[0].mxu0
    %v2454 = vadd.f32 %v2330, %v2453
    %2455 = vdwg.mxu0
    %2456 = vmatprep.subr.bf16.mxu0 %v2292
    %2457 = vmatpush1.bf16.msra.mxu0 %v2291
    %2458 = vmatprep.subr.bf16.mxu0 %v2296
    %2459 = vmatpush1.bf16.msra.mxu0 %v2295
    %2460 = vmatprep.subr.bf16.mxu0 %v2300
    %2461 = vmatpush1.bf16.msra.mxu0 %v2299
    %2462 = vmatprep.subr.bf16.mxu0 %v2304
    %2463 = vmatpush1.bf16.msra.mxu0 %v2303
    %2464 = vmatprep.subr.bf16.mxu0 %v2308
    %2465 = vmatpush1.bf16.msra.mxu0 %v2307
    %2466 = vmatprep.subr.bf16.mxu0 %v2312
    %2467 = vmatpush1.bf16.msra.mxu0 %v2311
    %2468 = vmatprep.subr.bf16.mxu0 %v2316
    %2469 = vmatpush1.bf16.msra.mxu0 %v2315
    %2470 = vmatprep.subr.bf16.mxu0 %v2320
    %2471 = vmatpush1.bf16.msra.mxu0 %v2319
    %2472 = vmatprep.subr.bf16.mxu0 0
    %2473 = vmatpush1.bf16.msra.mxu0 0
    %2474 = vmatprep.subr.bf16.mxu0 0
    %2475 = vmatpush1.bf16.msra.mxu0 0
    %2476 = vmatprep.subr.bf16.mxu0 0
    %2477 = vmatpush1.bf16.msra.mxu0 0
    %2478 = vmatprep.subr.bf16.mxu0 0
    %2479 = vmatpush1.bf16.msra.mxu0 0
    %2480 = vmatprep.subr.bf16.mxu0 0
    %2481 = vmatpush1.bf16.msra.mxu0 0
    %2482 = vmatprep.subr.bf16.mxu0 0
    %2483 = vmatpush1.bf16.msra.mxu0 0
    %2484 = vmatprep.subr.bf16.mxu0 0
    %2485 = vmatpush1.bf16.msra.mxu0 0
    %2486 = vmatprep.subr.bf16.mxu0 0
    %2487 = vmatpush1.bf16.msra.mxu0 0
    %2488 = vmatprep.mubr.bf16.mxu0 0
    %2489 = vmatmul.mubr.bf16.gmra.mrb[0].mxu0 %v2281
    %v2490 = vpop.f32.mrb[0].mxu0
    %v2491 = vadd.f32 %v2334, %v2490
    %v2492 = vpop.f32.mrb[0].mxu0
    %v2493 = vadd.f32 %v2338, %v2492
    %v2494 = vpop.f32.mrb[0].mxu0
    %v2495 = vadd.f32 %v2334, %v2494
    %v2496 = vpop.f32.mrb[0].mxu0
    %v2497 = vadd.f32 %v2338, %v2496
    %2498 = vmatprep.mubr.bf16.mxu0 0
    %2499 = vmatmul.mubr.bf16.gmra.mrb[0].mxu0 %v2282
    %v2500 = vpop.f32.mrb[0].mxu0
    %v2501 = vadd.f32 %v2334, %v2500
    %v2502 = vpop.f32.mrb[0].mxu0
    %v2503 = vadd.f32 %v2338, %v2502
    %v2504 = vpop.f32.mrb[0].mxu0
    %v2505 = vadd.f32 %v2334, %v2504
    %v2506 = vpop.f32.mrb[0].mxu0
    %v2507 = vadd.f32 %v2338, %v2506
    %2508 = vmatprep.mubr.bf16.mxu0 0
    %2509 = vmatmul.mubr.bf16.gmra.mrb[0].mxu0 %v2283
    %v2510 = vpop.f32.mrb[0].mxu0
    %v2511 = vadd.f32 %v2334, %v2510
    %v2512 = vpop.f32.mrb[0].mxu0
    %v2513 = vadd.f32 %v2338, %v2512
    %v2514 = vpop.f32.mrb[0].mxu0
    %v2515 = vadd.f32 %v2334, %v2514
    %v2516 = vpop.f32.mrb[0].mxu0
    %v2517 = vadd.f32 %v2338, %v2516
    %2518 = vmatprep.mubr.bf16.mxu0 0
    %2519 = vmatmul.mubr.bf16.gmra.mrb[0].mxu0 %v2284
    %v2520 = vpop.f32.mrb[0].mxu0
    %v2521 = vadd.f32 %v2334, %v2520
    %v2522 = vpop.f32.mrb[0].mxu0
    %v2523 = vadd.f32 %v2338, %v2522
    %v2524 = vpop.f32.mrb[0].mxu0
    %v2525 = vadd.f32 %v2334, %v2524
    %v2526 = vpop.f32.mrb[0].mxu0
    %v2527 = vadd.f32 %v2338, %v2526
    %2528 = vmatprep.mubr.bf16.mxu0 0
    %2529 = vmatmul.mubr.bf16.gmra.mrb[0].mxu0 %v2285
    %v2530 = vpop.f32.mrb[0].mxu0
    %v2531 = vadd.f32 %v2334, %v2530
    %v2532 = vpop.f32.mrb[0].mxu0
    %v2533 = vadd.f32 %v2338, %v2532
    %v2534 = vpop.f32.mrb[0].mxu0
    %v2535 = vadd.f32 %v2334, %v2534
    %v2536 = vpop.f32.mrb[0].mxu0
    %v2537 = vadd.f32 %v2338, %v2536
    %2538 = vmatprep.mubr.bf16.mxu0 0
    %2539 = vmatmul.mubr.bf16.gmra.mrb[0].mxu0 %v2286
    %v2540 = vpop.f32.mrb[0].mxu0
    %v2541 = vadd.f32 %v2334, %v2540
    %v2542 = vpop.f32.mrb[0].mxu0
    %v2543 = vadd.f32 %v2338, %v2542
    %v2544 = vpop.f32.mrb[0].mxu0
    %v2545 = vadd.f32 %v2334, %v2544
    %v2546 = vpop.f32.mrb[0].mxu0
    %v2547 = vadd.f32 %v2338, %v2546
    %2548 = vmatprep.mubr.bf16.mxu0 0
    %2549 = vmatmul.mubr.bf16.gmra.mrb[0].mxu0 %v2287
    %v2550 = vpop.f32.mrb[0].mxu0
    %v2551 = vadd.f32 %v2334, %v2550
    %v2552 = vpop.f32.mrb[0].mxu0
    %v2553 = vadd.f32 %v2338, %v2552
    %v2554 = vpop.f32.mrb[0].mxu0
    %v2555 = vadd.f32 %v2334, %v2554
    %v2556 = vpop.f32.mrb[0].mxu0
    %v2557 = vadd.f32 %v2338, %v2556
    %2558 = vmatprep.mubr.bf16.mxu0 0
    %2559 = vmatmul.mubr.bf16.gmra.mrb[0].mxu0 %v2288
    %v2560 = vpop.f32.mrb[0].mxu0
    %v2561 = vadd.f32 %v2334, %v2560
    %v2562 = vpop.f32.mrb[0].mxu0
    %v2563 = vadd.f32 %v2338, %v2562
    %v2564 = vpop.f32.mrb[0].mxu0
    %v2565 = vadd.f32 %v2334, %v2564
    %v2566 = vpop.f32.mrb[0].mxu0
    %v2567 = vadd.f32 %v2338, %v2566
    %2568 = vdwg.mxu0
    %v2569 = vpack.c.bf16 %v2382, %v2378
    %v2570 = vpack.c.bf16 %v2384, %v2380
    %v2571 = vpack.c.bf16 %v2495, %v2491
    %v2572 = vpack.c.bf16 %v2497, %v2493
    %v2573 = vpack.c.bf16 %v2392, %v2388
    %v2574 = vpack.c.bf16 %v2394, %v2390
    %v2575 = vpack.c.bf16 %v2505, %v2501
    %v2576 = vpack.c.bf16 %v2507, %v2503
    %v2577 = vpack.c.bf16 %v2402, %v2398
    %v2578 = vpack.c.bf16 %v2404, %v2400
    %v2579 = vpack.c.bf16 %v2515, %v2511
    %v2580 = vpack.c.bf16 %v2517, %v2513
    %v2581 = vpack.c.bf16 %v2412, %v2408
    %v2582 = vpack.c.bf16 %v2414, %v2410
    %v2583 = vpack.c.bf16 %v2525, %v2521
    %v2584 = vpack.c.bf16 %v2527, %v2523
    %v2585 = vpack.c.bf16 %v2422, %v2418
    %v2586 = vpack.c.bf16 %v2424, %v2420
    %v2587 = vpack.c.bf16 %v2535, %v2531
    %v2588 = vpack.c.bf16 %v2537, %v2533
    %v2589 = vpack.c.bf16 %v2432, %v2428
    %v2590 = vpack.c.bf16 %v2434, %v2430
    %v2591 = vpack.c.bf16 %v2545, %v2541
    %v2592 = vpack.c.bf16 %v2547, %v2543
    %v2593 = vpack.c.bf16 %v2442, %v2438
    %v2594 = vpack.c.bf16 %v2444, %v2440
    %v2595 = vpack.c.bf16 %v2555, %v2551
    %v2596 = vpack.c.bf16 %v2557, %v2553
    %v2597 = vpack.c.bf16 %v2452, %v2448
    %v2598 = vpack.c.bf16 %v2454, %v2450
    %v2599 = vpack.c.bf16 %v2565, %v2561
    %v2600 = vpack.c.bf16 %v2567, %v2563
    %2601 = vst [vmem:[#allocation10] sm:$0xff] %v2569
    %2602 = vst [vmem:[#allocation10 + $0x8] sm:$0xff] %v2570
    %2603 = vst [vmem:[#allocation10 + $0x10] sm:$0xff] %v2571
    %2604 = vst [vmem:[#allocation10 + $0x18] sm:$0xff] %v2572
    %2605 = vst [vmem:[#allocation10 + $0x20] sm:$0xff] %v2573
    %2606 = vst [vmem:[#allocation10 + $0x28] sm:$0xff] %v2574
    %2607 = vst [vmem:[#allocation10 + $0x30] sm:$0xff] %v2575
    %2608 = vst [vmem:[#allocation10 + $0x38] sm:$0xff] %v2576
    %2609 = vst [vmem:[#allocation10 + $0x40] sm:$0xff] %v2577
    %2610 = vst [vmem:[#allocation10 + $0x48] sm:$0xff] %v2578
    %2611 = vst [vmem:[#allocation10 + $0x50] sm:$0xff] %v2579
    %2612 = vst [vmem:[#allocation10 + $0x58] sm:$0xff] %v2580
    %2613 = vst [vmem:[#allocation10 + $0x60] sm:$0xff] %v2581
    %2614 = vst [vmem:[#allocation10 + $0x68] sm:$0xff] %v2582
    %2615 = vst [vmem:[#allocation10 + $0x70] sm:$0xff] %v2583
    %2616 = vst [vmem:[#allocation10 + $0x78] sm:$0xff] %v2584
    %2617 = vst [vmem:[#allocation10 + $0x80] sm:$0xff] %v2585
    %2618 = vst [vmem:[#allocation10 + $0x88] sm:$0xff] %v2586
    %2619 = vst [vmem:[#allocation10 + $0x90] sm:$0xff] %v2587
    %2620 = vst [vmem:[#allocation10 + $0x98] sm:$0xff] %v2588
    %2621 = vst [vmem:[#allocation10 + $0xa0] sm:$0xff] %v2589
    %2622 = vst [vmem:[#allocation10 + $0xa8] sm:$0xff] %v2590
    %2623 = vst [vmem:[#allocation10 + $0xb0] sm:$0xff] %v2591
    %2624 = vst [vmem:[#allocation10 + $0xb8] sm:$0xff] %v2592
    %2625 = vst [vmem:[#allocation10 + $0xc0] sm:$0xff] %v2593
    %2626 = vst [vmem:[#allocation10 + $0xc8] sm:$0xff] %v2594
    %2627 = vst [vmem:[#allocation10 + $0xd0] sm:$0xff] %v2595
    %2628 = vst [vmem:[#allocation10 + $0xd8] sm:$0xff] %v2596
    %2629 = vst [vmem:[#allocation10 + $0xe0] sm:$0xff] %v2597
    %2630 = vst [vmem:[#allocation10 + $0xe8] sm:$0xff] %v2598
    %2631 = vst [vmem:[#allocation10 + $0xf0] sm:$0xff] %v2599
    %2632 = vst [vmem:[#allocation10 + $0xf8] sm:$0xff] %v2600
    %v2633 = vld [vmem:[%s772] sm:$0xff]
    %v2634 = vld [vmem:[%s772 + $0x8] sm:$0xff]
    %v2635 = vld [vmem:[%s772 + $0x10] sm:$0xff]
    %v2636 = vld [vmem:[%s772 + $0x18] sm:$0xff]
    %v2637 = vunpack.c.l.bf16 %v2633
    %v2638 = vunpack.c.l.bf16 %v2634
    %v2639 = vunpack.c.l.bf16 %v2635
    %v2640 = vunpack.c.l.bf16 %v2636
    %v2641 = vunpack.c.h.bf16 %v2633
    %v2642 = vunpack.c.h.bf16 %v2634
    %v2643 = vunpack.c.h.bf16 %v2635
    %v2644 = vunpack.c.h.bf16 %v2636
    %s2645 = scalar_lea.vmem [#allocation12], 16
    %v2646 = vld [vmem:[%s2645] sm:$0xff]
    %v2647 = vld [vmem:[%s2645 + $0x8] sm:$0xff]
    %v2648 = vpack.c.bf16 %v2647, %v2646
    %v2649 = vld [vmem:[#allocation6] sm:$0xff]
    %v2650 = vld [vmem:[#allocation6 + $0x8] sm:$0xff]
    %v2651 = vld [vmem:[#allocation6 + $0x10] sm:$0xff]
    %v2652 = vld [vmem:[#allocation6 + $0x18] sm:$0xff]
    %v2653 = vld [vmem:[#allocation6 + $0x20] sm:$0xff]
    %v2654 = vld [vmem:[#allocation6 + $0x28] sm:$0xff]
    %v2655 = vld [vmem:[#allocation6 + $0x30] sm:$0xff]
    %v2656 = vld [vmem:[#allocation6 + $0x38] sm:$0xff]
    %v2657 = vld [vmem:[#allocation6 + $0x40] sm:$0xff]
    %v2658 = vld [vmem:[#allocation6 + $0x48] sm:$0xff]
    %v2659 = vld [vmem:[#allocation6 + $0x50] sm:$0xff]
    %v2660 = vld [vmem:[#allocation6 + $0x58] sm:$0xff]
    %v2661 = vld [vmem:[#allocation6 + $0x60] sm:$0xff]
    %v2662 = vld [vmem:[#allocation6 + $0x68] sm:$0xff]
    %v2663 = vld [vmem:[#allocation6 + $0x70] sm:$0xff]
    %v2664 = vld [vmem:[#allocation6 + $0x78] sm:$0xff]
    %v2665 = vld [vmem:[#allocation6 + $0x80] sm:$0xff]
    %v2666 = vld [vmem:[#allocation6 + $0x88] sm:$0xff]
    %v2667 = vld [vmem:[#allocation6 + $0x90] sm:$0xff]
    %v2668 = vld [vmem:[#allocation6 + $0x98] sm:$0xff]
    %v2669 = vld [vmem:[#allocation6 + $0xa0] sm:$0xff]
    %v2670 = vld [vmem:[#allocation6 + $0xa8] sm:$0xff]
    %v2671 = vld [vmem:[#allocation6 + $0xb0] sm:$0xff]
    %v2672 = vld [vmem:[#allocation6 + $0xb8] sm:$0xff]
    %v2673 = vld [vmem:[#allocation6 + $0xc0] sm:$0xff]
    %v2674 = vld [vmem:[#allocation6 + $0xc8] sm:$0xff]
    %v2675 = vld [vmem:[#allocation6 + $0xd0] sm:$0xff]
    %v2676 = vld [vmem:[#allocation6 + $0xd8] sm:$0xff]
    %v2677 = vld [vmem:[#allocation6 + $0xe0] sm:$0xff]
    %v2678 = vld [vmem:[#allocation6 + $0xe8] sm:$0xff]
    %v2679 = vld [vmem:[#allocation6 + $0xf0] sm:$0xff]
    %v2680 = vld [vmem:[#allocation6 + $0xf8] sm:$0xff]
    %2681 = vmatprep.subr.bf16.mxu0 %v2650
    %2682 = vmatpush1.bf16.msra.mxu0 %v2649
    %2683 = vmatprep.subr.bf16.mxu0 %v2654
    %2684 = vmatpush1.bf16.msra.mxu0 %v2653
    %2685 = vmatprep.subr.bf16.mxu0 %v2658
    %2686 = vmatpush1.bf16.msra.mxu0 %v2657
    %2687 = vmatprep.subr.bf16.mxu0 %v2662
    %2688 = vmatpush1.bf16.msra.mxu0 %v2661
    %2689 = vmatprep.subr.bf16.mxu0 %v2666
    %2690 = vmatpush1.bf16.msra.mxu0 %v2665
    %2691 = vmatprep.subr.bf16.mxu0 %v2670
    %2692 = vmatpush1.bf16.msra.mxu0 %v2669
    %2693 = vmatprep.subr.bf16.mxu0 %v2674
    %2694 = vmatpush1.bf16.msra.mxu0 %v2673
    %2695 = vmatprep.subr.bf16.mxu0 %v2678
    %2696 = vmatpush1.bf16.msra.mxu0 %v2677
    %2697 = vmatprep.subr.bf16.mxu0 0
    %2698 = vmatpush1.bf16.msra.mxu0 0
    %2699 = vmatprep.subr.bf16.mxu0 0
    %2700 = vmatpush1.bf16.msra.mxu0 0
    %2701 = vmatprep.subr.bf16.mxu0 0
    %2702 = vmatpush1.bf16.msra.mxu0 0
    %2703 = vmatprep.subr.bf16.mxu0 0
    %2704 = vmatpush1.bf16.msra.mxu0 0
    %2705 = vmatprep.subr.bf16.mxu0 0
    %2706 = vmatpush1.bf16.msra.mxu0 0
    %2707 = vmatprep.subr.bf16.mxu0 0
    %2708 = vmatpush1.bf16.msra.mxu0 0
    %2709 = vmatprep.subr.bf16.mxu0 0
    %2710 = vmatpush1.bf16.msra.mxu0 0
    %2711 = vmatprep.subr.bf16.mxu0 0
    %2712 = vmatpush1.bf16.msra.mxu0 0
    %2713 = vmatprep.mubr.bf16.mxu0 0
    %2714 = vmatmul.mubr.bf16.gmra.mrb[0].mxu0 %v2648
    %v2715 = vpop.f32.mrb[0].mxu0
    %v2716 = vadd.f32 0.0, %v2715
    %v2717 = vpop.f32.mrb[0].mxu0
    %v2718 = vadd.f32 0.0, %v2717
    %v2719 = vpop.f32.mrb[0].mxu0
    %v2720 = vadd.f32 0.0, %v2719
    %v2721 = vpop.f32.mrb[0].mxu0
    %v2722 = vadd.f32 0.0, %v2721
    %2723 = vdwg.mxu0
    %2724 = vmatprep.subr.bf16.mxu0 %v2652
    %2725 = vmatpush1.bf16.msra.mxu0 %v2651
    %2726 = vmatprep.subr.bf16.mxu0 %v2656
    %2727 = vmatpush1.bf16.msra.mxu0 %v2655
    %2728 = vmatprep.subr.bf16.mxu0 %v2660
    %2729 = vmatpush1.bf16.msra.mxu0 %v2659
    %2730 = vmatprep.subr.bf16.mxu0 %v2664
    %2731 = vmatpush1.bf16.msra.mxu0 %v2663
    %2732 = vmatprep.subr.bf16.mxu0 %v2668
    %2733 = vmatpush1.bf16.msra.mxu0 %v2667
    %2734 = vmatprep.subr.bf16.mxu0 %v2672
    %2735 = vmatpush1.bf16.msra.mxu0 %v2671
    %2736 = vmatprep.subr.bf16.mxu0 %v2676
    %2737 = vmatpush1.bf16.msra.mxu0 %v2675
    %2738 = vmatprep.subr.bf16.mxu0 %v2680
    %2739 = vmatpush1.bf16.msra.mxu0 %v2679
    %2740 = vmatprep.subr.bf16.mxu0 0
    %2741 = vmatpush1.bf16.msra.mxu0 0
    %2742 = vmatprep.subr.bf16.mxu0 0
    %2743 = vmatpush1.bf16.msra.mxu0 0
    %2744 = vmatprep.subr.bf16.mxu0 0
    %2745 = vmatpush1.bf16.msra.mxu0 0
    %2746 = vmatprep.subr.bf16.mxu0 0
    %2747 = vmatpush1.bf16.msra.mxu0 0
    %2748 = vmatprep.subr.bf16.mxu0 0
    %2749 = vmatpush1.bf16.msra.mxu0 0
    %2750 = vmatprep.subr.bf16.mxu0 0
    %2751 = vmatpush1.bf16.msra.mxu0 0
    %2752 = vmatprep.subr.bf16.mxu0 0
    %2753 = vmatpush1.bf16.msra.mxu0 0
    %2754 = vmatprep.subr.bf16.mxu0 0
    %2755 = vmatpush1.bf16.msra.mxu0 0
    %2756 = vmatprep.mubr.bf16.mxu0 0
    %2757 = vmatmul.mubr.bf16.gmra.mrb[0].mxu0 %v2648
    %v2758 = vpop.f32.mrb[0].mxu0
    %v2759 = vadd.f32 0.0, %v2758
    %v2760 = vpop.f32.mrb[0].mxu0
    %v2761 = vadd.f32 0.0, %v2760
    %v2762 = vpop.f32.mrb[0].mxu0
    %v2763 = vadd.f32 0.0, %v2762
    %v2764 = vpop.f32.mrb[0].mxu0
    %v2765 = vadd.f32 0.0, %v2764
    %2766 = vdwg.mxu0
    %v2767 = vadd.f32 %v2637, %v2716
    %v2768 = vadd.f32 %v2638, %v2718
    %v2769 = vadd.f32 %v2639, %v2759
    %v2770 = vadd.f32 %v2640, %v2761
    %v2771 = vadd.f32 %v2641, %v2720
    %v2772 = vadd.f32 %v2642, %v2722
    %v2773 = vadd.f32 %v2643, %v2763
    %v2774 = vadd.f32 %v2644, %v2765
    %v2775 = vmul.f32 %v2767, 0.5
    %v2776 = vmul.f32 %v2771, 0.5
    %v2777 = vtanh.pop %v2775
    %v2778 = vtanh.pop %v2776
    %v2779 = vmul.f32 %v2777, 0.5
    %v2780 = vmul.f32 %v2778, 0.5
    %v2781 = vadd.f32 %v2779, 0.5
    %v2782 = vadd.f32 %v2780, 0.5
    %v2783 = vmul.f32 %v2768, 0.5
    %v2784 = vmul.f32 %v2772, 0.5
    %v2785 = vtanh.pop %v2783
    %v2786 = vtanh.pop %v2784
    %v2787 = vmul.f32 %v2785, 0.5
    %v2788 = vmul.f32 %v2786, 0.5
    %v2789 = vadd.f32 %v2787, 0.5
    %v2790 = vadd.f32 %v2788, 0.5
    %v2791 = vtanh.pop %v2769
    %v2792 = vtanh.pop %v2773
    %v2793 = vmul.f32 %v2770, 0.5
    %v2794 = vmul.f32 %v2774, 0.5
    %v2795 = vtanh.pop %v2793
    %v2796 = vtanh.pop %v2794
    %v2797 = vmul.f32 %v2795, 0.5
    %v2798 = vmul.f32 %v2796, 0.5
    %v2799 = vadd.f32 %v2797, 0.5
    %v2800 = vadd.f32 %v2798, 0.5
    %s2801 = scalar_lea.vmem [#allocation13], 16
    %v2802 = vld [vmem:[%s2801] sm:$0xff]
    %v2803 = vld [vmem:[%s2801 + $0x8] sm:$0xff]
    %v2804 = vmul.f32 %v2789, %v2802
    %v2805 = vmul.f32 %v2790, %v2803
    %v2806 = vmul.f32 %v2781, %v2791
    %v2807 = vmul.f32 %v2782, %v2792
    %v2808 = vadd.f32 %v2804, %v2806
    %v2809 = vadd.f32 %v2805, %v2807
    %v2810 = vtanh.pop %v2808
    %v2811 = vtanh.pop %v2809
    %v2812 = vmul.f32 %v2799, %v2810
    %v2813 = vmul.f32 %v2800, %v2811
    %2814 = vst [vmem:[%s2801] sm:$0xff] %v2808
    %2815 = vst [vmem:[%s2801 + $0x8] sm:$0xff] %v2809
    %2816 = vst [vmem:[%s2645] sm:$0xff] %v2812
    %2817 = vst [vmem:[%s2645 + $0x8] sm:$0xff] %v2813
    %v2818 = vld [vmem:[%s960] sm:$0xff]
    %v2819 = vld [vmem:[%s960 + $0x8] sm:$0xff]
    %v2820 = vld [vmem:[%s960 + $0x10] sm:$0xff]
    %v2821 = vld [vmem:[%s960 + $0x18] sm:$0xff]
    %v2822 = vunpack.c.l.bf16 %v2818
    %v2823 = vunpack.c.l.bf16 %v2819
    %v2824 = vunpack.c.l.bf16 %v2820
    %v2825 = vunpack.c.l.bf16 %v2821
    %v2826 = vunpack.c.h.bf16 %v2818
    %v2827 = vunpack.c.h.bf16 %v2819
    %v2828 = vunpack.c.h.bf16 %v2820
    %v2829 = vunpack.c.h.bf16 %v2821
    %v2830 = vld [vmem:[%s2645] sm:$0xff]
    %v2831 = vld [vmem:[%s2645 + $0x8] sm:$0xff]
    %v2832 = vpack.c.bf16 %v2831, %v2830
    %v2833 = vld [vmem:[#allocation6] sm:$0xff]
    %v2834 = vld [vmem:[#allocation6 + $0x8] sm:$0xff]
    %v2835 = vld [vmem:[#allocation6 + $0x10] sm:$0xff]
    %v2836 = vld [vmem:[#allocation6 + $0x18] sm:$0xff]
    %v2837 = vld [vmem:[#allocation6 + $0x20] sm:$0xff]
    %v2838 = vld [vmem:[#allocation6 + $0x28] sm:$0xff]
    %v2839 = vld [vmem:[#allocation6 + $0x30] sm:$0xff]
    %v2840 = vld [vmem:[#allocation6 + $0x38] sm:$0xff]
    %v2841 = vld [vmem:[#allocation6 + $0x40] sm:$0xff]
    %v2842 = vld [vmem:[#allocation6 + $0x48] sm:$0xff]
    %v2843 = vld [vmem:[#allocation6 + $0x50] sm:$0xff]
    %v2844 = vld [vmem:[#allocation6 + $0x58] sm:$0xff]
    %v2845 = vld [vmem:[#allocation6 + $0x60] sm:$0xff]
    %v2846 = vld [vmem:[#allocation6 + $0x68] sm:$0xff]
    %v2847 = vld [vmem:[#allocation6 + $0x70] sm:$0xff]
    %v2848 = vld [vmem:[#allocation6 + $0x78] sm:$0xff]
    %v2849 = vld [vmem:[#allocation6 + $0x80] sm:$0xff]
    %v2850 = vld [vmem:[#allocation6 + $0x88] sm:$0xff]
    %v2851 = vld [vmem:[#allocation6 + $0x90] sm:$0xff]
    %v2852 = vld [vmem:[#allocation6 + $0x98] sm:$0xff]
    %v2853 = vld [vmem:[#allocation6 + $0xa0] sm:$0xff]
    %v2854 = vld [vmem:[#allocation6 + $0xa8] sm:$0xff]
    %v2855 = vld [vmem:[#allocation6 + $0xb0] sm:$0xff]
    %v2856 = vld [vmem:[#allocation6 + $0xb8] sm:$0xff]
    %v2857 = vld [vmem:[#allocation6 + $0xc0] sm:$0xff]
    %v2858 = vld [vmem:[#allocation6 + $0xc8] sm:$0xff]
    %v2859 = vld [vmem:[#allocation6 + $0xd0] sm:$0xff]
    %v2860 = vld [vmem:[#allocation6 + $0xd8] sm:$0xff]
    %v2861 = vld [vmem:[#allocation6 + $0xe0] sm:$0xff]
    %v2862 = vld [vmem:[#allocation6 + $0xe8] sm:$0xff]
    %v2863 = vld [vmem:[#allocation6 + $0xf0] sm:$0xff]
    %v2864 = vld [vmem:[#allocation6 + $0xf8] sm:$0xff]
    %2865 = vmatprep.subr.bf16.mxu0 %v2834
    %2866 = vmatpush1.bf16.msra.mxu0 %v2833
    %2867 = vmatprep.subr.bf16.mxu0 %v2838
    %2868 = vmatpush1.bf16.msra.mxu0 %v2837
    %2869 = vmatprep.subr.bf16.mxu0 %v2842
    %2870 = vmatpush1.bf16.msra.mxu0 %v2841
    %2871 = vmatprep.subr.bf16.mxu0 %v2846
    %2872 = vmatpush1.bf16.msra.mxu0 %v2845
    %2873 = vmatprep.subr.bf16.mxu0 %v2850
    %2874 = vmatpush1.bf16.msra.mxu0 %v2849
    %2875 = vmatprep.subr.bf16.mxu0 %v2854
    %2876 = vmatpush1.bf16.msra.mxu0 %v2853
    %2877 = vmatprep.subr.bf16.mxu0 %v2858
    %2878 = vmatpush1.bf16.msra.mxu0 %v2857
    %2879 = vmatprep.subr.bf16.mxu0 %v2862
    %2880 = vmatpush1.bf16.msra.mxu0 %v2861
    %2881 = vmatprep.subr.bf16.mxu0 0
    %2882 = vmatpush1.bf16.msra.mxu0 0
    %2883 = vmatprep.subr.bf16.mxu0 0
    %2884 = vmatpush1.bf16.msra.mxu0 0
    %2885 = vmatprep.subr.bf16.mxu0 0
    %2886 = vmatpush1.bf16.msra.mxu0 0
    %2887 = vmatprep.subr.bf16.mxu0 0
    %2888 = vmatpush1.bf16.msra.mxu0 0
    %2889 = vmatprep.subr.bf16.mxu0 0
    %2890 = vmatpush1.bf16.msra.mxu0 0
    %2891 = vmatprep.subr.bf16.mxu0 0
    %2892 = vmatpush1.bf16.msra.mxu0 0
    %2893 = vmatprep.subr.bf16.mxu0 0
    %2894 = vmatpush1.bf16.msra.mxu0 0
    %2895 = vmatprep.subr.bf16.mxu0 0
    %2896 = vmatpush1.bf16.msra.mxu0 0
    %2897 = vmatprep.mubr.bf16.mxu0 0
    %2898 = vmatmul.mubr.bf16.gmra.mrb[0].mxu0 %v2832
    %v2899 = vpop.f32.mrb[0].mxu0
    %v2900 = vadd.f32 0.0, %v2899
    %v2901 = vpop.f32.mrb[0].mxu0
    %v2902 = vadd.f32 0.0, %v2901
    %v2903 = vpop.f32.mrb[0].mxu0
    %v2904 = vadd.f32 0.0, %v2903
    %v2905 = vpop.f32.mrb[0].mxu0
    %v2906 = vadd.f32 0.0, %v2905
    %2907 = vdwg.mxu0
    %2908 = vmatprep.subr.bf16.mxu0 %v2836
    %2909 = vmatpush1.bf16.msra.mxu0 %v2835
    %2910 = vmatprep.subr.bf16.mxu0 %v2840
    %2911 = vmatpush1.bf16.msra.mxu0 %v2839
    %2912 = vmatprep.subr.bf16.mxu0 %v2844
    %2913 = vmatpush1.bf16.msra.mxu0 %v2843
    %2914 = vmatprep.subr.bf16.mxu0 %v2848
    %2915 = vmatpush1.bf16.msra.mxu0 %v2847
    %2916 = vmatprep.subr.bf16.mxu0 %v2852
    %2917 = vmatpush1.bf16.msra.mxu0 %v2851
    %2918 = vmatprep.subr.bf16.mxu0 %v2856
    %2919 = vmatpush1.bf16.msra.mxu0 %v2855
    %2920 = vmatprep.subr.bf16.mxu0 %v2860
    %2921 = vmatpush1.bf16.msra.mxu0 %v2859
    %2922 = vmatprep.subr.bf16.mxu0 %v2864
    %2923 = vmatpush1.bf16.msra.mxu0 %v2863
    %2924 = vmatprep.subr.bf16.mxu0 0
    %2925 = vmatpush1.bf16.msra.mxu0 0
    %2926 = vmatprep.subr.bf16.mxu0 0
    %2927 = vmatpush1.bf16.msra.mxu0 0
    %2928 = vmatprep.subr.bf16.mxu0 0
    %2929 = vmatpush1.bf16.msra.mxu0 0
    %2930 = vmatprep.subr.bf16.mxu0 0
    %2931 = vmatpush1.bf16.msra.mxu0 0
    %2932 = vmatprep.subr.bf16.mxu0 0
    %2933 = vmatpush1.bf16.msra.mxu0 0
    %2934 = vmatprep.subr.bf16.mxu0 0
    %2935 = vmatpush1.bf16.msra.mxu0 0
    %2936 = vmatprep.subr.bf16.mxu0 0
    %2937 = vmatpush1.bf16.msra.mxu0 0
    %2938 = vmatprep.subr.bf16.mxu0 0
    %2939 = vmatpush1.bf16.msra.mxu0 0
    %2940 = vmatprep.mubr.bf16.mxu0 0
    %2941 = vmatmul.mubr.bf16.gmra.mrb[0].mxu0 %v2832
    %v2942 = vpop.f32.mrb[0].mxu0
    %v2943 = vadd.f32 0.0, %v2942
    %v2944 = vpop.f32.mrb[0].mxu0
    %v2945 = vadd.f32 0.0, %v2944
    %v2946 = vpop.f32.mrb[0].mxu0
    %v2947 = vadd.f32 0.0, %v2946
    %v2948 = vpop.f32.mrb[0].mxu0
    %v2949 = vadd.f32 0.0, %v2948
    %2950 = vdwg.mxu0
    %v2951 = vadd.f32 %v2822, %v2900
    %v2952 = vadd.f32 %v2823, %v2902
    %v2953 = vadd.f32 %v2824, %v2943
    %v2954 = vadd.f32 %v2825, %v2945
    %v2955 = vadd.f32 %v2826, %v2904
    %v2956 = vadd.f32 %v2827, %v2906
    %v2957 = vadd.f32 %v2828, %v2947
    %v2958 = vadd.f32 %v2829, %v2949
    %v2959 = vmul.f32 %v2951, 0.5
    %v2960 = vmul.f32 %v2955, 0.5
    %v2961 = vtanh.pop %v2959
    %v2962 = vtanh.pop %v2960
    %v2963 = vmul.f32 %v2961, 0.5
    %v2964 = vmul.f32 %v2962, 0.5
    %v2965 = vadd.f32 %v2963, 0.5
    %v2966 = vadd.f32 %v2964, 0.5
    %v2967 = vmul.f32 %v2952, 0.5
    %v2968 = vmul.f32 %v2956, 0.5
    %v2969 = vtanh.pop %v2967
    %v2970 = vtanh.pop %v2968
    %v2971 = vmul.f32 %v2969, 0.5
    %v2972 = vmul.f32 %v2970, 0.5
    %v2973 = vadd.f32 %v2971, 0.5
    %v2974 = vadd.f32 %v2972, 0.5
    %v2975 = vtanh.pop %v2953
    %v2976 = vtanh.pop %v2957
    %v2977 = vmul.f32 %v2954, 0.5
    %v2978 = vmul.f32 %v2958, 0.5
    %v2979 = vtanh.pop %v2977
    %v2980 = vtanh.pop %v2978
    %v2981 = vmul.f32 %v2979, 0.5
    %v2982 = vmul.f32 %v2980, 0.5
    %v2983 = vadd.f32 %v2981, 0.5
    %v2984 = vadd.f32 %v2982, 0.5
    %v2985 = vld [vmem:[%s2801] sm:$0xff]
    %v2986 = vld [vmem:[%s2801 + $0x8] sm:$0xff]
    %v2987 = vmul.f32 %v2973, %v2985
    %v2988 = vmul.f32 %v2974, %v2986
    %v2989 = vmul.f32 %v2965, %v2975
    %v2990 = vmul.f32 %v2966, %v2976
    %v2991 = vadd.f32 %v2987, %v2989
    %v2992 = vadd.f32 %v2988, %v2990
    %v2993 = vtanh.pop %v2991
    %v2994 = vtanh.pop %v2992
    %v2995 = vmul.f32 %v2983, %v2993
    %v2996 = vmul.f32 %v2984, %v2994
    %2997 = vst [vmem:[%s2801] sm:$0xff] %v2991
    %2998 = vst [vmem:[%s2801 + $0x8] sm:$0xff] %v2992
    %2999 = vst [vmem:[%s2645] sm:$0xff] %v2995
    %3000 = vst [vmem:[%s2645 + $0x8] sm:$0xff] %v2996
    %v3001 = vld [vmem:[%s1149] sm:$0xff]
    %v3002 = vld [vmem:[%s1149 + $0x8] sm:$0xff]
    %v3003 = vld [vmem:[%s1149 + $0x10] sm:$0xff]
    %v3004 = vld [vmem:[%s1149 + $0x18] sm:$0xff]
    %v3005 = vunpack.c.l.bf16 %v3001
    %v3006 = vunpack.c.l.bf16 %v3002
    %v3007 = vunpack.c.l.bf16 %v3003
    %v3008 = vunpack.c.l.bf16 %v3004
    %v3009 = vunpack.c.h.bf16 %v3001
    %v3010 = vunpack.c.h.bf16 %v3002
    %v3011 = vunpack.c.h.bf16 %v3003
    %v3012 = vunpack.c.h.bf16 %v3004
    %v3013 = vld [vmem:[%s2645] sm:$0xff]
    %v3014 = vld [vmem:[%s2645 + $0x8] sm:$0xff]
    %v3015 = vpack.c.bf16 %v3014, %v3013
    %v3016 = vld [vmem:[#allocation6] sm:$0xff]
    %v3017 = vld [vmem:[#allocation6 + $0x8] sm:$0xff]
    %v3018 = vld [vmem:[#allocation6 + $0x10] sm:$0xff]
    %v3019 = vld [vmem:[#allocation6 + $0x18] sm:$0xff]
    %v3020 = vld [vmem:[#allocation6 + $0x20] sm:$0xff]
    %v3021 = vld [vmem:[#allocation6 + $0x28] sm:$0xff]
    %v3022 = vld [vmem:[#allocation6 + $0x30] sm:$0xff]
    %v3023 = vld [vmem:[#allocation6 + $0x38] sm:$0xff]
    %v3024 = vld [vmem:[#allocation6 + $0x40] sm:$0xff]
    %v3025 = vld [vmem:[#allocation6 + $0x48] sm:$0xff]
    %v3026 = vld [vmem:[#allocation6 + $0x50] sm:$0xff]
    %v3027 = vld [vmem:[#allocation6 + $0x58] sm:$0xff]
    %v3028 = vld [vmem:[#allocation6 + $0x60] sm:$0xff]
    %v3029 = vld [vmem:[#allocation6 + $0x68] sm:$0xff]
    %v3030 = vld [vmem:[#allocation6 + $0x70] sm:$0xff]
    %v3031 = vld [vmem:[#allocation6 + $0x78] sm:$0xff]
    %v3032 = vld [vmem:[#allocation6 + $0x80] sm:$0xff]
    %v3033 = vld [vmem:[#allocation6 + $0x88] sm:$0xff]
    %v3034 = vld [vmem:[#allocation6 + $0x90] sm:$0xff]
    %v3035 = vld [vmem:[#allocation6 + $0x98] sm:$0xff]
    %v3036 = vld [vmem:[#allocation6 + $0xa0] sm:$0xff]
    %v3037 = vld [vmem:[#allocation6 + $0xa8] sm:$0xff]
    %v3038 = vld [vmem:[#allocation6 + $0xb0] sm:$0xff]
    %v3039 = vld [vmem:[#allocation6 + $0xb8] sm:$0xff]
    %v3040 = vld [vmem:[#allocation6 + $0xc0] sm:$0xff]
    %v3041 = vld [vmem:[#allocation6 + $0xc8] sm:$0xff]
    %v3042 = vld [vmem:[#allocation6 + $0xd0] sm:$0xff]
    %v3043 = vld [vmem:[#allocation6 + $0xd8] sm:$0xff]
    %v3044 = vld [vmem:[#allocation6 + $0xe0] sm:$0xff]
    %v3045 = vld [vmem:[#allocation6 + $0xe8] sm:$0xff]
    %v3046 = vld [vmem:[#allocation6 + $0xf0] sm:$0xff]
    %v3047 = vld [vmem:[#allocation6 + $0xf8] sm:$0xff]
    %3048 = vmatprep.subr.bf16.mxu0 %v3017
    %3049 = vmatpush1.bf16.msra.mxu0 %v3016
    %3050 = vmatprep.subr.bf16.mxu0 %v3021
    %3051 = vmatpush1.bf16.msra.mxu0 %v3020
    %3052 = vmatprep.subr.bf16.mxu0 %v3025
    %3053 = vmatpush1.bf16.msra.mxu0 %v3024
    %3054 = vmatprep.subr.bf16.mxu0 %v3029
    %3055 = vmatpush1.bf16.msra.mxu0 %v3028
    %3056 = vmatprep.subr.bf16.mxu0 %v3033
    %3057 = vmatpush1.bf16.msra.mxu0 %v3032
    %3058 = vmatprep.subr.bf16.mxu0 %v3037
    %3059 = vmatpush1.bf16.msra.mxu0 %v3036
    %3060 = vmatprep.subr.bf16.mxu0 %v3041
    %3061 = vmatpush1.bf16.msra.mxu0 %v3040
    %3062 = vmatprep.subr.bf16.mxu0 %v3045
    %3063 = vmatpush1.bf16.msra.mxu0 %v3044
    %3064 = vmatprep.subr.bf16.mxu0 0
    %3065 = vmatpush1.bf16.msra.mxu0 0
    %3066 = vmatprep.subr.bf16.mxu0 0
    %3067 = vmatpush1.bf16.msra.mxu0 0
    %3068 = vmatprep.subr.bf16.mxu0 0
    %3069 = vmatpush1.bf16.msra.mxu0 0
    %3070 = vmatprep.subr.bf16.mxu0 0
    %3071 = vmatpush1.bf16.msra.mxu0 0
    %3072 = vmatprep.subr.bf16.mxu0 0
    %3073 = vmatpush1.bf16.msra.mxu0 0
    %3074 = vmatprep.subr.bf16.mxu0 0
    %3075 = vmatpush1.bf16.msra.mxu0 0
    %3076 = vmatprep.subr.bf16.mxu0 0
    %3077 = vmatpush1.bf16.msra.mxu0 0
    %3078 = vmatprep.subr.bf16.mxu0 0
    %3079 = vmatpush1.bf16.msra.mxu0 0
    %3080 = vmatprep.mubr.bf16.mxu0 0
    %3081 = vmatmul.mubr.bf16.gmra.mrb[0].mxu0 %v3015
    %v3082 = vpop.f32.mrb[0].mxu0
    %v3083 = vadd.f32 0.0, %v3082
    %v3084 = vpop.f32.mrb[0].mxu0
    %v3085 = vadd.f32 0.0, %v3084
    %v3086 = vpop.f32.mrb[0].mxu0
    %v3087 = vadd.f32 0.0, %v3086
    %v3088 = vpop.f32.mrb[0].mxu0
    %v3089 = vadd.f32 0.0, %v3088
    %3090 = vdwg.mxu0
    %3091 = vmatprep.subr.bf16.mxu0 %v3019
    %3092 = vmatpush1.bf16.msra.mxu0 %v3018
    %3093 = vmatprep.subr.bf16.mxu0 %v3023
    %3094 = vmatpush1.bf16.msra.mxu0 %v3022
    %3095 = vmatprep.subr.bf16.mxu0 %v3027
    %3096 = vmatpush1.bf16.msra.mxu0 %v3026
    %3097 = vmatprep.subr.bf16.mxu0 %v3031
    %3098 = vmatpush1.bf16.msra.mxu0 %v3030
    %3099 = vmatprep.subr.bf16.mxu0 %v3035
    %3100 = vmatpush1.bf16.msra.mxu0 %v3034
    %3101 = vmatprep.subr.bf16.mxu0 %v3039
    %3102 = vmatpush1.bf16.msra.mxu0 %v3038
    %3103 = vmatprep.subr.bf16.mxu0 %v3043
    %3104 = vmatpush1.bf16.msra.mxu0 %v3042
    %3105 = vmatprep.subr.bf16.mxu0 %v3047
    %3106 = vmatpush1.bf16.msra.mxu0 %v3046
    %3107 = vmatprep.subr.bf16.mxu0 0
    %3108 = vmatpush1.bf16.msra.mxu0 0
    %3109 = vmatprep.subr.bf16.mxu0 0
    %3110 = vmatpush1.bf16.msra.mxu0 0
    %3111 = vmatprep.subr.bf16.mxu0 0
    %3112 = vmatpush1.bf16.msra.mxu0 0
    %3113 = vmatprep.subr.bf16.mxu0 0
    %3114 = vmatpush1.bf16.msra.mxu0 0
    %3115 = vmatprep.subr.bf16.mxu0 0
    %3116 = vmatpush1.bf16.msra.mxu0 0
    %3117 = vmatprep.subr.bf16.mxu0 0
    %3118 = vmatpush1.bf16.msra.mxu0 0
    %3119 = vmatprep.subr.bf16.mxu0 0
    %3120 = vmatpush1.bf16.msra.mxu0 0
    %3121 = vmatprep.subr.bf16.mxu0 0
    %3122 = vmatpush1.bf16.msra.mxu0 0
    %3123 = vmatprep.mubr.bf16.mxu0 0
    %3124 = vmatmul.mubr.bf16.gmra.mrb[0].mxu0 %v3015
    %v3125 = vpop.f32.mrb[0].mxu0
    %v3126 = vadd.f32 0.0, %v3125
    %v3127 = vpop.f32.mrb[0].mxu0
    %v3128 = vadd.f32 0.0, %v3127
    %v3129 = vpop.f32.mrb[0].mxu0
    %v3130 = vadd.f32 0.0, %v3129
    %v3131 = vpop.f32.mrb[0].mxu0
    %v3132 = vadd.f32 0.0, %v3131
    %3133 = vdwg.mxu0
    %v3134 = vadd.f32 %v3005, %v3083
    %v3135 = vadd.f32 %v3006, %v3085
    %v3136 = vadd.f32 %v3007, %v3126
    %v3137 = vadd.f32 %v3008, %v3128
    %v3138 = vadd.f32 %v3009, %v3087
    %v3139 = vadd.f32 %v3010, %v3089
    %v3140 = vadd.f32 %v3011, %v3130
    %v3141 = vadd.f32 %v3012, %v3132
    %v3142 = vmul.f32 %v3134, 0.5
    %v3143 = vmul.f32 %v3138, 0.5
    %v3144 = vtanh.pop %v3142
    %v3145 = vtanh.pop %v3143
    %v3146 = vmul.f32 %v3144, 0.5
    %v3147 = vmul.f32 %v3145, 0.5
    %v3148 = vadd.f32 %v3146, 0.5
    %v3149 = vadd.f32 %v3147, 0.5
    %v3150 = vmul.f32 %v3135, 0.5
    %v3151 = vmul.f32 %v3139, 0.5
    %v3152 = vtanh.pop %v3150
    %v3153 = vtanh.pop %v3151
    %v3154 = vmul.f32 %v3152, 0.5
    %v3155 = vmul.f32 %v3153, 0.5
    %v3156 = vadd.f32 %v3154, 0.5
    %v3157 = vadd.f32 %v3155, 0.5
    %v3158 = vtanh.pop %v3136
    %v3159 = vtanh.pop %v3140
    %v3160 = vmul.f32 %v3137, 0.5
    %v3161 = vmul.f32 %v3141, 0.5
    %v3162 = vtanh.pop %v3160
    %v3163 = vtanh.pop %v3161
    %v3164 = vmul.f32 %v3162, 0.5
    %v3165 = vmul.f32 %v3163, 0.5
    %v3166 = vadd.f32 %v3164, 0.5
    %v3167 = vadd.f32 %v3165, 0.5
    %v3168 = vld [vmem:[%s2801] sm:$0xff]
    %v3169 = vld [vmem:[%s2801 + $0x8] sm:$0xff]
    %v3170 = vmul.f32 %v3156, %v3168
    %v3171 = vmul.f32 %v3157, %v3169
    %v3172 = vmul.f32 %v3148, %v3158
    %v3173 = vmul.f32 %v3149, %v3159
    %v3174 = vadd.f32 %v3170, %v3172
    %v3175 = vadd.f32 %v3171, %v3173
    %v3176 = vtanh.pop %v3174
    %v3177 = vtanh.pop %v3175
    %v3178 = vmul.f32 %v3166, %v3176
    %v3179 = vmul.f32 %v3167, %v3177
    %3180 = vst [vmem:[%s2801] sm:$0xff] %v3174
    %3181 = vst [vmem:[%s2801 + $0x8] sm:$0xff] %v3175
    %3182 = vst [vmem:[%s2645] sm:$0xff] %v3178
    %3183 = vst [vmem:[%s2645 + $0x8] sm:$0xff] %v3179
    %v3184 = vld [vmem:[%s1338] sm:$0xff]
    %v3185 = vld [vmem:[%s1338 + $0x8] sm:$0xff]
    %v3186 = vld [vmem:[%s1338 + $0x10] sm:$0xff]
    %v3187 = vld [vmem:[%s1338 + $0x18] sm:$0xff]
    %v3188 = vunpack.c.l.bf16 %v3184
    %v3189 = vunpack.c.l.bf16 %v3185
    %v3190 = vunpack.c.l.bf16 %v3186
    %v3191 = vunpack.c.l.bf16 %v3187
    %v3192 = vunpack.c.h.bf16 %v3184
    %v3193 = vunpack.c.h.bf16 %v3185
    %v3194 = vunpack.c.h.bf16 %v3186
    %v3195 = vunpack.c.h.bf16 %v3187
    %v3196 = vld [vmem:[%s2645] sm:$0xff]
    %v3197 = vld [vmem:[%s2645 + $0x8] sm:$0xff]
    %v3198 = vpack.c.bf16 %v3197, %v3196
    %v3199 = vld [vmem:[#allocation6] sm:$0xff]
    %v3200 = vld [vmem:[#allocation6 + $0x8] sm:$0xff]
    %v3201 = vld [vmem:[#allocation6 + $0x10] sm:$0xff]
    %v3202 = vld [vmem:[#allocation6 + $0x18] sm:$0xff]
    %v3203 = vld [vmem:[#allocation6 + $0x20] sm:$0xff]
    %v3204 = vld [vmem:[#allocation6 + $0x28] sm:$0xff]
    %v3205 = vld [vmem:[#allocation6 + $0x30] sm:$0xff]
    %v3206 = vld [vmem:[#allocation6 + $0x38] sm:$0xff]
    %v3207 = vld [vmem:[#allocation6 + $0x40] sm:$0xff]
    %v3208 = vld [vmem:[#allocation6 + $0x48] sm:$0xff]
    %v3209 = vld [vmem:[#allocation6 + $0x50] sm:$0xff]
    %v3210 = vld [vmem:[#allocation6 + $0x58] sm:$0xff]
    %v3211 = vld [vmem:[#allocation6 + $0x60] sm:$0xff]
    %v3212 = vld [vmem:[#allocation6 + $0x68] sm:$0xff]
    %v3213 = vld [vmem:[#allocation6 + $0x70] sm:$0xff]
    %v3214 = vld [vmem:[#allocation6 + $0x78] sm:$0xff]
    %v3215 = vld [vmem:[#allocation6 + $0x80] sm:$0xff]
    %v3216 = vld [vmem:[#allocation6 + $0x88] sm:$0xff]
    %v3217 = vld [vmem:[#allocation6 + $0x90] sm:$0xff]
    %v3218 = vld [vmem:[#allocation6 + $0x98] sm:$0xff]
    %v3219 = vld [vmem:[#allocation6 + $0xa0] sm:$0xff]
    %v3220 = vld [vmem:[#allocation6 + $0xa8] sm:$0xff]
    %v3221 = vld [vmem:[#allocation6 + $0xb0] sm:$0xff]
    %v3222 = vld [vmem:[#allocation6 + $0xb8] sm:$0xff]
    %v3223 = vld [vmem:[#allocation6 + $0xc0] sm:$0xff]
    %v3224 = vld [vmem:[#allocation6 + $0xc8] sm:$0xff]
    %v3225 = vld [vmem:[#allocation6 + $0xd0] sm:$0xff]
    %v3226 = vld [vmem:[#allocation6 + $0xd8] sm:$0xff]
    %v3227 = vld [vmem:[#allocation6 + $0xe0] sm:$0xff]
    %v3228 = vld [vmem:[#allocation6 + $0xe8] sm:$0xff]
    %v3229 = vld [vmem:[#allocation6 + $0xf0] sm:$0xff]
    %v3230 = vld [vmem:[#allocation6 + $0xf8] sm:$0xff]
    %3231 = vmatprep.subr.bf16.mxu0 %v3200
    %3232 = vmatpush1.bf16.msra.mxu0 %v3199
    %3233 = vmatprep.subr.bf16.mxu0 %v3204
    %3234 = vmatpush1.bf16.msra.mxu0 %v3203
    %3235 = vmatprep.subr.bf16.mxu0 %v3208
    %3236 = vmatpush1.bf16.msra.mxu0 %v3207
    %3237 = vmatprep.subr.bf16.mxu0 %v3212
    %3238 = vmatpush1.bf16.msra.mxu0 %v3211
    %3239 = vmatprep.subr.bf16.mxu0 %v3216
    %3240 = vmatpush1.bf16.msra.mxu0 %v3215
    %3241 = vmatprep.subr.bf16.mxu0 %v3220
    %3242 = vmatpush1.bf16.msra.mxu0 %v3219
    %3243 = vmatprep.subr.bf16.mxu0 %v3224
    %3244 = vmatpush1.bf16.msra.mxu0 %v3223
    %3245 = vmatprep.subr.bf16.mxu0 %v3228
    %3246 = vmatpush1.bf16.msra.mxu0 %v3227
    %3247 = vmatprep.subr.bf16.mxu0 0
    %3248 = vmatpush1.bf16.msra.mxu0 0
    %3249 = vmatprep.subr.bf16.mxu0 0
    %3250 = vmatpush1.bf16.msra.mxu0 0
    %3251 = vmatprep.subr.bf16.mxu0 0
    %3252 = vmatpush1.bf16.msra.mxu0 0
    %3253 = vmatprep.subr.bf16.mxu0 0
    %3254 = vmatpush1.bf16.msra.mxu0 0
    %3255 = vmatprep.subr.bf16.mxu0 0
    %3256 = vmatpush1.bf16.msra.mxu0 0
    %3257 = vmatprep.subr.bf16.mxu0 0
    %3258 = vmatpush1.bf16.msra.mxu0 0
    %3259 = vmatprep.subr.bf16.mxu0 0
    %3260 = vmatpush1.bf16.msra.mxu0 0
    %3261 = vmatprep.subr.bf16.mxu0 0
    %3262 = vmatpush1.bf16.msra.mxu0 0
    %3263 = vmatprep.mubr.bf16.mxu0 0
    %3264 = vmatmul.mubr.bf16.gmra.mrb[0].mxu0 %v3198
    %v3265 = vpop.f32.mrb[0].mxu0
    %v3266 = vadd.f32 0.0, %v3265
    %v3267 = vpop.f32.mrb[0].mxu0
    %v3268 = vadd.f32 0.0, %v3267
    %v3269 = vpop.f32.mrb[0].mxu0
    %v3270 = vadd.f32 0.0, %v3269
    %v3271 = vpop.f32.mrb[0].mxu0
    %v3272 = vadd.f32 0.0, %v3271
    %3273 = vdwg.mxu0
    %3274 = vmatprep.subr.bf16.mxu0 %v3202
    %3275 = vmatpush1.bf16.msra.mxu0 %v3201
    %3276 = vmatprep.subr.bf16.mxu0 %v3206
    %3277 = vmatpush1.bf16.msra.mxu0 %v3205
    %3278 = vmatprep.subr.bf16.mxu0 %v3210
    %3279 = vmatpush1.bf16.msra.mxu0 %v3209
    %3280 = vmatprep.subr.bf16.mxu0 %v3214
    %3281 = vmatpush1.bf16.msra.mxu0 %v3213
    %3282 = vmatprep.subr.bf16.mxu0 %v3218
    %3283 = vmatpush1.bf16.msra.mxu0 %v3217
    %3284 = vmatprep.subr.bf16.mxu0 %v3222
    %3285 = vmatpush1.bf16.msra.mxu0 %v3221
    %3286 = vmatprep.subr.bf16.mxu0 %v3226
    %3287 = vmatpush1.bf16.msra.mxu0 %v3225
    %3288 = vmatprep.subr.bf16.mxu0 %v3230
    %3289 = vmatpush1.bf16.msra.mxu0 %v3229
    %3290 = vmatprep.subr.bf16.mxu0 0
    %3291 = vmatpush1.bf16.msra.mxu0 0
    %3292 = vmatprep.subr.bf16.mxu0 0
    %3293 = vmatpush1.bf16.msra.mxu0 0
    %3294 = vmatprep.subr.bf16.mxu0 0
    %3295 = vmatpush1.bf16.msra.mxu0 0
    %3296 = vmatprep.subr.bf16.mxu0 0
    %3297 = vmatpush1.bf16.msra.mxu0 0
    %3298 = vmatprep.subr.bf16.mxu0 0
    %3299 = vmatpush1.bf16.msra.mxu0 0
    %3300 = vmatprep.subr.bf16.mxu0 0
    %3301 = vmatpush1.bf16.msra.mxu0 0
    %3302 = vmatprep.subr.bf16.mxu0 0
    %3303 = vmatpush1.bf16.msra.mxu0 0
    %3304 = vmatprep.subr.bf16.mxu0 0
    %3305 = vmatpush1.bf16.msra.mxu0 0
    %3306 = vmatprep.mubr.bf16.mxu0 0
    %3307 = vmatmul.mubr.bf16.gmra.mrb[0].mxu0 %v3198
    %v3308 = vpop.f32.mrb[0].mxu0
    %v3309 = vadd.f32 0.0, %v3308
    %v3310 = vpop.f32.mrb[0].mxu0
    %v3311 = vadd.f32 0.0, %v3310
    %v3312 = vpop.f32.mrb[0].mxu0
    %v3313 = vadd.f32 0.0, %v3312
    %v3314 = vpop.f32.mrb[0].mxu0
    %v3315 = vadd.f32 0.0, %v3314
    %3316 = vdwg.mxu0
    %v3317 = vadd.f32 %v3188, %v3266
    %v3318 = vadd.f32 %v3189, %v3268
    %v3319 = vadd.f32 %v3190, %v3309
    %v3320 = vadd.f32 %v3191, %v3311
    %v3321 = vadd.f32 %v3192, %v3270
    %v3322 = vadd.f32 %v3193, %v3272
    %v3323 = vadd.f32 %v3194, %v3313
    %v3324 = vadd.f32 %v3195, %v3315
    %v3325 = vmul.f32 %v3317, 0.5
    %v3326 = vmul.f32 %v3321, 0.5
    %v3327 = vtanh.pop %v3325
    %v3328 = vtanh.pop %v3326
    %v3329 = vmul.f32 %v3327, 0.5
    %v3330 = vmul.f32 %v3328, 0.5
    %v3331 = vadd.f32 %v3329, 0.5
    %v3332 = vadd.f32 %v3330, 0.5
    %v3333 = vmul.f32 %v3318, 0.5
    %v3334 = vmul.f32 %v3322, 0.5
    %v3335 = vtanh.pop %v3333
    %v3336 = vtanh.pop %v3334
    %v3337 = vmul.f32 %v3335, 0.5
    %v3338 = vmul.f32 %v3336, 0.5
    %v3339 = vadd.f32 %v3337, 0.5
    %v3340 = vadd.f32 %v3338, 0.5
    %v3341 = vtanh.pop %v3319
    %v3342 = vtanh.pop %v3323
    %v3343 = vmul.f32 %v3320, 0.5
    %v3344 = vmul.f32 %v3324, 0.5
    %v3345 = vtanh.pop %v3343
    %v3346 = vtanh.pop %v3344
    %v3347 = vmul.f32 %v3345, 0.5
    %v3348 = vmul.f32 %v3346, 0.5
    %v3349 = vadd.f32 %v3347, 0.5
    %v3350 = vadd.f32 %v3348, 0.5
    %v3351 = vld [vmem:[%s2801] sm:$0xff]
    %v3352 = vld [vmem:[%s2801 + $0x8] sm:$0xff]
    %v3353 = vmul.f32 %v3339, %v3351
    %v3354 = vmul.f32 %v3340, %v3352
    %v3355 = vmul.f32 %v3331, %v3341
    %v3356 = vmul.f32 %v3332, %v3342
    %v3357 = vadd.f32 %v3353, %v3355
    %v3358 = vadd.f32 %v3354, %v3356
    %v3359 = vtanh.pop %v3357
    %v3360 = vtanh.pop %v3358
    %v3361 = vmul.f32 %v3349, %v3359
    %v3362 = vmul.f32 %v3350, %v3360
    %3363 = vst [vmem:[%s2801] sm:$0xff] %v3357
    %3364 = vst [vmem:[%s2801 + $0x8] sm:$0xff] %v3358
    %3365 = vst [vmem:[%s2645] sm:$0xff] %v3361
    %3366 = vst [vmem:[%s2645 + $0x8] sm:$0xff] %v3362
    %v3367 = vld [vmem:[%s1527] sm:$0xff]
    %v3368 = vld [vmem:[%s1527 + $0x8] sm:$0xff]
    %v3369 = vld [vmem:[%s1527 + $0x10] sm:$0xff]
    %v3370 = vld [vmem:[%s1527 + $0x18] sm:$0xff]
    %v3371 = vunpack.c.l.bf16 %v3367
    %v3372 = vunpack.c.l.bf16 %v3368
    %v3373 = vunpack.c.l.bf16 %v3369
    %v3374 = vunpack.c.l.bf16 %v3370
    %v3375 = vunpack.c.h.bf16 %v3367
    %v3376 = vunpack.c.h.bf16 %v3368
    %v3377 = vunpack.c.h.bf16 %v3369
    %v3378 = vunpack.c.h.bf16 %v3370
    %v3379 = vld [vmem:[%s2645] sm:$0xff]
    %v3380 = vld [vmem:[%s2645 + $0x8] sm:$0xff]
    %v3381 = vpack.c.bf16 %v3380, %v3379
    %v3382 = vld [vmem:[#allocation6] sm:$0xff]
    %v3383 = vld [vmem:[#allocation6 + $0x8] sm:$0xff]
    %v3384 = vld [vmem:[#allocation6 + $0x10] sm:$0xff]
    %v3385 = vld [vmem:[#allocation6 + $0x18] sm:$0xff]
    %v3386 = vld [vmem:[#allocation6 + $0x20] sm:$0xff]
    %v3387 = vld [vmem:[#allocation6 + $0x28] sm:$0xff]
    %v3388 = vld [vmem:[#allocation6 + $0x30] sm:$0xff]
    %v3389 = vld [vmem:[#allocation6 + $0x38] sm:$0xff]
    %v3390 = vld [vmem:[#allocation6 + $0x40] sm:$0xff]
    %v3391 = vld [vmem:[#allocation6 + $0x48] sm:$0xff]
    %v3392 = vld [vmem:[#allocation6 + $0x50] sm:$0xff]
    %v3393 = vld [vmem:[#allocation6 + $0x58] sm:$0xff]
    %v3394 = vld [vmem:[#allocation6 + $0x60] sm:$0xff]
    %v3395 = vld [vmem:[#allocation6 + $0x68] sm:$0xff]
    %v3396 = vld [vmem:[#allocation6 + $0x70] sm:$0xff]
    %v3397 = vld [vmem:[#allocation6 + $0x78] sm:$0xff]
    %v3398 = vld [vmem:[#allocation6 + $0x80] sm:$0xff]
    %v3399 = vld [vmem:[#allocation6 + $0x88] sm:$0xff]
    %v3400 = vld [vmem:[#allocation6 + $0x90] sm:$0xff]
    %v3401 = vld [vmem:[#allocation6 + $0x98] sm:$0xff]
    %v3402 = vld [vmem:[#allocation6 + $0xa0] sm:$0xff]
    %v3403 = vld [vmem:[#allocation6 + $0xa8] sm:$0xff]
    %v3404 = vld [vmem:[#allocation6 + $0xb0] sm:$0xff]
    %v3405 = vld [vmem:[#allocation6 + $0xb8] sm:$0xff]
    %v3406 = vld [vmem:[#allocation6 + $0xc0] sm:$0xff]
    %v3407 = vld [vmem:[#allocation6 + $0xc8] sm:$0xff]
    %v3408 = vld [vmem:[#allocation6 + $0xd0] sm:$0xff]
    %v3409 = vld [vmem:[#allocation6 + $0xd8] sm:$0xff]
    %v3410 = vld [vmem:[#allocation6 + $0xe0] sm:$0xff]
    %v3411 = vld [vmem:[#allocation6 + $0xe8] sm:$0xff]
    %v3412 = vld [vmem:[#allocation6 + $0xf0] sm:$0xff]
    %v3413 = vld [vmem:[#allocation6 + $0xf8] sm:$0xff]
    %3414 = vmatprep.subr.bf16.mxu0 %v3383
    %3415 = vmatpush1.bf16.msra.mxu0 %v3382
    %3416 = vmatprep.subr.bf16.mxu0 %v3387
    %3417 = vmatpush1.bf16.msra.mxu0 %v3386
    %3418 = vmatprep.subr.bf16.mxu0 %v3391
    %3419 = vmatpush1.bf16.msra.mxu0 %v3390
    %3420 = vmatprep.subr.bf16.mxu0 %v3395
    %3421 = vmatpush1.bf16.msra.mxu0 %v3394
    %3422 = vmatprep.subr.bf16.mxu0 %v3399
    %3423 = vmatpush1.bf16.msra.mxu0 %v3398
    %3424 = vmatprep.subr.bf16.mxu0 %v3403
    %3425 = vmatpush1.bf16.msra.mxu0 %v3402
    %3426 = vmatprep.subr.bf16.mxu0 %v3407
    %3427 = vmatpush1.bf16.msra.mxu0 %v3406
    %3428 = vmatprep.subr.bf16.mxu0 %v3411
    %3429 = vmatpush1.bf16.msra.mxu0 %v3410
    %3430 = vmatprep.subr.bf16.mxu0 0
    %3431 = vmatpush1.bf16.msra.mxu0 0
    %3432 = vmatprep.subr.bf16.mxu0 0
    %3433 = vmatpush1.bf16.msra.mxu0 0
    %3434 = vmatprep.subr.bf16.mxu0 0
    %3435 = vmatpush1.bf16.msra.mxu0 0
    %3436 = vmatprep.subr.bf16.mxu0 0
    %3437 = vmatpush1.bf16.msra.mxu0 0
    %3438 = vmatprep.subr.bf16.mxu0 0
    %3439 = vmatpush1.bf16.msra.mxu0 0
    %3440 = vmatprep.subr.bf16.mxu0 0
    %3441 = vmatpush1.bf16.msra.mxu0 0
    %3442 = vmatprep.subr.bf16.mxu0 0
    %3443 = vmatpush1.bf16.msra.mxu0 0
    %3444 = vmatprep.subr.bf16.mxu0 0
    %3445 = vmatpush1.bf16.msra.mxu0 0
    %3446 = vmatprep.mubr.bf16.mxu0 0
    %3447 = vmatmul.mubr.bf16.gmra.mrb[0].mxu0 %v3381
    %v3448 = vpop.f32.mrb[0].mxu0
    %v3449 = vadd.f32 0.0, %v3448
    %v3450 = vpop.f32.mrb[0].mxu0
    %v3451 = vadd.f32 0.0, %v3450
    %v3452 = vpop.f32.mrb[0].mxu0
    %v3453 = vadd.f32 0.0, %v3452
    %v3454 = vpop.f32.mrb[0].mxu0
    %v3455 = vadd.f32 0.0, %v3454
    %3456 = vdwg.mxu0
    %3457 = vmatprep.subr.bf16.mxu0 %v3385
    %3458 = vmatpush1.bf16.msra.mxu0 %v3384
    %3459 = vmatprep.subr.bf16.mxu0 %v3389
    %3460 = vmatpush1.bf16.msra.mxu0 %v3388
    %3461 = vmatprep.subr.bf16.mxu0 %v3393
    %3462 = vmatpush1.bf16.msra.mxu0 %v3392
    %3463 = vmatprep.subr.bf16.mxu0 %v3397
    %3464 = vmatpush1.bf16.msra.mxu0 %v3396
    %3465 = vmatprep.subr.bf16.mxu0 %v3401
    %3466 = vmatpush1.bf16.msra.mxu0 %v3400
    %3467 = vmatprep.subr.bf16.mxu0 %v3405
    %3468 = vmatpush1.bf16.msra.mxu0 %v3404
    %3469 = vmatprep.subr.bf16.mxu0 %v3409
    %3470 = vmatpush1.bf16.msra.mxu0 %v3408
    %3471 = vmatprep.subr.bf16.mxu0 %v3413
    %3472 = vmatpush1.bf16.msra.mxu0 %v3412
    %3473 = vmatprep.subr.bf16.mxu0 0
    %3474 = vmatpush1.bf16.msra.mxu0 0
    %3475 = vmatprep.subr.bf16.mxu0 0
    %3476 = vmatpush1.bf16.msra.mxu0 0
    %3477 = vmatprep.subr.bf16.mxu0 0
    %3478 = vmatpush1.bf16.msra.mxu0 0
    %3479 = vmatprep.subr.bf16.mxu0 0
    %3480 = vmatpush1.bf16.msra.mxu0 0
    %3481 = vmatprep.subr.bf16.mxu0 0
    %3482 = vmatpush1.bf16.msra.mxu0 0
    %3483 = vmatprep.subr.bf16.mxu0 0
    %3484 = vmatpush1.bf16.msra.mxu0 0
    %3485 = vmatprep.subr.bf16.mxu0 0
    %3486 = vmatpush1.bf16.msra.mxu0 0
    %3487 = vmatprep.subr.bf16.mxu0 0
    %3488 = vmatpush1.bf16.msra.mxu0 0
    %3489 = vmatprep.mubr.bf16.mxu0 0
    %3490 = vmatmul.mubr.bf16.gmra.mrb[0].mxu0 %v3381
    %v3491 = vpop.f32.mrb[0].mxu0
    %v3492 = vadd.f32 0.0, %v3491
    %v3493 = vpop.f32.mrb[0].mxu0
    %v3494 = vadd.f32 0.0, %v3493
    %v3495 = vpop.f32.mrb[0].mxu0
    %v3496 = vadd.f32 0.0, %v3495
    %v3497 = vpop.f32.mrb[0].mxu0
    %v3498 = vadd.f32 0.0, %v3497
    %3499 = vdwg.mxu0
    %v3500 = vadd.f32 %v3371, %v3449
    %v3501 = vadd.f32 %v3372, %v3451
    %v3502 = vadd.f32 %v3373, %v3492
    %v3503 = vadd.f32 %v3374, %v3494
    %v3504 = vadd.f32 %v3375, %v3453
    %v3505 = vadd.f32 %v3376, %v3455
    %v3506 = vadd.f32 %v3377, %v3496
    %v3507 = vadd.f32 %v3378, %v3498
    %v3508 = vmul.f32 %v3500, 0.5
    %v3509 = vmul.f32 %v3504, 0.5
    %v3510 = vtanh.pop %v3508
    %v3511 = vtanh.pop %v3509
    %v3512 = vmul.f32 %v3510, 0.5
    %v3513 = vmul.f32 %v3511, 0.5
    %v3514 = vadd.f32 %v3512, 0.5
    %v3515 = vadd.f32 %v3513, 0.5
    %v3516 = vmul.f32 %v3501, 0.5
    %v3517 = vmul.f32 %v3505, 0.5
    %v3518 = vtanh.pop %v3516
    %v3519 = vtanh.pop %v3517
    %v3520 = vmul.f32 %v3518, 0.5
    %v3521 = vmul.f32 %v3519, 0.5
    %v3522 = vadd.f32 %v3520, 0.5
    %v3523 = vadd.f32 %v3521, 0.5
    %v3524 = vtanh.pop %v3502
    %v3525 = vtanh.pop %v3506
    %v3526 = vmul.f32 %v3503, 0.5
    %v3527 = vmul.f32 %v3507, 0.5
    %v3528 = vtanh.pop %v3526
    %v3529 = vtanh.pop %v3527
    %v3530 = vmul.f32 %v3528, 0.5
    %v3531 = vmul.f32 %v3529, 0.5
    %v3532 = vadd.f32 %v3530, 0.5
    %v3533 = vadd.f32 %v3531, 0.5
    %v3534 = vld [vmem:[%s2801] sm:$0xff]
    %v3535 = vld [vmem:[%s2801 + $0x8] sm:$0xff]
    %v3536 = vmul.f32 %v3522, %v3534
    %v3537 = vmul.f32 %v3523, %v3535
    %v3538 = vmul.f32 %v3514, %v3524
    %v3539 = vmul.f32 %v3515, %v3525
    %v3540 = vadd.f32 %v3536, %v3538
    %v3541 = vadd.f32 %v3537, %v3539
    %v3542 = vtanh.pop %v3540
    %v3543 = vtanh.pop %v3541
    %v3544 = vmul.f32 %v3532, %v3542
    %v3545 = vmul.f32 %v3533, %v3543
    %3546 = vst [vmem:[%s2801] sm:$0xff] %v3540
    %3547 = vst [vmem:[%s2801 + $0x8] sm:$0xff] %v3541
    %3548 = vst [vmem:[%s2645] sm:$0xff] %v3544
    %3549 = vst [vmem:[%s2645 + $0x8] sm:$0xff] %v3545
    %v3550 = vld [vmem:[%s1716] sm:$0xff]
    %v3551 = vld [vmem:[%s1716 + $0x8] sm:$0xff]
    %v3552 = vld [vmem:[%s1716 + $0x10] sm:$0xff]
    %v3553 = vld [vmem:[%s1716 + $0x18] sm:$0xff]
    %v3554 = vunpack.c.l.bf16 %v3550
    %v3555 = vunpack.c.l.bf16 %v3551
    %v3556 = vunpack.c.l.bf16 %v3552
    %v3557 = vunpack.c.l.bf16 %v3553
    %v3558 = vunpack.c.h.bf16 %v3550
    %v3559 = vunpack.c.h.bf16 %v3551
    %v3560 = vunpack.c.h.bf16 %v3552
    %v3561 = vunpack.c.h.bf16 %v3553
    %v3562 = vld [vmem:[%s2645] sm:$0xff]
    %v3563 = vld [vmem:[%s2645 + $0x8] sm:$0xff]
    %v3564 = vpack.c.bf16 %v3563, %v3562
    %v3565 = vld [vmem:[#allocation6] sm:$0xff]
    %v3566 = vld [vmem:[#allocation6 + $0x8] sm:$0xff]
    %v3567 = vld [vmem:[#allocation6 + $0x10] sm:$0xff]
    %v3568 = vld [vmem:[#allocation6 + $0x18] sm:$0xff]
    %v3569 = vld [vmem:[#allocation6 + $0x20] sm:$0xff]
    %v3570 = vld [vmem:[#allocation6 + $0x28] sm:$0xff]
    %v3571 = vld [vmem:[#allocation6 + $0x30] sm:$0xff]
    %v3572 = vld [vmem:[#allocation6 + $0x38] sm:$0xff]
    %v3573 = vld [vmem:[#allocation6 + $0x40] sm:$0xff]
    %v3574 = vld [vmem:[#allocation6 + $0x48] sm:$0xff]
    %v3575 = vld [vmem:[#allocation6 + $0x50] sm:$0xff]
    %v3576 = vld [vmem:[#allocation6 + $0x58] sm:$0xff]
    %v3577 = vld [vmem:[#allocation6 + $0x60] sm:$0xff]
    %v3578 = vld [vmem:[#allocation6 + $0x68] sm:$0xff]
    %v3579 = vld [vmem:[#allocation6 + $0x70] sm:$0xff]
    %v3580 = vld [vmem:[#allocation6 + $0x78] sm:$0xff]
    %v3581 = vld [vmem:[#allocation6 + $0x80] sm:$0xff]
    %v3582 = vld [vmem:[#allocation6 + $0x88] sm:$0xff]
    %v3583 = vld [vmem:[#allocation6 + $0x90] sm:$0xff]
    %v3584 = vld [vmem:[#allocation6 + $0x98] sm:$0xff]
    %v3585 = vld [vmem:[#allocation6 + $0xa0] sm:$0xff]
    %v3586 = vld [vmem:[#allocation6 + $0xa8] sm:$0xff]
    %v3587 = vld [vmem:[#allocation6 + $0xb0] sm:$0xff]
    %v3588 = vld [vmem:[#allocation6 + $0xb8] sm:$0xff]
    %v3589 = vld [vmem:[#allocation6 + $0xc0] sm:$0xff]
    %v3590 = vld [vmem:[#allocation6 + $0xc8] sm:$0xff]
    %v3591 = vld [vmem:[#allocation6 + $0xd0] sm:$0xff]
    %v3592 = vld [vmem:[#allocation6 + $0xd8] sm:$0xff]
    %v3593 = vld [vmem:[#allocation6 + $0xe0] sm:$0xff]
    %v3594 = vld [vmem:[#allocation6 + $0xe8] sm:$0xff]
    %v3595 = vld [vmem:[#allocation6 + $0xf0] sm:$0xff]
    %v3596 = vld [vmem:[#allocation6 + $0xf8] sm:$0xff]
    %3597 = vmatprep.subr.bf16.mxu0 %v3566
    %3598 = vmatpush1.bf16.msra.mxu0 %v3565
    %3599 = vmatprep.subr.bf16.mxu0 %v3570
    %3600 = vmatpush1.bf16.msra.mxu0 %v3569
    %3601 = vmatprep.subr.bf16.mxu0 %v3574
    %3602 = vmatpush1.bf16.msra.mxu0 %v3573
    %3603 = vmatprep.subr.bf16.mxu0 %v3578
    %3604 = vmatpush1.bf16.msra.mxu0 %v3577
    %3605 = vmatprep.subr.bf16.mxu0 %v3582
    %3606 = vmatpush1.bf16.msra.mxu0 %v3581
    %3607 = vmatprep.subr.bf16.mxu0 %v3586
    %3608 = vmatpush1.bf16.msra.mxu0 %v3585
    %3609 = vmatprep.subr.bf16.mxu0 %v3590
    %3610 = vmatpush1.bf16.msra.mxu0 %v3589
    %3611 = vmatprep.subr.bf16.mxu0 %v3594
    %3612 = vmatpush1.bf16.msra.mxu0 %v3593
    %3613 = vmatprep.subr.bf16.mxu0 0
    %3614 = vmatpush1.bf16.msra.mxu0 0
    %3615 = vmatprep.subr.bf16.mxu0 0
    %3616 = vmatpush1.bf16.msra.mxu0 0
    %3617 = vmatprep.subr.bf16.mxu0 0
    %3618 = vmatpush1.bf16.msra.mxu0 0
    %3619 = vmatprep.subr.bf16.mxu0 0
    %3620 = vmatpush1.bf16.msra.mxu0 0
    %3621 = vmatprep.subr.bf16.mxu0 0
    %3622 = vmatpush1.bf16.msra.mxu0 0
    %3623 = vmatprep.subr.bf16.mxu0 0
    %3624 = vmatpush1.bf16.msra.mxu0 0
    %3625 = vmatprep.subr.bf16.mxu0 0
    %3626 = vmatpush1.bf16.msra.mxu0 0
    %3627 = vmatprep.subr.bf16.mxu0 0
    %3628 = vmatpush1.bf16.msra.mxu0 0
    %3629 = vmatprep.mubr.bf16.mxu0 0
    %3630 = vmatmul.mubr.bf16.gmra.mrb[0].mxu0 %v3564
    %v3631 = vpop.f32.mrb[0].mxu0
    %v3632 = vadd.f32 0.0, %v3631
    %v3633 = vpop.f32.mrb[0].mxu0
    %v3634 = vadd.f32 0.0, %v3633
    %v3635 = vpop.f32.mrb[0].mxu0
    %v3636 = vadd.f32 0.0, %v3635
    %v3637 = vpop.f32.mrb[0].mxu0
    %v3638 = vadd.f32 0.0, %v3637
    %3639 = vdwg.mxu0
    %3640 = vmatprep.subr.bf16.mxu0 %v3568
    %3641 = vmatpush1.bf16.msra.mxu0 %v3567
    %3642 = vmatprep.subr.bf16.mxu0 %v3572
    %3643 = vmatpush1.bf16.msra.mxu0 %v3571
    %3644 = vmatprep.subr.bf16.mxu0 %v3576
    %3645 = vmatpush1.bf16.msra.mxu0 %v3575
    %3646 = vmatprep.subr.bf16.mxu0 %v3580
    %3647 = vmatpush1.bf16.msra.mxu0 %v3579
    %3648 = vmatprep.subr.bf16.mxu0 %v3584
    %3649 = vmatpush1.bf16.msra.mxu0 %v3583
    %3650 = vmatprep.subr.bf16.mxu0 %v3588
    %3651 = vmatpush1.bf16.msra.mxu0 %v3587
    %3652 = vmatprep.subr.bf16.mxu0 %v3592
    %3653 = vmatpush1.bf16.msra.mxu0 %v3591
    %3654 = vmatprep.subr.bf16.mxu0 %v3596
    %3655 = vmatpush1.bf16.msra.mxu0 %v3595
    %3656 = vmatprep.subr.bf16.mxu0 0
    %3657 = vmatpush1.bf16.msra.mxu0 0
    %3658 = vmatprep.subr.bf16.mxu0 0
    %3659 = vmatpush1.bf16.msra.mxu0 0
    %3660 = vmatprep.subr.bf16.mxu0 0
    %3661 = vmatpush1.bf16.msra.mxu0 0
    %3662 = vmatprep.subr.bf16.mxu0 0
    %3663 = vmatpush1.bf16.msra.mxu0 0
    %3664 = vmatprep.subr.bf16.mxu0 0
    %3665 = vmatpush1.bf16.msra.mxu0 0
    %3666 = vmatprep.subr.bf16.mxu0 0
    %3667 = vmatpush1.bf16.msra.mxu0 0
    %3668 = vmatprep.subr.bf16.mxu0 0
    %3669 = vmatpush1.bf16.msra.mxu0 0
    %3670 = vmatprep.subr.bf16.mxu0 0
    %3671 = vmatpush1.bf16.msra.mxu0 0
    %3672 = vmatprep.mubr.bf16.mxu0 0
    %3673 = vmatmul.mubr.bf16.gmra.mrb[0].mxu0 %v3564
    %v3674 = vpop.f32.mrb[0].mxu0
    %v3675 = vadd.f32 0.0, %v3674
    %v3676 = vpop.f32.mrb[0].mxu0
    %v3677 = vadd.f32 0.0, %v3676
    %v3678 = vpop.f32.mrb[0].mxu0
    %v3679 = vadd.f32 0.0, %v3678
    %v3680 = vpop.f32.mrb[0].mxu0
    %v3681 = vadd.f32 0.0, %v3680
    %3682 = vdwg.mxu0
    %v3683 = vadd.f32 %v3554, %v3632
    %v3684 = vadd.f32 %v3555, %v3634
    %v3685 = vadd.f32 %v3556, %v3675
    %v3686 = vadd.f32 %v3557, %v3677
    %v3687 = vadd.f32 %v3558, %v3636
    %v3688 = vadd.f32 %v3559, %v3638
    %v3689 = vadd.f32 %v3560, %v3679
    %v3690 = vadd.f32 %v3561, %v3681
    %v3691 = vmul.f32 %v3683, 0.5
    %v3692 = vmul.f32 %v3687, 0.5
    %v3693 = vtanh.pop %v3691
    %v3694 = vtanh.pop %v3692
    %v3695 = vmul.f32 %v3693, 0.5
    %v3696 = vmul.f32 %v3694, 0.5
    %v3697 = vadd.f32 %v3695, 0.5
    %v3698 = vadd.f32 %v3696, 0.5
    %v3699 = vmul.f32 %v3684, 0.5
    %v3700 = vmul.f32 %v3688, 0.5
    %v3701 = vtanh.pop %v3699
    %v3702 = vtanh.pop %v3700
    %v3703 = vmul.f32 %v3701, 0.5
    %v3704 = vmul.f32 %v3702, 0.5
    %v3705 = vadd.f32 %v3703, 0.5
    %v3706 = vadd.f32 %v3704, 0.5
    %v3707 = vtanh.pop %v3685
    %v3708 = vtanh.pop %v3689
    %v3709 = vmul.f32 %v3686, 0.5
    %v3710 = vmul.f32 %v3690, 0.5
    %v3711 = vtanh.pop %v3709
    %v3712 = vtanh.pop %v3710
    %v3713 = vmul.f32 %v3711, 0.5
    %v3714 = vmul.f32 %v3712, 0.5
    %v3715 = vadd.f32 %v3713, 0.5
    %v3716 = vadd.f32 %v3714, 0.5
    %v3717 = vld [vmem:[%s2801] sm:$0xff]
    %v3718 = vld [vmem:[%s2801 + $0x8] sm:$0xff]
    %v3719 = vmul.f32 %v3705, %v3717
    %v3720 = vmul.f32 %v3706, %v3718
    %v3721 = vmul.f32 %v3697, %v3707
    %v3722 = vmul.f32 %v3698, %v3708
    %v3723 = vadd.f32 %v3719, %v3721
    %v3724 = vadd.f32 %v3720, %v3722
    %v3725 = vtanh.pop %v3723
    %v3726 = vtanh.pop %v3724
    %v3727 = vmul.f32 %v3715, %v3725
    %v3728 = vmul.f32 %v3716, %v3726
    %3729 = vst [vmem:[%s2801] sm:$0xff] %v3723
    %3730 = vst [vmem:[%s2801 + $0x8] sm:$0xff] %v3724
    %3731 = vst [vmem:[%s2645] sm:$0xff] %v3727
    %3732 = vst [vmem:[%s2645 + $0x8] sm:$0xff] %v3728
    %v3733 = vld [vmem:[%s1905] sm:$0xff]
    %v3734 = vld [vmem:[%s1905 + $0x8] sm:$0xff]
    %v3735 = vld [vmem:[%s1905 + $0x10] sm:$0xff]
    %v3736 = vld [vmem:[%s1905 + $0x18] sm:$0xff]
    %v3737 = vunpack.c.l.bf16 %v3733
    %v3738 = vunpack.c.l.bf16 %v3734
    %v3739 = vunpack.c.l.bf16 %v3735
    %v3740 = vunpack.c.l.bf16 %v3736
    %v3741 = vunpack.c.h.bf16 %v3733
    %v3742 = vunpack.c.h.bf16 %v3734
    %v3743 = vunpack.c.h.bf16 %v3735
    %v3744 = vunpack.c.h.bf16 %v3736
    %v3745 = vld [vmem:[%s2645] sm:$0xff]
    %v3746 = vld [vmem:[%s2645 + $0x8] sm:$0xff]
    %v3747 = vpack.c.bf16 %v3746, %v3745
    %v3748 = vld [vmem:[#allocation6] sm:$0xff]
    %v3749 = vld [vmem:[#allocation6 + $0x8] sm:$0xff]
    %v3750 = vld [vmem:[#allocation6 + $0x10] sm:$0xff]
    %v3751 = vld [vmem:[#allocation6 + $0x18] sm:$0xff]
    %v3752 = vld [vmem:[#allocation6 + $0x20] sm:$0xff]
    %v3753 = vld [vmem:[#allocation6 + $0x28] sm:$0xff]
    %v3754 = vld [vmem:[#allocation6 + $0x30] sm:$0xff]
    %v3755 = vld [vmem:[#allocation6 + $0x38] sm:$0xff]
    %v3756 = vld [vmem:[#allocation6 + $0x40] sm:$0xff]
    %v3757 = vld [vmem:[#allocation6 + $0x48] sm:$0xff]
    %v3758 = vld [vmem:[#allocation6 + $0x50] sm:$0xff]
    %v3759 = vld [vmem:[#allocation6 + $0x58] sm:$0xff]
    %v3760 = vld [vmem:[#allocation6 + $0x60] sm:$0xff]
    %v3761 = vld [vmem:[#allocation6 + $0x68] sm:$0xff]
    %v3762 = vld [vmem:[#allocation6 + $0x70] sm:$0xff]
    %v3763 = vld [vmem:[#allocation6 + $0x78] sm:$0xff]
    %v3764 = vld [vmem:[#allocation6 + $0x80] sm:$0xff]
    %v3765 = vld [vmem:[#allocation6 + $0x88] sm:$0xff]
    %v3766 = vld [vmem:[#allocation6 + $0x90] sm:$0xff]
    %v3767 = vld [vmem:[#allocation6 + $0x98] sm:$0xff]
    %v3768 = vld [vmem:[#allocation6 + $0xa0] sm:$0xff]
    %v3769 = vld [vmem:[#allocation6 + $0xa8] sm:$0xff]
    %v3770 = vld [vmem:[#allocation6 + $0xb0] sm:$0xff]
    %v3771 = vld [vmem:[#allocation6 + $0xb8] sm:$0xff]
    %v3772 = vld [vmem:[#allocation6 + $0xc0] sm:$0xff]
    %v3773 = vld [vmem:[#allocation6 + $0xc8] sm:$0xff]
    %v3774 = vld [vmem:[#allocation6 + $0xd0] sm:$0xff]
    %v3775 = vld [vmem:[#allocation6 + $0xd8] sm:$0xff]
    %v3776 = vld [vmem:[#allocation6 + $0xe0] sm:$0xff]
    %v3777 = vld [vmem:[#allocation6 + $0xe8] sm:$0xff]
    %v3778 = vld [vmem:[#allocation6 + $0xf0] sm:$0xff]
    %v3779 = vld [vmem:[#allocation6 + $0xf8] sm:$0xff]
    %3780 = vmatprep.subr.bf16.mxu0 %v3749
    %3781 = vmatpush1.bf16.msra.mxu0 %v3748
    %3782 = vmatprep.subr.bf16.mxu0 %v3753
    %3783 = vmatpush1.bf16.msra.mxu0 %v3752
    %3784 = vmatprep.subr.bf16.mxu0 %v3757
    %3785 = vmatpush1.bf16.msra.mxu0 %v3756
    %3786 = vmatprep.subr.bf16.mxu0 %v3761
    %3787 = vmatpush1.bf16.msra.mxu0 %v3760
    %3788 = vmatprep.subr.bf16.mxu0 %v3765
    %3789 = vmatpush1.bf16.msra.mxu0 %v3764
    %3790 = vmatprep.subr.bf16.mxu0 %v3769
    %3791 = vmatpush1.bf16.msra.mxu0 %v3768
    %3792 = vmatprep.subr.bf16.mxu0 %v3773
    %3793 = vmatpush1.bf16.msra.mxu0 %v3772
    %3794 = vmatprep.subr.bf16.mxu0 %v3777
    %3795 = vmatpush1.bf16.msra.mxu0 %v3776
    %3796 = vmatprep.subr.bf16.mxu0 0
    %3797 = vmatpush1.bf16.msra.mxu0 0
    %3798 = vmatprep.subr.bf16.mxu0 0
    %3799 = vmatpush1.bf16.msra.mxu0 0
    %3800 = vmatprep.subr.bf16.mxu0 0
    %3801 = vmatpush1.bf16.msra.mxu0 0
    %3802 = vmatprep.subr.bf16.mxu0 0
    %3803 = vmatpush1.bf16.msra.mxu0 0
    %3804 = vmatprep.subr.bf16.mxu0 0
    %3805 = vmatpush1.bf16.msra.mxu0 0
    %3806 = vmatprep.subr.bf16.mxu0 0
    %3807 = vmatpush1.bf16.msra.mxu0 0
    %3808 = vmatprep.subr.bf16.mxu0 0
    %3809 = vmatpush1.bf16.msra.mxu0 0
    %3810 = vmatprep.subr.bf16.mxu0 0
    %3811 = vmatpush1.bf16.msra.mxu0 0
    %3812 = vmatprep.mubr.bf16.mxu0 0
    %3813 = vmatmul.mubr.bf16.gmra.mrb[0].mxu0 %v3747
    %v3814 = vpop.f32.mrb[0].mxu0
    %v3815 = vadd.f32 0.0, %v3814
    %v3816 = vpop.f32.mrb[0].mxu0
    %v3817 = vadd.f32 0.0, %v3816
    %v3818 = vpop.f32.mrb[0].mxu0
    %v3819 = vadd.f32 0.0, %v3818
    %v3820 = vpop.f32.mrb[0].mxu0
    %v3821 = vadd.f32 0.0, %v3820
    %3822 = vdwg.mxu0
    %3823 = vmatprep.subr.bf16.mxu0 %v3751
    %3824 = vmatpush1.bf16.msra.mxu0 %v3750
    %3825 = vmatprep.subr.bf16.mxu0 %v3755
    %3826 = vmatpush1.bf16.msra.mxu0 %v3754
    %3827 = vmatprep.subr.bf16.mxu0 %v3759
    %3828 = vmatpush1.bf16.msra.mxu0 %v3758
    %3829 = vmatprep.subr.bf16.mxu0 %v3763
    %3830 = vmatpush1.bf16.msra.mxu0 %v3762
    %3831 = vmatprep.subr.bf16.mxu0 %v3767
    %3832 = vmatpush1.bf16.msra.mxu0 %v3766
    %3833 = vmatprep.subr.bf16.mxu0 %v3771
    %3834 = vmatpush1.bf16.msra.mxu0 %v3770
    %3835 = vmatprep.subr.bf16.mxu0 %v3775
    %3836 = vmatpush1.bf16.msra.mxu0 %v3774
    %3837 = vmatprep.subr.bf16.mxu0 %v3779
    %3838 = vmatpush1.bf16.msra.mxu0 %v3778
    %3839 = vmatprep.subr.bf16.mxu0 0
    %3840 = vmatpush1.bf16.msra.mxu0 0
    %3841 = vmatprep.subr.bf16.mxu0 0
    %3842 = vmatpush1.bf16.msra.mxu0 0
    %3843 = vmatprep.subr.bf16.mxu0 0
    %3844 = vmatpush1.bf16.msra.mxu0 0
    %3845 = vmatprep.subr.bf16.mxu0 0
    %3846 = vmatpush1.bf16.msra.mxu0 0
    %3847 = vmatprep.subr.bf16.mxu0 0
    %3848 = vmatpush1.bf16.msra.mxu0 0
    %3849 = vmatprep.subr.bf16.mxu0 0
    %3850 = vmatpush1.bf16.msra.mxu0 0
    %3851 = vmatprep.subr.bf16.mxu0 0
    %3852 = vmatpush1.bf16.msra.mxu0 0
    %3853 = vmatprep.subr.bf16.mxu0 0
    %3854 = vmatpush1.bf16.msra.mxu0 0
    %3855 = vmatprep.mubr.bf16.mxu0 0
    %3856 = vmatmul.mubr.bf16.gmra.mrb[0].mxu0 %v3747
    %v3857 = vpop.f32.mrb[0].mxu0
    %v3858 = vadd.f32 0.0, %v3857
    %v3859 = vpop.f32.mrb[0].mxu0
    %v3860 = vadd.f32 0.0, %v3859
    %v3861 = vpop.f32.mrb[0].mxu0
    %v3862 = vadd.f32 0.0, %v3861
    %v3863 = vpop.f32.mrb[0].mxu0
    %v3864 = vadd.f32 0.0, %v3863
    %3865 = vdwg.mxu0
    %v3866 = vadd.f32 %v3737, %v3815
    %v3867 = vadd.f32 %v3738, %v3817
    %v3868 = vadd.f32 %v3739, %v3858
    %v3869 = vadd.f32 %v3740, %v3860
    %v3870 = vadd.f32 %v3741, %v3819
    %v3871 = vadd.f32 %v3742, %v3821
    %v3872 = vadd.f32 %v3743, %v3862
    %v3873 = vadd.f32 %v3744, %v3864
    %v3874 = vmul.f32 %v3866, 0.5
    %v3875 = vmul.f32 %v3870, 0.5
    %v3876 = vtanh.pop %v3874
    %v3877 = vtanh.pop %v3875
    %v3878 = vmul.f32 %v3876, 0.5
    %v3879 = vmul.f32 %v3877, 0.5
    %v3880 = vadd.f32 %v3878, 0.5
    %v3881 = vadd.f32 %v3879, 0.5
    %v3882 = vmul.f32 %v3867, 0.5
    %v3883 = vmul.f32 %v3871, 0.5
    %v3884 = vtanh.pop %v3882
    %v3885 = vtanh.pop %v3883
    %v3886 = vmul.f32 %v3884, 0.5
    %v3887 = vmul.f32 %v3885, 0.5
    %v3888 = vadd.f32 %v3886, 0.5
    %v3889 = vadd.f32 %v3887, 0.5
    %v3890 = vtanh.pop %v3868
    %v3891 = vtanh.pop %v3872
    %v3892 = vmul.f32 %v3869, 0.5
    %v3893 = vmul.f32 %v3873, 0.5
    %v3894 = vtanh.pop %v3892
    %v3895 = vtanh.pop %v3893
    %v3896 = vmul.f32 %v3894, 0.5
    %v3897 = vmul.f32 %v3895, 0.5
    %v3898 = vadd.f32 %v3896, 0.5
    %v3899 = vadd.f32 %v3897, 0.5
    %v3900 = vld [vmem:[%s2801] sm:$0xff]
    %v3901 = vld [vmem:[%s2801 + $0x8] sm:$0xff]
    %v3902 = vmul.f32 %v3888, %v3900
    %v3903 = vmul.f32 %v3889, %v3901
    %v3904 = vmul.f32 %v3880, %v3890
    %v3905 = vmul.f32 %v3881, %v3891
    %v3906 = vadd.f32 %v3902, %v3904
    %v3907 = vadd.f32 %v3903, %v3905
    %v3908 = vtanh.pop %v3906
    %v3909 = vtanh.pop %v3907
    %v3910 = vmul.f32 %v3898, %v3908
    %v3911 = vmul.f32 %v3899, %v3909
    %3912 = vst [vmem:[%s2801] sm:$0xff] %v3906
    %3913 = vst [vmem:[%s2801 + $0x8] sm:$0xff] %v3907
    %3914 = vst [vmem:[%s2645] sm:$0xff] %v3910
    %3915 = vst [vmem:[%s2645 + $0x8] sm:$0xff] %v3911
    %v3916 = vld [vmem:[%s2094] sm:$0xff]
    %v3917 = vld [vmem:[%s2094 + $0x8] sm:$0xff]
    %v3918 = vld [vmem:[%s2094 + $0x10] sm:$0xff]
    %v3919 = vld [vmem:[%s2094 + $0x18] sm:$0xff]
    %v3920 = vunpack.c.l.bf16 %v3916
    %v3921 = vunpack.c.l.bf16 %v3917
    %v3922 = vunpack.c.l.bf16 %v3918
    %v3923 = vunpack.c.l.bf16 %v3919
    %v3924 = vunpack.c.h.bf16 %v3916
    %v3925 = vunpack.c.h.bf16 %v3917
    %v3926 = vunpack.c.h.bf16 %v3918
    %v3927 = vunpack.c.h.bf16 %v3919
    %v3928 = vld [vmem:[%s2645] sm:$0xff]
    %v3929 = vld [vmem:[%s2645 + $0x8] sm:$0xff]
    %v3930 = vpack.c.bf16 %v3929, %v3928
    %v3931 = vld [vmem:[#allocation6] sm:$0xff]
    %v3932 = vld [vmem:[#allocation6 + $0x8] sm:$0xff]
    %v3933 = vld [vmem:[#allocation6 + $0x10] sm:$0xff]
    %v3934 = vld [vmem:[#allocation6 + $0x18] sm:$0xff]
    %v3935 = vld [vmem:[#allocation6 + $0x20] sm:$0xff]
    %v3936 = vld [vmem:[#allocation6 + $0x28] sm:$0xff]
    %v3937 = vld [vmem:[#allocation6 + $0x30] sm:$0xff]
    %v3938 = vld [vmem:[#allocation6 + $0x38] sm:$0xff]
    %v3939 = vld [vmem:[#allocation6 + $0x40] sm:$0xff]
    %v3940 = vld [vmem:[#allocation6 + $0x48] sm:$0xff]
    %v3941 = vld [vmem:[#allocation6 + $0x50] sm:$0xff]
    %v3942 = vld [vmem:[#allocation6 + $0x58] sm:$0xff]
    %v3943 = vld [vmem:[#allocation6 + $0x60] sm:$0xff]
    %v3944 = vld [vmem:[#allocation6 + $0x68] sm:$0xff]
    %v3945 = vld [vmem:[#allocation6 + $0x70] sm:$0xff]
    %v3946 = vld [vmem:[#allocation6 + $0x78] sm:$0xff]
    %v3947 = vld [vmem:[#allocation6 + $0x80] sm:$0xff]
    %v3948 = vld [vmem:[#allocation6 + $0x88] sm:$0xff]
    %v3949 = vld [vmem:[#allocation6 + $0x90] sm:$0xff]
    %v3950 = vld [vmem:[#allocation6 + $0x98] sm:$0xff]
    %v3951 = vld [vmem:[#allocation6 + $0xa0] sm:$0xff]
    %v3952 = vld [vmem:[#allocation6 + $0xa8] sm:$0xff]
    %v3953 = vld [vmem:[#allocation6 + $0xb0] sm:$0xff]
    %v3954 = vld [vmem:[#allocation6 + $0xb8] sm:$0xff]
    %v3955 = vld [vmem:[#allocation6 + $0xc0] sm:$0xff]
    %v3956 = vld [vmem:[#allocation6 + $0xc8] sm:$0xff]
    %v3957 = vld [vmem:[#allocation6 + $0xd0] sm:$0xff]
    %v3958 = vld [vmem:[#allocation6 + $0xd8] sm:$0xff]
    %v3959 = vld [vmem:[#allocation6 + $0xe0] sm:$0xff]
    %v3960 = vld [vmem:[#allocation6 + $0xe8] sm:$0xff]
    %v3961 = vld [vmem:[#allocation6 + $0xf0] sm:$0xff]
    %v3962 = vld [vmem:[#allocation6 + $0xf8] sm:$0xff]
    %3963 = vmatprep.subr.bf16.mxu0 %v3932
    %3964 = vmatpush1.bf16.msra.mxu0 %v3931
    %3965 = vmatprep.subr.bf16.mxu0 %v3936
    %3966 = vmatpush1.bf16.msra.mxu0 %v3935
    %3967 = vmatprep.subr.bf16.mxu0 %v3940
    %3968 = vmatpush1.bf16.msra.mxu0 %v3939
    %3969 = vmatprep.subr.bf16.mxu0 %v3944
    %3970 = vmatpush1.bf16.msra.mxu0 %v3943
    %3971 = vmatprep.subr.bf16.mxu0 %v3948
    %3972 = vmatpush1.bf16.msra.mxu0 %v3947
    %3973 = vmatprep.subr.bf16.mxu0 %v3952
    %3974 = vmatpush1.bf16.msra.mxu0 %v3951
    %3975 = vmatprep.subr.bf16.mxu0 %v3956
    %3976 = vmatpush1.bf16.msra.mxu0 %v3955
    %3977 = vmatprep.subr.bf16.mxu0 %v3960
    %3978 = vmatpush1.bf16.msra.mxu0 %v3959
    %3979 = vmatprep.subr.bf16.mxu0 0
    %3980 = vmatpush1.bf16.msra.mxu0 0
    %3981 = vmatprep.subr.bf16.mxu0 0
    %3982 = vmatpush1.bf16.msra.mxu0 0
    %3983 = vmatprep.subr.bf16.mxu0 0
    %3984 = vmatpush1.bf16.msra.mxu0 0
    %3985 = vmatprep.subr.bf16.mxu0 0
    %3986 = vmatpush1.bf16.msra.mxu0 0
    %3987 = vmatprep.subr.bf16.mxu0 0
    %3988 = vmatpush1.bf16.msra.mxu0 0
    %3989 = vmatprep.subr.bf16.mxu0 0
    %3990 = vmatpush1.bf16.msra.mxu0 0
    %3991 = vmatprep.subr.bf16.mxu0 0
    %3992 = vmatpush1.bf16.msra.mxu0 0
    %3993 = vmatprep.subr.bf16.mxu0 0
    %3994 = vmatpush1.bf16.msra.mxu0 0
    %3995 = vmatprep.mubr.bf16.mxu0 0
    %3996 = vmatmul.mubr.bf16.gmra.mrb[0].mxu0 %v3930
    %v3997 = vpop.f32.mrb[0].mxu0
    %v3998 = vadd.f32 0.0, %v3997
    %v3999 = vpop.f32.mrb[0].mxu0
    %v4000 = vadd.f32 0.0, %v3999
    %v4001 = vpop.f32.mrb[0].mxu0
    %v4002 = vadd.f32 0.0, %v4001
    %v4003 = vpop.f32.mrb[0].mxu0
    %v4004 = vadd.f32 0.0, %v4003
    %4005 = vdwg.mxu0
    %4006 = vmatprep.subr.bf16.mxu0 %v3934
    %4007 = vmatpush1.bf16.msra.mxu0 %v3933
    %4008 = vmatprep.subr.bf16.mxu0 %v3938
    %4009 = vmatpush1.bf16.msra.mxu0 %v3937
    %4010 = vmatprep.subr.bf16.mxu0 %v3942
    %4011 = vmatpush1.bf16.msra.mxu0 %v3941
    %4012 = vmatprep.subr.bf16.mxu0 %v3946
    %4013 = vmatpush1.bf16.msra.mxu0 %v3945
    %4014 = vmatprep.subr.bf16.mxu0 %v3950
    %4015 = vmatpush1.bf16.msra.mxu0 %v3949
    %4016 = vmatprep.subr.bf16.mxu0 %v3954
    %4017 = vmatpush1.bf16.msra.mxu0 %v3953
    %4018 = vmatprep.subr.bf16.mxu0 %v3958
    %4019 = vmatpush1.bf16.msra.mxu0 %v3957
    %4020 = vmatprep.subr.bf16.mxu0 %v3962
    %4021 = vmatpush1.bf16.msra.mxu0 %v3961
    %4022 = vmatprep.subr.bf16.mxu0 0
    %4023 = vmatpush1.bf16.msra.mxu0 0
    %4024 = vmatprep.subr.bf16.mxu0 0
    %4025 = vmatpush1.bf16.msra.mxu0 0
    %4026 = vmatprep.subr.bf16.mxu0 0
    %4027 = vmatpush1.bf16.msra.mxu0 0
    %4028 = vmatprep.subr.bf16.mxu0 0
    %4029 = vmatpush1.bf16.msra.mxu0 0
    %4030 = vmatprep.subr.bf16.mxu0 0
    %4031 = vmatpush1.bf16.msra.mxu0 0
    %4032 = vmatprep.subr.bf16.mxu0 0
    %4033 = vmatpush1.bf16.msra.mxu0 0
    %4034 = vmatprep.subr.bf16.mxu0 0
    %4035 = vmatpush1.bf16.msra.mxu0 0
    %4036 = vmatprep.subr.bf16.mxu0 0
    %4037 = vmatpush1.bf16.msra.mxu0 0
    %4038 = vmatprep.mubr.bf16.mxu0 0
    %4039 = vmatmul.mubr.bf16.gmra.mrb[0].mxu0 %v3930
    %v4040 = vpop.f32.mrb[0].mxu0
    %v4041 = vadd.f32 0.0, %v4040
    %v4042 = vpop.f32.mrb[0].mxu0
    %v4043 = vadd.f32 0.0, %v4042
    %v4044 = vpop.f32.mrb[0].mxu0
    %v4045 = vadd.f32 0.0, %v4044
    %v4046 = vpop.f32.mrb[0].mxu0
    %v4047 = vadd.f32 0.0, %v4046
    %4048 = vdwg.mxu0
    %v4049 = vadd.f32 %v3920, %v3998
    %v4050 = vadd.f32 %v3921, %v4000
    %v4051 = vadd.f32 %v3922, %v4041
    %v4052 = vadd.f32 %v3923, %v4043
    %v4053 = vadd.f32 %v3924, %v4002
    %v4054 = vadd.f32 %v3925, %v4004
    %v4055 = vadd.f32 %v3926, %v4045
    %v4056 = vadd.f32 %v3927, %v4047
    %v4057 = vmul.f32 %v4049, 0.5
    %v4058 = vmul.f32 %v4053, 0.5
    %v4059 = vtanh.pop %v4057
    %v4060 = vtanh.pop %v4058
    %v4061 = vmul.f32 %v4059, 0.5
    %v4062 = vmul.f32 %v4060, 0.5
    %v4063 = vadd.f32 %v4061, 0.5
    %v4064 = vadd.f32 %v4062, 0.5
    %v4065 = vmul.f32 %v4050, 0.5
    %v4066 = vmul.f32 %v4054, 0.5
    %v4067 = vtanh.pop %v4065
    %v4068 = vtanh.pop %v4066
    %v4069 = vmul.f32 %v4067, 0.5
    %v4070 = vmul.f32 %v4068, 0.5
    %v4071 = vadd.f32 %v4069, 0.5
    %v4072 = vadd.f32 %v4070, 0.5
    %v4073 = vtanh.pop %v4051
    %v4074 = vtanh.pop %v4055
    %v4075 = vmul.f32 %v4052, 0.5
    %v4076 = vmul.f32 %v4056, 0.5
    %v4077 = vtanh.pop %v4075
    %v4078 = vtanh.pop %v4076
    %v4079 = vmul.f32 %v4077, 0.5
    %v4080 = vmul.f32 %v4078, 0.5
    %v4081 = vadd.f32 %v4079, 0.5
    %v4082 = vadd.f32 %v4080, 0.5
    %v4083 = vld [vmem:[%s2801] sm:$0xff]
    %v4084 = vld [vmem:[%s2801 + $0x8] sm:$0xff]
    %v4085 = vmul.f32 %v4071, %v4083
    %v4086 = vmul.f32 %v4072, %v4084
    %v4087 = vmul.f32 %v4063, %v4073
    %v4088 = vmul.f32 %v4064, %v4074
    %v4089 = vadd.f32 %v4085, %v4087
    %v4090 = vadd.f32 %v4086, %v4088
    %v4091 = vtanh.pop %v4089
    %v4092 = vtanh.pop %v4090
    %v4093 = vmul.f32 %v4081, %v4091
    %v4094 = vmul.f32 %v4082, %v4092
    %4095 = vst [vmem:[%s2801] sm:$0xff] %v4089
    %4096 = vst [vmem:[%s2801 + $0x8] sm:$0xff] %v4090
    %4097 = vst [vmem:[%s2645] sm:$0xff] %v4093
    %4098 = vst [vmem:[%s2645 + $0x8] sm:$0xff] %v4094
    // Predicated region
    $region119: #{tpu_custom_call.1} parent=1 // pred_check
      %p4099 = pneg %p18
    $region120: #{tpu_custom_call.1} parent=1 // pred_check_branch
      %4101 = sbr.rel (%p4099) target = $region122
    $region121: #{tpu_custom_call.1} parent=1 // pred_region
      %v4102 = vld [vmem:[%s2645] sm:$0xff]
      %v4103 = vld [vmem:[%s2645 + $0x8] sm:$0xff]
      %v4104 = vpack.c.bf16 %v4103, %v4102
      %v4105 = vld [vmem:[#allocation8] sm:$0xff]
      %v4106 = vld [vmem:[#allocation8 + $0x8] sm:$0xff]
      %v4107 = vld [vmem:[#allocation8 + $0x10] sm:$0xff]
      %v4108 = vld [vmem:[#allocation8 + $0x18] sm:$0xff]
      %v4109 = vld [vmem:[#allocation8 + $0x20] sm:$0xff]
      %v4110 = vld [vmem:[#allocation8 + $0x28] sm:$0xff]
      %v4111 = vld [vmem:[#allocation8 + $0x30] sm:$0xff]
      %v4112 = vld [vmem:[#allocation8 + $0x38] sm:$0xff]
      %v4113 = vld [vmem:[#allocation9] sm:$0x1]
      %v4115 = vlaneseq
      %v4116 = vshrl.u32 %v4115, 7
      %v4117 = vsub.s32 0, %v4116
      %v4118 = vrot.slane %v4113, %v4117
      %4120 = vmatprep.subr.bf16.mxu0 0
      %4121 = vmatpush1.bf16.msra.mxu0 %v4105
      %4122 = vmatprep.subr.bf16.mxu0 0
      %4123 = vmatpush1.bf16.msra.mxu0 %v4106
      %4124 = vmatprep.subr.bf16.mxu0 0
      %4125 = vmatpush1.bf16.msra.mxu0 %v4107
      %4126 = vmatprep.subr.bf16.mxu0 0
      %4127 = vmatpush1.bf16.msra.mxu0 %v4108
      %4128 = vmatprep.subr.bf16.mxu0 0
      %4129 = vmatpush1.bf16.msra.mxu0 %v4109
      %4130 = vmatprep.subr.bf16.mxu0 0
      %4131 = vmatpush1.bf16.msra.mxu0 %v4110
      %4132 = vmatprep.subr.bf16.mxu0 0
      %4133 = vmatpush1.bf16.msra.mxu0 %v4111
      %4134 = vmatprep.subr.bf16.mxu0 0
      %4135 = vmatpush1.bf16.msra.mxu0 %v4112
      %4136 = vmatprep.subr.bf16.mxu0 0
      %4137 = vmatpush1.bf16.msra.mxu0 0
      %4138 = vmatprep.subr.bf16.mxu0 0
      %4139 = vmatpush1.bf16.msra.mxu0 0
      %4140 = vmatprep.subr.bf16.mxu0 0
      %4141 = vmatpush1.bf16.msra.mxu0 0
      %4142 = vmatprep.subr.bf16.mxu0 0
      %4143 = vmatpush1.bf16.msra.mxu0 0
      %4144 = vmatprep.subr.bf16.mxu0 0
      %4145 = vmatpush1.bf16.msra.mxu0 0
      %4146 = vmatprep.subr.bf16.mxu0 0
      %4147 = vmatpush1.bf16.msra.mxu0 0
      %4148 = vmatprep.subr.bf16.mxu0 0
      %4149 = vmatpush1.bf16.msra.mxu0 0
      %4150 = vmatprep.subr.bf16.mxu0 0
      %4151 = vmatpush1.bf16.msra.mxu0 0
      %4152 = vmatprep.mubr.bf16.mxu0 0
      %4153 = vmatmul.mubr.bf16.gmra.mrb[0].mxu0 %v4104
      %v4154 = vpop.f32.mrb[0].mxu0
      %v4155 = vadd.f32 %v4118, %v4154
      %v4156 = vpop.f32.mrb[0].mxu0
      %v4157 = vpop.f32.mrb[0].mxu0
      %v4158 = vadd.f32 %v4118, %v4157
      %v4159 = vpop.f32.mrb[0].mxu0
      %4160 = vdwg.mxu0
      %4161 = vst [vmem:[#allocation15] sm:$0xff] %v4155
      %4162 = vst [vmem:[#allocation15 + $0x8] sm:$0xff] %v4158
    $region122: #{tpu_custom_call.1} parent=1 // pred_fallthru
      _
    // Predicated region
    $region123: #{tpu_custom_call.1} parent=1 // pred_check
      _
    $region124: #{tpu_custom_call.1} parent=1 // pred_check_branch
      %4164 = sbr.rel (0) target = $region126
    $region125: #{tpu_custom_call.1} parent=1 // pred_region
      %s4166 = ssub.s32 256, 256
      %4167 = vsyncadd [#allocation16], %s4166
      %s4168 = sshll.u32 [#allocation15], 4
      %s4169 = int_to_ptr.vmem [resolvable:$true] %s4168
      %4174 = dma.vmem_to_hbm [thread:$0]  %s4169, 256, %s9, [#allocation16], 128, 128, 8
    $region126: #{tpu_custom_call.1} parent=1 // pred_fallthru
      _
    // Predicated region
    $region127: #{tpu_custom_call.1} parent=1 // pred_check
      _
    $region128: #{tpu_custom_call.1} parent=1 // pred_check_branch
      %4176 = sbr.rel (0) target = $region130
    $region129: #{tpu_custom_call.1} parent=1 // pred_region
      %4177 = dma.done [#allocation16], 256
    $region130: #{tpu_custom_call.1} parent=1 // pred_fallthru
      _
    %4178 = vsyncpa [#allocation16], 1
  %4179 = vsyncmov [#allocation14]
  %s4180 = vpop.sfrf %4179
  %p4181 = scmp.eq.s32.totalorder %s4180, 0
  %p4182 = pneg %p4181
  %4184 = shalt.err (%p4182)
  %s4185 = scalar_lea.sflag [#allocation14], 1
  %4186 = vsyncmov %s4185
  %s4187 = vpop.sfrf %4186
  %p4188 = scmp.eq.s32.totalorder %s4187, 0
  %p4189 = pneg %p4188
  %4191 = shalt.err (%p4189)
  %s4192 = scalar_lea.sflag [#allocation14], 2
  %4193 = vsyncmov %s4192
  %s4194 = vpop.sfrf %4193
  %p4195 = scmp.eq.s32.totalorder %s4194, 0
  %p4196 = pneg %p4195
  %4198 = shalt.err (%p4196)
  %s4199 = scalar_lea.sflag [#allocation14], 3
  %4200 = vsyncmov %s4199
  %s4201 = vpop.sfrf %4200
  %p4202 = scmp.eq.s32.totalorder %s4201, 0
  %p4203 = pneg %p4202
  %4205 = shalt.err (%p4203)
  %s4206 = scalar_lea.sflag [#allocation14], 4
  %4207 = vsyncmov %s4206
  %s4208 = vpop.sfrf %4207
  %p4209 = scmp.eq.s32.totalorder %s4208, 0
  %p4210 = pneg %p4209
  %4212 = shalt.err (%p4210)
  %s4213 = scalar_lea.sflag [#allocation14], 5
  %4214 = vsyncmov %s4213
  %s4215 = vpop.sfrf %4214
  %p4216 = scmp.eq.s32.totalorder %s4215, 0
  %p4217 = pneg %p4216
  %4219 = shalt.err (%p4217)
  %s4220 = scalar_lea.sflag [#allocation14], 6
  %4221 = vsyncmov %s4220
  %s4222 = vpop.sfrf %4221
  %p4223 = scmp.eq.s32.totalorder %s4222, 0
  %p4224 = pneg %p4223
  %4226 = shalt.err (%p4224)
  %s4227 = scalar_lea.sflag [#allocation14], 7
  %4228 = vsyncmov %s4227
  %s4229 = vpop.sfrf %4228
  %p4230 = scmp.eq.s32.totalorder %s4229, 0
  %p4231 = pneg %p4230
  %4233 = shalt.err (%p4231)

</llo_original>
